<compile_context>
chip_gen: v7x
topology: tpu7x:2x2x1
jax: 0.10.0
libtpu: 0.0.40
codegen_flags: <defaults>
</compile_context>

<pallas_src>
import jax
import jax.numpy as jnp
from jax.experimental import pallas as pl
from jax.experimental.pallas import tpu as pltpu


_EPS = 1e-5
_SLOPE = 0.01   # LeakyReLU negative slope (PyTorch default)
_LAYERS = ("enc0a", "enc0b", "down1", "enc1a", "enc1b", "dec0a", "dec0b")


def _round8(c):
    return ((c + 7) // 8) * 8


# ---------------------------------------------------------------------------
# Fused AutoEnc kernel (one batch element per grid step)
# ---------------------------------------------------------------------------

def _make_autoenc_kernel(h, w, base):
    hw = h * w
    hl, wl = h // 2, w // 2
    log_w = w.bit_length() - 1
    log_wl = wl.bit_length() - 1
    f32 = jnp.float32
    bf16 = jnp.bfloat16

    def kernel(x_ref, pw_ref, pgb_ref, psw_ref, psb_ref,
               aw_ref, agb_ref, asw_ref, asb_ref,
               d_ref, u_ref, o_ref, col_ref):
        lane = jax.lax.broadcasted_iota(jnp.int32, (1, hw), 1)

        def make_masks(hd, wd, logw):
            hwl = hd * wd
            hh = jnp.right_shift(lane, logw)
            ww = jnp.bitwise_and(lane, wd - 1)
            inside = lane < hwl
            masks = {}
            for dh in (-1, 0, 1):
                for dw in (-1, 0, 1):
                    masks[(dh, dw)] = (inside
                                       & (hh + dh >= 0) & (hh + dh < hd)
                                       & (ww + dw >= 0) & (ww + dw < wd))
            return masks, jnp.where(inside, 1.0, 0.0)

        masks_hi, _ = make_masks(h, w, log_w)
        masks_lo, valid_lo = make_masks(hl, wl, log_wl)

        def conv3x3_in_lrelu(pieces, w_all_ref, gb_all_ref, layer, cout,
                             w_dim, masks, valid, count):
            """3x3 conv (pad=1, bias-free: cancelled by IN) + InstanceNorm + LeakyReLU.

            pieces: list of (c_i, hw) f32 activations (channel-concatenated input).
            Builds the full im2col slab in VMEM (col_ref) via lane rolls + masks,
            then a single bf16 MXU matmul with K = 9 * sum(c_i), N = hw.
            """
            cin = sum(p.shape[0] for p in pieces)
            k9 = 9 * cin
            tap = 0
            for dh in (-1, 0, 1):
                for dw in (-1, 0, 1):
                    s = dh * w_dim + dw
                    m = masks[(dh, dw)]
                    off = tap * cin
                    for p in pieces:
                        c = p.shape[0]
                        shifted = p if s == 0 else pltpu.roll(
                            p, shift=(-s) % hw, axis=1)
                        col_ref[off:off + c, :] = jnp.where(m, shifted, 0.0)
                        off += c
                    tap += 1
            w_t = w_all_ref[layer, 0:cout, 0:k9]                   # (cout, k9) bf16
            col = col_ref[0:k9, :].astype(bf16)                    # (k9, hw)
            y = jnp.dot(w_t, col, preferred_element_type=f32)      # (cout, hw)

            # InstanceNorm over (valid) spatial positions, then LeakyReLU.
            inv_n = 1.0 / count
            mean = jnp.sum(y, axis=1, keepdims=True) * inv_n
            yc = y - mean
            if valid is not None:
                yc = yc * valid
            var = jnp.sum(yc * yc, axis=1, keepdims=True) * inv_n
            gamma = gb_all_ref[layer, 0:cout, 0:1]
            beta = gb_all_ref[layer, 0:cout, 1:2]
            y = yc * jax.lax.rsqrt(var + _EPS) * gamma + beta
            y = jnp.where(y >= 0.0, y, _SLOPE * y)
            if valid is not None:
                y = y * valid          # keep padded lanes exactly zero
            return y

        def pad_ch(x, cpad):
            c = x.shape[0]
            if c == cpad:
                return [x]
            return [x, jnp.zeros((cpad - c, hw), f32)]

        def run_unet(x0, w_refs, gb_refs, sw_ref, sb_ref):
            hi = dict(w_dim=w, masks=masks_hi, valid=None, count=float(hw))
            lo = dict(w_dim=wl, masks=masks_lo, valid=valid_lo,
                      count=float(hl * wl))
            cb = conv3x3_in_lrelu
            e0 = cb(pad_ch(x0, base), w_refs, gb_refs, 0, base, **hi)
            e0 = cb([e0], w_refs, gb_refs, 1, base, **hi)
            y = cb([e0], w_refs, gb_refs, 2, 2 * base, **hi)           # "down" conv
            d1 = jnp.dot(y.astype(bf16), d_ref[...],
                         preferred_element_type=f32)                   # 2x subsample (in VMEM)
            e1 = cb([d1], w_refs, gb_refs, 3, 2 * base, **lo)
            e1 = cb([e1], w_refs, gb_refs, 4, 2 * base, **lo)
            up = jnp.dot(e1.astype(bf16), u_ref[...],
                         preferred_element_type=f32)                   # nearest upsample (in VMEM)
            d0 = cb([up, e0], w_refs, gb_refs, 5, base, **hi)          # fused skip concat
            d0 = cb([d0], w_refs, gb_refs, 6, base, **hi)
            logits = jnp.dot(sw_ref[...], d0.astype(bf16),
                             preferred_element_type=f32) + sb_ref[...]  # 1x1 seg head
            return logits                                              # (2, hw)

        x0 = x_ref[0]                                                  # (Cin, hw) f32
        logits = run_unet(x0, pw_ref, pgb_ref, psw_ref, psb_ref)
        # softmax over the 2 classes, keep class 1  ==  sigmoid(l1 - l0)
        preds = 1.0 / (1.0 + jnp.exp(logits[0:1, :] - logits[1:2, :]))
        o_ref[0] = run_unet(preds, aw_ref, agb_ref, asw_ref, asb_ref)

    return kernel


# ---------------------------------------------------------------------------
# Host-side packing / wrapper
# ---------------------------------------------------------------------------

def _init_conv(key, cin, cout):
    # NOTE: conv bias omitted -- it is exactly cancelled by InstanceNorm's mean
    # subtraction (perf feedback: dead work).
    wconv = jax.random.normal(key, (3, 3, cin, cout), jnp.float32) / (9.0 * cin) ** 0.5
    return dict(w=wconv,
                gamma=jnp.ones((cout,), jnp.float32),
                beta=jnp.zeros((cout,), jnp.float32))


def init_unet_params(key, in_ch, base=8, num_classes=2):
    ks = jax.random.split(key, 8)
    return dict(
        enc0a=_init_conv(ks[0], in_ch, base),
        enc0b=_init_conv(ks[1], base, base),
        down1=_init_conv(ks[2], base, 2 * base),
        enc1a=_init_conv(ks[3], 2 * base, 2 * base),
        enc1b=_init_conv(ks[4], 2 * base, 2 * base),
        dec0a=_init_conv(ks[5], 3 * base, base),
        dec0b=_init_conv(ks[6], base, base),
        seg_w=jax.random.normal(ks[7], (base, num_classes), jnp.float32) / base ** 0.5,
        seg_b=jnp.zeros((num_classes,), jnp.float32),
    )


def pack_unet_params(p, base=8):
    """Pack per-layer weights into MXU-friendly (Cout, 9*Cin_pad) bf16 slabs."""
    n_l = len(_LAYERS)
    cmax, kmax = 3 * base, 27 * base
    w_all = jnp.zeros((n_l, cmax, kmax), jnp.float32)
    gb_all = jnp.zeros((n_l, cmax, 2), jnp.float32)
    for i, name in enumerate(_LAYERS):
        wconv = p[name]['w']                              # (3, 3, cin, cout)
        cin, cout = wconv.shape[2], wconv.shape[3]
        cin_p = _round8(cin)
        wpad = jnp.zeros((3, 3, cin_p, cout), jnp.float32).at[:, :, :cin, :].set(wconv)
        w_t = wpad.reshape(9 * cin_p, cout).T             # (cout, 9*cin_p)
        w_all = w_all.at[i, :cout, :9 * cin_p].set(w_t)
        gb_all = gb_all.at[i, :cout, 0].set(p[name]['gamma'])
        gb_all = gb_all.at[i, :cout, 1].set(p[name]['beta'])
    seg_w = p['seg_w'].T.astype(jnp.bfloat16)             # (num_classes, base)
    seg_b = p['seg_b'].reshape(-1, 1).astype(jnp.float32)
    return w_all.astype(jnp.bfloat16), gb_all, seg_w, seg_b


def make_resample_mats(h, w):
    """0/1 matrices applying stride-2 subsample / 2x nearest upsample on the
    flattened-spatial (lane) axis, so the resample runs on the MXU in VMEM."""
    hw = h * w
    hl, wl = h // 2, w // 2
    hwl = hl * wl
    r = jnp.arange(hw)
    rh, rw = r // w, r % w
    j = jnp.arange(hw)
    jh, jw = j // wl, j % wl
    src = 2 * jh * w + 2 * jw
    down = ((r[:, None] == src[None, :]) & (j[None, :] < hwl)).astype(jnp.bfloat16)
    tgt = (rh // 2) * wl + rw // 2
    up = ((j[:, None] == tgt[None, :]) & (j[:, None] < hwl)).astype(jnp.bfloat16)
    return down, up


def autoenc_forward(x_nchw, pred_packed, ae_packed, resample, base=8):
    n, c, h, w = x_nchw.shape
    hw = h * w
    assert h & (h - 1) == 0 and w & (w - 1) == 0 and hw % 128 == 0
    x2 = x_nchw.reshape(n, c, hw).astype(jnp.float32)     # NCHW -> (N, C, H*W)
    pw, pgb, psw, psb = pred_packed
    aw, agb, asw, asb = ae_packed
    dmat, umat = resample

    def full(a):
        return pl.BlockSpec(a.shape, lambda i: (0,) * a.ndim)

    out = pl.pallas_call(
        _make_autoenc_kernel(h, w, base),
        out_shape=jax.ShapeDtypeStruct((n, 2, hw), jnp.float32),
        grid=(n,),
        in_specs=[
            pl.BlockSpec((1, c, hw), lambda i: (i, 0, 0)),
            full(pw), full(pgb), full(psw), full(psb),
            full(aw), full(agb), full(asw), full(asb),
            full(dmat), full(umat),
        ],
        out_specs=pl.BlockSpec((1, 2, hw), lambda i: (i, 0, 0)),
        scratch_shapes=[pltpu.VMEM((27 * base, hw), jnp.float32)],   # im2col slab
        compiler_params=pltpu.CompilerParams(dimension_semantics=("parallel",)),
    )(x2, pw, pgb, psw, psb, aw, agb, asw, asb, dmat, umat)

    return (out.reshape(n, 2, h, w),)     # deep-supervision tuple, out[0] = logits (NCHW)


# ---------------------------------------------------------------------------
# Demo
# ---------------------------------------------------------------------------

if __name__ == "__main__":
    key = jax.random.PRNGKey(0)
    k_x, k_pred, k_ae = jax.random.split(key, 3)

    N, C, H, W = 2, 4, 16, 16
    x = jax.random.normal(k_x, (N, C, H, W), jnp.float32)

    base = 8
    pred_packed = pack_unet_params(init_unet_params(k_pred, in_ch=C, base=base), base)
    ae_packed = pack_unet_params(init_unet_params(k_ae, in_ch=1, base=base), base)
    resample = make_resample_mats(H, W)

    fwd = jax.jit(lambda xx: autoenc_forward(xx, pred_packed, ae_packed,
                                             resample, base=base))
    out = jax.block_until_ready(fwd(x))

    assert out[0].shape == (N, 2, H, W), out[0].shape
    assert bool(jnp.all(jnp.isfinite(out[0])))
    print("KERNEL_OK")
</pallas_src>

<mosaic_0001>
module attributes {stable_mosaic.version = 11 : i64} {
  func.func @kernel(%arg0: i32, %arg1: memref<1x4x256xf32, #tpu.memory_space<vmem>>, %arg2: memref<7x24x216xbf16, #tpu.memory_space<vmem>>, %arg3: memref<7x24x2xf32, #tpu.memory_space<vmem>>, %arg4: memref<2x8xbf16, #tpu.memory_space<vmem>>, %arg5: memref<2x1xf32, #tpu.memory_space<vmem>>, %arg6: memref<7x24x216xbf16, #tpu.memory_space<vmem>>, %arg7: memref<7x24x2xf32, #tpu.memory_space<vmem>>, %arg8: memref<2x8xbf16, #tpu.memory_space<vmem>>, %arg9: memref<2x1xf32, #tpu.memory_space<vmem>>, %arg10: memref<256x256xbf16, #tpu.memory_space<vmem>>, %arg11: memref<256x256xbf16, #tpu.memory_space<vmem>>, %arg12: memref<1x2x256xf32, #tpu.memory_space<vmem>>, %arg13: memref<216x256xf32, #tpu.memory_space<vmem>>) attributes {dimension_semantics = [#tpu.dimension_semantics<parallel>], iteration_bounds = array<i64: 2>, scalar_prefetch = 0 : i64, scratch_operands = 1 : i64, tpu.core_type = #tpu.core_type<tc>, window_params = [{transform_indices = @transform_0, window_bounds = array<i64: 1, 4, 256>}, {pipeline_mode = #tpu.pipeline_mode<synchronous>, transform_indices = @transform_1, window_bounds = array<i64: 7, 24, 216>}, {pipeline_mode = #tpu.pipeline_mode<synchronous>, transform_indices = @transform_2, window_bounds = array<i64: 7, 24, 2>}, {pipeline_mode = #tpu.pipeline_mode<synchronous>, transform_indices = @transform_3, window_bounds = array<i64: 2, 8>}, {pipeline_mode = #tpu.pipeline_mode<synchronous>, transform_indices = @transform_4, window_bounds = array<i64: 2, 1>}, {pipeline_mode = #tpu.pipeline_mode<synchronous>, transform_indices = @transform_5, window_bounds = array<i64: 7, 24, 216>}, {pipeline_mode = #tpu.pipeline_mode<synchronous>, transform_indices = @transform_6, window_bounds = array<i64: 7, 24, 2>}, {pipeline_mode = #tpu.pipeline_mode<synchronous>, transform_indices = @transform_7, window_bounds = array<i64: 2, 8>}, {pipeline_mode = #tpu.pipeline_mode<synchronous>, transform_indices = @transform_8, window_bounds = array<i64: 2, 1>}, {pipeline_mode = #tpu.pipeline_mode<synchronous>, transform_indices = @transform_9, window_bounds = array<i64: 256, 256>}, {pipeline_mode = #tpu.pipeline_mode<synchronous>, transform_indices = @transform_10, window_bounds = array<i64: 256, 256>}, {transform_indices = @transform_11, window_bounds = array<i64: 1, 2, 256>}]} {
    %0 = tpu.iota {dimensions = array<i32: 1>} : vector<1x256xi32>
    %c4_i32 = arith.constant 4 : i32
    %1 = vector.broadcast %c4_i32 : i32 to vector<1x256xi32>
    %2 = arith.shrsi %0, %1 : vector<1x256xi32>
    %c15_i32 = arith.constant 15 : i32
    %3 = vector.broadcast %c15_i32 : i32 to vector<1x256xi32>
    %4 = arith.andi %0, %3 : vector<1x256xi32>
    %c256_i32 = arith.constant 256 : i32
    %5 = vector.broadcast %c256_i32 : i32 to vector<1x256xi32>
    %6 = arith.cmpi slt, %0, %5 : vector<1x256xi32>
    %c-1_i32 = arith.constant -1 : i32
    %7 = vector.broadcast %c-1_i32 : i32 to vector<1x256xi32>
    %8 = arith.addi %2, %7 : vector<1x256xi32>
    %c0_i32 = arith.constant 0 : i32
    %9 = vector.broadcast %c0_i32 : i32 to vector<1x256xi32>
    %10 = arith.cmpi sge, %8, %9 : vector<1x256xi32>
    %11 = arith.andi %6, %10 : vector<1x256xi1>
    %c-1_i32_0 = arith.constant -1 : i32
    %12 = vector.broadcast %c-1_i32_0 : i32 to vector<1x256xi32>
    %13 = arith.addi %2, %12 : vector<1x256xi32>
    %c16_i32 = arith.constant 16 : i32
    %14 = vector.broadcast %c16_i32 : i32 to vector<1x256xi32>
    %15 = arith.cmpi slt, %13, %14 : vector<1x256xi32>
    %16 = arith.andi %11, %15 : vector<1x256xi1>
    %c-1_i32_1 = arith.constant -1 : i32
    %17 = vector.broadcast %c-1_i32_1 : i32 to vector<1x256xi32>
    %18 = arith.addi %4, %17 : vector<1x256xi32>
    %c0_i32_2 = arith.constant 0 : i32
    %19 = vector.broadcast %c0_i32_2 : i32 to vector<1x256xi32>
    %20 = arith.cmpi sge, %18, %19 : vector<1x256xi32>
    %21 = arith.andi %16, %20 : vector<1x256xi1>
    %c-1_i32_3 = arith.constant -1 : i32
    %22 = vector.broadcast %c-1_i32_3 : i32 to vector<1x256xi32>
    %23 = arith.addi %4, %22 : vector<1x256xi32>
    %c16_i32_4 = arith.constant 16 : i32
    %24 = vector.broadcast %c16_i32_4 : i32 to vector<1x256xi32>
    %25 = arith.cmpi slt, %23, %24 : vector<1x256xi32>
    %26 = arith.andi %21, %25 : vector<1x256xi1>
    %c-1_i32_5 = arith.constant -1 : i32
    %27 = vector.broadcast %c-1_i32_5 : i32 to vector<1x256xi32>
    %28 = arith.addi %2, %27 : vector<1x256xi32>
    %c0_i32_6 = arith.constant 0 : i32
    %29 = vector.broadcast %c0_i32_6 : i32 to vector<1x256xi32>
    %30 = arith.cmpi sge, %28, %29 : vector<1x256xi32>
    %31 = arith.andi %6, %30 : vector<1x256xi1>
    %c-1_i32_7 = arith.constant -1 : i32
    %32 = vector.broadcast %c-1_i32_7 : i32 to vector<1x256xi32>
    %33 = arith.addi %2, %32 : vector<1x256xi32>
    %c16_i32_8 = arith.constant 16 : i32
    %34 = vector.broadcast %c16_i32_8 : i32 to vector<1x256xi32>
    %35 = arith.cmpi slt, %33, %34 : vector<1x256xi32>
    %36 = arith.andi %31, %35 : vector<1x256xi1>
    %c0_i32_9 = arith.constant 0 : i32
    %37 = vector.broadcast %c0_i32_9 : i32 to vector<1x256xi32>
    %38 = arith.addi %4, %37 : vector<1x256xi32>
    %c0_i32_10 = arith.constant 0 : i32
    %39 = vector.broadcast %c0_i32_10 : i32 to vector<1x256xi32>
    %40 = arith.cmpi sge, %38, %39 : vector<1x256xi32>
    %41 = arith.andi %36, %40 : vector<1x256xi1>
    %c0_i32_11 = arith.constant 0 : i32
    %42 = vector.broadcast %c0_i32_11 : i32 to vector<1x256xi32>
    %43 = arith.addi %4, %42 : vector<1x256xi32>
    %c16_i32_12 = arith.constant 16 : i32
    %44 = vector.broadcast %c16_i32_12 : i32 to vector<1x256xi32>
    %45 = arith.cmpi slt, %43, %44 : vector<1x256xi32>
    %46 = arith.andi %41, %45 : vector<1x256xi1>
    %c-1_i32_13 = arith.constant -1 : i32
    %47 = vector.broadcast %c-1_i32_13 : i32 to vector<1x256xi32>
    %48 = arith.addi %2, %47 : vector<1x256xi32>
    %c0_i32_14 = arith.constant 0 : i32
    %49 = vector.broadcast %c0_i32_14 : i32 to vector<1x256xi32>
    %50 = arith.cmpi sge, %48, %49 : vector<1x256xi32>
    %51 = arith.andi %6, %50 : vector<1x256xi1>
    %c-1_i32_15 = arith.constant -1 : i32
    %52 = vector.broadcast %c-1_i32_15 : i32 to vector<1x256xi32>
    %53 = arith.addi %2, %52 : vector<1x256xi32>
    %c16_i32_16 = arith.constant 16 : i32
    %54 = vector.broadcast %c16_i32_16 : i32 to vector<1x256xi32>
    %55 = arith.cmpi slt, %53, %54 : vector<1x256xi32>
    %56 = arith.andi %51, %55 : vector<1x256xi1>
    %c1_i32 = arith.constant 1 : i32
    %57 = vector.broadcast %c1_i32 : i32 to vector<1x256xi32>
    %58 = arith.addi %4, %57 : vector<1x256xi32>
    %c0_i32_17 = arith.constant 0 : i32
    %59 = vector.broadcast %c0_i32_17 : i32 to vector<1x256xi32>
    %60 = arith.cmpi sge, %58, %59 : vector<1x256xi32>
    %61 = arith.andi %56, %60 : vector<1x256xi1>
    %c1_i32_18 = arith.constant 1 : i32
    %62 = vector.broadcast %c1_i32_18 : i32 to vector<1x256xi32>
    %63 = arith.addi %4, %62 : vector<1x256xi32>
    %c16_i32_19 = arith.constant 16 : i32
    %64 = vector.broadcast %c16_i32_19 : i32 to vector<1x256xi32>
    %65 = arith.cmpi slt, %63, %64 : vector<1x256xi32>
    %66 = arith.andi %61, %65 : vector<1x256xi1>
    %c0_i32_20 = arith.constant 0 : i32
    %67 = vector.broadcast %c0_i32_20 : i32 to vector<1x256xi32>
    %68 = arith.addi %2, %67 : vector<1x256xi32>
    %c0_i32_21 = arith.constant 0 : i32
    %69 = vector.broadcast %c0_i32_21 : i32 to vector<1x256xi32>
    %70 = arith.cmpi sge, %68, %69 : vector<1x256xi32>
    %71 = arith.andi %6, %70 : vector<1x256xi1>
    %c0_i32_22 = arith.constant 0 : i32
    %72 = vector.broadcast %c0_i32_22 : i32 to vector<1x256xi32>
    %73 = arith.addi %2, %72 : vector<1x256xi32>
    %c16_i32_23 = arith.constant 16 : i32
    %74 = vector.broadcast %c16_i32_23 : i32 to vector<1x256xi32>
    %75 = arith.cmpi slt, %73, %74 : vector<1x256xi32>
    %76 = arith.andi %71, %75 : vector<1x256xi1>
    %c-1_i32_24 = arith.constant -1 : i32
    %77 = vector.broadcast %c-1_i32_24 : i32 to vector<1x256xi32>
    %78 = arith.addi %4, %77 : vector<1x256xi32>
    %c0_i32_25 = arith.constant 0 : i32
    %79 = vector.broadcast %c0_i32_25 : i32 to vector<1x256xi32>
    %80 = arith.cmpi sge, %78, %79 : vector<1x256xi32>
    %81 = arith.andi %76, %80 : vector<1x256xi1>
    %c-1_i32_26 = arith.constant -1 : i32
    %82 = vector.broadcast %c-1_i32_26 : i32 to vector<1x256xi32>
    %83 = arith.addi %4, %82 : vector<1x256xi32>
    %c16_i32_27 = arith.constant 16 : i32
    %84 = vector.broadcast %c16_i32_27 : i32 to vector<1x256xi32>
    %85 = arith.cmpi slt, %83, %84 : vector<1x256xi32>
    %86 = arith.andi %81, %85 : vector<1x256xi1>
    %c0_i32_28 = arith.constant 0 : i32
    %87 = vector.broadcast %c0_i32_28 : i32 to vector<1x256xi32>
    %88 = arith.addi %2, %87 : vector<1x256xi32>
    %c0_i32_29 = arith.constant 0 : i32
    %89 = vector.broadcast %c0_i32_29 : i32 to vector<1x256xi32>
    %90 = arith.cmpi sge, %88, %89 : vector<1x256xi32>
    %91 = arith.andi %6, %90 : vector<1x256xi1>
    %c0_i32_30 = arith.constant 0 : i32
    %92 = vector.broadcast %c0_i32_30 : i32 to vector<1x256xi32>
    %93 = arith.addi %2, %92 : vector<1x256xi32>
    %c16_i32_31 = arith.constant 16 : i32
    %94 = vector.broadcast %c16_i32_31 : i32 to vector<1x256xi32>
    %95 = arith.cmpi slt, %93, %94 : vector<1x256xi32>
    %96 = arith.andi %91, %95 : vector<1x256xi1>
    %c0_i32_32 = arith.constant 0 : i32
    %97 = vector.broadcast %c0_i32_32 : i32 to vector<1x256xi32>
    %98 = arith.addi %4, %97 : vector<1x256xi32>
    %c0_i32_33 = arith.constant 0 : i32
    %99 = vector.broadcast %c0_i32_33 : i32 to vector<1x256xi32>
    %100 = arith.cmpi sge, %98, %99 : vector<1x256xi32>
    %101 = arith.andi %96, %100 : vector<1x256xi1>
    %c0_i32_34 = arith.constant 0 : i32
    %102 = vector.broadcast %c0_i32_34 : i32 to vector<1x256xi32>
    %103 = arith.addi %4, %102 : vector<1x256xi32>
    %c16_i32_35 = arith.constant 16 : i32
    %104 = vector.broadcast %c16_i32_35 : i32 to vector<1x256xi32>
    %105 = arith.cmpi slt, %103, %104 : vector<1x256xi32>
    %106 = arith.andi %101, %105 : vector<1x256xi1>
    %c0_i32_36 = arith.constant 0 : i32
    %107 = vector.broadcast %c0_i32_36 : i32 to vector<1x256xi32>
    %108 = arith.addi %2, %107 : vector<1x256xi32>
    %c0_i32_37 = arith.constant 0 : i32
    %109 = vector.broadcast %c0_i32_37 : i32 to vector<1x256xi32>
    %110 = arith.cmpi sge, %108, %109 : vector<1x256xi32>
    %111 = arith.andi %6, %110 : vector<1x256xi1>
    %c0_i32_38 = arith.constant 0 : i32
    %112 = vector.broadcast %c0_i32_38 : i32 to vector<1x256xi32>
    %113 = arith.addi %2, %112 : vector<1x256xi32>
    %c16_i32_39 = arith.constant 16 : i32
    %114 = vector.broadcast %c16_i32_39 : i32 to vector<1x256xi32>
    %115 = arith.cmpi slt, %113, %114 : vector<1x256xi32>
    %116 = arith.andi %111, %115 : vector<1x256xi1>
    %c1_i32_40 = arith.constant 1 : i32
    %117 = vector.broadcast %c1_i32_40 : i32 to vector<1x256xi32>
    %118 = arith.addi %4, %117 : vector<1x256xi32>
    %c0_i32_41 = arith.constant 0 : i32
    %119 = vector.broadcast %c0_i32_41 : i32 to vector<1x256xi32>
    %120 = arith.cmpi sge, %118, %119 : vector<1x256xi32>
    %121 = arith.andi %116, %120 : vector<1x256xi1>
    %c1_i32_42 = arith.constant 1 : i32
    %122 = vector.broadcast %c1_i32_42 : i32 to vector<1x256xi32>
    %123 = arith.addi %4, %122 : vector<1x256xi32>
    %c16_i32_43 = arith.constant 16 : i32
    %124 = vector.broadcast %c16_i32_43 : i32 to vector<1x256xi32>
    %125 = arith.cmpi slt, %123, %124 : vector<1x256xi32>
    %126 = arith.andi %121, %125 : vector<1x256xi1>
    %c1_i32_44 = arith.constant 1 : i32
    %127 = vector.broadcast %c1_i32_44 : i32 to vector<1x256xi32>
    %128 = arith.addi %2, %127 : vector<1x256xi32>
    %c0_i32_45 = arith.constant 0 : i32
    %129 = vector.broadcast %c0_i32_45 : i32 to vector<1x256xi32>
    %130 = arith.cmpi sge, %128, %129 : vector<1x256xi32>
    %131 = arith.andi %6, %130 : vector<1x256xi1>
    %c1_i32_46 = arith.constant 1 : i32
    %132 = vector.broadcast %c1_i32_46 : i32 to vector<1x256xi32>
    %133 = arith.addi %2, %132 : vector<1x256xi32>
    %c16_i32_47 = arith.constant 16 : i32
    %134 = vector.broadcast %c16_i32_47 : i32 to vector<1x256xi32>
    %135 = arith.cmpi slt, %133, %134 : vector<1x256xi32>
    %136 = arith.andi %131, %135 : vector<1x256xi1>
    %c-1_i32_48 = arith.constant -1 : i32
    %137 = vector.broadcast %c-1_i32_48 : i32 to vector<1x256xi32>
    %138 = arith.addi %4, %137 : vector<1x256xi32>
    %c0_i32_49 = arith.constant 0 : i32
    %139 = vector.broadcast %c0_i32_49 : i32 to vector<1x256xi32>
    %140 = arith.cmpi sge, %138, %139 : vector<1x256xi32>
    %141 = arith.andi %136, %140 : vector<1x256xi1>
    %c-1_i32_50 = arith.constant -1 : i32
    %142 = vector.broadcast %c-1_i32_50 : i32 to vector<1x256xi32>
    %143 = arith.addi %4, %142 : vector<1x256xi32>
    %c16_i32_51 = arith.constant 16 : i32
    %144 = vector.broadcast %c16_i32_51 : i32 to vector<1x256xi32>
    %145 = arith.cmpi slt, %143, %144 : vector<1x256xi32>
    %146 = arith.andi %141, %145 : vector<1x256xi1>
    %c1_i32_52 = arith.constant 1 : i32
    %147 = vector.broadcast %c1_i32_52 : i32 to vector<1x256xi32>
    %148 = arith.addi %2, %147 : vector<1x256xi32>
    %c0_i32_53 = arith.constant 0 : i32
    %149 = vector.broadcast %c0_i32_53 : i32 to vector<1x256xi32>
    %150 = arith.cmpi sge, %148, %149 : vector<1x256xi32>
    %151 = arith.andi %6, %150 : vector<1x256xi1>
    %c1_i32_54 = arith.constant 1 : i32
    %152 = vector.broadcast %c1_i32_54 : i32 to vector<1x256xi32>
    %153 = arith.addi %2, %152 : vector<1x256xi32>
    %c16_i32_55 = arith.constant 16 : i32
    %154 = vector.broadcast %c16_i32_55 : i32 to vector<1x256xi32>
    %155 = arith.cmpi slt, %153, %154 : vector<1x256xi32>
    %156 = arith.andi %151, %155 : vector<1x256xi1>
    %c0_i32_56 = arith.constant 0 : i32
    %157 = vector.broadcast %c0_i32_56 : i32 to vector<1x256xi32>
    %158 = arith.addi %4, %157 : vector<1x256xi32>
    %c0_i32_57 = arith.constant 0 : i32
    %159 = vector.broadcast %c0_i32_57 : i32 to vector<1x256xi32>
    %160 = arith.cmpi sge, %158, %159 : vector<1x256xi32>
    %161 = arith.andi %156, %160 : vector<1x256xi1>
    %c0_i32_58 = arith.constant 0 : i32
    %162 = vector.broadcast %c0_i32_58 : i32 to vector<1x256xi32>
    %163 = arith.addi %4, %162 : vector<1x256xi32>
    %c16_i32_59 = arith.constant 16 : i32
    %164 = vector.broadcast %c16_i32_59 : i32 to vector<1x256xi32>
    %165 = arith.cmpi slt, %163, %164 : vector<1x256xi32>
    %166 = arith.andi %161, %165 : vector<1x256xi1>
    %c1_i32_60 = arith.constant 1 : i32
    %167 = vector.broadcast %c1_i32_60 : i32 to vector<1x256xi32>
    %168 = arith.addi %2, %167 : vector<1x256xi32>
    %c0_i32_61 = arith.constant 0 : i32
    %169 = vector.broadcast %c0_i32_61 : i32 to vector<1x256xi32>
    %170 = arith.cmpi sge, %168, %169 : vector<1x256xi32>
    %171 = arith.andi %6, %170 : vector<1x256xi1>
    %c1_i32_62 = arith.constant 1 : i32
    %172 = vector.broadcast %c1_i32_62 : i32 to vector<1x256xi32>
    %173 = arith.addi %2, %172 : vector<1x256xi32>
    %c16_i32_63 = arith.constant 16 : i32
    %174 = vector.broadcast %c16_i32_63 : i32 to vector<1x256xi32>
    %175 = arith.cmpi slt, %173, %174 : vector<1x256xi32>
    %176 = arith.andi %171, %175 : vector<1x256xi1>
    %c1_i32_64 = arith.constant 1 : i32
    %177 = vector.broadcast %c1_i32_64 : i32 to vector<1x256xi32>
    %178 = arith.addi %4, %177 : vector<1x256xi32>
    %c0_i32_65 = arith.constant 0 : i32
    %179 = vector.broadcast %c0_i32_65 : i32 to vector<1x256xi32>
    %180 = arith.cmpi sge, %178, %179 : vector<1x256xi32>
    %181 = arith.andi %176, %180 : vector<1x256xi1>
    %c1_i32_66 = arith.constant 1 : i32
    %182 = vector.broadcast %c1_i32_66 : i32 to vector<1x256xi32>
    %183 = arith.addi %4, %182 : vector<1x256xi32>
    %c16_i32_67 = arith.constant 16 : i32
    %184 = vector.broadcast %c16_i32_67 : i32 to vector<1x256xi32>
    %185 = arith.cmpi slt, %183, %184 : vector<1x256xi32>
    %186 = arith.andi %181, %185 : vector<1x256xi1>
    %c3_i32 = arith.constant 3 : i32
    %187 = vector.broadcast %c3_i32 : i32 to vector<1x256xi32>
    %188 = arith.shrsi %0, %187 : vector<1x256xi32>
    %c7_i32 = arith.constant 7 : i32
    %189 = vector.broadcast %c7_i32 : i32 to vector<1x256xi32>
    %190 = arith.andi %0, %189 : vector<1x256xi32>
    %c64_i32 = arith.constant 64 : i32
    %191 = vector.broadcast %c64_i32 : i32 to vector<1x256xi32>
    %192 = arith.cmpi slt, %0, %191 : vector<1x256xi32>
    %c-1_i32_68 = arith.constant -1 : i32
    %193 = vector.broadcast %c-1_i32_68 : i32 to vector<1x256xi32>
    %194 = arith.addi %188, %193 : vector<1x256xi32>
    %c0_i32_69 = arith.constant 0 : i32
    %195 = vector.broadcast %c0_i32_69 : i32 to vector<1x256xi32>
    %196 = arith.cmpi sge, %194, %195 : vector<1x256xi32>
    %197 = arith.andi %192, %196 : vector<1x256xi1>
    %c-1_i32_70 = arith.constant -1 : i32
    %198 = vector.broadcast %c-1_i32_70 : i32 to vector<1x256xi32>
    %199 = arith.addi %188, %198 : vector<1x256xi32>
    %c8_i32 = arith.constant 8 : i32
    %200 = vector.broadcast %c8_i32 : i32 to vector<1x256xi32>
    %201 = arith.cmpi slt, %199, %200 : vector<1x256xi32>
    %202 = arith.andi %197, %201 : vector<1x256xi1>
    %c-1_i32_71 = arith.constant -1 : i32
    %203 = vector.broadcast %c-1_i32_71 : i32 to vector<1x256xi32>
    %204 = arith.addi %190, %203 : vector<1x256xi32>
    %c0_i32_72 = arith.constant 0 : i32
    %205 = vector.broadcast %c0_i32_72 : i32 to vector<1x256xi32>
    %206 = arith.cmpi sge, %204, %205 : vector<1x256xi32>
    %207 = arith.andi %202, %206 : vector<1x256xi1>
    %c-1_i32_73 = arith.constant -1 : i32
    %208 = vector.broadcast %c-1_i32_73 : i32 to vector<1x256xi32>
    %209 = arith.addi %190, %208 : vector<1x256xi32>
    %c8_i32_74 = arith.constant 8 : i32
    %210 = vector.broadcast %c8_i32_74 : i32 to vector<1x256xi32>
    %211 = arith.cmpi slt, %209, %210 : vector<1x256xi32>
    %212 = arith.andi %207, %211 : vector<1x256xi1>
    %c-1_i32_75 = arith.constant -1 : i32
    %213 = vector.broadcast %c-1_i32_75 : i32 to vector<1x256xi32>
    %214 = arith.addi %188, %213 : vector<1x256xi32>
    %c0_i32_76 = arith.constant 0 : i32
    %215 = vector.broadcast %c0_i32_76 : i32 to vector<1x256xi32>
    %216 = arith.cmpi sge, %214, %215 : vector<1x256xi32>
    %217 = arith.andi %192, %216 : vector<1x256xi1>
    %c-1_i32_77 = arith.constant -1 : i32
    %218 = vector.broadcast %c-1_i32_77 : i32 to vector<1x256xi32>
    %219 = arith.addi %188, %218 : vector<1x256xi32>
    %c8_i32_78 = arith.constant 8 : i32
    %220 = vector.broadcast %c8_i32_78 : i32 to vector<1x256xi32>
    %221 = arith.cmpi slt, %219, %220 : vector<1x256xi32>
    %222 = arith.andi %217, %221 : vector<1x256xi1>
    %c0_i32_79 = arith.constant 0 : i32
    %223 = vector.broadcast %c0_i32_79 : i32 to vector<1x256xi32>
    %224 = arith.addi %190, %223 : vector<1x256xi32>
    %c0_i32_80 = arith.constant 0 : i32
    %225 = vector.broadcast %c0_i32_80 : i32 to vector<1x256xi32>
    %226 = arith.cmpi sge, %224, %225 : vector<1x256xi32>
    %227 = arith.andi %222, %226 : vector<1x256xi1>
    %c0_i32_81 = arith.constant 0 : i32
    %228 = vector.broadcast %c0_i32_81 : i32 to vector<1x256xi32>
    %229 = arith.addi %190, %228 : vector<1x256xi32>
    %c8_i32_82 = arith.constant 8 : i32
    %230 = vector.broadcast %c8_i32_82 : i32 to vector<1x256xi32>
    %231 = arith.cmpi slt, %229, %230 : vector<1x256xi32>
    %232 = arith.andi %227, %231 : vector<1x256xi1>
    %c-1_i32_83 = arith.constant -1 : i32
    %233 = vector.broadcast %c-1_i32_83 : i32 to vector<1x256xi32>
    %234 = arith.addi %188, %233 : vector<1x256xi32>
    %c0_i32_84 = arith.constant 0 : i32
    %235 = vector.broadcast %c0_i32_84 : i32 to vector<1x256xi32>
    %236 = arith.cmpi sge, %234, %235 : vector<1x256xi32>
    %237 = arith.andi %192, %236 : vector<1x256xi1>
    %c-1_i32_85 = arith.constant -1 : i32
    %238 = vector.broadcast %c-1_i32_85 : i32 to vector<1x256xi32>
    %239 = arith.addi %188, %238 : vector<1x256xi32>
    %c8_i32_86 = arith.constant 8 : i32
    %240 = vector.broadcast %c8_i32_86 : i32 to vector<1x256xi32>
    %241 = arith.cmpi slt, %239, %240 : vector<1x256xi32>
    %242 = arith.andi %237, %241 : vector<1x256xi1>
    %c1_i32_87 = arith.constant 1 : i32
    %243 = vector.broadcast %c1_i32_87 : i32 to vector<1x256xi32>
    %244 = arith.addi %190, %243 : vector<1x256xi32>
    %c0_i32_88 = arith.constant 0 : i32
    %245 = vector.broadcast %c0_i32_88 : i32 to vector<1x256xi32>
    %246 = arith.cmpi sge, %244, %245 : vector<1x256xi32>
    %247 = arith.andi %242, %246 : vector<1x256xi1>
    %c1_i32_89 = arith.constant 1 : i32
    %248 = vector.broadcast %c1_i32_89 : i32 to vector<1x256xi32>
    %249 = arith.addi %190, %248 : vector<1x256xi32>
    %c8_i32_90 = arith.constant 8 : i32
    %250 = vector.broadcast %c8_i32_90 : i32 to vector<1x256xi32>
    %251 = arith.cmpi slt, %249, %250 : vector<1x256xi32>
    %252 = arith.andi %247, %251 : vector<1x256xi1>
    %c0_i32_91 = arith.constant 0 : i32
    %253 = vector.broadcast %c0_i32_91 : i32 to vector<1x256xi32>
    %254 = arith.addi %188, %253 : vector<1x256xi32>
    %c0_i32_92 = arith.constant 0 : i32
    %255 = vector.broadcast %c0_i32_92 : i32 to vector<1x256xi32>
    %256 = arith.cmpi sge, %254, %255 : vector<1x256xi32>
    %257 = arith.andi %192, %256 : vector<1x256xi1>
    %c0_i32_93 = arith.constant 0 : i32
    %258 = vector.broadcast %c0_i32_93 : i32 to vector<1x256xi32>
    %259 = arith.addi %188, %258 : vector<1x256xi32>
    %c8_i32_94 = arith.constant 8 : i32
    %260 = vector.broadcast %c8_i32_94 : i32 to vector<1x256xi32>
    %261 = arith.cmpi slt, %259, %260 : vector<1x256xi32>
    %262 = arith.andi %257, %261 : vector<1x256xi1>
    %c-1_i32_95 = arith.constant -1 : i32
    %263 = vector.broadcast %c-1_i32_95 : i32 to vector<1x256xi32>
    %264 = arith.addi %190, %263 : vector<1x256xi32>
    %c0_i32_96 = arith.constant 0 : i32
    %265 = vector.broadcast %c0_i32_96 : i32 to vector<1x256xi32>
    %266 = arith.cmpi sge, %264, %265 : vector<1x256xi32>
    %267 = arith.andi %262, %266 : vector<1x256xi1>
    %c-1_i32_97 = arith.constant -1 : i32
    %268 = vector.broadcast %c-1_i32_97 : i32 to vector<1x256xi32>
    %269 = arith.addi %190, %268 : vector<1x256xi32>
    %c8_i32_98 = arith.constant 8 : i32
    %270 = vector.broadcast %c8_i32_98 : i32 to vector<1x256xi32>
    %271 = arith.cmpi slt, %269, %270 : vector<1x256xi32>
    %272 = arith.andi %267, %271 : vector<1x256xi1>
    %c0_i32_99 = arith.constant 0 : i32
    %273 = vector.broadcast %c0_i32_99 : i32 to vector<1x256xi32>
    %274 = arith.addi %188, %273 : vector<1x256xi32>
    %c0_i32_100 = arith.constant 0 : i32
    %275 = vector.broadcast %c0_i32_100 : i32 to vector<1x256xi32>
    %276 = arith.cmpi sge, %274, %275 : vector<1x256xi32>
    %277 = arith.andi %192, %276 : vector<1x256xi1>
    %c0_i32_101 = arith.constant 0 : i32
    %278 = vector.broadcast %c0_i32_101 : i32 to vector<1x256xi32>
    %279 = arith.addi %188, %278 : vector<1x256xi32>
    %c8_i32_102 = arith.constant 8 : i32
    %280 = vector.broadcast %c8_i32_102 : i32 to vector<1x256xi32>
    %281 = arith.cmpi slt, %279, %280 : vector<1x256xi32>
    %282 = arith.andi %277, %281 : vector<1x256xi1>
    %c0_i32_103 = arith.constant 0 : i32
    %283 = vector.broadcast %c0_i32_103 : i32 to vector<1x256xi32>
    %284 = arith.addi %190, %283 : vector<1x256xi32>
    %c0_i32_104 = arith.constant 0 : i32
    %285 = vector.broadcast %c0_i32_104 : i32 to vector<1x256xi32>
    %286 = arith.cmpi sge, %284, %285 : vector<1x256xi32>
    %287 = arith.andi %282, %286 : vector<1x256xi1>
    %c0_i32_105 = arith.constant 0 : i32
    %288 = vector.broadcast %c0_i32_105 : i32 to vector<1x256xi32>
    %289 = arith.addi %190, %288 : vector<1x256xi32>
    %c8_i32_106 = arith.constant 8 : i32
    %290 = vector.broadcast %c8_i32_106 : i32 to vector<1x256xi32>
    %291 = arith.cmpi slt, %289, %290 : vector<1x256xi32>
    %292 = arith.andi %287, %291 : vector<1x256xi1>
    %c0_i32_107 = arith.constant 0 : i32
    %293 = vector.broadcast %c0_i32_107 : i32 to vector<1x256xi32>
    %294 = arith.addi %188, %293 : vector<1x256xi32>
    %c0_i32_108 = arith.constant 0 : i32
    %295 = vector.broadcast %c0_i32_108 : i32 to vector<1x256xi32>
    %296 = arith.cmpi sge, %294, %295 : vector<1x256xi32>
    %297 = arith.andi %192, %296 : vector<1x256xi1>
    %c0_i32_109 = arith.constant 0 : i32
    %298 = vector.broadcast %c0_i32_109 : i32 to vector<1x256xi32>
    %299 = arith.addi %188, %298 : vector<1x256xi32>
    %c8_i32_110 = arith.constant 8 : i32
    %300 = vector.broadcast %c8_i32_110 : i32 to vector<1x256xi32>
    %301 = arith.cmpi slt, %299, %300 : vector<1x256xi32>
    %302 = arith.andi %297, %301 : vector<1x256xi1>
    %c1_i32_111 = arith.constant 1 : i32
    %303 = vector.broadcast %c1_i32_111 : i32 to vector<1x256xi32>
    %304 = arith.addi %190, %303 : vector<1x256xi32>
    %c0_i32_112 = arith.constant 0 : i32
    %305 = vector.broadcast %c0_i32_112 : i32 to vector<1x256xi32>
    %306 = arith.cmpi sge, %304, %305 : vector<1x256xi32>
    %307 = arith.andi %302, %306 : vector<1x256xi1>
    %c1_i32_113 = arith.constant 1 : i32
    %308 = vector.broadcast %c1_i32_113 : i32 to vector<1x256xi32>
    %309 = arith.addi %190, %308 : vector<1x256xi32>
    %c8_i32_114 = arith.constant 8 : i32
    %310 = vector.broadcast %c8_i32_114 : i32 to vector<1x256xi32>
    %311 = arith.cmpi slt, %309, %310 : vector<1x256xi32>
    %312 = arith.andi %307, %311 : vector<1x256xi1>
    %c1_i32_115 = arith.constant 1 : i32
    %313 = vector.broadcast %c1_i32_115 : i32 to vector<1x256xi32>
    %314 = arith.addi %188, %313 : vector<1x256xi32>
    %c0_i32_116 = arith.constant 0 : i32
    %315 = vector.broadcast %c0_i32_116 : i32 to vector<1x256xi32>
    %316 = arith.cmpi sge, %314, %315 : vector<1x256xi32>
    %317 = arith.andi %192, %316 : vector<1x256xi1>
    %c1_i32_117 = arith.constant 1 : i32
    %318 = vector.broadcast %c1_i32_117 : i32 to vector<1x256xi32>
    %319 = arith.addi %188, %318 : vector<1x256xi32>
    %c8_i32_118 = arith.constant 8 : i32
    %320 = vector.broadcast %c8_i32_118 : i32 to vector<1x256xi32>
    %321 = arith.cmpi slt, %319, %320 : vector<1x256xi32>
    %322 = arith.andi %317, %321 : vector<1x256xi1>
    %c-1_i32_119 = arith.constant -1 : i32
    %323 = vector.broadcast %c-1_i32_119 : i32 to vector<1x256xi32>
    %324 = arith.addi %190, %323 : vector<1x256xi32>
    %c0_i32_120 = arith.constant 0 : i32
    %325 = vector.broadcast %c0_i32_120 : i32 to vector<1x256xi32>
    %326 = arith.cmpi sge, %324, %325 : vector<1x256xi32>
    %327 = arith.andi %322, %326 : vector<1x256xi1>
    %c-1_i32_121 = arith.constant -1 : i32
    %328 = vector.broadcast %c-1_i32_121 : i32 to vector<1x256xi32>
    %329 = arith.addi %190, %328 : vector<1x256xi32>
    %c8_i32_122 = arith.constant 8 : i32
    %330 = vector.broadcast %c8_i32_122 : i32 to vector<1x256xi32>
    %331 = arith.cmpi slt, %329, %330 : vector<1x256xi32>
    %332 = arith.andi %327, %331 : vector<1x256xi1>
    %c1_i32_123 = arith.constant 1 : i32
    %333 = vector.broadcast %c1_i32_123 : i32 to vector<1x256xi32>
    %334 = arith.addi %188, %333 : vector<1x256xi32>
    %c0_i32_124 = arith.constant 0 : i32
    %335 = vector.broadcast %c0_i32_124 : i32 to vector<1x256xi32>
    %336 = arith.cmpi sge, %334, %335 : vector<1x256xi32>
    %337 = arith.andi %192, %336 : vector<1x256xi1>
    %c1_i32_125 = arith.constant 1 : i32
    %338 = vector.broadcast %c1_i32_125 : i32 to vector<1x256xi32>
    %339 = arith.addi %188, %338 : vector<1x256xi32>
    %c8_i32_126 = arith.constant 8 : i32
    %340 = vector.broadcast %c8_i32_126 : i32 to vector<1x256xi32>
    %341 = arith.cmpi slt, %339, %340 : vector<1x256xi32>
    %342 = arith.andi %337, %341 : vector<1x256xi1>
    %c0_i32_127 = arith.constant 0 : i32
    %343 = vector.broadcast %c0_i32_127 : i32 to vector<1x256xi32>
    %344 = arith.addi %190, %343 : vector<1x256xi32>
    %c0_i32_128 = arith.constant 0 : i32
    %345 = vector.broadcast %c0_i32_128 : i32 to vector<1x256xi32>
    %346 = arith.cmpi sge, %344, %345 : vector<1x256xi32>
    %347 = arith.andi %342, %346 : vector<1x256xi1>
    %c0_i32_129 = arith.constant 0 : i32
    %348 = vector.broadcast %c0_i32_129 : i32 to vector<1x256xi32>
    %349 = arith.addi %190, %348 : vector<1x256xi32>
    %c8_i32_130 = arith.constant 8 : i32
    %350 = vector.broadcast %c8_i32_130 : i32 to vector<1x256xi32>
    %351 = arith.cmpi slt, %349, %350 : vector<1x256xi32>
    %352 = arith.andi %347, %351 : vector<1x256xi1>
    %c1_i32_131 = arith.constant 1 : i32
    %353 = vector.broadcast %c1_i32_131 : i32 to vector<1x256xi32>
    %354 = arith.addi %188, %353 : vector<1x256xi32>
    %c0_i32_132 = arith.constant 0 : i32
    %355 = vector.broadcast %c0_i32_132 : i32 to vector<1x256xi32>
    %356 = arith.cmpi sge, %354, %355 : vector<1x256xi32>
    %357 = arith.andi %192, %356 : vector<1x256xi1>
    %c1_i32_133 = arith.constant 1 : i32
    %358 = vector.broadcast %c1_i32_133 : i32 to vector<1x256xi32>
    %359 = arith.addi %188, %358 : vector<1x256xi32>
    %c8_i32_134 = arith.constant 8 : i32
    %360 = vector.broadcast %c8_i32_134 : i32 to vector<1x256xi32>
    %361 = arith.cmpi slt, %359, %360 : vector<1x256xi32>
    %362 = arith.andi %357, %361 : vector<1x256xi1>
    %c1_i32_135 = arith.constant 1 : i32
    %363 = vector.broadcast %c1_i32_135 : i32 to vector<1x256xi32>
    %364 = arith.addi %190, %363 : vector<1x256xi32>
    %c0_i32_136 = arith.constant 0 : i32
    %365 = vector.broadcast %c0_i32_136 : i32 to vector<1x256xi32>
    %366 = arith.cmpi sge, %364, %365 : vector<1x256xi32>
    %367 = arith.andi %362, %366 : vector<1x256xi1>
    %c1_i32_137 = arith.constant 1 : i32
    %368 = vector.broadcast %c1_i32_137 : i32 to vector<1x256xi32>
    %369 = arith.addi %190, %368 : vector<1x256xi32>
    %c8_i32_138 = arith.constant 8 : i32
    %370 = vector.broadcast %c8_i32_138 : i32 to vector<1x256xi32>
    %371 = arith.cmpi slt, %369, %370 : vector<1x256xi32>
    %372 = arith.andi %367, %371 : vector<1x256xi1>
    %cst = arith.constant 1.000000e+00 : f32
    %cst_139 = arith.constant 0.000000e+00 : f32
    %373 = vector.broadcast %cst : f32 to vector<1x256xf32>
    %374 = vector.broadcast %cst_139 : f32 to vector<1x256xf32>
    %375 = arith.select %192, %373, %374 : vector<1x256xi1>, vector<1x256xf32>
    %c0 = arith.constant 0 : index
    %c0_140 = arith.constant 0 : index
    %c0_141 = arith.constant 0 : index
    %376 = vector.load %arg1[%c0, %c0_140, %c0_141] : memref<1x4x256xf32, #tpu.memory_space<vmem>>, vector<1x4x256xf32>
    %377 = vector.shape_cast %376 : vector<1x4x256xf32> to vector<4x256xf32>
    %cst_142 = arith.constant 0.000000e+00 : f32
    %378 = vector.broadcast %cst_142 : f32 to vector<4x256xf32>
    %c17_i32 = arith.constant 17 : i32
    %379 = tpu.dynamic_rotate %377 by %c17_i32 dim 1 : vector<4x256xf32>, i32 -> vector<4x256xf32>
    %cst_143 = arith.constant 0.000000e+00 : f32
    %380 = vector.shape_cast %26 : vector<1x256xi1> to vector<1x256xi1>
    %381 = vector.broadcast %380 : vector<1x256xi1> to vector<4x256xi1>
    %382 = vector.broadcast %cst_143 : f32 to vector<4x256xf32>
    %383 = arith.select %381, %379, %382 : vector<4x256xi1>, vector<4x256xf32>
    %c0_144 = arith.constant 0 : index
    %c0_145 = arith.constant 0 : index
    %384 = vector.load %arg13[%c0_144, %c0_145] : memref<216x256xf32, #tpu.memory_space<vmem>>, vector<4x256xf32>
    tpu.vector_store %arg13[%c0_144, %c0_145], %383 {strides = array<i32>} : memref<216x256xf32, #tpu.memory_space<vmem>>, vector<4x256xf32>,
    %c17_i32_146 = arith.constant 17 : i32
    %385 = tpu.dynamic_rotate %378 by %c17_i32_146 dim 1 : vector<4x256xf32>, i32 -> vector<4x256xf32>
    %cst_147 = arith.constant 0.000000e+00 : f32
    %386 = vector.shape_cast %26 : vector<1x256xi1> to vector<1x256xi1>
    %387 = vector.broadcast %386 : vector<1x256xi1> to vector<4x256xi1>
    %388 = vector.broadcast %cst_147 : f32 to vector<4x256xf32>
    %389 = arith.select %387, %385, %388 : vector<4x256xi1>, vector<4x256xf32>
    %c4 = arith.constant 4 : index
    %c0_148 = arith.constant 0 : index
    %390 = vector.load %arg13[%c4, %c0_148] : memref<216x256xf32, #tpu.memory_space<vmem>>, vector<4x256xf32>
    tpu.vector_store %arg13[%c4, %c0_148], %389 {strides = array<i32>} : memref<216x256xf32, #tpu.memory_space<vmem>>, vector<4x256xf32>,
    %c16_i32_149 = arith.constant 16 : i32
    %391 = tpu.dynamic_rotate %377 by %c16_i32_149 dim 1 : vector<4x256xf32>, i32 -> vector<4x256xf32>
    %cst_150 = arith.constant 0.000000e+00 : f32
    %392 = vector.shape_cast %46 : vector<1x256xi1> to vector<1x256xi1>
    %393 = vector.broadcast %392 : vector<1x256xi1> to vector<4x256xi1>
    %394 = vector.broadcast %cst_150 : f32 to vector<4x256xf32>
    %395 = arith.select %393, %391, %394 : vector<4x256xi1>, vector<4x256xf32>
    %c8 = arith.constant 8 : index
    %c0_151 = arith.constant 0 : index
    %396 = vector.load %arg13[%c8, %c0_151] : memref<216x256xf32, #tpu.memory_space<vmem>>, vector<4x256xf32>
    tpu.vector_store %arg13[%c8, %c0_151], %395 {strides = array<i32>} : memref<216x256xf32, #tpu.memory_space<vmem>>, vector<4x256xf32>,
    %c16_i32_152 = arith.constant 16 : i32
    %397 = tpu.dynamic_rotate %378 by %c16_i32_152 dim 1 : vector<4x256xf32>, i32 -> vector<4x256xf32>
    %cst_153 = arith.constant 0.000000e+00 : f32
    %398 = vector.shape_cast %46 : vector<1x256xi1> to vector<1x256xi1>
    %399 = vector.broadcast %398 : vector<1x256xi1> to vector<4x256xi1>
    %400 = vector.broadcast %cst_153 : f32 to vector<4x256xf32>
    %401 = arith.select %399, %397, %400 : vector<4x256xi1>, vector<4x256xf32>
    %c12 = arith.constant 12 : index
    %c0_154 = arith.constant 0 : index
    %402 = vector.load %arg13[%c12, %c0_154] : memref<216x256xf32, #tpu.memory_space<vmem>>, vector<4x256xf32>
    tpu.vector_store %arg13[%c12, %c0_154], %401 {strides = array<i32>} : memref<216x256xf32, #tpu.memory_space<vmem>>, vector<4x256xf32>,
    %c15_i32_155 = arith.constant 15 : i32
    %403 = tpu.dynamic_rotate %377 by %c15_i32_155 dim 1 : vector<4x256xf32>, i32 -> vector<4x256xf32>
    %cst_156 = arith.constant 0.000000e+00 : f32
    %404 = vector.shape_cast %66 : vector<1x256xi1> to vector<1x256xi1>
    %405 = vector.broadcast %404 : vector<1x256xi1> to vector<4x256xi1>
    %406 = vector.broadcast %cst_156 : f32 to vector<4x256xf32>
    %407 = arith.select %405, %403, %406 : vector<4x256xi1>, vector<4x256xf32>
    %c16 = arith.constant 16 : index
    %c0_157 = arith.constant 0 : index
    %408 = vector.load %arg13[%c16, %c0_157] : memref<216x256xf32, #tpu.memory_space<vmem>>, vector<4x256xf32>
    tpu.vector_store %arg13[%c16, %c0_157], %407 {strides = array<i32>} : memref<216x256xf32, #tpu.memory_space<vmem>>, vector<4x256xf32>,
    %c15_i32_158 = arith.constant 15 : i32
    %409 = tpu.dynamic_rotate %378 by %c15_i32_158 dim 1 : vector<4x256xf32>, i32 -> vector<4x256xf32>
    %cst_159 = arith.constant 0.000000e+00 : f32
    %410 = vector.shape_cast %66 : vector<1x256xi1> to vector<1x256xi1>
    %411 = vector.broadcast %410 : vector<1x256xi1> to vector<4x256xi1>
    %412 = vector.broadcast %cst_159 : f32 to vector<4x256xf32>
    %413 = arith.select %411, %409, %412 : vector<4x256xi1>, vector<4x256xf32>
    %c20 = arith.constant 20 : index
    %c0_160 = arith.constant 0 : index
    %414 = vector.load %arg13[%c20, %c0_160] : memref<216x256xf32, #tpu.memory_space<vmem>>, vector<4x256xf32>
    tpu.vector_store %arg13[%c20, %c0_160], %413 {strides = array<i32>} : memref<216x256xf32, #tpu.memory_space<vmem>>, vector<4x256xf32>,
    %c1_i32_161 = arith.constant 1 : i32
    %415 = tpu.dynamic_rotate %377 by %c1_i32_161 dim 1 : vector<4x256xf32>, i32 -> vector<4x256xf32>
    %cst_162 = arith.constant 0.000000e+00 : f32
    %416 = vector.shape_cast %86 : vector<1x256xi1> to vector<1x256xi1>
    %417 = vector.broadcast %416 : vector<1x256xi1> to vector<4x256xi1>
    %418 = vector.broadcast %cst_162 : f32 to vector<4x256xf32>
    %419 = arith.select %417, %415, %418 : vector<4x256xi1>, vector<4x256xf32>
    %c24 = arith.constant 24 : index
    %c0_163 = arith.constant 0 : index
    %420 = vector.load %arg13[%c24, %c0_163] : memref<216x256xf32, #tpu.memory_space<vmem>>, vector<4x256xf32>
    tpu.vector_store %arg13[%c24, %c0_163], %419 {strides = array<i32>} : memref<216x256xf32, #tpu.memory_space<vmem>>, vector<4x256xf32>,
    %c1_i32_164 = arith.constant 1 : i32
    %421 = tpu.dynamic_rotate %378 by %c1_i32_164 dim 1 : vector<4x256xf32>, i32 -> vector<4x256xf32>
    %cst_165 = arith.constant 0.000000e+00 : f32
    %422 = vector.shape_cast %86 : vector<1x256xi1> to vector<1x256xi1>
    %423 = vector.broadcast %422 : vector<1x256xi1> to vector<4x256xi1>
    %424 = vector.broadcast %cst_165 : f32 to vector<4x256xf32>
    %425 = arith.select %423, %421, %424 : vector<4x256xi1>, vector<4x256xf32>
    %c28 = arith.constant 28 : index
    %c0_166 = arith.constant 0 : index
    %426 = vector.load %arg13[%c28, %c0_166] : memref<216x256xf32, #tpu.memory_space<vmem>>, vector<4x256xf32>
    tpu.vector_store %arg13[%c28, %c0_166], %425 {strides = array<i32>} : memref<216x256xf32, #tpu.memory_space<vmem>>, vector<4x256xf32>,
    %cst_167 = arith.constant 0.000000e+00 : f32
    %427 = vector.shape_cast %106 : vector<1x256xi1> to vector<1x256xi1>
    %428 = vector.broadcast %427 : vector<1x256xi1> to vector<4x256xi1>
    %429 = vector.broadcast %cst_167 : f32 to vector<4x256xf32>
    %430 = arith.select %428, %377, %429 : vector<4x256xi1>, vector<4x256xf32>
    %c32 = arith.constant 32 : index
    %c0_168 = arith.constant 0 : index
    %431 = vector.load %arg13[%c32, %c0_168] : memref<216x256xf32, #tpu.memory_space<vmem>>, vector<4x256xf32>
    tpu.vector_store %arg13[%c32, %c0_168], %430 {strides = array<i32>} : memref<216x256xf32, #tpu.memory_space<vmem>>, vector<4x256xf32>,
    %cst_169 = arith.constant 0.000000e+00 : f32
    %432 = vector.shape_cast %106 : vector<1x256xi1> to vector<1x256xi1>
    %433 = vector.broadcast %432 : vector<1x256xi1> to vector<4x256xi1>
    %434 = vector.broadcast %cst_169 : f32 to vector<4x256xf32>
    %435 = arith.select %433, %378, %434 : vector<4x256xi1>, vector<4x256xf32>
    %c36 = arith.constant 36 : index
    %c0_170 = arith.constant 0 : index
    %436 = vector.load %arg13[%c36, %c0_170] : memref<216x256xf32, #tpu.memory_space<vmem>>, vector<4x256xf32>
    tpu.vector_store %arg13[%c36, %c0_170], %435 {strides = array<i32>} : memref<216x256xf32, #tpu.memory_space<vmem>>, vector<4x256xf32>,
    %c255_i32 = arith.constant 255 : i32
    %437 = tpu.dynamic_rotate %377 by %c255_i32 dim 1 : vector<4x256xf32>, i32 -> vector<4x256xf32>
    %cst_171 = arith.constant 0.000000e+00 : f32
    %438 = vector.shape_cast %126 : vector<1x256xi1> to vector<1x256xi1>
    %439 = vector.broadcast %438 : vector<1x256xi1> to vector<4x256xi1>
    %440 = vector.broadcast %cst_171 : f32 to vector<4x256xf32>
    %441 = arith.select %439, %437, %440 : vector<4x256xi1>, vector<4x256xf32>
    %c40 = arith.constant 40 : index
    %c0_172 = arith.constant 0 : index
    %442 = vector.load %arg13[%c40, %c0_172] : memref<216x256xf32, #tpu.memory_space<vmem>>, vector<4x256xf32>
    tpu.vector_store %arg13[%c40, %c0_172], %441 {strides = array<i32>} : memref<216x256xf32, #tpu.memory_space<vmem>>, vector<4x256xf32>,
    %c255_i32_173 = arith.constant 255 : i32
    %443 = tpu.dynamic_rotate %378 by %c255_i32_173 dim 1 : vector<4x256xf32>, i32 -> vector<4x256xf32>
    %cst_174 = arith.constant 0.000000e+00 : f32
    %444 = vector.shape_cast %126 : vector<1x256xi1> to vector<1x256xi1>
    %445 = vector.broadcast %444 : vector<1x256xi1> to vector<4x256xi1>
    %446 = vector.broadcast %cst_174 : f32 to vector<4x256xf32>
    %447 = arith.select %445, %443, %446 : vector<4x256xi1>, vector<4x256xf32>
    %c44 = arith.constant 44 : index
    %c0_175 = arith.constant 0 : index
    %448 = vector.load %arg13[%c44, %c0_175] : memref<216x256xf32, #tpu.memory_space<vmem>>, vector<4x256xf32>
    tpu.vector_store %arg13[%c44, %c0_175], %447 {strides = array<i32>} : memref<216x256xf32, #tpu.memory_space<vmem>>, vector<4x256xf32>,
    %c241_i32 = arith.constant 241 : i32
    %449 = tpu.dynamic_rotate %377 by %c241_i32 dim 1 : vector<4x256xf32>, i32 -> vector<4x256xf32>
    %cst_176 = arith.constant 0.000000e+00 : f32
    %450 = vector.shape_cast %146 : vector<1x256xi1> to vector<1x256xi1>
    %451 = vector.broadcast %450 : vector<1x256xi1> to vector<4x256xi1>
    %452 = vector.broadcast %cst_176 : f32 to vector<4x256xf32>
    %453 = arith.select %451, %449, %452 : vector<4x256xi1>, vector<4x256xf32>
    %c48 = arith.constant 48 : index
    %c0_177 = arith.constant 0 : index
    %454 = vector.load %arg13[%c48, %c0_177] : memref<216x256xf32, #tpu.memory_space<vmem>>, vector<4x256xf32>
    tpu.vector_store %arg13[%c48, %c0_177], %453 {strides = array<i32>} : memref<216x256xf32, #tpu.memory_space<vmem>>, vector<4x256xf32>,
    %c241_i32_178 = arith.constant 241 : i32
    %455 = tpu.dynamic_rotate %378 by %c241_i32_178 dim 1 : vector<4x256xf32>, i32 -> vector<4x256xf32>
    %cst_179 = arith.constant 0.000000e+00 : f32
    %456 = vector.shape_cast %146 : vector<1x256xi1> to vector<1x256xi1>
    %457 = vector.broadcast %456 : vector<1x256xi1> to vector<4x256xi1>
    %458 = vector.broadcast %cst_179 : f32 to vector<4x256xf32>
    %459 = arith.select %457, %455, %458 : vector<4x256xi1>, vector<4x256xf32>
    %c52 = arith.constant 52 : index
    %c0_180 = arith.constant 0 : index
    %460 = vector.load %arg13[%c52, %c0_180] : memref<216x256xf32, #tpu.memory_space<vmem>>, vector<4x256xf32>
    tpu.vector_store %arg13[%c52, %c0_180], %459 {strides = array<i32>} : memref<216x256xf32, #tpu.memory_space<vmem>>, vector<4x256xf32>,
    %c240_i32 = arith.constant 240 : i32
    %461 = tpu.dynamic_rotate %377 by %c240_i32 dim 1 : vector<4x256xf32>, i32 -> vector<4x256xf32>
    %cst_181 = arith.constant 0.000000e+00 : f32
    %462 = vector.shape_cast %166 : vector<1x256xi1> to vector<1x256xi1>
    %463 = vector.broadcast %462 : vector<1x256xi1> to vector<4x256xi1>
    %464 = vector.broadcast %cst_181 : f32 to vector<4x256xf32>
    %465 = arith.select %463, %461, %464 : vector<4x256xi1>, vector<4x256xf32>
    %c56 = arith.constant 56 : index
    %c0_182 = arith.constant 0 : index
    %466 = vector.load %arg13[%c56, %c0_182] : memref<216x256xf32, #tpu.memory_space<vmem>>, vector<4x256xf32>
    tpu.vector_store %arg13[%c56, %c0_182], %465 {strides = array<i32>} : memref<216x256xf32, #tpu.memory_space<vmem>>, vector<4x256xf32>,
    %c240_i32_183 = arith.constant 240 : i32
    %467 = tpu.dynamic_rotate %378 by %c240_i32_183 dim 1 : vector<4x256xf32>, i32 -> vector<4x256xf32>
    %cst_184 = arith.constant 0.000000e+00 : f32
    %468 = vector.shape_cast %166 : vector<1x256xi1> to vector<1x256xi1>
    %469 = vector.broadcast %468 : vector<1x256xi1> to vector<4x256xi1>
    %470 = vector.broadcast %cst_184 : f32 to vector<4x256xf32>
    %471 = arith.select %469, %467, %470 : vector<4x256xi1>, vector<4x256xf32>
    %c60 = arith.constant 60 : index
    %c0_185 = arith.constant 0 : index
    %472 = vector.load %arg13[%c60, %c0_185] : memref<216x256xf32, #tpu.memory_space<vmem>>, vector<4x256xf32>
    tpu.vector_store %arg13[%c60, %c0_185], %471 {strides = array<i32>} : memref<216x256xf32, #tpu.memory_space<vmem>>, vector<4x256xf32>,
    %c239_i32 = arith.constant 239 : i32
    %473 = tpu.dynamic_rotate %377 by %c239_i32 dim 1 : vector<4x256xf32>, i32 -> vector<4x256xf32>
    %cst_186 = arith.constant 0.000000e+00 : f32
    %474 = vector.shape_cast %186 : vector<1x256xi1> to vector<1x256xi1>
    %475 = vector.broadcast %474 : vector<1x256xi1> to vector<4x256xi1>
    %476 = vector.broadcast %cst_186 : f32 to vector<4x256xf32>
    %477 = arith.select %475, %473, %476 : vector<4x256xi1>, vector<4x256xf32>
    %c64 = arith.constant 64 : index
    %c0_187 = arith.constant 0 : index
    %478 = vector.load %arg13[%c64, %c0_187] : memref<216x256xf32, #tpu.memory_space<vmem>>, vector<4x256xf32>
    tpu.vector_store %arg13[%c64, %c0_187], %477 {strides = array<i32>} : memref<216x256xf32, #tpu.memory_space<vmem>>, vector<4x256xf32>,
    %c239_i32_188 = arith.constant 239 : i32
    %479 = tpu.dynamic_rotate %378 by %c239_i32_188 dim 1 : vector<4x256xf32>, i32 -> vector<4x256xf32>
    %cst_189 = arith.constant 0.000000e+00 : f32
    %480 = vector.shape_cast %186 : vector<1x256xi1> to vector<1x256xi1>
    %481 = vector.broadcast %480 : vector<1x256xi1> to vector<4x256xi1>
    %482 = vector.broadcast %cst_189 : f32 to vector<4x256xf32>
    %483 = arith.select %481, %479, %482 : vector<4x256xi1>, vector<4x256xf32>
    %c68 = arith.constant 68 : index
    %c0_190 = arith.constant 0 : index
    %484 = vector.load %arg13[%c68, %c0_190] : memref<216x256xf32, #tpu.memory_space<vmem>>, vector<4x256xf32>
    tpu.vector_store %arg13[%c68, %c0_190], %483 {strides = array<i32>} : memref<216x256xf32, #tpu.memory_space<vmem>>, vector<4x256xf32>,
    %c0_191 = arith.constant 0 : index
    %c0_192 = arith.constant 0 : index
    %c0_193 = arith.constant 0 : index
    %485 = vector.load %arg2[%c0_191, %c0_192, %c0_193] : memref<7x24x216xbf16, #tpu.memory_space<vmem>>, vector<1x8x72xbf16>
    %486 = vector.shape_cast %485 : vector<1x8x72xbf16> to vector<8x72xbf16>
    %c0_194 = arith.constant 0 : index
    %c0_195 = arith.constant 0 : index
    %487 = vector.load %arg13[%c0_194, %c0_195] : memref<216x256xf32, #tpu.memory_space<vmem>>, vector<72x256xf32>
    %488 = arith.truncf %487 : vector<72x256xf32> to vector<72x256xbf16>
    %cst_196 = arith.constant dense<0.000000e+00> : vector<8x256xf32>
    %489 = tpu.matmul %486, %488, %cst_196 {dimension_numbers = #tpu.dot_dimension_numbers<[1], [0], [0], [1], [0, 0, 1, 1], [], []>} : vector<8x72xbf16>, vector<72x256xbf16>, vector<8x256xf32> -> vector<8x256xf32>
    %cst_197 = arith.constant dense<0.000000e+00> : vector<8xf32>
    %490 = vector.multi_reduction <add>, %489, %cst_197 [1] : vector<8x256xf32> to vector<8xf32>
    %491 = vector.shape_cast %490 : vector<8xf32> to vector<8x1xf32>
    %cst_198 = arith.constant 3.906250e-03 : f32
    %492 = vector.broadcast %cst_198 : f32 to vector<8x1xf32>
    %493 = arith.mulf %491, %492 : vector<8x1xf32>
    %494 = vector.broadcast %493 : vector<8x1xf32> to vector<8x256xf32>
    %495 = arith.subf %489, %494 : vector<8x256xf32>
    %496 = arith.mulf %495, %495 : vector<8x256xf32>
    %cst_199 = arith.constant dense<0.000000e+00> : vector<8xf32>
    %497 = vector.multi_reduction <add>, %496, %cst_199 [1] : vector<8x256xf32> to vector<8xf32>
    %498 = vector.shape_cast %497 : vector<8xf32> to vector<8x1xf32>
    %cst_200 = arith.constant 3.906250e-03 : f32
    %499 = vector.broadcast %cst_200 : f32 to vector<8x1xf32>
    %500 = arith.mulf %498, %499 : vector<8x1xf32>
    %c0_201 = arith.constant 0 : index
    %c0_202 = arith.constant 0 : index
    %c0_203 = arith.constant 0 : index
    %501 = vector.load %arg3[%c0_201, %c0_202, %c0_203] : memref<7x24x2xf32, #tpu.memory_space<vmem>>, vector<1x8x1xf32>
    %502 = vector.shape_cast %501 : vector<1x8x1xf32> to vector<8x1xf32>
    %c0_204 = arith.constant 0 : index
    %c0_205 = arith.constant 0 : index
    %c1 = arith.constant 1 : index
    %503 = vector.load %arg3[%c0_204, %c0_205, %c1] : memref<7x24x2xf32, #tpu.memory_space<vmem>>, vector<1x8x1xf32>
    %504 = vector.shape_cast %503 : vector<1x8x1xf32> to vector<8x1xf32>
    %cst_206 = arith.constant 9.99999974E-6 : f32
    %505 = vector.broadcast %cst_206 : f32 to vector<8x1xf32>
    %506 = arith.addf %500, %505 : vector<8x1xf32>
    %507 = math.rsqrt %506 : vector<8x1xf32>
    %508 = vector.broadcast %507 : vector<8x1xf32> to vector<8x256xf32>
    %509 = arith.mulf %495, %508 : vector<8x256xf32>
    %510 = vector.broadcast %502 : vector<8x1xf32> to vector<8x256xf32>
    %511 = arith.mulf %509, %510 : vector<8x256xf32>
    %512 = vector.broadcast %504 : vector<8x1xf32> to vector<8x256xf32>
    %513 = arith.addf %511, %512 : vector<8x256xf32>
    %cst_207 = arith.constant 0.000000e+00 : f32
    %514 = vector.broadcast %cst_207 : f32 to vector<8x256xf32>
    %515 = arith.cmpf oge, %513, %514 : vector<8x256xf32>
    %cst_208 = arith.constant 0.00999999977 : f32
    %516 = vector.broadcast %cst_208 : f32 to vector<8x256xf32>
    %517 = arith.mulf %516, %513 : vector<8x256xf32>
    %518 = arith.select %515, %513, %517 : vector<8x256xi1>, vector<8x256xf32>
    %c17_i32_209 = arith.constant 17 : i32
    %519 = tpu.dynamic_rotate %518 by %c17_i32_209 dim 1 : vector<8x256xf32>, i32 -> vector<8x256xf32>
    %cst_210 = arith.constant 0.000000e+00 : f32
    %520 = vector.shape_cast %26 : vector<1x256xi1> to vector<1x256xi1>
    %521 = vector.broadcast %520 : vector<1x256xi1> to vector<8x256xi1>
    %522 = vector.broadcast %cst_210 : f32 to vector<8x256xf32>
    %523 = arith.select %521, %519, %522 : vector<8x256xi1>, vector<8x256xf32>
    %c0_211 = arith.constant 0 : index
    %c0_212 = arith.constant 0 : index
    %524 = vector.load %arg13[%c0_211, %c0_212] : memref<216x256xf32, #tpu.memory_space<vmem>>, vector<8x256xf32>
    tpu.vector_store %arg13[%c0_211, %c0_212], %523 {strides = array<i32>} : memref<216x256xf32, #tpu.memory_space<vmem>>, vector<8x256xf32>,
    %c16_i32_213 = arith.constant 16 : i32
    %525 = tpu.dynamic_rotate %518 by %c16_i32_213 dim 1 : vector<8x256xf32>, i32 -> vector<8x256xf32>
    %cst_214 = arith.constant 0.000000e+00 : f32
    %526 = vector.shape_cast %46 : vector<1x256xi1> to vector<1x256xi1>
    %527 = vector.broadcast %526 : vector<1x256xi1> to vector<8x256xi1>
    %528 = vector.broadcast %cst_214 : f32 to vector<8x256xf32>
    %529 = arith.select %527, %525, %528 : vector<8x256xi1>, vector<8x256xf32>
    %c8_215 = arith.constant 8 : index
    %c0_216 = arith.constant 0 : index
    %530 = vector.load %arg13[%c8_215, %c0_216] : memref<216x256xf32, #tpu.memory_space<vmem>>, vector<8x256xf32>
    tpu.vector_store %arg13[%c8_215, %c0_216], %529 {strides = array<i32>} : memref<216x256xf32, #tpu.memory_space<vmem>>, vector<8x256xf32>,
    %c15_i32_217 = arith.constant 15 : i32
    %531 = tpu.dynamic_rotate %518 by %c15_i32_217 dim 1 : vector<8x256xf32>, i32 -> vector<8x256xf32>
    %cst_218 = arith.constant 0.000000e+00 : f32
    %532 = vector.shape_cast %66 : vector<1x256xi1> to vector<1x256xi1>
    %533 = vector.broadcast %532 : vector<1x256xi1> to vector<8x256xi1>
    %534 = vector.broadcast %cst_218 : f32 to vector<8x256xf32>
    %535 = arith.select %533, %531, %534 : vector<8x256xi1>, vector<8x256xf32>
    %c16_219 = arith.constant 16 : index
    %c0_220 = arith.constant 0 : index
    %536 = vector.load %arg13[%c16_219, %c0_220] : memref<216x256xf32, #tpu.memory_space<vmem>>, vector<8x256xf32>
    tpu.vector_store %arg13[%c16_219, %c0_220], %535 {strides = array<i32>} : memref<216x256xf32, #tpu.memory_space<vmem>>, vector<8x256xf32>,
    %c1_i32_221 = arith.constant 1 : i32
    %537 = tpu.dynamic_rotate %518 by %c1_i32_221 dim 1 : vector<8x256xf32>, i32 -> vector<8x256xf32>
    %cst_222 = arith.constant 0.000000e+00 : f32
    %538 = vector.shape_cast %86 : vector<1x256xi1> to vector<1x256xi1>
    %539 = vector.broadcast %538 : vector<1x256xi1> to vector<8x256xi1>
    %540 = vector.broadcast %cst_222 : f32 to vector<8x256xf32>
    %541 = arith.select %539, %537, %540 : vector<8x256xi1>, vector<8x256xf32>
    %c24_223 = arith.constant 24 : index
    %c0_224 = arith.constant 0 : index
    %542 = vector.load %arg13[%c24_223, %c0_224] : memref<216x256xf32, #tpu.memory_space<vmem>>, vector<8x256xf32>
    tpu.vector_store %arg13[%c24_223, %c0_224], %541 {strides = array<i32>} : memref<216x256xf32, #tpu.memory_space<vmem>>, vector<8x256xf32>,
    %cst_225 = arith.constant 0.000000e+00 : f32
    %543 = vector.shape_cast %106 : vector<1x256xi1> to vector<1x256xi1>
    %544 = vector.broadcast %543 : vector<1x256xi1> to vector<8x256xi1>
    %545 = vector.broadcast %cst_225 : f32 to vector<8x256xf32>
    %546 = arith.select %544, %518, %545 : vector<8x256xi1>, vector<8x256xf32>
    %c32_226 = arith.constant 32 : index
    %c0_227 = arith.constant 0 : index
    %547 = vector.load %arg13[%c32_226, %c0_227] : memref<216x256xf32, #tpu.memory_space<vmem>>, vector<8x256xf32>
    tpu.vector_store %arg13[%c32_226, %c0_227], %546 {strides = array<i32>} : memref<216x256xf32, #tpu.memory_space<vmem>>, vector<8x256xf32>,
    %c255_i32_228 = arith.constant 255 : i32
    %548 = tpu.dynamic_rotate %518 by %c255_i32_228 dim 1 : vector<8x256xf32>, i32 -> vector<8x256xf32>
    %cst_229 = arith.constant 0.000000e+00 : f32
    %549 = vector.shape_cast %126 : vector<1x256xi1> to vector<1x256xi1>
    %550 = vector.broadcast %549 : vector<1x256xi1> to vector<8x256xi1>
    %551 = vector.broadcast %cst_229 : f32 to vector<8x256xf32>
    %552 = arith.select %550, %548, %551 : vector<8x256xi1>, vector<8x256xf32>
    %c40_230 = arith.constant 40 : index
    %c0_231 = arith.constant 0 : index
    %553 = vector.load %arg13[%c40_230, %c0_231] : memref<216x256xf32, #tpu.memory_space<vmem>>, vector<8x256xf32>
    tpu.vector_store %arg13[%c40_230, %c0_231], %552 {strides = array<i32>} : memref<216x256xf32, #tpu.memory_space<vmem>>, vector<8x256xf32>,
    %c241_i32_232 = arith.constant 241 : i32
    %554 = tpu.dynamic_rotate %518 by %c241_i32_232 dim 1 : vector<8x256xf32>, i32 -> vector<8x256xf32>
    %cst_233 = arith.constant 0.000000e+00 : f32
    %555 = vector.shape_cast %146 : vector<1x256xi1> to vector<1x256xi1>
    %556 = vector.broadcast %555 : vector<1x256xi1> to vector<8x256xi1>
    %557 = vector.broadcast %cst_233 : f32 to vector<8x256xf32>
    %558 = arith.select %556, %554, %557 : vector<8x256xi1>, vector<8x256xf32>
    %c48_234 = arith.constant 48 : index
    %c0_235 = arith.constant 0 : index
    %559 = vector.load %arg13[%c48_234, %c0_235] : memref<216x256xf32, #tpu.memory_space<vmem>>, vector<8x256xf32>
    tpu.vector_store %arg13[%c48_234, %c0_235], %558 {strides = array<i32>} : memref<216x256xf32, #tpu.memory_space<vmem>>, vector<8x256xf32>,
    %c240_i32_236 = arith.constant 240 : i32
    %560 = tpu.dynamic_rotate %518 by %c240_i32_236 dim 1 : vector<8x256xf32>, i32 -> vector<8x256xf32>
    %cst_237 = arith.constant 0.000000e+00 : f32
    %561 = vector.shape_cast %166 : vector<1x256xi1> to vector<1x256xi1>
    %562 = vector.broadcast %561 : vector<1x256xi1> to vector<8x256xi1>
    %563 = vector.broadcast %cst_237 : f32 to vector<8x256xf32>
    %564 = arith.select %562, %560, %563 : vector<8x256xi1>, vector<8x256xf32>
    %c56_238 = arith.constant 56 : index
    %c0_239 = arith.constant 0 : index
    %565 = vector.load %arg13[%c56_238, %c0_239] : memref<216x256xf32, #tpu.memory_space<vmem>>, vector<8x256xf32>
    tpu.vector_store %arg13[%c56_238, %c0_239], %564 {strides = array<i32>} : memref<216x256xf32, #tpu.memory_space<vmem>>, vector<8x256xf32>,
    %c239_i32_240 = arith.constant 239 : i32
    %566 = tpu.dynamic_rotate %518 by %c239_i32_240 dim 1 : vector<8x256xf32>, i32 -> vector<8x256xf32>
    %cst_241 = arith.constant 0.000000e+00 : f32
    %567 = vector.shape_cast %186 : vector<1x256xi1> to vector<1x256xi1>
    %568 = vector.broadcast %567 : vector<1x256xi1> to vector<8x256xi1>
    %569 = vector.broadcast %cst_241 : f32 to vector<8x256xf32>
    %570 = arith.select %568, %566, %569 : vector<8x256xi1>, vector<8x256xf32>
    %c64_242 = arith.constant 64 : index
    %c0_243 = arith.constant 0 : index
    %571 = vector.load %arg13[%c64_242, %c0_243] : memref<216x256xf32, #tpu.memory_space<vmem>>, vector<8x256xf32>
    tpu.vector_store %arg13[%c64_242, %c0_243], %570 {strides = array<i32>} : memref<216x256xf32, #tpu.memory_space<vmem>>, vector<8x256xf32>,
    %c1_244 = arith.constant 1 : index
    %c0_245 = arith.constant 0 : index
    %c0_246 = arith.constant 0 : index
    %572 = vector.load %arg2[%c1_244, %c0_245, %c0_246] : memref<7x24x216xbf16, #tpu.memory_space<vmem>>, vector<1x8x72xbf16>
    %573 = vector.shape_cast %572 : vector<1x8x72xbf16> to vector<8x72xbf16>
    %c0_247 = arith.constant 0 : index
    %c0_248 = arith.constant 0 : index
    %574 = vector.load %arg13[%c0_247, %c0_248] : memref<216x256xf32, #tpu.memory_space<vmem>>, vector<72x256xf32>
    %575 = arith.truncf %574 : vector<72x256xf32> to vector<72x256xbf16>
    %cst_249 = arith.constant dense<0.000000e+00> : vector<8x256xf32>
    %576 = tpu.matmul %573, %575, %cst_249 {dimension_numbers = #tpu.dot_dimension_numbers<[1], [0], [0], [1], [0, 0, 1, 1], [], []>} : vector<8x72xbf16>, vector<72x256xbf16>, vector<8x256xf32> -> vector<8x256xf32>
    %cst_250 = arith.constant dense<0.000000e+00> : vector<8xf32>
    %577 = vector.multi_reduction <add>, %576, %cst_250 [1] : vector<8x256xf32> to vector<8xf32>
    %578 = vector.shape_cast %577 : vector<8xf32> to vector<8x1xf32>
    %cst_251 = arith.constant 3.906250e-03 : f32
    %579 = vector.broadcast %cst_251 : f32 to vector<8x1xf32>
    %580 = arith.mulf %578, %579 : vector<8x1xf32>
    %581 = vector.broadcast %580 : vector<8x1xf32> to vector<8x256xf32>
    %582 = arith.subf %576, %581 : vector<8x256xf32>
    %583 = arith.mulf %582, %582 : vector<8x256xf32>
    %cst_252 = arith.constant dense<0.000000e+00> : vector<8xf32>
    %584 = vector.multi_reduction <add>, %583, %cst_252 [1] : vector<8x256xf32> to vector<8xf32>
    %585 = vector.shape_cast %584 : vector<8xf32> to vector<8x1xf32>
    %cst_253 = arith.constant 3.906250e-03 : f32
    %586 = vector.broadcast %cst_253 : f32 to vector<8x1xf32>
    %587 = arith.mulf %585, %586 : vector<8x1xf32>
    %c1_254 = arith.constant 1 : index
    %c0_255 = arith.constant 0 : index
    %c0_256 = arith.constant 0 : index
    %588 = vector.load %arg3[%c1_254, %c0_255, %c0_256] : memref<7x24x2xf32, #tpu.memory_space<vmem>>, vector<1x8x1xf32>
    %589 = vector.shape_cast %588 : vector<1x8x1xf32> to vector<8x1xf32>
    %c1_257 = arith.constant 1 : index
    %c0_258 = arith.constant 0 : index
    %c1_259 = arith.constant 1 : index
    %590 = vector.load %arg3[%c1_257, %c0_258, %c1_259] : memref<7x24x2xf32, #tpu.memory_space<vmem>>, vector<1x8x1xf32>
    %591 = vector.shape_cast %590 : vector<1x8x1xf32> to vector<8x1xf32>
    %cst_260 = arith.constant 9.99999974E-6 : f32
    %592 = vector.broadcast %cst_260 : f32 to vector<8x1xf32>
    %593 = arith.addf %587, %592 : vector<8x1xf32>
    %594 = math.rsqrt %593 : vector<8x1xf32>
    %595 = vector.broadcast %594 : vector<8x1xf32> to vector<8x256xf32>
    %596 = arith.mulf %582, %595 : vector<8x256xf32>
    %597 = vector.broadcast %589 : vector<8x1xf32> to vector<8x256xf32>
    %598 = arith.mulf %596, %597 : vector<8x256xf32>
    %599 = vector.broadcast %591 : vector<8x1xf32> to vector<8x256xf32>
    %600 = arith.addf %598, %599 : vector<8x256xf32>
    %cst_261 = arith.constant 0.000000e+00 : f32
    %601 = vector.broadcast %cst_261 : f32 to vector<8x256xf32>
    %602 = arith.cmpf oge, %600, %601 : vector<8x256xf32>
    %cst_262 = arith.constant 0.00999999977 : f32
    %603 = vector.broadcast %cst_262 : f32 to vector<8x256xf32>
    %604 = arith.mulf %603, %600 : vector<8x256xf32>
    %605 = arith.select %602, %600, %604 : vector<8x256xi1>, vector<8x256xf32>
    %c17_i32_263 = arith.constant 17 : i32
    %606 = tpu.dynamic_rotate %605 by %c17_i32_263 dim 1 : vector<8x256xf32>, i32 -> vector<8x256xf32>
    %cst_264 = arith.constant 0.000000e+00 : f32
    %607 = vector.shape_cast %26 : vector<1x256xi1> to vector<1x256xi1>
    %608 = vector.broadcast %607 : vector<1x256xi1> to vector<8x256xi1>
    %609 = vector.broadcast %cst_264 : f32 to vector<8x256xf32>
    %610 = arith.select %608, %606, %609 : vector<8x256xi1>, vector<8x256xf32>
    %c0_265 = arith.constant 0 : index
    %c0_266 = arith.constant 0 : index
    %611 = vector.load %arg13[%c0_265, %c0_266] : memref<216x256xf32, #tpu.memory_space<vmem>>, vector<8x256xf32>
    tpu.vector_store %arg13[%c0_265, %c0_266], %610 {strides = array<i32>} : memref<216x256xf32, #tpu.memory_space<vmem>>, vector<8x256xf32>,
    %c16_i32_267 = arith.constant 16 : i32
    %612 = tpu.dynamic_rotate %605 by %c16_i32_267 dim 1 : vector<8x256xf32>, i32 -> vector<8x256xf32>
    %cst_268 = arith.constant 0.000000e+00 : f32
    %613 = vector.shape_cast %46 : vector<1x256xi1> to vector<1x256xi1>
    %614 = vector.broadcast %613 : vector<1x256xi1> to vector<8x256xi1>
    %615 = vector.broadcast %cst_268 : f32 to vector<8x256xf32>
    %616 = arith.select %614, %612, %615 : vector<8x256xi1>, vector<8x256xf32>
    %c8_269 = arith.constant 8 : index
    %c0_270 = arith.constant 0 : index
    %617 = vector.load %arg13[%c8_269, %c0_270] : memref<216x256xf32, #tpu.memory_space<vmem>>, vector<8x256xf32>
    tpu.vector_store %arg13[%c8_269, %c0_270], %616 {strides = array<i32>} : memref<216x256xf32, #tpu.memory_space<vmem>>, vector<8x256xf32>,
    %c15_i32_271 = arith.constant 15 : i32
    %618 = tpu.dynamic_rotate %605 by %c15_i32_271 dim 1 : vector<8x256xf32>, i32 -> vector<8x256xf32>
    %cst_272 = arith.constant 0.000000e+00 : f32
    %619 = vector.shape_cast %66 : vector<1x256xi1> to vector<1x256xi1>
    %620 = vector.broadcast %619 : vector<1x256xi1> to vector<8x256xi1>
    %621 = vector.broadcast %cst_272 : f32 to vector<8x256xf32>
    %622 = arith.select %620, %618, %621 : vector<8x256xi1>, vector<8x256xf32>
    %c16_273 = arith.constant 16 : index
    %c0_274 = arith.constant 0 : index
    %623 = vector.load %arg13[%c16_273, %c0_274] : memref<216x256xf32, #tpu.memory_space<vmem>>, vector<8x256xf32>
    tpu.vector_store %arg13[%c16_273, %c0_274], %622 {strides = array<i32>} : memref<216x256xf32, #tpu.memory_space<vmem>>, vector<8x256xf32>,
    %c1_i32_275 = arith.constant 1 : i32
    %624 = tpu.dynamic_rotate %605 by %c1_i32_275 dim 1 : vector<8x256xf32>, i32 -> vector<8x256xf32>
    %cst_276 = arith.constant 0.000000e+00 : f32
    %625 = vector.shape_cast %86 : vector<1x256xi1> to vector<1x256xi1>
    %626 = vector.broadcast %625 : vector<1x256xi1> to vector<8x256xi1>
    %627 = vector.broadcast %cst_276 : f32 to vector<8x256xf32>
    %628 = arith.select %626, %624, %627 : vector<8x256xi1>, vector<8x256xf32>
    %c24_277 = arith.constant 24 : index
    %c0_278 = arith.constant 0 : index
    %629 = vector.load %arg13[%c24_277, %c0_278] : memref<216x256xf32, #tpu.memory_space<vmem>>, vector<8x256xf32>
    tpu.vector_store %arg13[%c24_277, %c0_278], %628 {strides = array<i32>} : memref<216x256xf32, #tpu.memory_space<vmem>>, vector<8x256xf32>,
    %cst_279 = arith.constant 0.000000e+00 : f32
    %630 = vector.shape_cast %106 : vector<1x256xi1> to vector<1x256xi1>
    %631 = vector.broadcast %630 : vector<1x256xi1> to vector<8x256xi1>
    %632 = vector.broadcast %cst_279 : f32 to vector<8x256xf32>
    %633 = arith.select %631, %605, %632 : vector<8x256xi1>, vector<8x256xf32>
    %c32_280 = arith.constant 32 : index
    %c0_281 = arith.constant 0 : index
    %634 = vector.load %arg13[%c32_280, %c0_281] : memref<216x256xf32, #tpu.memory_space<vmem>>, vector<8x256xf32>
    tpu.vector_store %arg13[%c32_280, %c0_281], %633 {strides = array<i32>} : memref<216x256xf32, #tpu.memory_space<vmem>>, vector<8x256xf32>,
    %c255_i32_282 = arith.constant 255 : i32
    %635 = tpu.dynamic_rotate %605 by %c255_i32_282 dim 1 : vector<8x256xf32>, i32 -> vector<8x256xf32>
    %cst_283 = arith.constant 0.000000e+00 : f32
    %636 = vector.shape_cast %126 : vector<1x256xi1> to vector<1x256xi1>
    %637 = vector.broadcast %636 : vector<1x256xi1> to vector<8x256xi1>
    %638 = vector.broadcast %cst_283 : f32 to vector<8x256xf32>
    %639 = arith.select %637, %635, %638 : vector<8x256xi1>, vector<8x256xf32>
    %c40_284 = arith.constant 40 : index
    %c0_285 = arith.constant 0 : index
    %640 = vector.load %arg13[%c40_284, %c0_285] : memref<216x256xf32, #tpu.memory_space<vmem>>, vector<8x256xf32>
    tpu.vector_store %arg13[%c40_284, %c0_285], %639 {strides = array<i32>} : memref<216x256xf32, #tpu.memory_space<vmem>>, vector<8x256xf32>,
    %c241_i32_286 = arith.constant 241 : i32
    %641 = tpu.dynamic_rotate %605 by %c241_i32_286 dim 1 : vector<8x256xf32>, i32 -> vector<8x256xf32>
    %cst_287 = arith.constant 0.000000e+00 : f32
    %642 = vector.shape_cast %146 : vector<1x256xi1> to vector<1x256xi1>
    %643 = vector.broadcast %642 : vector<1x256xi1> to vector<8x256xi1>
    %644 = vector.broadcast %cst_287 : f32 to vector<8x256xf32>
    %645 = arith.select %643, %641, %644 : vector<8x256xi1>, vector<8x256xf32>
    %c48_288 = arith.constant 48 : index
    %c0_289 = arith.constant 0 : index
    %646 = vector.load %arg13[%c48_288, %c0_289] : memref<216x256xf32, #tpu.memory_space<vmem>>, vector<8x256xf32>
    tpu.vector_store %arg13[%c48_288, %c0_289], %645 {strides = array<i32>} : memref<216x256xf32, #tpu.memory_space<vmem>>, vector<8x256xf32>,
    %c240_i32_290 = arith.constant 240 : i32
    %647 = tpu.dynamic_rotate %605 by %c240_i32_290 dim 1 : vector<8x256xf32>, i32 -> vector<8x256xf32>
    %cst_291 = arith.constant 0.000000e+00 : f32
    %648 = vector.shape_cast %166 : vector<1x256xi1> to vector<1x256xi1>
    %649 = vector.broadcast %648 : vector<1x256xi1> to vector<8x256xi1>
    %650 = vector.broadcast %cst_291 : f32 to vector<8x256xf32>
    %651 = arith.select %649, %647, %650 : vector<8x256xi1>, vector<8x256xf32>
    %c56_292 = arith.constant 56 : index
    %c0_293 = arith.constant 0 : index
    %652 = vector.load %arg13[%c56_292, %c0_293] : memref<216x256xf32, #tpu.memory_space<vmem>>, vector<8x256xf32>
    tpu.vector_store %arg13[%c56_292, %c0_293], %651 {strides = array<i32>} : memref<216x256xf32, #tpu.memory_space<vmem>>, vector<8x256xf32>,
    %c239_i32_294 = arith.constant 239 : i32
    %653 = tpu.dynamic_rotate %605 by %c239_i32_294 dim 1 : vector<8x256xf32>, i32 -> vector<8x256xf32>
    %cst_295 = arith.constant 0.000000e+00 : f32
    %654 = vector.shape_cast %186 : vector<1x256xi1> to vector<1x256xi1>
    %655 = vector.broadcast %654 : vector<1x256xi1> to vector<8x256xi1>
    %656 = vector.broadcast %cst_295 : f32 to vector<8x256xf32>
    %657 = arith.select %655, %653, %656 : vector<8x256xi1>, vector<8x256xf32>
    %c64_296 = arith.constant 64 : index
    %c0_297 = arith.constant 0 : index
    %658 = vector.load %arg13[%c64_296, %c0_297] : memref<216x256xf32, #tpu.memory_space<vmem>>, vector<8x256xf32>
    tpu.vector_store %arg13[%c64_296, %c0_297], %657 {strides = array<i32>} : memref<216x256xf32, #tpu.memory_space<vmem>>, vector<8x256xf32>,
    %c2 = arith.constant 2 : index
    %c0_298 = arith.constant 0 : index
    %c0_299 = arith.constant 0 : index
    %659 = vector.load %arg2[%c2, %c0_298, %c0_299] : memref<7x24x216xbf16, #tpu.memory_space<vmem>>, vector<1x16x72xbf16>
    %660 = vector.shape_cast %659 : vector<1x16x72xbf16> to vector<16x72xbf16>
    %c0_300 = arith.constant 0 : index
    %c0_301 = arith.constant 0 : index
    %661 = vector.load %arg13[%c0_300, %c0_301] : memref<216x256xf32, #tpu.memory_space<vmem>>, vector<72x256xf32>
    %662 = arith.truncf %661 : vector<72x256xf32> to vector<72x256xbf16>
    %cst_302 = arith.constant dense<0.000000e+00> : vector<16x256xf32>
    %663 = tpu.matmul %660, %662, %cst_302 {dimension_numbers = #tpu.dot_dimension_numbers<[1], [0], [0], [1], [0, 0, 1, 1], [], []>} : vector<16x72xbf16>, vector<72x256xbf16>, vector<16x256xf32> -> vector<16x256xf32>
    %cst_303 = arith.constant dense<0.000000e+00> : vector<16xf32>
    %664 = vector.multi_reduction <add>, %663, %cst_303 [1] : vector<16x256xf32> to vector<16xf32>
    %665 = vector.shape_cast %664 : vector<16xf32> to vector<16x1xf32>
    %cst_304 = arith.constant 3.906250e-03 : f32
    %666 = vector.broadcast %cst_304 : f32 to vector<16x1xf32>
    %667 = arith.mulf %665, %666 : vector<16x1xf32>
    %668 = vector.broadcast %667 : vector<16x1xf32> to vector<16x256xf32>
    %669 = arith.subf %663, %668 : vector<16x256xf32>
    %670 = arith.mulf %669, %669 : vector<16x256xf32>
    %cst_305 = arith.constant dense<0.000000e+00> : vector<16xf32>
    %671 = vector.multi_reduction <add>, %670, %cst_305 [1] : vector<16x256xf32> to vector<16xf32>
    %672 = vector.shape_cast %671 : vector<16xf32> to vector<16x1xf32>
    %cst_306 = arith.constant 3.906250e-03 : f32
    %673 = vector.broadcast %cst_306 : f32 to vector<16x1xf32>
    %674 = arith.mulf %672, %673 : vector<16x1xf32>
    %c2_307 = arith.constant 2 : index
    %c0_308 = arith.constant 0 : index
    %c0_309 = arith.constant 0 : index
    %675 = vector.load %arg3[%c2_307, %c0_308, %c0_309] : memref<7x24x2xf32, #tpu.memory_space<vmem>>, vector<1x16x1xf32>
    %676 = vector.shape_cast %675 : vector<1x16x1xf32> to vector<16x1xf32>
    %c2_310 = arith.constant 2 : index
    %c0_311 = arith.constant 0 : index
    %c1_312 = arith.constant 1 : index
    %677 = vector.load %arg3[%c2_310, %c0_311, %c1_312] : memref<7x24x2xf32, #tpu.memory_space<vmem>>, vector<1x16x1xf32>
    %678 = vector.shape_cast %677 : vector<1x16x1xf32> to vector<16x1xf32>
    %cst_313 = arith.constant 9.99999974E-6 : f32
    %679 = vector.broadcast %cst_313 : f32 to vector<16x1xf32>
    %680 = arith.addf %674, %679 : vector<16x1xf32>
    %681 = math.rsqrt %680 : vector<16x1xf32>
    %682 = vector.broadcast %681 : vector<16x1xf32> to vector<16x256xf32>
    %683 = arith.mulf %669, %682 : vector<16x256xf32>
    %684 = vector.broadcast %676 : vector<16x1xf32> to vector<16x256xf32>
    %685 = arith.mulf %683, %684 : vector<16x256xf32>
    %686 = vector.broadcast %678 : vector<16x1xf32> to vector<16x256xf32>
    %687 = arith.addf %685, %686 : vector<16x256xf32>
    %cst_314 = arith.constant 0.000000e+00 : f32
    %688 = vector.broadcast %cst_314 : f32 to vector<16x256xf32>
    %689 = arith.cmpf oge, %687, %688 : vector<16x256xf32>
    %cst_315 = arith.constant 0.00999999977 : f32
    %690 = vector.broadcast %cst_315 : f32 to vector<16x256xf32>
    %691 = arith.mulf %690, %687 : vector<16x256xf32>
    %692 = arith.select %689, %687, %691 : vector<16x256xi1>, vector<16x256xf32>
    %693 = arith.truncf %692 : vector<16x256xf32> to vector<16x256xbf16>
    %c0_316 = arith.constant 0 : index
    %c0_317 = arith.constant 0 : index
    %694 = vector.load %arg10[%c0_316, %c0_317] : memref<256x256xbf16, #tpu.memory_space<vmem>>, vector<256x256xbf16>
    %cst_318 = arith.constant dense<0.000000e+00> : vector<16x256xf32>
    %695 = tpu.matmul %693, %694, %cst_318 {dimension_numbers = #tpu.dot_dimension_numbers<[1], [0], [0], [1], [0, 0, 1, 1], [], []>} : vector<16x256xbf16>, vector<256x256xbf16>, vector<16x256xf32> -> vector<16x256xf32>
    %c9_i32 = arith.constant 9 : i32
    %696 = tpu.dynamic_rotate %695 by %c9_i32 dim 1 : vector<16x256xf32>, i32 -> vector<16x256xf32>
    %cst_319 = arith.constant 0.000000e+00 : f32
    %697 = vector.shape_cast %212 : vector<1x256xi1> to vector<1x256xi1>
    %698 = vector.broadcast %697 : vector<1x256xi1> to vector<16x256xi1>
    %699 = vector.broadcast %cst_319 : f32 to vector<16x256xf32>
    %700 = arith.select %698, %696, %699 : vector<16x256xi1>, vector<16x256xf32>
    %c0_320 = arith.constant 0 : index
    %c0_321 = arith.constant 0 : index
    %701 = vector.load %arg13[%c0_320, %c0_321] : memref<216x256xf32, #tpu.memory_space<vmem>>, vector<16x256xf32>
    tpu.vector_store %arg13[%c0_320, %c0_321], %700 {strides = array<i32>} : memref<216x256xf32, #tpu.memory_space<vmem>>, vector<16x256xf32>,
    %c8_i32_322 = arith.constant 8 : i32
    %702 = tpu.dynamic_rotate %695 by %c8_i32_322 dim 1 : vector<16x256xf32>, i32 -> vector<16x256xf32>
    %cst_323 = arith.constant 0.000000e+00 : f32
    %703 = vector.shape_cast %232 : vector<1x256xi1> to vector<1x256xi1>
    %704 = vector.broadcast %703 : vector<1x256xi1> to vector<16x256xi1>
    %705 = vector.broadcast %cst_323 : f32 to vector<16x256xf32>
    %706 = arith.select %704, %702, %705 : vector<16x256xi1>, vector<16x256xf32>
    %c16_324 = arith.constant 16 : index
    %c0_325 = arith.constant 0 : index
    %707 = vector.load %arg13[%c16_324, %c0_325] : memref<216x256xf32, #tpu.memory_space<vmem>>, vector<16x256xf32>
    tpu.vector_store %arg13[%c16_324, %c0_325], %706 {strides = array<i32>} : memref<216x256xf32, #tpu.memory_space<vmem>>, vector<16x256xf32>,
    %c7_i32_326 = arith.constant 7 : i32
    %708 = tpu.dynamic_rotate %695 by %c7_i32_326 dim 1 : vector<16x256xf32>, i32 -> vector<16x256xf32>
    %cst_327 = arith.constant 0.000000e+00 : f32
    %709 = vector.shape_cast %252 : vector<1x256xi1> to vector<1x256xi1>
    %710 = vector.broadcast %709 : vector<1x256xi1> to vector<16x256xi1>
    %711 = vector.broadcast %cst_327 : f32 to vector<16x256xf32>
    %712 = arith.select %710, %708, %711 : vector<16x256xi1>, vector<16x256xf32>
    %c32_328 = arith.constant 32 : index
    %c0_329 = arith.constant 0 : index
    %713 = vector.load %arg13[%c32_328, %c0_329] : memref<216x256xf32, #tpu.memory_space<vmem>>, vector<16x256xf32>
    tpu.vector_store %arg13[%c32_328, %c0_329], %712 {strides = array<i32>} : memref<216x256xf32, #tpu.memory_space<vmem>>, vector<16x256xf32>,
    %c1_i32_330 = arith.constant 1 : i32
    %714 = tpu.dynamic_rotate %695 by %c1_i32_330 dim 1 : vector<16x256xf32>, i32 -> vector<16x256xf32>
    %cst_331 = arith.constant 0.000000e+00 : f32
    %715 = vector.shape_cast %272 : vector<1x256xi1> to vector<1x256xi1>
    %716 = vector.broadcast %715 : vector<1x256xi1> to vector<16x256xi1>
    %717 = vector.broadcast %cst_331 : f32 to vector<16x256xf32>
    %718 = arith.select %716, %714, %717 : vector<16x256xi1>, vector<16x256xf32>
    %c48_332 = arith.constant 48 : index
    %c0_333 = arith.constant 0 : index
    %719 = vector.load %arg13[%c48_332, %c0_333] : memref<216x256xf32, #tpu.memory_space<vmem>>, vector<16x256xf32>
    tpu.vector_store %arg13[%c48_332, %c0_333], %718 {strides = array<i32>} : memref<216x256xf32, #tpu.memory_space<vmem>>, vector<16x256xf32>,
    %cst_334 = arith.constant 0.000000e+00 : f32
    %720 = vector.shape_cast %292 : vector<1x256xi1> to vector<1x256xi1>
    %721 = vector.broadcast %720 : vector<1x256xi1> to vector<16x256xi1>
    %722 = vector.broadcast %cst_334 : f32 to vector<16x256xf32>
    %723 = arith.select %721, %695, %722 : vector<16x256xi1>, vector<16x256xf32>
    %c64_335 = arith.constant 64 : index
    %c0_336 = arith.constant 0 : index
    %724 = vector.load %arg13[%c64_335, %c0_336] : memref<216x256xf32, #tpu.memory_space<vmem>>, vector<16x256xf32>
    tpu.vector_store %arg13[%c64_335, %c0_336], %723 {strides = array<i32>} : memref<216x256xf32, #tpu.memory_space<vmem>>, vector<16x256xf32>,
    %c255_i32_337 = arith.constant 255 : i32
    %725 = tpu.dynamic_rotate %695 by %c255_i32_337 dim 1 : vector<16x256xf32>, i32 -> vector<16x256xf32>
    %cst_338 = arith.constant 0.000000e+00 : f32
    %726 = vector.shape_cast %312 : vector<1x256xi1> to vector<1x256xi1>
    %727 = vector.broadcast %726 : vector<1x256xi1> to vector<16x256xi1>
    %728 = vector.broadcast %cst_338 : f32 to vector<16x256xf32>
    %729 = arith.select %727, %725, %728 : vector<16x256xi1>, vector<16x256xf32>
    %c80 = arith.constant 80 : index
    %c0_339 = arith.constant 0 : index
    %730 = vector.load %arg13[%c80, %c0_339] : memref<216x256xf32, #tpu.memory_space<vmem>>, vector<16x256xf32>
    tpu.vector_store %arg13[%c80, %c0_339], %729 {strides = array<i32>} : memref<216x256xf32, #tpu.memory_space<vmem>>, vector<16x256xf32>,
    %c249_i32 = arith.constant 249 : i32
    %731 = tpu.dynamic_rotate %695 by %c249_i32 dim 1 : vector<16x256xf32>, i32 -> vector<16x256xf32>
    %cst_340 = arith.constant 0.000000e+00 : f32
    %732 = vector.shape_cast %332 : vector<1x256xi1> to vector<1x256xi1>
    %733 = vector.broadcast %732 : vector<1x256xi1> to vector<16x256xi1>
    %734 = vector.broadcast %cst_340 : f32 to vector<16x256xf32>
    %735 = arith.select %733, %731, %734 : vector<16x256xi1>, vector<16x256xf32>
    %c96 = arith.constant 96 : index
    %c0_341 = arith.constant 0 : index
    %736 = vector.load %arg13[%c96, %c0_341] : memref<216x256xf32, #tpu.memory_space<vmem>>, vector<16x256xf32>
    tpu.vector_store %arg13[%c96, %c0_341], %735 {strides = array<i32>} : memref<216x256xf32, #tpu.memory_space<vmem>>, vector<16x256xf32>,
    %c248_i32 = arith.constant 248 : i32
    %737 = tpu.dynamic_rotate %695 by %c248_i32 dim 1 : vector<16x256xf32>, i32 -> vector<16x256xf32>
    %cst_342 = arith.constant 0.000000e+00 : f32
    %738 = vector.shape_cast %352 : vector<1x256xi1> to vector<1x256xi1>
    %739 = vector.broadcast %738 : vector<1x256xi1> to vector<16x256xi1>
    %740 = vector.broadcast %cst_342 : f32 to vector<16x256xf32>
    %741 = arith.select %739, %737, %740 : vector<16x256xi1>, vector<16x256xf32>
    %c112 = arith.constant 112 : index
    %c0_343 = arith.constant 0 : index
    %742 = vector.load %arg13[%c112, %c0_343] : memref<216x256xf32, #tpu.memory_space<vmem>>, vector<16x256xf32>
    tpu.vector_store %arg13[%c112, %c0_343], %741 {strides = array<i32>} : memref<216x256xf32, #tpu.memory_space<vmem>>, vector<16x256xf32>,
    %c247_i32 = arith.constant 247 : i32
    %743 = tpu.dynamic_rotate %695 by %c247_i32 dim 1 : vector<16x256xf32>, i32 -> vector<16x256xf32>
    %cst_344 = arith.constant 0.000000e+00 : f32
    %744 = vector.shape_cast %372 : vector<1x256xi1> to vector<1x256xi1>
    %745 = vector.broadcast %744 : vector<1x256xi1> to vector<16x256xi1>
    %746 = vector.broadcast %cst_344 : f32 to vector<16x256xf32>
    %747 = arith.select %745, %743, %746 : vector<16x256xi1>, vector<16x256xf32>
    %c128 = arith.constant 128 : index
    %c0_345 = arith.constant 0 : index
    %748 = vector.load %arg13[%c128, %c0_345] : memref<216x256xf32, #tpu.memory_space<vmem>>, vector<16x256xf32>
    tpu.vector_store %arg13[%c128, %c0_345], %747 {strides = array<i32>} : memref<216x256xf32, #tpu.memory_space<vmem>>, vector<16x256xf32>,
    %c3 = arith.constant 3 : index
    %c0_346 = arith.constant 0 : index
    %c0_347 = arith.constant 0 : index
    %749 = vector.load %arg2[%c3, %c0_346, %c0_347] : memref<7x24x216xbf16, #tpu.memory_space<vmem>>, vector<1x16x144xbf16>
    %750 = vector.shape_cast %749 : vector<1x16x144xbf16> to vector<16x144xbf16>
    %c0_348 = arith.constant 0 : index
    %c0_349 = arith.constant 0 : index
    %751 = vector.load %arg13[%c0_348, %c0_349] : memref<216x256xf32, #tpu.memory_space<vmem>>, vector<144x256xf32>
    %752 = arith.truncf %751 : vector<144x256xf32> to vector<144x256xbf16>
    %cst_350 = arith.constant dense<0.000000e+00> : vector<16x256xf32>
    %753 = tpu.matmul %750, %752, %cst_350 {dimension_numbers = #tpu.dot_dimension_numbers<[1], [0], [0], [1], [0, 0, 1, 1], [], []>} : vector<16x144xbf16>, vector<144x256xbf16>, vector<16x256xf32> -> vector<16x256xf32>
    %cst_351 = arith.constant dense<0.000000e+00> : vector<16xf32>
    %754 = vector.multi_reduction <add>, %753, %cst_351 [1] : vector<16x256xf32> to vector<16xf32>
    %755 = vector.shape_cast %754 : vector<16xf32> to vector<16x1xf32>
    %cst_352 = arith.constant 1.562500e-02 : f32
    %756 = vector.broadcast %cst_352 : f32 to vector<16x1xf32>
    %757 = arith.mulf %755, %756 : vector<16x1xf32>
    %758 = vector.broadcast %757 : vector<16x1xf32> to vector<16x256xf32>
    %759 = arith.subf %753, %758 : vector<16x256xf32>
    %760 = vector.broadcast %375 : vector<1x256xf32> to vector<16x256xf32>
    %761 = arith.mulf %759, %760 : vector<16x256xf32>
    %762 = arith.mulf %761, %761 : vector<16x256xf32>
    %cst_353 = arith.constant dense<0.000000e+00> : vector<16xf32>
    %763 = vector.multi_reduction <add>, %762, %cst_353 [1] : vector<16x256xf32> to vector<16xf32>
    %764 = vector.shape_cast %763 : vector<16xf32> to vector<16x1xf32>
    %cst_354 = arith.constant 1.562500e-02 : f32
    %765 = vector.broadcast %cst_354 : f32 to vector<16x1xf32>
    %766 = arith.mulf %764, %765 : vector<16x1xf32>
    %c3_355 = arith.constant 3 : index
    %c0_356 = arith.constant 0 : index
    %c0_357 = arith.constant 0 : index
    %767 = vector.load %arg3[%c3_355, %c0_356, %c0_357] : memref<7x24x2xf32, #tpu.memory_space<vmem>>, vector<1x16x1xf32>
    %768 = vector.shape_cast %767 : vector<1x16x1xf32> to vector<16x1xf32>
    %c3_358 = arith.constant 3 : index
    %c0_359 = arith.constant 0 : index
    %c1_360 = arith.constant 1 : index
    %769 = vector.load %arg3[%c3_358, %c0_359, %c1_360] : memref<7x24x2xf32, #tpu.memory_space<vmem>>, vector<1x16x1xf32>
    %770 = vector.shape_cast %769 : vector<1x16x1xf32> to vector<16x1xf32>
    %cst_361 = arith.constant 9.99999974E-6 : f32
    %771 = vector.broadcast %cst_361 : f32 to vector<16x1xf32>
    %772 = arith.addf %766, %771 : vector<16x1xf32>
    %773 = math.rsqrt %772 : vector<16x1xf32>
    %774 = vector.broadcast %773 : vector<16x1xf32> to vector<16x256xf32>
    %775 = arith.mulf %761, %774 : vector<16x256xf32>
    %776 = vector.broadcast %768 : vector<16x1xf32> to vector<16x256xf32>
    %777 = arith.mulf %775, %776 : vector<16x256xf32>
    %778 = vector.broadcast %770 : vector<16x1xf32> to vector<16x256xf32>
    %779 = arith.addf %777, %778 : vector<16x256xf32>
    %cst_362 = arith.constant 0.000000e+00 : f32
    %780 = vector.broadcast %cst_362 : f32 to vector<16x256xf32>
    %781 = arith.cmpf oge, %779, %780 : vector<16x256xf32>
    %cst_363 = arith.constant 0.00999999977 : f32
    %782 = vector.broadcast %cst_363 : f32 to vector<16x256xf32>
    %783 = arith.mulf %782, %779 : vector<16x256xf32>
    %784 = arith.select %781, %779, %783 : vector<16x256xi1>, vector<16x256xf32>
    %785 = vector.broadcast %375 : vector<1x256xf32> to vector<16x256xf32>
    %786 = arith.mulf %784, %785 : vector<16x256xf32>
    %c9_i32_364 = arith.constant 9 : i32
    %787 = tpu.dynamic_rotate %786 by %c9_i32_364 dim 1 : vector<16x256xf32>, i32 -> vector<16x256xf32>
    %cst_365 = arith.constant 0.000000e+00 : f32
    %788 = vector.shape_cast %212 : vector<1x256xi1> to vector<1x256xi1>
    %789 = vector.broadcast %788 : vector<1x256xi1> to vector<16x256xi1>
    %790 = vector.broadcast %cst_365 : f32 to vector<16x256xf32>
    %791 = arith.select %789, %787, %790 : vector<16x256xi1>, vector<16x256xf32>
    %c0_366 = arith.constant 0 : index
    %c0_367 = arith.constant 0 : index
    %792 = vector.load %arg13[%c0_366, %c0_367] : memref<216x256xf32, #tpu.memory_space<vmem>>, vector<16x256xf32>
    tpu.vector_store %arg13[%c0_366, %c0_367], %791 {strides = array<i32>} : memref<216x256xf32, #tpu.memory_space<vmem>>, vector<16x256xf32>,
    %c8_i32_368 = arith.constant 8 : i32
    %793 = tpu.dynamic_rotate %786 by %c8_i32_368 dim 1 : vector<16x256xf32>, i32 -> vector<16x256xf32>
    %cst_369 = arith.constant 0.000000e+00 : f32
    %794 = vector.shape_cast %232 : vector<1x256xi1> to vector<1x256xi1>
    %795 = vector.broadcast %794 : vector<1x256xi1> to vector<16x256xi1>
    %796 = vector.broadcast %cst_369 : f32 to vector<16x256xf32>
    %797 = arith.select %795, %793, %796 : vector<16x256xi1>, vector<16x256xf32>
    %c16_370 = arith.constant 16 : index
    %c0_371 = arith.constant 0 : index
    %798 = vector.load %arg13[%c16_370, %c0_371] : memref<216x256xf32, #tpu.memory_space<vmem>>, vector<16x256xf32>
    tpu.vector_store %arg13[%c16_370, %c0_371], %797 {strides = array<i32>} : memref<216x256xf32, #tpu.memory_space<vmem>>, vector<16x256xf32>,
    %c7_i32_372 = arith.constant 7 : i32
    %799 = tpu.dynamic_rotate %786 by %c7_i32_372 dim 1 : vector<16x256xf32>, i32 -> vector<16x256xf32>
    %cst_373 = arith.constant 0.000000e+00 : f32
    %800 = vector.shape_cast %252 : vector<1x256xi1> to vector<1x256xi1>
    %801 = vector.broadcast %800 : vector<1x256xi1> to vector<16x256xi1>
    %802 = vector.broadcast %cst_373 : f32 to vector<16x256xf32>
    %803 = arith.select %801, %799, %802 : vector<16x256xi1>, vector<16x256xf32>
    %c32_374 = arith.constant 32 : index
    %c0_375 = arith.constant 0 : index
    %804 = vector.load %arg13[%c32_374, %c0_375] : memref<216x256xf32, #tpu.memory_space<vmem>>, vector<16x256xf32>
    tpu.vector_store %arg13[%c32_374, %c0_375], %803 {strides = array<i32>} : memref<216x256xf32, #tpu.memory_space<vmem>>, vector<16x256xf32>,
    %c1_i32_376 = arith.constant 1 : i32
    %805 = tpu.dynamic_rotate %786 by %c1_i32_376 dim 1 : vector<16x256xf32>, i32 -> vector<16x256xf32>
    %cst_377 = arith.constant 0.000000e+00 : f32
    %806 = vector.shape_cast %272 : vector<1x256xi1> to vector<1x256xi1>
    %807 = vector.broadcast %806 : vector<1x256xi1> to vector<16x256xi1>
    %808 = vector.broadcast %cst_377 : f32 to vector<16x256xf32>
    %809 = arith.select %807, %805, %808 : vector<16x256xi1>, vector<16x256xf32>
    %c48_378 = arith.constant 48 : index
    %c0_379 = arith.constant 0 : index
    %810 = vector.load %arg13[%c48_378, %c0_379] : memref<216x256xf32, #tpu.memory_space<vmem>>, vector<16x256xf32>
    tpu.vector_store %arg13[%c48_378, %c0_379], %809 {strides = array<i32>} : memref<216x256xf32, #tpu.memory_space<vmem>>, vector<16x256xf32>,
    %cst_380 = arith.constant 0.000000e+00 : f32
    %811 = vector.shape_cast %292 : vector<1x256xi1> to vector<1x256xi1>
    %812 = vector.broadcast %811 : vector<1x256xi1> to vector<16x256xi1>
    %813 = vector.broadcast %cst_380 : f32 to vector<16x256xf32>
    %814 = arith.select %812, %786, %813 : vector<16x256xi1>, vector<16x256xf32>
    %c64_381 = arith.constant 64 : index
    %c0_382 = arith.constant 0 : index
    %815 = vector.load %arg13[%c64_381, %c0_382] : memref<216x256xf32, #tpu.memory_space<vmem>>, vector<16x256xf32>
    tpu.vector_store %arg13[%c64_381, %c0_382], %814 {strides = array<i32>} : memref<216x256xf32, #tpu.memory_space<vmem>>, vector<16x256xf32>,
    %c255_i32_383 = arith.constant 255 : i32
    %816 = tpu.dynamic_rotate %786 by %c255_i32_383 dim 1 : vector<16x256xf32>, i32 -> vector<16x256xf32>
    %cst_384 = arith.constant 0.000000e+00 : f32
    %817 = vector.shape_cast %312 : vector<1x256xi1> to vector<1x256xi1>
    %818 = vector.broadcast %817 : vector<1x256xi1> to vector<16x256xi1>
    %819 = vector.broadcast %cst_384 : f32 to vector<16x256xf32>
    %820 = arith.select %818, %816, %819 : vector<16x256xi1>, vector<16x256xf32>
    %c80_385 = arith.constant 80 : index
    %c0_386 = arith.constant 0 : index
    %821 = vector.load %arg13[%c80_385, %c0_386] : memref<216x256xf32, #tpu.memory_space<vmem>>, vector<16x256xf32>
    tpu.vector_store %arg13[%c80_385, %c0_386], %820 {strides = array<i32>} : memref<216x256xf32, #tpu.memory_space<vmem>>, vector<16x256xf32>,
    %c249_i32_387 = arith.constant 249 : i32
    %822 = tpu.dynamic_rotate %786 by %c249_i32_387 dim 1 : vector<16x256xf32>, i32 -> vector<16x256xf32>
    %cst_388 = arith.constant 0.000000e+00 : f32
    %823 = vector.shape_cast %332 : vector<1x256xi1> to vector<1x256xi1>
    %824 = vector.broadcast %823 : vector<1x256xi1> to vector<16x256xi1>
    %825 = vector.broadcast %cst_388 : f32 to vector<16x256xf32>
    %826 = arith.select %824, %822, %825 : vector<16x256xi1>, vector<16x256xf32>
    %c96_389 = arith.constant 96 : index
    %c0_390 = arith.constant 0 : index
    %827 = vector.load %arg13[%c96_389, %c0_390] : memref<216x256xf32, #tpu.memory_space<vmem>>, vector<16x256xf32>
    tpu.vector_store %arg13[%c96_389, %c0_390], %826 {strides = array<i32>} : memref<216x256xf32, #tpu.memory_space<vmem>>, vector<16x256xf32>,
    %c248_i32_391 = arith.constant 248 : i32
    %828 = tpu.dynamic_rotate %786 by %c248_i32_391 dim 1 : vector<16x256xf32>, i32 -> vector<16x256xf32>
    %cst_392 = arith.constant 0.000000e+00 : f32
    %829 = vector.shape_cast %352 : vector<1x256xi1> to vector<1x256xi1>
    %830 = vector.broadcast %829 : vector<1x256xi1> to vector<16x256xi1>
    %831 = vector.broadcast %cst_392 : f32 to vector<16x256xf32>
    %832 = arith.select %830, %828, %831 : vector<16x256xi1>, vector<16x256xf32>
    %c112_393 = arith.constant 112 : index
    %c0_394 = arith.constant 0 : index
    %833 = vector.load %arg13[%c112_393, %c0_394] : memref<216x256xf32, #tpu.memory_space<vmem>>, vector<16x256xf32>
    tpu.vector_store %arg13[%c112_393, %c0_394], %832 {strides = array<i32>} : memref<216x256xf32, #tpu.memory_space<vmem>>, vector<16x256xf32>,
    %c247_i32_395 = arith.constant 247 : i32
    %834 = tpu.dynamic_rotate %786 by %c247_i32_395 dim 1 : vector<16x256xf32>, i32 -> vector<16x256xf32>
    %cst_396 = arith.constant 0.000000e+00 : f32
    %835 = vector.shape_cast %372 : vector<1x256xi1> to vector<1x256xi1>
    %836 = vector.broadcast %835 : vector<1x256xi1> to vector<16x256xi1>
    %837 = vector.broadcast %cst_396 : f32 to vector<16x256xf32>
    %838 = arith.select %836, %834, %837 : vector<16x256xi1>, vector<16x256xf32>
    %c128_397 = arith.constant 128 : index
    %c0_398 = arith.constant 0 : index
    %839 = vector.load %arg13[%c128_397, %c0_398] : memref<216x256xf32, #tpu.memory_space<vmem>>, vector<16x256xf32>
    tpu.vector_store %arg13[%c128_397, %c0_398], %838 {strides = array<i32>} : memref<216x256xf32, #tpu.memory_space<vmem>>, vector<16x256xf32>,
    %c4_399 = arith.constant 4 : index
    %c0_400 = arith.constant 0 : index
    %c0_401 = arith.constant 0 : index
    %840 = vector.load %arg2[%c4_399, %c0_400, %c0_401] : memref<7x24x216xbf16, #tpu.memory_space<vmem>>, vector<1x16x144xbf16>
    %841 = vector.shape_cast %840 : vector<1x16x144xbf16> to vector<16x144xbf16>
    %c0_402 = arith.constant 0 : index
    %c0_403 = arith.constant 0 : index
    %842 = vector.load %arg13[%c0_402, %c0_403] : memref<216x256xf32, #tpu.memory_space<vmem>>, vector<144x256xf32>
    %843 = arith.truncf %842 : vector<144x256xf32> to vector<144x256xbf16>
    %cst_404 = arith.constant dense<0.000000e+00> : vector<16x256xf32>
    %844 = tpu.matmul %841, %843, %cst_404 {dimension_numbers = #tpu.dot_dimension_numbers<[1], [0], [0], [1], [0, 0, 1, 1], [], []>} : vector<16x144xbf16>, vector<144x256xbf16>, vector<16x256xf32> -> vector<16x256xf32>
    %cst_405 = arith.constant dense<0.000000e+00> : vector<16xf32>
    %845 = vector.multi_reduction <add>, %844, %cst_405 [1] : vector<16x256xf32> to vector<16xf32>
    %846 = vector.shape_cast %845 : vector<16xf32> to vector<16x1xf32>
    %cst_406 = arith.constant 1.562500e-02 : f32
    %847 = vector.broadcast %cst_406 : f32 to vector<16x1xf32>
    %848 = arith.mulf %846, %847 : vector<16x1xf32>
    %849 = vector.broadcast %848 : vector<16x1xf32> to vector<16x256xf32>
    %850 = arith.subf %844, %849 : vector<16x256xf32>
    %851 = vector.broadcast %375 : vector<1x256xf32> to vector<16x256xf32>
    %852 = arith.mulf %850, %851 : vector<16x256xf32>
    %853 = arith.mulf %852, %852 : vector<16x256xf32>
    %cst_407 = arith.constant dense<0.000000e+00> : vector<16xf32>
    %854 = vector.multi_reduction <add>, %853, %cst_407 [1] : vector<16x256xf32> to vector<16xf32>
    %855 = vector.shape_cast %854 : vector<16xf32> to vector<16x1xf32>
    %cst_408 = arith.constant 1.562500e-02 : f32
    %856 = vector.broadcast %cst_408 : f32 to vector<16x1xf32>
    %857 = arith.mulf %855, %856 : vector<16x1xf32>
    %c4_409 = arith.constant 4 : index
    %c0_410 = arith.constant 0 : index
    %c0_411 = arith.constant 0 : index
    %858 = vector.load %arg3[%c4_409, %c0_410, %c0_411] : memref<7x24x2xf32, #tpu.memory_space<vmem>>, vector<1x16x1xf32>
    %859 = vector.shape_cast %858 : vector<1x16x1xf32> to vector<16x1xf32>
    %c4_412 = arith.constant 4 : index
    %c0_413 = arith.constant 0 : index
    %c1_414 = arith.constant 1 : index
    %860 = vector.load %arg3[%c4_412, %c0_413, %c1_414] : memref<7x24x2xf32, #tpu.memory_space<vmem>>, vector<1x16x1xf32>
    %861 = vector.shape_cast %860 : vector<1x16x1xf32> to vector<16x1xf32>
    %cst_415 = arith.constant 9.99999974E-6 : f32
    %862 = vector.broadcast %cst_415 : f32 to vector<16x1xf32>
    %863 = arith.addf %857, %862 : vector<16x1xf32>
    %864 = math.rsqrt %863 : vector<16x1xf32>
    %865 = vector.broadcast %864 : vector<16x1xf32> to vector<16x256xf32>
    %866 = arith.mulf %852, %865 : vector<16x256xf32>
    %867 = vector.broadcast %859 : vector<16x1xf32> to vector<16x256xf32>
    %868 = arith.mulf %866, %867 : vector<16x256xf32>
    %869 = vector.broadcast %861 : vector<16x1xf32> to vector<16x256xf32>
    %870 = arith.addf %868, %869 : vector<16x256xf32>
    %cst_416 = arith.constant 0.000000e+00 : f32
    %871 = vector.broadcast %cst_416 : f32 to vector<16x256xf32>
    %872 = arith.cmpf oge, %870, %871 : vector<16x256xf32>
    %cst_417 = arith.constant 0.00999999977 : f32
    %873 = vector.broadcast %cst_417 : f32 to vector<16x256xf32>
    %874 = arith.mulf %873, %870 : vector<16x256xf32>
    %875 = arith.select %872, %870, %874 : vector<16x256xi1>, vector<16x256xf32>
    %876 = vector.broadcast %375 : vector<1x256xf32> to vector<16x256xf32>
    %877 = arith.mulf %875, %876 : vector<16x256xf32>
    %878 = arith.truncf %877 : vector<16x256xf32> to vector<16x256xbf16>
    %c0_418 = arith.constant 0 : index
    %c0_419 = arith.constant 0 : index
    %879 = vector.load %arg11[%c0_418, %c0_419] : memref<256x256xbf16, #tpu.memory_space<vmem>>, vector<256x256xbf16>
    %cst_420 = arith.constant dense<0.000000e+00> : vector<16x256xf32>
    %880 = tpu.matmul %878, %879, %cst_420 {dimension_numbers = #tpu.dot_dimension_numbers<[1], [0], [0], [1], [0, 0, 1, 1], [], []>} : vector<16x256xbf16>, vector<256x256xbf16>, vector<16x256xf32> -> vector<16x256xf32>
    %c17_i32_421 = arith.constant 17 : i32
    %881 = tpu.dynamic_rotate %880 by %c17_i32_421 dim 1 : vector<16x256xf32>, i32 -> vector<16x256xf32>
    %cst_422 = arith.constant 0.000000e+00 : f32
    %882 = vector.shape_cast %26 : vector<1x256xi1> to vector<1x256xi1>
    %883 = vector.broadcast %882 : vector<1x256xi1> to vector<16x256xi1>
    %884 = vector.broadcast %cst_422 : f32 to vector<16x256xf32>
    %885 = arith.select %883, %881, %884 : vector<16x256xi1>, vector<16x256xf32>
    %c0_423 = arith.constant 0 : index
    %c0_424 = arith.constant 0 : index
    %886 = vector.load %arg13[%c0_423, %c0_424] : memref<216x256xf32, #tpu.memory_space<vmem>>, vector<16x256xf32>
    tpu.vector_store %arg13[%c0_423, %c0_424], %885 {strides = array<i32>} : memref<216x256xf32, #tpu.memory_space<vmem>>, vector<16x256xf32>,
    %c17_i32_425 = arith.constant 17 : i32
    %887 = tpu.dynamic_rotate %605 by %c17_i32_425 dim 1 : vector<8x256xf32>, i32 -> vector<8x256xf32>
    %cst_426 = arith.constant 0.000000e+00 : f32
    %888 = vector.shape_cast %26 : vector<1x256xi1> to vector<1x256xi1>
    %889 = vector.broadcast %888 : vector<1x256xi1> to vector<8x256xi1>
    %890 = vector.broadcast %cst_426 : f32 to vector<8x256xf32>
    %891 = arith.select %889, %887, %890 : vector<8x256xi1>, vector<8x256xf32>
    %c16_427 = arith.constant 16 : index
    %c0_428 = arith.constant 0 : index
    %892 = vector.load %arg13[%c16_427, %c0_428] : memref<216x256xf32, #tpu.memory_space<vmem>>, vector<8x256xf32>
    tpu.vector_store %arg13[%c16_427, %c0_428], %891 {strides = array<i32>} : memref<216x256xf32, #tpu.memory_space<vmem>>, vector<8x256xf32>,
    %c16_i32_429 = arith.constant 16 : i32
    %893 = tpu.dynamic_rotate %880 by %c16_i32_429 dim 1 : vector<16x256xf32>, i32 -> vector<16x256xf32>
    %cst_430 = arith.constant 0.000000e+00 : f32
    %894 = vector.shape_cast %46 : vector<1x256xi1> to vector<1x256xi1>
    %895 = vector.broadcast %894 : vector<1x256xi1> to vector<16x256xi1>
    %896 = vector.broadcast %cst_430 : f32 to vector<16x256xf32>
    %897 = arith.select %895, %893, %896 : vector<16x256xi1>, vector<16x256xf32>
    %c24_431 = arith.constant 24 : index
    %c0_432 = arith.constant 0 : index
    %898 = vector.load %arg13[%c24_431, %c0_432] : memref<216x256xf32, #tpu.memory_space<vmem>>, vector<16x256xf32>
    tpu.vector_store %arg13[%c24_431, %c0_432], %897 {strides = array<i32>} : memref<216x256xf32, #tpu.memory_space<vmem>>, vector<16x256xf32>,
    %c16_i32_433 = arith.constant 16 : i32
    %899 = tpu.dynamic_rotate %605 by %c16_i32_433 dim 1 : vector<8x256xf32>, i32 -> vector<8x256xf32>
    %cst_434 = arith.constant 0.000000e+00 : f32
    %900 = vector.shape_cast %46 : vector<1x256xi1> to vector<1x256xi1>
    %901 = vector.broadcast %900 : vector<1x256xi1> to vector<8x256xi1>
    %902 = vector.broadcast %cst_434 : f32 to vector<8x256xf32>
    %903 = arith.select %901, %899, %902 : vector<8x256xi1>, vector<8x256xf32>
    %c40_435 = arith.constant 40 : index
    %c0_436 = arith.constant 0 : index
    %904 = vector.load %arg13[%c40_435, %c0_436] : memref<216x256xf32, #tpu.memory_space<vmem>>, vector<8x256xf32>
    tpu.vector_store %arg13[%c40_435, %c0_436], %903 {strides = array<i32>} : memref<216x256xf32, #tpu.memory_space<vmem>>, vector<8x256xf32>,
    %c15_i32_437 = arith.constant 15 : i32
    %905 = tpu.dynamic_rotate %880 by %c15_i32_437 dim 1 : vector<16x256xf32>, i32 -> vector<16x256xf32>
    %cst_438 = arith.constant 0.000000e+00 : f32
    %906 = vector.shape_cast %66 : vector<1x256xi1> to vector<1x256xi1>
    %907 = vector.broadcast %906 : vector<1x256xi1> to vector<16x256xi1>
    %908 = vector.broadcast %cst_438 : f32 to vector<16x256xf32>
    %909 = arith.select %907, %905, %908 : vector<16x256xi1>, vector<16x256xf32>
    %c48_439 = arith.constant 48 : index
    %c0_440 = arith.constant 0 : index
    %910 = vector.load %arg13[%c48_439, %c0_440] : memref<216x256xf32, #tpu.memory_space<vmem>>, vector<16x256xf32>
    tpu.vector_store %arg13[%c48_439, %c0_440], %909 {strides = array<i32>} : memref<216x256xf32, #tpu.memory_space<vmem>>, vector<16x256xf32>,
    %c15_i32_441 = arith.constant 15 : i32
    %911 = tpu.dynamic_rotate %605 by %c15_i32_441 dim 1 : vector<8x256xf32>, i32 -> vector<8x256xf32>
    %cst_442 = arith.constant 0.000000e+00 : f32
    %912 = vector.shape_cast %66 : vector<1x256xi1> to vector<1x256xi1>
    %913 = vector.broadcast %912 : vector<1x256xi1> to vector<8x256xi1>
    %914 = vector.broadcast %cst_442 : f32 to vector<8x256xf32>
    %915 = arith.select %913, %911, %914 : vector<8x256xi1>, vector<8x256xf32>
    %c64_443 = arith.constant 64 : index
    %c0_444 = arith.constant 0 : index
    %916 = vector.load %arg13[%c64_443, %c0_444] : memref<216x256xf32, #tpu.memory_space<vmem>>, vector<8x256xf32>
    tpu.vector_store %arg13[%c64_443, %c0_444], %915 {strides = array<i32>} : memref<216x256xf32, #tpu.memory_space<vmem>>, vector<8x256xf32>,
    %c1_i32_445 = arith.constant 1 : i32
    %917 = tpu.dynamic_rotate %880 by %c1_i32_445 dim 1 : vector<16x256xf32>, i32 -> vector<16x256xf32>
    %cst_446 = arith.constant 0.000000e+00 : f32
    %918 = vector.shape_cast %86 : vector<1x256xi1> to vector<1x256xi1>
    %919 = vector.broadcast %918 : vector<1x256xi1> to vector<16x256xi1>
    %920 = vector.broadcast %cst_446 : f32 to vector<16x256xf32>
    %921 = arith.select %919, %917, %920 : vector<16x256xi1>, vector<16x256xf32>
    %c72 = arith.constant 72 : index
    %c0_447 = arith.constant 0 : index
    %922 = vector.load %arg13[%c72, %c0_447] : memref<216x256xf32, #tpu.memory_space<vmem>>, vector<16x256xf32>
    tpu.vector_store %arg13[%c72, %c0_447], %921 {strides = array<i32>} : memref<216x256xf32, #tpu.memory_space<vmem>>, vector<16x256xf32>,
    %c1_i32_448 = arith.constant 1 : i32
    %923 = tpu.dynamic_rotate %605 by %c1_i32_448 dim 1 : vector<8x256xf32>, i32 -> vector<8x256xf32>
    %cst_449 = arith.constant 0.000000e+00 : f32
    %924 = vector.shape_cast %86 : vector<1x256xi1> to vector<1x256xi1>
    %925 = vector.broadcast %924 : vector<1x256xi1> to vector<8x256xi1>
    %926 = vector.broadcast %cst_449 : f32 to vector<8x256xf32>
    %927 = arith.select %925, %923, %926 : vector<8x256xi1>, vector<8x256xf32>
    %c88 = arith.constant 88 : index
    %c0_450 = arith.constant 0 : index
    %928 = vector.load %arg13[%c88, %c0_450] : memref<216x256xf32, #tpu.memory_space<vmem>>, vector<8x256xf32>
    tpu.vector_store %arg13[%c88, %c0_450], %927 {strides = array<i32>} : memref<216x256xf32, #tpu.memory_space<vmem>>, vector<8x256xf32>,
    %cst_451 = arith.constant 0.000000e+00 : f32
    %929 = vector.shape_cast %106 : vector<1x256xi1> to vector<1x256xi1>
    %930 = vector.broadcast %929 : vector<1x256xi1> to vector<16x256xi1>
    %931 = vector.broadcast %cst_451 : f32 to vector<16x256xf32>
    %932 = arith.select %930, %880, %931 : vector<16x256xi1>, vector<16x256xf32>
    %c96_452 = arith.constant 96 : index
    %c0_453 = arith.constant 0 : index
    %933 = vector.load %arg13[%c96_452, %c0_453] : memref<216x256xf32, #tpu.memory_space<vmem>>, vector<16x256xf32>
    tpu.vector_store %arg13[%c96_452, %c0_453], %932 {strides = array<i32>} : memref<216x256xf32, #tpu.memory_space<vmem>>, vector<16x256xf32>,
    %cst_454 = arith.constant 0.000000e+00 : f32
    %934 = vector.shape_cast %106 : vector<1x256xi1> to vector<1x256xi1>
    %935 = vector.broadcast %934 : vector<1x256xi1> to vector<8x256xi1>
    %936 = vector.broadcast %cst_454 : f32 to vector<8x256xf32>
    %937 = arith.select %935, %605, %936 : vector<8x256xi1>, vector<8x256xf32>
    %c112_455 = arith.constant 112 : index
    %c0_456 = arith.constant 0 : index
    %938 = vector.load %arg13[%c112_455, %c0_456] : memref<216x256xf32, #tpu.memory_space<vmem>>, vector<8x256xf32>
    tpu.vector_store %arg13[%c112_455, %c0_456], %937 {strides = array<i32>} : memref<216x256xf32, #tpu.memory_space<vmem>>, vector<8x256xf32>,
    %c255_i32_457 = arith.constant 255 : i32
    %939 = tpu.dynamic_rotate %880 by %c255_i32_457 dim 1 : vector<16x256xf32>, i32 -> vector<16x256xf32>
    %cst_458 = arith.constant 0.000000e+00 : f32
    %940 = vector.shape_cast %126 : vector<1x256xi1> to vector<1x256xi1>
    %941 = vector.broadcast %940 : vector<1x256xi1> to vector<16x256xi1>
    %942 = vector.broadcast %cst_458 : f32 to vector<16x256xf32>
    %943 = arith.select %941, %939, %942 : vector<16x256xi1>, vector<16x256xf32>
    %c120 = arith.constant 120 : index
    %c0_459 = arith.constant 0 : index
    %944 = vector.load %arg13[%c120, %c0_459] : memref<216x256xf32, #tpu.memory_space<vmem>>, vector<16x256xf32>
    tpu.vector_store %arg13[%c120, %c0_459], %943 {strides = array<i32>} : memref<216x256xf32, #tpu.memory_space<vmem>>, vector<16x256xf32>,
    %c255_i32_460 = arith.constant 255 : i32
    %945 = tpu.dynamic_rotate %605 by %c255_i32_460 dim 1 : vector<8x256xf32>, i32 -> vector<8x256xf32>
    %cst_461 = arith.constant 0.000000e+00 : f32
    %946 = vector.shape_cast %126 : vector<1x256xi1> to vector<1x256xi1>
    %947 = vector.broadcast %946 : vector<1x256xi1> to vector<8x256xi1>
    %948 = vector.broadcast %cst_461 : f32 to vector<8x256xf32>
    %949 = arith.select %947, %945, %948 : vector<8x256xi1>, vector<8x256xf32>
    %c136 = arith.constant 136 : index
    %c0_462 = arith.constant 0 : index
    %950 = vector.load %arg13[%c136, %c0_462] : memref<216x256xf32, #tpu.memory_space<vmem>>, vector<8x256xf32>
    tpu.vector_store %arg13[%c136, %c0_462], %949 {strides = array<i32>} : memref<216x256xf32, #tpu.memory_space<vmem>>, vector<8x256xf32>,
    %c241_i32_463 = arith.constant 241 : i32
    %951 = tpu.dynamic_rotate %880 by %c241_i32_463 dim 1 : vector<16x256xf32>, i32 -> vector<16x256xf32>
    %cst_464 = arith.constant 0.000000e+00 : f32
    %952 = vector.shape_cast %146 : vector<1x256xi1> to vector<1x256xi1>
    %953 = vector.broadcast %952 : vector<1x256xi1> to vector<16x256xi1>
    %954 = vector.broadcast %cst_464 : f32 to vector<16x256xf32>
    %955 = arith.select %953, %951, %954 : vector<16x256xi1>, vector<16x256xf32>
    %c144 = arith.constant 144 : index
    %c0_465 = arith.constant 0 : index
    %956 = vector.load %arg13[%c144, %c0_465] : memref<216x256xf32, #tpu.memory_space<vmem>>, vector<16x256xf32>
    tpu.vector_store %arg13[%c144, %c0_465], %955 {strides = array<i32>} : memref<216x256xf32, #tpu.memory_space<vmem>>, vector<16x256xf32>,
    %c241_i32_466 = arith.constant 241 : i32
    %957 = tpu.dynamic_rotate %605 by %c241_i32_466 dim 1 : vector<8x256xf32>, i32 -> vector<8x256xf32>
    %cst_467 = arith.constant 0.000000e+00 : f32
    %958 = vector.shape_cast %146 : vector<1x256xi1> to vector<1x256xi1>
    %959 = vector.broadcast %958 : vector<1x256xi1> to vector<8x256xi1>
    %960 = vector.broadcast %cst_467 : f32 to vector<8x256xf32>
    %961 = arith.select %959, %957, %960 : vector<8x256xi1>, vector<8x256xf32>
    %c160 = arith.constant 160 : index
    %c0_468 = arith.constant 0 : index
    %962 = vector.load %arg13[%c160, %c0_468] : memref<216x256xf32, #tpu.memory_space<vmem>>, vector<8x256xf32>
    tpu.vector_store %arg13[%c160, %c0_468], %961 {strides = array<i32>} : memref<216x256xf32, #tpu.memory_space<vmem>>, vector<8x256xf32>,
    %c240_i32_469 = arith.constant 240 : i32
    %963 = tpu.dynamic_rotate %880 by %c240_i32_469 dim 1 : vector<16x256xf32>, i32 -> vector<16x256xf32>
    %cst_470 = arith.constant 0.000000e+00 : f32
    %964 = vector.shape_cast %166 : vector<1x256xi1> to vector<1x256xi1>
    %965 = vector.broadcast %964 : vector<1x256xi1> to vector<16x256xi1>
    %966 = vector.broadcast %cst_470 : f32 to vector<16x256xf32>
    %967 = arith.select %965, %963, %966 : vector<16x256xi1>, vector<16x256xf32>
    %c168 = arith.constant 168 : index
    %c0_471 = arith.constant 0 : index
    %968 = vector.load %arg13[%c168, %c0_471] : memref<216x256xf32, #tpu.memory_space<vmem>>, vector<16x256xf32>
    tpu.vector_store %arg13[%c168, %c0_471], %967 {strides = array<i32>} : memref<216x256xf32, #tpu.memory_space<vmem>>, vector<16x256xf32>,
    %c240_i32_472 = arith.constant 240 : i32
    %969 = tpu.dynamic_rotate %605 by %c240_i32_472 dim 1 : vector<8x256xf32>, i32 -> vector<8x256xf32>
    %cst_473 = arith.constant 0.000000e+00 : f32
    %970 = vector.shape_cast %166 : vector<1x256xi1> to vector<1x256xi1>
    %971 = vector.broadcast %970 : vector<1x256xi1> to vector<8x256xi1>
    %972 = vector.broadcast %cst_473 : f32 to vector<8x256xf32>
    %973 = arith.select %971, %969, %972 : vector<8x256xi1>, vector<8x256xf32>
    %c184 = arith.constant 184 : index
    %c0_474 = arith.constant 0 : index
    %974 = vector.load %arg13[%c184, %c0_474] : memref<216x256xf32, #tpu.memory_space<vmem>>, vector<8x256xf32>
    tpu.vector_store %arg13[%c184, %c0_474], %973 {strides = array<i32>} : memref<216x256xf32, #tpu.memory_space<vmem>>, vector<8x256xf32>,
    %c239_i32_475 = arith.constant 239 : i32
    %975 = tpu.dynamic_rotate %880 by %c239_i32_475 dim 1 : vector<16x256xf32>, i32 -> vector<16x256xf32>
    %cst_476 = arith.constant 0.000000e+00 : f32
    %976 = vector.shape_cast %186 : vector<1x256xi1> to vector<1x256xi1>
    %977 = vector.broadcast %976 : vector<1x256xi1> to vector<16x256xi1>
    %978 = vector.broadcast %cst_476 : f32 to vector<16x256xf32>
    %979 = arith.select %977, %975, %978 : vector<16x256xi1>, vector<16x256xf32>
    %c192 = arith.constant 192 : index
    %c0_477 = arith.constant 0 : index
    %980 = vector.load %arg13[%c192, %c0_477] : memref<216x256xf32, #tpu.memory_space<vmem>>, vector<16x256xf32>
    tpu.vector_store %arg13[%c192, %c0_477], %979 {strides = array<i32>} : memref<216x256xf32, #tpu.memory_space<vmem>>, vector<16x256xf32>,
    %c239_i32_478 = arith.constant 239 : i32
    %981 = tpu.dynamic_rotate %605 by %c239_i32_478 dim 1 : vector<8x256xf32>, i32 -> vector<8x256xf32>
    %cst_479 = arith.constant 0.000000e+00 : f32
    %982 = vector.shape_cast %186 : vector<1x256xi1> to vector<1x256xi1>
    %983 = vector.broadcast %982 : vector<1x256xi1> to vector<8x256xi1>
    %984 = vector.broadcast %cst_479 : f32 to vector<8x256xf32>
    %985 = arith.select %983, %981, %984 : vector<8x256xi1>, vector<8x256xf32>
    %c208 = arith.constant 208 : index
    %c0_480 = arith.constant 0 : index
    %986 = vector.load %arg13[%c208, %c0_480] : memref<216x256xf32, #tpu.memory_space<vmem>>, vector<8x256xf32>
    tpu.vector_store %arg13[%c208, %c0_480], %985 {strides = array<i32>} : memref<216x256xf32, #tpu.memory_space<vmem>>, vector<8x256xf32>,
    %c5 = arith.constant 5 : index
    %c0_481 = arith.constant 0 : index
    %c0_482 = arith.constant 0 : index
    %987 = vector.load %arg2[%c5, %c0_481, %c0_482] : memref<7x24x216xbf16, #tpu.memory_space<vmem>>, vector<1x8x216xbf16>
    %988 = vector.shape_cast %987 : vector<1x8x216xbf16> to vector<8x216xbf16>
    %c0_483 = arith.constant 0 : index
    %c0_484 = arith.constant 0 : index
    %989 = vector.load %arg13[%c0_483, %c0_484] : memref<216x256xf32, #tpu.memory_space<vmem>>, vector<216x256xf32>
    %990 = arith.truncf %989 : vector<216x256xf32> to vector<216x256xbf16>
    %cst_485 = arith.constant dense<0.000000e+00> : vector<8x256xf32>
    %991 = tpu.matmul %988, %990, %cst_485 {dimension_numbers = #tpu.dot_dimension_numbers<[1], [0], [0], [1], [0, 0, 1, 1], [], []>} : vector<8x216xbf16>, vector<216x256xbf16>, vector<8x256xf32> -> vector<8x256xf32>
    %cst_486 = arith.constant dense<0.000000e+00> : vector<8xf32>
    %992 = vector.multi_reduction <add>, %991, %cst_486 [1] : vector<8x256xf32> to vector<8xf32>
    %993 = vector.shape_cast %992 : vector<8xf32> to vector<8x1xf32>
    %cst_487 = arith.constant 3.906250e-03 : f32
    %994 = vector.broadcast %cst_487 : f32 to vector<8x1xf32>
    %995 = arith.mulf %993, %994 : vector<8x1xf32>
    %996 = vector.broadcast %995 : vector<8x1xf32> to vector<8x256xf32>
    %997 = arith.subf %991, %996 : vector<8x256xf32>
    %998 = arith.mulf %997, %997 : vector<8x256xf32>
    %cst_488 = arith.constant dense<0.000000e+00> : vector<8xf32>
    %999 = vector.multi_reduction <add>, %998, %cst_488 [1] : vector<8x256xf32> to vector<8xf32>
    %1000 = vector.shape_cast %999 : vector<8xf32> to vector<8x1xf32>
    %cst_489 = arith.constant 3.906250e-03 : f32
    %1001 = vector.broadcast %cst_489 : f32 to vector<8x1xf32>
    %1002 = arith.mulf %1000, %1001 : vector<8x1xf32>
    %c5_490 = arith.constant 5 : index
    %c0_491 = arith.constant 0 : index
    %c0_492 = arith.constant 0 : index
    %1003 = vector.load %arg3[%c5_490, %c0_491, %c0_492] : memref<7x24x2xf32, #tpu.memory_space<vmem>>, vector<1x8x1xf32>
    %1004 = vector.shape_cast %1003 : vector<1x8x1xf32> to vector<8x1xf32>
    %c5_493 = arith.constant 5 : index
    %c0_494 = arith.constant 0 : index
    %c1_495 = arith.constant 1 : index
    %1005 = vector.load %arg3[%c5_493, %c0_494, %c1_495] : memref<7x24x2xf32, #tpu.memory_space<vmem>>, vector<1x8x1xf32>
    %1006 = vector.shape_cast %1005 : vector<1x8x1xf32> to vector<8x1xf32>
    %cst_496 = arith.constant 9.99999974E-6 : f32
    %1007 = vector.broadcast %cst_496 : f32 to vector<8x1xf32>
    %1008 = arith.addf %1002, %1007 : vector<8x1xf32>
    %1009 = math.rsqrt %1008 : vector<8x1xf32>
    %1010 = vector.broadcast %1009 : vector<8x1xf32> to vector<8x256xf32>
    %1011 = arith.mulf %997, %1010 : vector<8x256xf32>
    %1012 = vector.broadcast %1004 : vector<8x1xf32> to vector<8x256xf32>
    %1013 = arith.mulf %1011, %1012 : vector<8x256xf32>
    %1014 = vector.broadcast %1006 : vector<8x1xf32> to vector<8x256xf32>
    %1015 = arith.addf %1013, %1014 : vector<8x256xf32>
    %cst_497 = arith.constant 0.000000e+00 : f32
    %1016 = vector.broadcast %cst_497 : f32 to vector<8x256xf32>
    %1017 = arith.cmpf oge, %1015, %1016 : vector<8x256xf32>
    %cst_498 = arith.constant 0.00999999977 : f32
    %1018 = vector.broadcast %cst_498 : f32 to vector<8x256xf32>
    %1019 = arith.mulf %1018, %1015 : vector<8x256xf32>
    %1020 = arith.select %1017, %1015, %1019 : vector<8x256xi1>, vector<8x256xf32>
    %c17_i32_499 = arith.constant 17 : i32
    %1021 = tpu.dynamic_rotate %1020 by %c17_i32_499 dim 1 : vector<8x256xf32>, i32 -> vector<8x256xf32>
    %cst_500 = arith.constant 0.000000e+00 : f32
    %1022 = vector.shape_cast %26 : vector<1x256xi1> to vector<1x256xi1>
    %1023 = vector.broadcast %1022 : vector<1x256xi1> to vector<8x256xi1>
    %1024 = vector.broadcast %cst_500 : f32 to vector<8x256xf32>
    %1025 = arith.select %1023, %1021, %1024 : vector<8x256xi1>, vector<8x256xf32>
    %c0_501 = arith.constant 0 : index
    %c0_502 = arith.constant 0 : index
    %1026 = vector.load %arg13[%c0_501, %c0_502] : memref<216x256xf32, #tpu.memory_space<vmem>>, vector<8x256xf32>
    tpu.vector_store %arg13[%c0_501, %c0_502], %1025 {strides = array<i32>} : memref<216x256xf32, #tpu.memory_space<vmem>>, vector<8x256xf32>,
    %c16_i32_503 = arith.constant 16 : i32
    %1027 = tpu.dynamic_rotate %1020 by %c16_i32_503 dim 1 : vector<8x256xf32>, i32 -> vector<8x256xf32>
    %cst_504 = arith.constant 0.000000e+00 : f32
    %1028 = vector.shape_cast %46 : vector<1x256xi1> to vector<1x256xi1>
    %1029 = vector.broadcast %1028 : vector<1x256xi1> to vector<8x256xi1>
    %1030 = vector.broadcast %cst_504 : f32 to vector<8x256xf32>
    %1031 = arith.select %1029, %1027, %1030 : vector<8x256xi1>, vector<8x256xf32>
    %c8_505 = arith.constant 8 : index
    %c0_506 = arith.constant 0 : index
    %1032 = vector.load %arg13[%c8_505, %c0_506] : memref<216x256xf32, #tpu.memory_space<vmem>>, vector<8x256xf32>
    tpu.vector_store %arg13[%c8_505, %c0_506], %1031 {strides = array<i32>} : memref<216x256xf32, #tpu.memory_space<vmem>>, vector<8x256xf32>,
    %c15_i32_507 = arith.constant 15 : i32
    %1033 = tpu.dynamic_rotate %1020 by %c15_i32_507 dim 1 : vector<8x256xf32>, i32 -> vector<8x256xf32>
    %cst_508 = arith.constant 0.000000e+00 : f32
    %1034 = vector.shape_cast %66 : vector<1x256xi1> to vector<1x256xi1>
    %1035 = vector.broadcast %1034 : vector<1x256xi1> to vector<8x256xi1>
    %1036 = vector.broadcast %cst_508 : f32 to vector<8x256xf32>
    %1037 = arith.select %1035, %1033, %1036 : vector<8x256xi1>, vector<8x256xf32>
    %c16_509 = arith.constant 16 : index
    %c0_510 = arith.constant 0 : index
    %1038 = vector.load %arg13[%c16_509, %c0_510] : memref<216x256xf32, #tpu.memory_space<vmem>>, vector<8x256xf32>
    tpu.vector_store %arg13[%c16_509, %c0_510], %1037 {strides = array<i32>} : memref<216x256xf32, #tpu.memory_space<vmem>>, vector<8x256xf32>,
    %c1_i32_511 = arith.constant 1 : i32
    %1039 = tpu.dynamic_rotate %1020 by %c1_i32_511 dim 1 : vector<8x256xf32>, i32 -> vector<8x256xf32>
    %cst_512 = arith.constant 0.000000e+00 : f32
    %1040 = vector.shape_cast %86 : vector<1x256xi1> to vector<1x256xi1>
    %1041 = vector.broadcast %1040 : vector<1x256xi1> to vector<8x256xi1>
    %1042 = vector.broadcast %cst_512 : f32 to vector<8x256xf32>
    %1043 = arith.select %1041, %1039, %1042 : vector<8x256xi1>, vector<8x256xf32>
    %c24_513 = arith.constant 24 : index
    %c0_514 = arith.constant 0 : index
    %1044 = vector.load %arg13[%c24_513, %c0_514] : memref<216x256xf32, #tpu.memory_space<vmem>>, vector<8x256xf32>
    tpu.vector_store %arg13[%c24_513, %c0_514], %1043 {strides = array<i32>} : memref<216x256xf32, #tpu.memory_space<vmem>>, vector<8x256xf32>,
    %cst_515 = arith.constant 0.000000e+00 : f32
    %1045 = vector.shape_cast %106 : vector<1x256xi1> to vector<1x256xi1>
    %1046 = vector.broadcast %1045 : vector<1x256xi1> to vector<8x256xi1>
    %1047 = vector.broadcast %cst_515 : f32 to vector<8x256xf32>
    %1048 = arith.select %1046, %1020, %1047 : vector<8x256xi1>, vector<8x256xf32>
    %c32_516 = arith.constant 32 : index
    %c0_517 = arith.constant 0 : index
    %1049 = vector.load %arg13[%c32_516, %c0_517] : memref<216x256xf32, #tpu.memory_space<vmem>>, vector<8x256xf32>
    tpu.vector_store %arg13[%c32_516, %c0_517], %1048 {strides = array<i32>} : memref<216x256xf32, #tpu.memory_space<vmem>>, vector<8x256xf32>,
    %c255_i32_518 = arith.constant 255 : i32
    %1050 = tpu.dynamic_rotate %1020 by %c255_i32_518 dim 1 : vector<8x256xf32>, i32 -> vector<8x256xf32>
    %cst_519 = arith.constant 0.000000e+00 : f32
    %1051 = vector.shape_cast %126 : vector<1x256xi1> to vector<1x256xi1>
    %1052 = vector.broadcast %1051 : vector<1x256xi1> to vector<8x256xi1>
    %1053 = vector.broadcast %cst_519 : f32 to vector<8x256xf32>
    %1054 = arith.select %1052, %1050, %1053 : vector<8x256xi1>, vector<8x256xf32>
    %c40_520 = arith.constant 40 : index
    %c0_521 = arith.constant 0 : index
    %1055 = vector.load %arg13[%c40_520, %c0_521] : memref<216x256xf32, #tpu.memory_space<vmem>>, vector<8x256xf32>
    tpu.vector_store %arg13[%c40_520, %c0_521], %1054 {strides = array<i32>} : memref<216x256xf32, #tpu.memory_space<vmem>>, vector<8x256xf32>,
    %c241_i32_522 = arith.constant 241 : i32
    %1056 = tpu.dynamic_rotate %1020 by %c241_i32_522 dim 1 : vector<8x256xf32>, i32 -> vector<8x256xf32>
    %cst_523 = arith.constant 0.000000e+00 : f32
    %1057 = vector.shape_cast %146 : vector<1x256xi1> to vector<1x256xi1>
    %1058 = vector.broadcast %1057 : vector<1x256xi1> to vector<8x256xi1>
    %1059 = vector.broadcast %cst_523 : f32 to vector<8x256xf32>
    %1060 = arith.select %1058, %1056, %1059 : vector<8x256xi1>, vector<8x256xf32>
    %c48_524 = arith.constant 48 : index
    %c0_525 = arith.constant 0 : index
    %1061 = vector.load %arg13[%c48_524, %c0_525] : memref<216x256xf32, #tpu.memory_space<vmem>>, vector<8x256xf32>
    tpu.vector_store %arg13[%c48_524, %c0_525], %1060 {strides = array<i32>} : memref<216x256xf32, #tpu.memory_space<vmem>>, vector<8x256xf32>,
    %c240_i32_526 = arith.constant 240 : i32
    %1062 = tpu.dynamic_rotate %1020 by %c240_i32_526 dim 1 : vector<8x256xf32>, i32 -> vector<8x256xf32>
    %cst_527 = arith.constant 0.000000e+00 : f32
    %1063 = vector.shape_cast %166 : vector<1x256xi1> to vector<1x256xi1>
    %1064 = vector.broadcast %1063 : vector<1x256xi1> to vector<8x256xi1>
    %1065 = vector.broadcast %cst_527 : f32 to vector<8x256xf32>
    %1066 = arith.select %1064, %1062, %1065 : vector<8x256xi1>, vector<8x256xf32>
    %c56_528 = arith.constant 56 : index
    %c0_529 = arith.constant 0 : index
    %1067 = vector.load %arg13[%c56_528, %c0_529] : memref<216x256xf32, #tpu.memory_space<vmem>>, vector<8x256xf32>
    tpu.vector_store %arg13[%c56_528, %c0_529], %1066 {strides = array<i32>} : memref<216x256xf32, #tpu.memory_space<vmem>>, vector<8x256xf32>,
    %c239_i32_530 = arith.constant 239 : i32
    %1068 = tpu.dynamic_rotate %1020 by %c239_i32_530 dim 1 : vector<8x256xf32>, i32 -> vector<8x256xf32>
    %cst_531 = arith.constant 0.000000e+00 : f32
    %1069 = vector.shape_cast %186 : vector<1x256xi1> to vector<1x256xi1>
    %1070 = vector.broadcast %1069 : vector<1x256xi1> to vector<8x256xi1>
    %1071 = vector.broadcast %cst_531 : f32 to vector<8x256xf32>
    %1072 = arith.select %1070, %1068, %1071 : vector<8x256xi1>, vector<8x256xf32>
    %c64_532 = arith.constant 64 : index
    %c0_533 = arith.constant 0 : index
    %1073 = vector.load %arg13[%c64_532, %c0_533] : memref<216x256xf32, #tpu.memory_space<vmem>>, vector<8x256xf32>
    tpu.vector_store %arg13[%c64_532, %c0_533], %1072 {strides = array<i32>} : memref<216x256xf32, #tpu.memory_space<vmem>>, vector<8x256xf32>,
    %c6 = arith.constant 6 : index
    %c0_534 = arith.constant 0 : index
    %c0_535 = arith.constant 0 : index
    %1074 = vector.load %arg2[%c6, %c0_534, %c0_535] : memref<7x24x216xbf16, #tpu.memory_space<vmem>>, vector<1x8x72xbf16>
    %1075 = vector.shape_cast %1074 : vector<1x8x72xbf16> to vector<8x72xbf16>
    %c0_536 = arith.constant 0 : index
    %c0_537 = arith.constant 0 : index
    %1076 = vector.load %arg13[%c0_536, %c0_537] : memref<216x256xf32, #tpu.memory_space<vmem>>, vector<72x256xf32>
    %1077 = arith.truncf %1076 : vector<72x256xf32> to vector<72x256xbf16>
    %cst_538 = arith.constant dense<0.000000e+00> : vector<8x256xf32>
    %1078 = tpu.matmul %1075, %1077, %cst_538 {dimension_numbers = #tpu.dot_dimension_numbers<[1], [0], [0], [1], [0, 0, 1, 1], [], []>} : vector<8x72xbf16>, vector<72x256xbf16>, vector<8x256xf32> -> vector<8x256xf32>
    %cst_539 = arith.constant dense<0.000000e+00> : vector<8xf32>
    %1079 = vector.multi_reduction <add>, %1078, %cst_539 [1] : vector<8x256xf32> to vector<8xf32>
    %1080 = vector.shape_cast %1079 : vector<8xf32> to vector<8x1xf32>
    %cst_540 = arith.constant 3.906250e-03 : f32
    %1081 = vector.broadcast %cst_540 : f32 to vector<8x1xf32>
    %1082 = arith.mulf %1080, %1081 : vector<8x1xf32>
    %1083 = vector.broadcast %1082 : vector<8x1xf32> to vector<8x256xf32>
    %1084 = arith.subf %1078, %1083 : vector<8x256xf32>
    %1085 = arith.mulf %1084, %1084 : vector<8x256xf32>
    %cst_541 = arith.constant dense<0.000000e+00> : vector<8xf32>
    %1086 = vector.multi_reduction <add>, %1085, %cst_541 [1] : vector<8x256xf32> to vector<8xf32>
    %1087 = vector.shape_cast %1086 : vector<8xf32> to vector<8x1xf32>
    %cst_542 = arith.constant 3.906250e-03 : f32
    %1088 = vector.broadcast %cst_542 : f32 to vector<8x1xf32>
    %1089 = arith.mulf %1087, %1088 : vector<8x1xf32>
    %c6_543 = arith.constant 6 : index
    %c0_544 = arith.constant 0 : index
    %c0_545 = arith.constant 0 : index
    %1090 = vector.load %arg3[%c6_543, %c0_544, %c0_545] : memref<7x24x2xf32, #tpu.memory_space<vmem>>, vector<1x8x1xf32>
    %1091 = vector.shape_cast %1090 : vector<1x8x1xf32> to vector<8x1xf32>
    %c6_546 = arith.constant 6 : index
    %c0_547 = arith.constant 0 : index
    %c1_548 = arith.constant 1 : index
    %1092 = vector.load %arg3[%c6_546, %c0_547, %c1_548] : memref<7x24x2xf32, #tpu.memory_space<vmem>>, vector<1x8x1xf32>
    %1093 = vector.shape_cast %1092 : vector<1x8x1xf32> to vector<8x1xf32>
    %cst_549 = arith.constant 9.99999974E-6 : f32
    %1094 = vector.broadcast %cst_549 : f32 to vector<8x1xf32>
    %1095 = arith.addf %1089, %1094 : vector<8x1xf32>
    %1096 = math.rsqrt %1095 : vector<8x1xf32>
    %1097 = vector.broadcast %1096 : vector<8x1xf32> to vector<8x256xf32>
    %1098 = arith.mulf %1084, %1097 : vector<8x256xf32>
    %1099 = vector.broadcast %1091 : vector<8x1xf32> to vector<8x256xf32>
    %1100 = arith.mulf %1098, %1099 : vector<8x256xf32>
    %1101 = vector.broadcast %1093 : vector<8x1xf32> to vector<8x256xf32>
    %1102 = arith.addf %1100, %1101 : vector<8x256xf32>
    %cst_550 = arith.constant 0.000000e+00 : f32
    %1103 = vector.broadcast %cst_550 : f32 to vector<8x256xf32>
    %1104 = arith.cmpf oge, %1102, %1103 : vector<8x256xf32>
    %cst_551 = arith.constant 0.00999999977 : f32
    %1105 = vector.broadcast %cst_551 : f32 to vector<8x256xf32>
    %1106 = arith.mulf %1105, %1102 : vector<8x256xf32>
    %1107 = arith.select %1104, %1102, %1106 : vector<8x256xi1>, vector<8x256xf32>
    %c0_552 = arith.constant 0 : index
    %c0_553 = arith.constant 0 : index
    %1108 = vector.load %arg4[%c0_552, %c0_553] : memref<2x8xbf16, #tpu.memory_space<vmem>>, vector<2x8xbf16>
    %1109 = arith.truncf %1107 : vector<8x256xf32> to vector<8x256xbf16>
    %cst_554 = arith.constant dense<0.000000e+00> : vector<2x256xf32>
    %1110 = tpu.matmul %1108, %1109, %cst_554 {dimension_numbers = #tpu.dot_dimension_numbers<[1], [0], [0], [1], [0, 0, 1, 1], [], []>} : vector<2x8xbf16>, vector<8x256xbf16>, vector<2x256xf32> -> vector<2x256xf32>
    %c0_555 = arith.constant 0 : index
    %c0_556 = arith.constant 0 : index
    %1111 = vector.load %arg5[%c0_555, %c0_556] : memref<2x1xf32, #tpu.memory_space<vmem>>, vector<2x1xf32>
    %1112 = vector.broadcast %1111 : vector<2x1xf32> to vector<2x256xf32>
    %1113 = arith.addf %1110, %1112 : vector<2x256xf32>
    %1114 = vector.extract_strided_slice %1113 {offsets = [0, 0], sizes = [1, 256], strides = [1, 1]} : vector<2x256xf32> to vector<1x256xf32>
    %1115 = vector.extract_strided_slice %1113 {offsets = [1, 0], sizes = [1, 256], strides = [1, 1]} : vector<2x256xf32> to vector<1x256xf32>
    %1116 = arith.subf %1114, %1115 : vector<1x256xf32>
    %1117 = math.exp %1116 : vector<1x256xf32>
    %cst_557 = arith.constant 1.000000e+00 : f32
    %1118 = vector.broadcast %cst_557 : f32 to vector<1x256xf32>
    %1119 = arith.addf %1118, %1117 : vector<1x256xf32>
    %cst_558 = arith.constant 1.000000e+00 : f32
    %1120 = vector.broadcast %cst_558 : f32 to vector<1x256xf32>
    %1121 = arith.divf %1120, %1119 : vector<1x256xf32>
    %cst_559 = arith.constant 0.000000e+00 : f32
    %1122 = vector.broadcast %cst_559 : f32 to vector<7x256xf32>
    %c17_i32_560 = arith.constant 17 : i32
    %1123 = tpu.dynamic_rotate %1121 by %c17_i32_560 dim 1 : vector<1x256xf32>, i32 -> vector<1x256xf32>
    %cst_561 = arith.constant 0.000000e+00 : f32
    %1124 = vector.broadcast %cst_561 : f32 to vector<1x256xf32>
    %1125 = arith.select %26, %1123, %1124 : vector<1x256xi1>, vector<1x256xf32>
    %c0_562 = arith.constant 0 : index
    %c0_563 = arith.constant 0 : index
    %1126 = vector.load %arg13[%c0_562, %c0_563] : memref<216x256xf32, #tpu.memory_space<vmem>>, vector<1x256xf32>
    tpu.vector_store %arg13[%c0_562, %c0_563], %1125 {strides = array<i32>} : memref<216x256xf32, #tpu.memory_space<vmem>>, vector<1x256xf32>,
    %c17_i32_564 = arith.constant 17 : i32
    %1127 = tpu.dynamic_rotate %1122 by %c17_i32_564 dim 1 : vector<7x256xf32>, i32 -> vector<7x256xf32>
    %cst_565 = arith.constant 0.000000e+00 : f32
    %1128 = vector.shape_cast %26 : vector<1x256xi1> to vector<1x256xi1>
    %1129 = vector.broadcast %1128 : vector<1x256xi1> to vector<7x256xi1>
    %1130 = vector.broadcast %cst_565 : f32 to vector<7x256xf32>
    %1131 = arith.select %1129, %1127, %1130 : vector<7x256xi1>, vector<7x256xf32>
    %c1_566 = arith.constant 1 : index
    %c0_567 = arith.constant 0 : index
    %1132 = vector.load %arg13[%c1_566, %c0_567] : memref<216x256xf32, #tpu.memory_space<vmem>>, vector<7x256xf32>
    tpu.vector_store %arg13[%c1_566, %c0_567], %1131 {strides = array<i32>} : memref<216x256xf32, #tpu.memory_space<vmem>>, vector<7x256xf32>,
    %c16_i32_568 = arith.constant 16 : i32
    %1133 = tpu.dynamic_rotate %1121 by %c16_i32_568 dim 1 : vector<1x256xf32>, i32 -> vector<1x256xf32>
    %cst_569 = arith.constant 0.000000e+00 : f32
    %1134 = vector.broadcast %cst_569 : f32 to vector<1x256xf32>
    %1135 = arith.select %46, %1133, %1134 : vector<1x256xi1>, vector<1x256xf32>
    %c8_570 = arith.constant 8 : index
    %c0_571 = arith.constant 0 : index
    %1136 = vector.load %arg13[%c8_570, %c0_571] : memref<216x256xf32, #tpu.memory_space<vmem>>, vector<1x256xf32>
    tpu.vector_store %arg13[%c8_570, %c0_571], %1135 {strides = array<i32>} : memref<216x256xf32, #tpu.memory_space<vmem>>, vector<1x256xf32>,
    %c16_i32_572 = arith.constant 16 : i32
    %1137 = tpu.dynamic_rotate %1122 by %c16_i32_572 dim 1 : vector<7x256xf32>, i32 -> vector<7x256xf32>
    %cst_573 = arith.constant 0.000000e+00 : f32
    %1138 = vector.shape_cast %46 : vector<1x256xi1> to vector<1x256xi1>
    %1139 = vector.broadcast %1138 : vector<1x256xi1> to vector<7x256xi1>
    %1140 = vector.broadcast %cst_573 : f32 to vector<7x256xf32>
    %1141 = arith.select %1139, %1137, %1140 : vector<7x256xi1>, vector<7x256xf32>
    %c9 = arith.constant 9 : index
    %c0_574 = arith.constant 0 : index
    %1142 = vector.load %arg13[%c9, %c0_574] : memref<216x256xf32, #tpu.memory_space<vmem>>, vector<7x256xf32>
    tpu.vector_store %arg13[%c9, %c0_574], %1141 {strides = array<i32>} : memref<216x256xf32, #tpu.memory_space<vmem>>, vector<7x256xf32>,
    %c15_i32_575 = arith.constant 15 : i32
    %1143 = tpu.dynamic_rotate %1121 by %c15_i32_575 dim 1 : vector<1x256xf32>, i32 -> vector<1x256xf32>
    %cst_576 = arith.constant 0.000000e+00 : f32
    %1144 = vector.broadcast %cst_576 : f32 to vector<1x256xf32>
    %1145 = arith.select %66, %1143, %1144 : vector<1x256xi1>, vector<1x256xf32>
    %c16_577 = arith.constant 16 : index
    %c0_578 = arith.constant 0 : index
    %1146 = vector.load %arg13[%c16_577, %c0_578] : memref<216x256xf32, #tpu.memory_space<vmem>>, vector<1x256xf32>
    tpu.vector_store %arg13[%c16_577, %c0_578], %1145 {strides = array<i32>} : memref<216x256xf32, #tpu.memory_space<vmem>>, vector<1x256xf32>,
    %c15_i32_579 = arith.constant 15 : i32
    %1147 = tpu.dynamic_rotate %1122 by %c15_i32_579 dim 1 : vector<7x256xf32>, i32 -> vector<7x256xf32>
    %cst_580 = arith.constant 0.000000e+00 : f32
    %1148 = vector.shape_cast %66 : vector<1x256xi1> to vector<1x256xi1>
    %1149 = vector.broadcast %1148 : vector<1x256xi1> to vector<7x256xi1>
    %1150 = vector.broadcast %cst_580 : f32 to vector<7x256xf32>
    %1151 = arith.select %1149, %1147, %1150 : vector<7x256xi1>, vector<7x256xf32>
    %c17 = arith.constant 17 : index
    %c0_581 = arith.constant 0 : index
    %1152 = vector.load %arg13[%c17, %c0_581] : memref<216x256xf32, #tpu.memory_space<vmem>>, vector<7x256xf32>
    tpu.vector_store %arg13[%c17, %c0_581], %1151 {strides = array<i32>} : memref<216x256xf32, #tpu.memory_space<vmem>>, vector<7x256xf32>,
    %c1_i32_582 = arith.constant 1 : i32
    %1153 = tpu.dynamic_rotate %1121 by %c1_i32_582 dim 1 : vector<1x256xf32>, i32 -> vector<1x256xf32>
    %cst_583 = arith.constant 0.000000e+00 : f32
    %1154 = vector.broadcast %cst_583 : f32 to vector<1x256xf32>
    %1155 = arith.select %86, %1153, %1154 : vector<1x256xi1>, vector<1x256xf32>
    %c24_584 = arith.constant 24 : index
    %c0_585 = arith.constant 0 : index
    %1156 = vector.load %arg13[%c24_584, %c0_585] : memref<216x256xf32, #tpu.memory_space<vmem>>, vector<1x256xf32>
    tpu.vector_store %arg13[%c24_584, %c0_585], %1155 {strides = array<i32>} : memref<216x256xf32, #tpu.memory_space<vmem>>, vector<1x256xf32>,
    %c1_i32_586 = arith.constant 1 : i32
    %1157 = tpu.dynamic_rotate %1122 by %c1_i32_586 dim 1 : vector<7x256xf32>, i32 -> vector<7x256xf32>
    %cst_587 = arith.constant 0.000000e+00 : f32
    %1158 = vector.shape_cast %86 : vector<1x256xi1> to vector<1x256xi1>
    %1159 = vector.broadcast %1158 : vector<1x256xi1> to vector<7x256xi1>
    %1160 = vector.broadcast %cst_587 : f32 to vector<7x256xf32>
    %1161 = arith.select %1159, %1157, %1160 : vector<7x256xi1>, vector<7x256xf32>
    %c25 = arith.constant 25 : index
    %c0_588 = arith.constant 0 : index
    %1162 = vector.load %arg13[%c25, %c0_588] : memref<216x256xf32, #tpu.memory_space<vmem>>, vector<7x256xf32>
    tpu.vector_store %arg13[%c25, %c0_588], %1161 {strides = array<i32>} : memref<216x256xf32, #tpu.memory_space<vmem>>, vector<7x256xf32>,
    %cst_589 = arith.constant 0.000000e+00 : f32
    %1163 = vector.broadcast %cst_589 : f32 to vector<1x256xf32>
    %1164 = arith.select %106, %1121, %1163 : vector<1x256xi1>, vector<1x256xf32>
    %c32_590 = arith.constant 32 : index
    %c0_591 = arith.constant 0 : index
    %1165 = vector.load %arg13[%c32_590, %c0_591] : memref<216x256xf32, #tpu.memory_space<vmem>>, vector<1x256xf32>
    tpu.vector_store %arg13[%c32_590, %c0_591], %1164 {strides = array<i32>} : memref<216x256xf32, #tpu.memory_space<vmem>>, vector<1x256xf32>,
    %cst_592 = arith.constant 0.000000e+00 : f32
    %1166 = vector.shape_cast %106 : vector<1x256xi1> to vector<1x256xi1>
    %1167 = vector.broadcast %1166 : vector<1x256xi1> to vector<7x256xi1>
    %1168 = vector.broadcast %cst_592 : f32 to vector<7x256xf32>
    %1169 = arith.select %1167, %1122, %1168 : vector<7x256xi1>, vector<7x256xf32>
    %c33 = arith.constant 33 : index
    %c0_593 = arith.constant 0 : index
    %1170 = vector.load %arg13[%c33, %c0_593] : memref<216x256xf32, #tpu.memory_space<vmem>>, vector<7x256xf32>
    tpu.vector_store %arg13[%c33, %c0_593], %1169 {strides = array<i32>} : memref<216x256xf32, #tpu.memory_space<vmem>>, vector<7x256xf32>,
    %c255_i32_594 = arith.constant 255 : i32
    %1171 = tpu.dynamic_rotate %1121 by %c255_i32_594 dim 1 : vector<1x256xf32>, i32 -> vector<1x256xf32>
    %cst_595 = arith.constant 0.000000e+00 : f32
    %1172 = vector.broadcast %cst_595 : f32 to vector<1x256xf32>
    %1173 = arith.select %126, %1171, %1172 : vector<1x256xi1>, vector<1x256xf32>
    %c40_596 = arith.constant 40 : index
    %c0_597 = arith.constant 0 : index
    %1174 = vector.load %arg13[%c40_596, %c0_597] : memref<216x256xf32, #tpu.memory_space<vmem>>, vector<1x256xf32>
    tpu.vector_store %arg13[%c40_596, %c0_597], %1173 {strides = array<i32>} : memref<216x256xf32, #tpu.memory_space<vmem>>, vector<1x256xf32>,
    %c255_i32_598 = arith.constant 255 : i32
    %1175 = tpu.dynamic_rotate %1122 by %c255_i32_598 dim 1 : vector<7x256xf32>, i32 -> vector<7x256xf32>
    %cst_599 = arith.constant 0.000000e+00 : f32
    %1176 = vector.shape_cast %126 : vector<1x256xi1> to vector<1x256xi1>
    %1177 = vector.broadcast %1176 : vector<1x256xi1> to vector<7x256xi1>
    %1178 = vector.broadcast %cst_599 : f32 to vector<7x256xf32>
    %1179 = arith.select %1177, %1175, %1178 : vector<7x256xi1>, vector<7x256xf32>
    %c41 = arith.constant 41 : index
    %c0_600 = arith.constant 0 : index
    %1180 = vector.load %arg13[%c41, %c0_600] : memref<216x256xf32, #tpu.memory_space<vmem>>, vector<7x256xf32>
    tpu.vector_store %arg13[%c41, %c0_600], %1179 {strides = array<i32>} : memref<216x256xf32, #tpu.memory_space<vmem>>, vector<7x256xf32>,
    %c241_i32_601 = arith.constant 241 : i32
    %1181 = tpu.dynamic_rotate %1121 by %c241_i32_601 dim 1 : vector<1x256xf32>, i32 -> vector<1x256xf32>
    %cst_602 = arith.constant 0.000000e+00 : f32
    %1182 = vector.broadcast %cst_602 : f32 to vector<1x256xf32>
    %1183 = arith.select %146, %1181, %1182 : vector<1x256xi1>, vector<1x256xf32>
    %c48_603 = arith.constant 48 : index
    %c0_604 = arith.constant 0 : index
    %1184 = vector.load %arg13[%c48_603, %c0_604] : memref<216x256xf32, #tpu.memory_space<vmem>>, vector<1x256xf32>
    tpu.vector_store %arg13[%c48_603, %c0_604], %1183 {strides = array<i32>} : memref<216x256xf32, #tpu.memory_space<vmem>>, vector<1x256xf32>,
    %c241_i32_605 = arith.constant 241 : i32
    %1185 = tpu.dynamic_rotate %1122 by %c241_i32_605 dim 1 : vector<7x256xf32>, i32 -> vector<7x256xf32>
    %cst_606 = arith.constant 0.000000e+00 : f32
    %1186 = vector.shape_cast %146 : vector<1x256xi1> to vector<1x256xi1>
    %1187 = vector.broadcast %1186 : vector<1x256xi1> to vector<7x256xi1>
    %1188 = vector.broadcast %cst_606 : f32 to vector<7x256xf32>
    %1189 = arith.select %1187, %1185, %1188 : vector<7x256xi1>, vector<7x256xf32>
    %c49 = arith.constant 49 : index
    %c0_607 = arith.constant 0 : index
    %1190 = vector.load %arg13[%c49, %c0_607] : memref<216x256xf32, #tpu.memory_space<vmem>>, vector<7x256xf32>
    tpu.vector_store %arg13[%c49, %c0_607], %1189 {strides = array<i32>} : memref<216x256xf32, #tpu.memory_space<vmem>>, vector<7x256xf32>,
    %c240_i32_608 = arith.constant 240 : i32
    %1191 = tpu.dynamic_rotate %1121 by %c240_i32_608 dim 1 : vector<1x256xf32>, i32 -> vector<1x256xf32>
    %cst_609 = arith.constant 0.000000e+00 : f32
    %1192 = vector.broadcast %cst_609 : f32 to vector<1x256xf32>
    %1193 = arith.select %166, %1191, %1192 : vector<1x256xi1>, vector<1x256xf32>
    %c56_610 = arith.constant 56 : index
    %c0_611 = arith.constant 0 : index
    %1194 = vector.load %arg13[%c56_610, %c0_611] : memref<216x256xf32, #tpu.memory_space<vmem>>, vector<1x256xf32>
    tpu.vector_store %arg13[%c56_610, %c0_611], %1193 {strides = array<i32>} : memref<216x256xf32, #tpu.memory_space<vmem>>, vector<1x256xf32>,
    %c240_i32_612 = arith.constant 240 : i32
    %1195 = tpu.dynamic_rotate %1122 by %c240_i32_612 dim 1 : vector<7x256xf32>, i32 -> vector<7x256xf32>
    %cst_613 = arith.constant 0.000000e+00 : f32
    %1196 = vector.shape_cast %166 : vector<1x256xi1> to vector<1x256xi1>
    %1197 = vector.broadcast %1196 : vector<1x256xi1> to vector<7x256xi1>
    %1198 = vector.broadcast %cst_613 : f32 to vector<7x256xf32>
    %1199 = arith.select %1197, %1195, %1198 : vector<7x256xi1>, vector<7x256xf32>
    %c57 = arith.constant 57 : index
    %c0_614 = arith.constant 0 : index
    %1200 = vector.load %arg13[%c57, %c0_614] : memref<216x256xf32, #tpu.memory_space<vmem>>, vector<7x256xf32>
    tpu.vector_store %arg13[%c57, %c0_614], %1199 {strides = array<i32>} : memref<216x256xf32, #tpu.memory_space<vmem>>, vector<7x256xf32>,
    %c239_i32_615 = arith.constant 239 : i32
    %1201 = tpu.dynamic_rotate %1121 by %c239_i32_615 dim 1 : vector<1x256xf32>, i32 -> vector<1x256xf32>
    %cst_616 = arith.constant 0.000000e+00 : f32
    %1202 = vector.broadcast %cst_616 : f32 to vector<1x256xf32>
    %1203 = arith.select %186, %1201, %1202 : vector<1x256xi1>, vector<1x256xf32>
    %c64_617 = arith.constant 64 : index
    %c0_618 = arith.constant 0 : index
    %1204 = vector.load %arg13[%c64_617, %c0_618] : memref<216x256xf32, #tpu.memory_space<vmem>>, vector<1x256xf32>
    tpu.vector_store %arg13[%c64_617, %c0_618], %1203 {strides = array<i32>} : memref<216x256xf32, #tpu.memory_space<vmem>>, vector<1x256xf32>,
    %c239_i32_619 = arith.constant 239 : i32
    %1205 = tpu.dynamic_rotate %1122 by %c239_i32_619 dim 1 : vector<7x256xf32>, i32 -> vector<7x256xf32>
    %cst_620 = arith.constant 0.000000e+00 : f32
    %1206 = vector.shape_cast %186 : vector<1x256xi1> to vector<1x256xi1>
    %1207 = vector.broadcast %1206 : vector<1x256xi1> to vector<7x256xi1>
    %1208 = vector.broadcast %cst_620 : f32 to vector<7x256xf32>
    %1209 = arith.select %1207, %1205, %1208 : vector<7x256xi1>, vector<7x256xf32>
    %c65 = arith.constant 65 : index
    %c0_621 = arith.constant 0 : index
    %1210 = vector.load %arg13[%c65, %c0_621] : memref<216x256xf32, #tpu.memory_space<vmem>>, vector<7x256xf32>
    tpu.vector_store %arg13[%c65, %c0_621], %1209 {strides = array<i32>} : memref<216x256xf32, #tpu.memory_space<vmem>>, vector<7x256xf32>,
    %c0_622 = arith.constant 0 : index
    %c0_623 = arith.constant 0 : index
    %c0_624 = arith.constant 0 : index
    %1211 = vector.load %arg6[%c0_622, %c0_623, %c0_624] : memref<7x24x216xbf16, #tpu.memory_space<vmem>>, vector<1x8x72xbf16>
    %1212 = vector.shape_cast %1211 : vector<1x8x72xbf16> to vector<8x72xbf16>
    %c0_625 = arith.constant 0 : index
    %c0_626 = arith.constant 0 : index
    %1213 = vector.load %arg13[%c0_625, %c0_626] : memref<216x256xf32, #tpu.memory_space<vmem>>, vector<72x256xf32>
    %1214 = arith.truncf %1213 : vector<72x256xf32> to vector<72x256xbf16>
    %cst_627 = arith.constant dense<0.000000e+00> : vector<8x256xf32>
    %1215 = tpu.matmul %1212, %1214, %cst_627 {dimension_numbers = #tpu.dot_dimension_numbers<[1], [0], [0], [1], [0, 0, 1, 1], [], []>} : vector<8x72xbf16>, vector<72x256xbf16>, vector<8x256xf32> -> vector<8x256xf32>
    %cst_628 = arith.constant dense<0.000000e+00> : vector<8xf32>
    %1216 = vector.multi_reduction <add>, %1215, %cst_628 [1] : vector<8x256xf32> to vector<8xf32>
    %1217 = vector.shape_cast %1216 : vector<8xf32> to vector<8x1xf32>
    %cst_629 = arith.constant 3.906250e-03 : f32
    %1218 = vector.broadcast %cst_629 : f32 to vector<8x1xf32>
    %1219 = arith.mulf %1217, %1218 : vector<8x1xf32>
    %1220 = vector.broadcast %1219 : vector<8x1xf32> to vector<8x256xf32>
    %1221 = arith.subf %1215, %1220 : vector<8x256xf32>
    %1222 = arith.mulf %1221, %1221 : vector<8x256xf32>
    %cst_630 = arith.constant dense<0.000000e+00> : vector<8xf32>
    %1223 = vector.multi_reduction <add>, %1222, %cst_630 [1] : vector<8x256xf32> to vector<8xf32>
    %1224 = vector.shape_cast %1223 : vector<8xf32> to vector<8x1xf32>
    %cst_631 = arith.constant 3.906250e-03 : f32
    %1225 = vector.broadcast %cst_631 : f32 to vector<8x1xf32>
    %1226 = arith.mulf %1224, %1225 : vector<8x1xf32>
    %c0_632 = arith.constant 0 : index
    %c0_633 = arith.constant 0 : index
    %c0_634 = arith.constant 0 : index
    %1227 = vector.load %arg7[%c0_632, %c0_633, %c0_634] : memref<7x24x2xf32, #tpu.memory_space<vmem>>, vector<1x8x1xf32>
    %1228 = vector.shape_cast %1227 : vector<1x8x1xf32> to vector<8x1xf32>
    %c0_635 = arith.constant 0 : index
    %c0_636 = arith.constant 0 : index
    %c1_637 = arith.constant 1 : index
    %1229 = vector.load %arg7[%c0_635, %c0_636, %c1_637] : memref<7x24x2xf32, #tpu.memory_space<vmem>>, vector<1x8x1xf32>
    %1230 = vector.shape_cast %1229 : vector<1x8x1xf32> to vector<8x1xf32>
    %cst_638 = arith.constant 9.99999974E-6 : f32
    %1231 = vector.broadcast %cst_638 : f32 to vector<8x1xf32>
    %1232 = arith.addf %1226, %1231 : vector<8x1xf32>
    %1233 = math.rsqrt %1232 : vector<8x1xf32>
    %1234 = vector.broadcast %1233 : vector<8x1xf32> to vector<8x256xf32>
    %1235 = arith.mulf %1221, %1234 : vector<8x256xf32>
    %1236 = vector.broadcast %1228 : vector<8x1xf32> to vector<8x256xf32>
    %1237 = arith.mulf %1235, %1236 : vector<8x256xf32>
    %1238 = vector.broadcast %1230 : vector<8x1xf32> to vector<8x256xf32>
    %1239 = arith.addf %1237, %1238 : vector<8x256xf32>
    %cst_639 = arith.constant 0.000000e+00 : f32
    %1240 = vector.broadcast %cst_639 : f32 to vector<8x256xf32>
    %1241 = arith.cmpf oge, %1239, %1240 : vector<8x256xf32>
    %cst_640 = arith.constant 0.00999999977 : f32
    %1242 = vector.broadcast %cst_640 : f32 to vector<8x256xf32>
    %1243 = arith.mulf %1242, %1239 : vector<8x256xf32>
    %1244 = arith.select %1241, %1239, %1243 : vector<8x256xi1>, vector<8x256xf32>
    %c17_i32_641 = arith.constant 17 : i32
    %1245 = tpu.dynamic_rotate %1244 by %c17_i32_641 dim 1 : vector<8x256xf32>, i32 -> vector<8x256xf32>
    %cst_642 = arith.constant 0.000000e+00 : f32
    %1246 = vector.shape_cast %26 : vector<1x256xi1> to vector<1x256xi1>
    %1247 = vector.broadcast %1246 : vector<1x256xi1> to vector<8x256xi1>
    %1248 = vector.broadcast %cst_642 : f32 to vector<8x256xf32>
    %1249 = arith.select %1247, %1245, %1248 : vector<8x256xi1>, vector<8x256xf32>
    %c0_643 = arith.constant 0 : index
    %c0_644 = arith.constant 0 : index
    %1250 = vector.load %arg13[%c0_643, %c0_644] : memref<216x256xf32, #tpu.memory_space<vmem>>, vector<8x256xf32>
    tpu.vector_store %arg13[%c0_643, %c0_644], %1249 {strides = array<i32>} : memref<216x256xf32, #tpu.memory_space<vmem>>, vector<8x256xf32>,
    %c16_i32_645 = arith.constant 16 : i32
    %1251 = tpu.dynamic_rotate %1244 by %c16_i32_645 dim 1 : vector<8x256xf32>, i32 -> vector<8x256xf32>
    %cst_646 = arith.constant 0.000000e+00 : f32
    %1252 = vector.shape_cast %46 : vector<1x256xi1> to vector<1x256xi1>
    %1253 = vector.broadcast %1252 : vector<1x256xi1> to vector<8x256xi1>
    %1254 = vector.broadcast %cst_646 : f32 to vector<8x256xf32>
    %1255 = arith.select %1253, %1251, %1254 : vector<8x256xi1>, vector<8x256xf32>
    %c8_647 = arith.constant 8 : index
    %c0_648 = arith.constant 0 : index
    %1256 = vector.load %arg13[%c8_647, %c0_648] : memref<216x256xf32, #tpu.memory_space<vmem>>, vector<8x256xf32>
    tpu.vector_store %arg13[%c8_647, %c0_648], %1255 {strides = array<i32>} : memref<216x256xf32, #tpu.memory_space<vmem>>, vector<8x256xf32>,
    %c15_i32_649 = arith.constant 15 : i32
    %1257 = tpu.dynamic_rotate %1244 by %c15_i32_649 dim 1 : vector<8x256xf32>, i32 -> vector<8x256xf32>
    %cst_650 = arith.constant 0.000000e+00 : f32
    %1258 = vector.shape_cast %66 : vector<1x256xi1> to vector<1x256xi1>
    %1259 = vector.broadcast %1258 : vector<1x256xi1> to vector<8x256xi1>
    %1260 = vector.broadcast %cst_650 : f32 to vector<8x256xf32>
    %1261 = arith.select %1259, %1257, %1260 : vector<8x256xi1>, vector<8x256xf32>
    %c16_651 = arith.constant 16 : index
    %c0_652 = arith.constant 0 : index
    %1262 = vector.load %arg13[%c16_651, %c0_652] : memref<216x256xf32, #tpu.memory_space<vmem>>, vector<8x256xf32>
    tpu.vector_store %arg13[%c16_651, %c0_652], %1261 {strides = array<i32>} : memref<216x256xf32, #tpu.memory_space<vmem>>, vector<8x256xf32>,
    %c1_i32_653 = arith.constant 1 : i32
    %1263 = tpu.dynamic_rotate %1244 by %c1_i32_653 dim 1 : vector<8x256xf32>, i32 -> vector<8x256xf32>
    %cst_654 = arith.constant 0.000000e+00 : f32
    %1264 = vector.shape_cast %86 : vector<1x256xi1> to vector<1x256xi1>
    %1265 = vector.broadcast %1264 : vector<1x256xi1> to vector<8x256xi1>
    %1266 = vector.broadcast %cst_654 : f32 to vector<8x256xf32>
    %1267 = arith.select %1265, %1263, %1266 : vector<8x256xi1>, vector<8x256xf32>
    %c24_655 = arith.constant 24 : index
    %c0_656 = arith.constant 0 : index
    %1268 = vector.load %arg13[%c24_655, %c0_656] : memref<216x256xf32, #tpu.memory_space<vmem>>, vector<8x256xf32>
    tpu.vector_store %arg13[%c24_655, %c0_656], %1267 {strides = array<i32>} : memref<216x256xf32, #tpu.memory_space<vmem>>, vector<8x256xf32>,
    %cst_657 = arith.constant 0.000000e+00 : f32
    %1269 = vector.shape_cast %106 : vector<1x256xi1> to vector<1x256xi1>
    %1270 = vector.broadcast %1269 : vector<1x256xi1> to vector<8x256xi1>
    %1271 = vector.broadcast %cst_657 : f32 to vector<8x256xf32>
    %1272 = arith.select %1270, %1244, %1271 : vector<8x256xi1>, vector<8x256xf32>
    %c32_658 = arith.constant 32 : index
    %c0_659 = arith.constant 0 : index
    %1273 = vector.load %arg13[%c32_658, %c0_659] : memref<216x256xf32, #tpu.memory_space<vmem>>, vector<8x256xf32>
    tpu.vector_store %arg13[%c32_658, %c0_659], %1272 {strides = array<i32>} : memref<216x256xf32, #tpu.memory_space<vmem>>, vector<8x256xf32>,
    %c255_i32_660 = arith.constant 255 : i32
    %1274 = tpu.dynamic_rotate %1244 by %c255_i32_660 dim 1 : vector<8x256xf32>, i32 -> vector<8x256xf32>
    %cst_661 = arith.constant 0.000000e+00 : f32
    %1275 = vector.shape_cast %126 : vector<1x256xi1> to vector<1x256xi1>
    %1276 = vector.broadcast %1275 : vector<1x256xi1> to vector<8x256xi1>
    %1277 = vector.broadcast %cst_661 : f32 to vector<8x256xf32>
    %1278 = arith.select %1276, %1274, %1277 : vector<8x256xi1>, vector<8x256xf32>
    %c40_662 = arith.constant 40 : index
    %c0_663 = arith.constant 0 : index
    %1279 = vector.load %arg13[%c40_662, %c0_663] : memref<216x256xf32, #tpu.memory_space<vmem>>, vector<8x256xf32>
    tpu.vector_store %arg13[%c40_662, %c0_663], %1278 {strides = array<i32>} : memref<216x256xf32, #tpu.memory_space<vmem>>, vector<8x256xf32>,
    %c241_i32_664 = arith.constant 241 : i32
    %1280 = tpu.dynamic_rotate %1244 by %c241_i32_664 dim 1 : vector<8x256xf32>, i32 -> vector<8x256xf32>
    %cst_665 = arith.constant 0.000000e+00 : f32
    %1281 = vector.shape_cast %146 : vector<1x256xi1> to vector<1x256xi1>
    %1282 = vector.broadcast %1281 : vector<1x256xi1> to vector<8x256xi1>
    %1283 = vector.broadcast %cst_665 : f32 to vector<8x256xf32>
    %1284 = arith.select %1282, %1280, %1283 : vector<8x256xi1>, vector<8x256xf32>
    %c48_666 = arith.constant 48 : index
    %c0_667 = arith.constant 0 : index
    %1285 = vector.load %arg13[%c48_666, %c0_667] : memref<216x256xf32, #tpu.memory_space<vmem>>, vector<8x256xf32>
    tpu.vector_store %arg13[%c48_666, %c0_667], %1284 {strides = array<i32>} : memref<216x256xf32, #tpu.memory_space<vmem>>, vector<8x256xf32>,
    %c240_i32_668 = arith.constant 240 : i32
    %1286 = tpu.dynamic_rotate %1244 by %c240_i32_668 dim 1 : vector<8x256xf32>, i32 -> vector<8x256xf32>
    %cst_669 = arith.constant 0.000000e+00 : f32
    %1287 = vector.shape_cast %166 : vector<1x256xi1> to vector<1x256xi1>
    %1288 = vector.broadcast %1287 : vector<1x256xi1> to vector<8x256xi1>
    %1289 = vector.broadcast %cst_669 : f32 to vector<8x256xf32>
    %1290 = arith.select %1288, %1286, %1289 : vector<8x256xi1>, vector<8x256xf32>
    %c56_670 = arith.constant 56 : index
    %c0_671 = arith.constant 0 : index
    %1291 = vector.load %arg13[%c56_670, %c0_671] : memref<216x256xf32, #tpu.memory_space<vmem>>, vector<8x256xf32>
    tpu.vector_store %arg13[%c56_670, %c0_671], %1290 {strides = array<i32>} : memref<216x256xf32, #tpu.memory_space<vmem>>, vector<8x256xf32>,
    %c239_i32_672 = arith.constant 239 : i32
    %1292 = tpu.dynamic_rotate %1244 by %c239_i32_672 dim 1 : vector<8x256xf32>, i32 -> vector<8x256xf32>
    %cst_673 = arith.constant 0.000000e+00 : f32
    %1293 = vector.shape_cast %186 : vector<1x256xi1> to vector<1x256xi1>
    %1294 = vector.broadcast %1293 : vector<1x256xi1> to vector<8x256xi1>
    %1295 = vector.broadcast %cst_673 : f32 to vector<8x256xf32>
    %1296 = arith.select %1294, %1292, %1295 : vector<8x256xi1>, vector<8x256xf32>
    %c64_674 = arith.constant 64 : index
    %c0_675 = arith.constant 0 : index
    %1297 = vector.load %arg13[%c64_674, %c0_675] : memref<216x256xf32, #tpu.memory_space<vmem>>, vector<8x256xf32>
    tpu.vector_store %arg13[%c64_674, %c0_675], %1296 {strides = array<i32>} : memref<216x256xf32, #tpu.memory_space<vmem>>, vector<8x256xf32>,
    %c1_676 = arith.constant 1 : index
    %c0_677 = arith.constant 0 : index
    %c0_678 = arith.constant 0 : index
    %1298 = vector.load %arg6[%c1_676, %c0_677, %c0_678] : memref<7x24x216xbf16, #tpu.memory_space<vmem>>, vector<1x8x72xbf16>
    %1299 = vector.shape_cast %1298 : vector<1x8x72xbf16> to vector<8x72xbf16>
    %c0_679 = arith.constant 0 : index
    %c0_680 = arith.constant 0 : index
    %1300 = vector.load %arg13[%c0_679, %c0_680] : memref<216x256xf32, #tpu.memory_space<vmem>>, vector<72x256xf32>
    %1301 = arith.truncf %1300 : vector<72x256xf32> to vector<72x256xbf16>
    %cst_681 = arith.constant dense<0.000000e+00> : vector<8x256xf32>
    %1302 = tpu.matmul %1299, %1301, %cst_681 {dimension_numbers = #tpu.dot_dimension_numbers<[1], [0], [0], [1], [0, 0, 1, 1], [], []>} : vector<8x72xbf16>, vector<72x256xbf16>, vector<8x256xf32> -> vector<8x256xf32>
    %cst_682 = arith.constant dense<0.000000e+00> : vector<8xf32>
    %1303 = vector.multi_reduction <add>, %1302, %cst_682 [1] : vector<8x256xf32> to vector<8xf32>
    %1304 = vector.shape_cast %1303 : vector<8xf32> to vector<8x1xf32>
    %cst_683 = arith.constant 3.906250e-03 : f32
    %1305 = vector.broadcast %cst_683 : f32 to vector<8x1xf32>
    %1306 = arith.mulf %1304, %1305 : vector<8x1xf32>
    %1307 = vector.broadcast %1306 : vector<8x1xf32> to vector<8x256xf32>
    %1308 = arith.subf %1302, %1307 : vector<8x256xf32>
    %1309 = arith.mulf %1308, %1308 : vector<8x256xf32>
    %cst_684 = arith.constant dense<0.000000e+00> : vector<8xf32>
    %1310 = vector.multi_reduction <add>, %1309, %cst_684 [1] : vector<8x256xf32> to vector<8xf32>
    %1311 = vector.shape_cast %1310 : vector<8xf32> to vector<8x1xf32>
    %cst_685 = arith.constant 3.906250e-03 : f32
    %1312 = vector.broadcast %cst_685 : f32 to vector<8x1xf32>
    %1313 = arith.mulf %1311, %1312 : vector<8x1xf32>
    %c1_686 = arith.constant 1 : index
    %c0_687 = arith.constant 0 : index
    %c0_688 = arith.constant 0 : index
    %1314 = vector.load %arg7[%c1_686, %c0_687, %c0_688] : memref<7x24x2xf32, #tpu.memory_space<vmem>>, vector<1x8x1xf32>
    %1315 = vector.shape_cast %1314 : vector<1x8x1xf32> to vector<8x1xf32>
    %c1_689 = arith.constant 1 : index
    %c0_690 = arith.constant 0 : index
    %c1_691 = arith.constant 1 : index
    %1316 = vector.load %arg7[%c1_689, %c0_690, %c1_691] : memref<7x24x2xf32, #tpu.memory_space<vmem>>, vector<1x8x1xf32>
    %1317 = vector.shape_cast %1316 : vector<1x8x1xf32> to vector<8x1xf32>
    %cst_692 = arith.constant 9.99999974E-6 : f32
    %1318 = vector.broadcast %cst_692 : f32 to vector<8x1xf32>
    %1319 = arith.addf %1313, %1318 : vector<8x1xf32>
    %1320 = math.rsqrt %1319 : vector<8x1xf32>
    %1321 = vector.broadcast %1320 : vector<8x1xf32> to vector<8x256xf32>
    %1322 = arith.mulf %1308, %1321 : vector<8x256xf32>
    %1323 = vector.broadcast %1315 : vector<8x1xf32> to vector<8x256xf32>
    %1324 = arith.mulf %1322, %1323 : vector<8x256xf32>
    %1325 = vector.broadcast %1317 : vector<8x1xf32> to vector<8x256xf32>
    %1326 = arith.addf %1324, %1325 : vector<8x256xf32>
    %cst_693 = arith.constant 0.000000e+00 : f32
    %1327 = vector.broadcast %cst_693 : f32 to vector<8x256xf32>
    %1328 = arith.cmpf oge, %1326, %1327 : vector<8x256xf32>
    %cst_694 = arith.constant 0.00999999977 : f32
    %1329 = vector.broadcast %cst_694 : f32 to vector<8x256xf32>
    %1330 = arith.mulf %1329, %1326 : vector<8x256xf32>
    %1331 = arith.select %1328, %1326, %1330 : vector<8x256xi1>, vector<8x256xf32>
    %c17_i32_695 = arith.constant 17 : i32
    %1332 = tpu.dynamic_rotate %1331 by %c17_i32_695 dim 1 : vector<8x256xf32>, i32 -> vector<8x256xf32>
    %cst_696 = arith.constant 0.000000e+00 : f32
    %1333 = vector.shape_cast %26 : vector<1x256xi1> to vector<1x256xi1>
    %1334 = vector.broadcast %1333 : vector<1x256xi1> to vector<8x256xi1>
    %1335 = vector.broadcast %cst_696 : f32 to vector<8x256xf32>
    %1336 = arith.select %1334, %1332, %1335 : vector<8x256xi1>, vector<8x256xf32>
    %c0_697 = arith.constant 0 : index
    %c0_698 = arith.constant 0 : index
    %1337 = vector.load %arg13[%c0_697, %c0_698] : memref<216x256xf32, #tpu.memory_space<vmem>>, vector<8x256xf32>
    tpu.vector_store %arg13[%c0_697, %c0_698], %1336 {strides = array<i32>} : memref<216x256xf32, #tpu.memory_space<vmem>>, vector<8x256xf32>,
    %c16_i32_699 = arith.constant 16 : i32
    %1338 = tpu.dynamic_rotate %1331 by %c16_i32_699 dim 1 : vector<8x256xf32>, i32 -> vector<8x256xf32>
    %cst_700 = arith.constant 0.000000e+00 : f32
    %1339 = vector.shape_cast %46 : vector<1x256xi1> to vector<1x256xi1>
    %1340 = vector.broadcast %1339 : vector<1x256xi1> to vector<8x256xi1>
    %1341 = vector.broadcast %cst_700 : f32 to vector<8x256xf32>
    %1342 = arith.select %1340, %1338, %1341 : vector<8x256xi1>, vector<8x256xf32>
    %c8_701 = arith.constant 8 : index
    %c0_702 = arith.constant 0 : index
    %1343 = vector.load %arg13[%c8_701, %c0_702] : memref<216x256xf32, #tpu.memory_space<vmem>>, vector<8x256xf32>
    tpu.vector_store %arg13[%c8_701, %c0_702], %1342 {strides = array<i32>} : memref<216x256xf32, #tpu.memory_space<vmem>>, vector<8x256xf32>,
    %c15_i32_703 = arith.constant 15 : i32
    %1344 = tpu.dynamic_rotate %1331 by %c15_i32_703 dim 1 : vector<8x256xf32>, i32 -> vector<8x256xf32>
    %cst_704 = arith.constant 0.000000e+00 : f32
    %1345 = vector.shape_cast %66 : vector<1x256xi1> to vector<1x256xi1>
    %1346 = vector.broadcast %1345 : vector<1x256xi1> to vector<8x256xi1>
    %1347 = vector.broadcast %cst_704 : f32 to vector<8x256xf32>
    %1348 = arith.select %1346, %1344, %1347 : vector<8x256xi1>, vector<8x256xf32>
    %c16_705 = arith.constant 16 : index
    %c0_706 = arith.constant 0 : index
    %1349 = vector.load %arg13[%c16_705, %c0_706] : memref<216x256xf32, #tpu.memory_space<vmem>>, vector<8x256xf32>
    tpu.vector_store %arg13[%c16_705, %c0_706], %1348 {strides = array<i32>} : memref<216x256xf32, #tpu.memory_space<vmem>>, vector<8x256xf32>,
    %c1_i32_707 = arith.constant 1 : i32
    %1350 = tpu.dynamic_rotate %1331 by %c1_i32_707 dim 1 : vector<8x256xf32>, i32 -> vector<8x256xf32>
    %cst_708 = arith.constant 0.000000e+00 : f32
    %1351 = vector.shape_cast %86 : vector<1x256xi1> to vector<1x256xi1>
    %1352 = vector.broadcast %1351 : vector<1x256xi1> to vector<8x256xi1>
    %1353 = vector.broadcast %cst_708 : f32 to vector<8x256xf32>
    %1354 = arith.select %1352, %1350, %1353 : vector<8x256xi1>, vector<8x256xf32>
    %c24_709 = arith.constant 24 : index
    %c0_710 = arith.constant 0 : index
    %1355 = vector.load %arg13[%c24_709, %c0_710] : memref<216x256xf32, #tpu.memory_space<vmem>>, vector<8x256xf32>
    tpu.vector_store %arg13[%c24_709, %c0_710], %1354 {strides = array<i32>} : memref<216x256xf32, #tpu.memory_space<vmem>>, vector<8x256xf32>,
    %cst_711 = arith.constant 0.000000e+00 : f32
    %1356 = vector.shape_cast %106 : vector<1x256xi1> to vector<1x256xi1>
    %1357 = vector.broadcast %1356 : vector<1x256xi1> to vector<8x256xi1>
    %1358 = vector.broadcast %cst_711 : f32 to vector<8x256xf32>
    %1359 = arith.select %1357, %1331, %1358 : vector<8x256xi1>, vector<8x256xf32>
    %c32_712 = arith.constant 32 : index
    %c0_713 = arith.constant 0 : index
    %1360 = vector.load %arg13[%c32_712, %c0_713] : memref<216x256xf32, #tpu.memory_space<vmem>>, vector<8x256xf32>
    tpu.vector_store %arg13[%c32_712, %c0_713], %1359 {strides = array<i32>} : memref<216x256xf32, #tpu.memory_space<vmem>>, vector<8x256xf32>,
    %c255_i32_714 = arith.constant 255 : i32
    %1361 = tpu.dynamic_rotate %1331 by %c255_i32_714 dim 1 : vector<8x256xf32>, i32 -> vector<8x256xf32>
    %cst_715 = arith.constant 0.000000e+00 : f32
    %1362 = vector.shape_cast %126 : vector<1x256xi1> to vector<1x256xi1>
    %1363 = vector.broadcast %1362 : vector<1x256xi1> to vector<8x256xi1>
    %1364 = vector.broadcast %cst_715 : f32 to vector<8x256xf32>
    %1365 = arith.select %1363, %1361, %1364 : vector<8x256xi1>, vector<8x256xf32>
    %c40_716 = arith.constant 40 : index
    %c0_717 = arith.constant 0 : index
    %1366 = vector.load %arg13[%c40_716, %c0_717] : memref<216x256xf32, #tpu.memory_space<vmem>>, vector<8x256xf32>
    tpu.vector_store %arg13[%c40_716, %c0_717], %1365 {strides = array<i32>} : memref<216x256xf32, #tpu.memory_space<vmem>>, vector<8x256xf32>,
    %c241_i32_718 = arith.constant 241 : i32
    %1367 = tpu.dynamic_rotate %1331 by %c241_i32_718 dim 1 : vector<8x256xf32>, i32 -> vector<8x256xf32>
    %cst_719 = arith.constant 0.000000e+00 : f32
    %1368 = vector.shape_cast %146 : vector<1x256xi1> to vector<1x256xi1>
    %1369 = vector.broadcast %1368 : vector<1x256xi1> to vector<8x256xi1>
    %1370 = vector.broadcast %cst_719 : f32 to vector<8x256xf32>
    %1371 = arith.select %1369, %1367, %1370 : vector<8x256xi1>, vector<8x256xf32>
    %c48_720 = arith.constant 48 : index
    %c0_721 = arith.constant 0 : index
    %1372 = vector.load %arg13[%c48_720, %c0_721] : memref<216x256xf32, #tpu.memory_space<vmem>>, vector<8x256xf32>
    tpu.vector_store %arg13[%c48_720, %c0_721], %1371 {strides = array<i32>} : memref<216x256xf32, #tpu.memory_space<vmem>>, vector<8x256xf32>,
    %c240_i32_722 = arith.constant 240 : i32
    %1373 = tpu.dynamic_rotate %1331 by %c240_i32_722 dim 1 : vector<8x256xf32>, i32 -> vector<8x256xf32>
    %cst_723 = arith.constant 0.000000e+00 : f32
    %1374 = vector.shape_cast %166 : vector<1x256xi1> to vector<1x256xi1>
    %1375 = vector.broadcast %1374 : vector<1x256xi1> to vector<8x256xi1>
    %1376 = vector.broadcast %cst_723 : f32 to vector<8x256xf32>
    %1377 = arith.select %1375, %1373, %1376 : vector<8x256xi1>, vector<8x256xf32>
    %c56_724 = arith.constant 56 : index
    %c0_725 = arith.constant 0 : index
    %1378 = vector.load %arg13[%c56_724, %c0_725] : memref<216x256xf32, #tpu.memory_space<vmem>>, vector<8x256xf32>
    tpu.vector_store %arg13[%c56_724, %c0_725], %1377 {strides = array<i32>} : memref<216x256xf32, #tpu.memory_space<vmem>>, vector<8x256xf32>,
    %c239_i32_726 = arith.constant 239 : i32
    %1379 = tpu.dynamic_rotate %1331 by %c239_i32_726 dim 1 : vector<8x256xf32>, i32 -> vector<8x256xf32>
    %cst_727 = arith.constant 0.000000e+00 : f32
    %1380 = vector.shape_cast %186 : vector<1x256xi1> to vector<1x256xi1>
    %1381 = vector.broadcast %1380 : vector<1x256xi1> to vector<8x256xi1>
    %1382 = vector.broadcast %cst_727 : f32 to vector<8x256xf32>
    %1383 = arith.select %1381, %1379, %1382 : vector<8x256xi1>, vector<8x256xf32>
    %c64_728 = arith.constant 64 : index
    %c0_729 = arith.constant 0 : index
    %1384 = vector.load %arg13[%c64_728, %c0_729] : memref<216x256xf32, #tpu.memory_space<vmem>>, vector<8x256xf32>
    tpu.vector_store %arg13[%c64_728, %c0_729], %1383 {strides = array<i32>} : memref<216x256xf32, #tpu.memory_space<vmem>>, vector<8x256xf32>,
    %c2_730 = arith.constant 2 : index
    %c0_731 = arith.constant 0 : index
    %c0_732 = arith.constant 0 : index
    %1385 = vector.load %arg6[%c2_730, %c0_731, %c0_732] : memref<7x24x216xbf16, #tpu.memory_space<vmem>>, vector<1x16x72xbf16>
    %1386 = vector.shape_cast %1385 : vector<1x16x72xbf16> to vector<16x72xbf16>
    %c0_733 = arith.constant 0 : index
    %c0_734 = arith.constant 0 : index
    %1387 = vector.load %arg13[%c0_733, %c0_734] : memref<216x256xf32, #tpu.memory_space<vmem>>, vector<72x256xf32>
    %1388 = arith.truncf %1387 : vector<72x256xf32> to vector<72x256xbf16>
    %cst_735 = arith.constant dense<0.000000e+00> : vector<16x256xf32>
    %1389 = tpu.matmul %1386, %1388, %cst_735 {dimension_numbers = #tpu.dot_dimension_numbers<[1], [0], [0], [1], [0, 0, 1, 1], [], []>} : vector<16x72xbf16>, vector<72x256xbf16>, vector<16x256xf32> -> vector<16x256xf32>
    %cst_736 = arith.constant dense<0.000000e+00> : vector<16xf32>
    %1390 = vector.multi_reduction <add>, %1389, %cst_736 [1] : vector<16x256xf32> to vector<16xf32>
    %1391 = vector.shape_cast %1390 : vector<16xf32> to vector<16x1xf32>
    %cst_737 = arith.constant 3.906250e-03 : f32
    %1392 = vector.broadcast %cst_737 : f32 to vector<16x1xf32>
    %1393 = arith.mulf %1391, %1392 : vector<16x1xf32>
    %1394 = vector.broadcast %1393 : vector<16x1xf32> to vector<16x256xf32>
    %1395 = arith.subf %1389, %1394 : vector<16x256xf32>
    %1396 = arith.mulf %1395, %1395 : vector<16x256xf32>
    %cst_738 = arith.constant dense<0.000000e+00> : vector<16xf32>
    %1397 = vector.multi_reduction <add>, %1396, %cst_738 [1] : vector<16x256xf32> to vector<16xf32>
    %1398 = vector.shape_cast %1397 : vector<16xf32> to vector<16x1xf32>
    %cst_739 = arith.constant 3.906250e-03 : f32
    %1399 = vector.broadcast %cst_739 : f32 to vector<16x1xf32>
    %1400 = arith.mulf %1398, %1399 : vector<16x1xf32>
    %c2_740 = arith.constant 2 : index
    %c0_741 = arith.constant 0 : index
    %c0_742 = arith.constant 0 : index
    %1401 = vector.load %arg7[%c2_740, %c0_741, %c0_742] : memref<7x24x2xf32, #tpu.memory_space<vmem>>, vector<1x16x1xf32>
    %1402 = vector.shape_cast %1401 : vector<1x16x1xf32> to vector<16x1xf32>
    %c2_743 = arith.constant 2 : index
    %c0_744 = arith.constant 0 : index
    %c1_745 = arith.constant 1 : index
    %1403 = vector.load %arg7[%c2_743, %c0_744, %c1_745] : memref<7x24x2xf32, #tpu.memory_space<vmem>>, vector<1x16x1xf32>
    %1404 = vector.shape_cast %1403 : vector<1x16x1xf32> to vector<16x1xf32>
    %cst_746 = arith.constant 9.99999974E-6 : f32
    %1405 = vector.broadcast %cst_746 : f32 to vector<16x1xf32>
    %1406 = arith.addf %1400, %1405 : vector<16x1xf32>
    %1407 = math.rsqrt %1406 : vector<16x1xf32>
    %1408 = vector.broadcast %1407 : vector<16x1xf32> to vector<16x256xf32>
    %1409 = arith.mulf %1395, %1408 : vector<16x256xf32>
    %1410 = vector.broadcast %1402 : vector<16x1xf32> to vector<16x256xf32>
    %1411 = arith.mulf %1409, %1410 : vector<16x256xf32>
    %1412 = vector.broadcast %1404 : vector<16x1xf32> to vector<16x256xf32>
    %1413 = arith.addf %1411, %1412 : vector<16x256xf32>
    %cst_747 = arith.constant 0.000000e+00 : f32
    %1414 = vector.broadcast %cst_747 : f32 to vector<16x256xf32>
    %1415 = arith.cmpf oge, %1413, %1414 : vector<16x256xf32>
    %cst_748 = arith.constant 0.00999999977 : f32
    %1416 = vector.broadcast %cst_748 : f32 to vector<16x256xf32>
    %1417 = arith.mulf %1416, %1413 : vector<16x256xf32>
    %1418 = arith.select %1415, %1413, %1417 : vector<16x256xi1>, vector<16x256xf32>
    %1419 = arith.truncf %1418 : vector<16x256xf32> to vector<16x256xbf16>
    %c0_749 = arith.constant 0 : index
    %c0_750 = arith.constant 0 : index
    %1420 = vector.load %arg10[%c0_749, %c0_750] : memref<256x256xbf16, #tpu.memory_space<vmem>>, vector<256x256xbf16>
    %cst_751 = arith.constant dense<0.000000e+00> : vector<16x256xf32>
    %1421 = tpu.matmul %1419, %1420, %cst_751 {dimension_numbers = #tpu.dot_dimension_numbers<[1], [0], [0], [1], [0, 0, 1, 1], [], []>} : vector<16x256xbf16>, vector<256x256xbf16>, vector<16x256xf32> -> vector<16x256xf32>
    %c9_i32_752 = arith.constant 9 : i32
    %1422 = tpu.dynamic_rotate %1421 by %c9_i32_752 dim 1 : vector<16x256xf32>, i32 -> vector<16x256xf32>
    %cst_753 = arith.constant 0.000000e+00 : f32
    %1423 = vector.shape_cast %212 : vector<1x256xi1> to vector<1x256xi1>
    %1424 = vector.broadcast %1423 : vector<1x256xi1> to vector<16x256xi1>
    %1425 = vector.broadcast %cst_753 : f32 to vector<16x256xf32>
    %1426 = arith.select %1424, %1422, %1425 : vector<16x256xi1>, vector<16x256xf32>
    %c0_754 = arith.constant 0 : index
    %c0_755 = arith.constant 0 : index
    %1427 = vector.load %arg13[%c0_754, %c0_755] : memref<216x256xf32, #tpu.memory_space<vmem>>, vector<16x256xf32>
    tpu.vector_store %arg13[%c0_754, %c0_755], %1426 {strides = array<i32>} : memref<216x256xf32, #tpu.memory_space<vmem>>, vector<16x256xf32>,
    %c8_i32_756 = arith.constant 8 : i32
    %1428 = tpu.dynamic_rotate %1421 by %c8_i32_756 dim 1 : vector<16x256xf32>, i32 -> vector<16x256xf32>
    %cst_757 = arith.constant 0.000000e+00 : f32
    %1429 = vector.shape_cast %232 : vector<1x256xi1> to vector<1x256xi1>
    %1430 = vector.broadcast %1429 : vector<1x256xi1> to vector<16x256xi1>
    %1431 = vector.broadcast %cst_757 : f32 to vector<16x256xf32>
    %1432 = arith.select %1430, %1428, %1431 : vector<16x256xi1>, vector<16x256xf32>
    %c16_758 = arith.constant 16 : index
    %c0_759 = arith.constant 0 : index
    %1433 = vector.load %arg13[%c16_758, %c0_759] : memref<216x256xf32, #tpu.memory_space<vmem>>, vector<16x256xf32>
    tpu.vector_store %arg13[%c16_758, %c0_759], %1432 {strides = array<i32>} : memref<216x256xf32, #tpu.memory_space<vmem>>, vector<16x256xf32>,
    %c7_i32_760 = arith.constant 7 : i32
    %1434 = tpu.dynamic_rotate %1421 by %c7_i32_760 dim 1 : vector<16x256xf32>, i32 -> vector<16x256xf32>
    %cst_761 = arith.constant 0.000000e+00 : f32
    %1435 = vector.shape_cast %252 : vector<1x256xi1> to vector<1x256xi1>
    %1436 = vector.broadcast %1435 : vector<1x256xi1> to vector<16x256xi1>
    %1437 = vector.broadcast %cst_761 : f32 to vector<16x256xf32>
    %1438 = arith.select %1436, %1434, %1437 : vector<16x256xi1>, vector<16x256xf32>
    %c32_762 = arith.constant 32 : index
    %c0_763 = arith.constant 0 : index
    %1439 = vector.load %arg13[%c32_762, %c0_763] : memref<216x256xf32, #tpu.memory_space<vmem>>, vector<16x256xf32>
    tpu.vector_store %arg13[%c32_762, %c0_763], %1438 {strides = array<i32>} : memref<216x256xf32, #tpu.memory_space<vmem>>, vector<16x256xf32>,
    %c1_i32_764 = arith.constant 1 : i32
    %1440 = tpu.dynamic_rotate %1421 by %c1_i32_764 dim 1 : vector<16x256xf32>, i32 -> vector<16x256xf32>
    %cst_765 = arith.constant 0.000000e+00 : f32
    %1441 = vector.shape_cast %272 : vector<1x256xi1> to vector<1x256xi1>
    %1442 = vector.broadcast %1441 : vector<1x256xi1> to vector<16x256xi1>
    %1443 = vector.broadcast %cst_765 : f32 to vector<16x256xf32>
    %1444 = arith.select %1442, %1440, %1443 : vector<16x256xi1>, vector<16x256xf32>
    %c48_766 = arith.constant 48 : index
    %c0_767 = arith.constant 0 : index
    %1445 = vector.load %arg13[%c48_766, %c0_767] : memref<216x256xf32, #tpu.memory_space<vmem>>, vector<16x256xf32>
    tpu.vector_store %arg13[%c48_766, %c0_767], %1444 {strides = array<i32>} : memref<216x256xf32, #tpu.memory_space<vmem>>, vector<16x256xf32>,
    %cst_768 = arith.constant 0.000000e+00 : f32
    %1446 = vector.shape_cast %292 : vector<1x256xi1> to vector<1x256xi1>
    %1447 = vector.broadcast %1446 : vector<1x256xi1> to vector<16x256xi1>
    %1448 = vector.broadcast %cst_768 : f32 to vector<16x256xf32>
    %1449 = arith.select %1447, %1421, %1448 : vector<16x256xi1>, vector<16x256xf32>
    %c64_769 = arith.constant 64 : index
    %c0_770 = arith.constant 0 : index
    %1450 = vector.load %arg13[%c64_769, %c0_770] : memref<216x256xf32, #tpu.memory_space<vmem>>, vector<16x256xf32>
    tpu.vector_store %arg13[%c64_769, %c0_770], %1449 {strides = array<i32>} : memref<216x256xf32, #tpu.memory_space<vmem>>, vector<16x256xf32>,
    %c255_i32_771 = arith.constant 255 : i32
    %1451 = tpu.dynamic_rotate %1421 by %c255_i32_771 dim 1 : vector<16x256xf32>, i32 -> vector<16x256xf32>
    %cst_772 = arith.constant 0.000000e+00 : f32
    %1452 = vector.shape_cast %312 : vector<1x256xi1> to vector<1x256xi1>
    %1453 = vector.broadcast %1452 : vector<1x256xi1> to vector<16x256xi1>
    %1454 = vector.broadcast %cst_772 : f32 to vector<16x256xf32>
    %1455 = arith.select %1453, %1451, %1454 : vector<16x256xi1>, vector<16x256xf32>
    %c80_773 = arith.constant 80 : index
    %c0_774 = arith.constant 0 : index
    %1456 = vector.load %arg13[%c80_773, %c0_774] : memref<216x256xf32, #tpu.memory_space<vmem>>, vector<16x256xf32>
    tpu.vector_store %arg13[%c80_773, %c0_774], %1455 {strides = array<i32>} : memref<216x256xf32, #tpu.memory_space<vmem>>, vector<16x256xf32>,
    %c249_i32_775 = arith.constant 249 : i32
    %1457 = tpu.dynamic_rotate %1421 by %c249_i32_775 dim 1 : vector<16x256xf32>, i32 -> vector<16x256xf32>
    %cst_776 = arith.constant 0.000000e+00 : f32
    %1458 = vector.shape_cast %332 : vector<1x256xi1> to vector<1x256xi1>
    %1459 = vector.broadcast %1458 : vector<1x256xi1> to vector<16x256xi1>
    %1460 = vector.broadcast %cst_776 : f32 to vector<16x256xf32>
    %1461 = arith.select %1459, %1457, %1460 : vector<16x256xi1>, vector<16x256xf32>
    %c96_777 = arith.constant 96 : index
    %c0_778 = arith.constant 0 : index
    %1462 = vector.load %arg13[%c96_777, %c0_778] : memref<216x256xf32, #tpu.memory_space<vmem>>, vector<16x256xf32>
    tpu.vector_store %arg13[%c96_777, %c0_778], %1461 {strides = array<i32>} : memref<216x256xf32, #tpu.memory_space<vmem>>, vector<16x256xf32>,
    %c248_i32_779 = arith.constant 248 : i32
    %1463 = tpu.dynamic_rotate %1421 by %c248_i32_779 dim 1 : vector<16x256xf32>, i32 -> vector<16x256xf32>
    %cst_780 = arith.constant 0.000000e+00 : f32
    %1464 = vector.shape_cast %352 : vector<1x256xi1> to vector<1x256xi1>
    %1465 = vector.broadcast %1464 : vector<1x256xi1> to vector<16x256xi1>
    %1466 = vector.broadcast %cst_780 : f32 to vector<16x256xf32>
    %1467 = arith.select %1465, %1463, %1466 : vector<16x256xi1>, vector<16x256xf32>
    %c112_781 = arith.constant 112 : index
    %c0_782 = arith.constant 0 : index
    %1468 = vector.load %arg13[%c112_781, %c0_782] : memref<216x256xf32, #tpu.memory_space<vmem>>, vector<16x256xf32>
    tpu.vector_store %arg13[%c112_781, %c0_782], %1467 {strides = array<i32>} : memref<216x256xf32, #tpu.memory_space<vmem>>, vector<16x256xf32>,
    %c247_i32_783 = arith.constant 247 : i32
    %1469 = tpu.dynamic_rotate %1421 by %c247_i32_783 dim 1 : vector<16x256xf32>, i32 -> vector<16x256xf32>
    %cst_784 = arith.constant 0.000000e+00 : f32
    %1470 = vector.shape_cast %372 : vector<1x256xi1> to vector<1x256xi1>
    %1471 = vector.broadcast %1470 : vector<1x256xi1> to vector<16x256xi1>
    %1472 = vector.broadcast %cst_784 : f32 to vector<16x256xf32>
    %1473 = arith.select %1471, %1469, %1472 : vector<16x256xi1>, vector<16x256xf32>
    %c128_785 = arith.constant 128 : index
    %c0_786 = arith.constant 0 : index
    %1474 = vector.load %arg13[%c128_785, %c0_786] : memref<216x256xf32, #tpu.memory_space<vmem>>, vector<16x256xf32>
    tpu.vector_store %arg13[%c128_785, %c0_786], %1473 {strides = array<i32>} : memref<216x256xf32, #tpu.memory_space<vmem>>, vector<16x256xf32>,
    %c3_787 = arith.constant 3 : index
    %c0_788 = arith.constant 0 : index
    %c0_789 = arith.constant 0 : index
    %1475 = vector.load %arg6[%c3_787, %c0_788, %c0_789] : memref<7x24x216xbf16, #tpu.memory_space<vmem>>, vector<1x16x144xbf16>
    %1476 = vector.shape_cast %1475 : vector<1x16x144xbf16> to vector<16x144xbf16>
    %c0_790 = arith.constant 0 : index
    %c0_791 = arith.constant 0 : index
    %1477 = vector.load %arg13[%c0_790, %c0_791] : memref<216x256xf32, #tpu.memory_space<vmem>>, vector<144x256xf32>
    %1478 = arith.truncf %1477 : vector<144x256xf32> to vector<144x256xbf16>
    %cst_792 = arith.constant dense<0.000000e+00> : vector<16x256xf32>
    %1479 = tpu.matmul %1476, %1478, %cst_792 {dimension_numbers = #tpu.dot_dimension_numbers<[1], [0], [0], [1], [0, 0, 1, 1], [], []>} : vector<16x144xbf16>, vector<144x256xbf16>, vector<16x256xf32> -> vector<16x256xf32>
    %cst_793 = arith.constant dense<0.000000e+00> : vector<16xf32>
    %1480 = vector.multi_reduction <add>, %1479, %cst_793 [1] : vector<16x256xf32> to vector<16xf32>
    %1481 = vector.shape_cast %1480 : vector<16xf32> to vector<16x1xf32>
    %cst_794 = arith.constant 1.562500e-02 : f32
    %1482 = vector.broadcast %cst_794 : f32 to vector<16x1xf32>
    %1483 = arith.mulf %1481, %1482 : vector<16x1xf32>
    %1484 = vector.broadcast %1483 : vector<16x1xf32> to vector<16x256xf32>
    %1485 = arith.subf %1479, %1484 : vector<16x256xf32>
    %1486 = vector.broadcast %375 : vector<1x256xf32> to vector<16x256xf32>
    %1487 = arith.mulf %1485, %1486 : vector<16x256xf32>
    %1488 = arith.mulf %1487, %1487 : vector<16x256xf32>
    %cst_795 = arith.constant dense<0.000000e+00> : vector<16xf32>
    %1489 = vector.multi_reduction <add>, %1488, %cst_795 [1] : vector<16x256xf32> to vector<16xf32>
    %1490 = vector.shape_cast %1489 : vector<16xf32> to vector<16x1xf32>
    %cst_796 = arith.constant 1.562500e-02 : f32
    %1491 = vector.broadcast %cst_796 : f32 to vector<16x1xf32>
    %1492 = arith.mulf %1490, %1491 : vector<16x1xf32>
    %c3_797 = arith.constant 3 : index
    %c0_798 = arith.constant 0 : index
    %c0_799 = arith.constant 0 : index
    %1493 = vector.load %arg7[%c3_797, %c0_798, %c0_799] : memref<7x24x2xf32, #tpu.memory_space<vmem>>, vector<1x16x1xf32>
    %1494 = vector.shape_cast %1493 : vector<1x16x1xf32> to vector<16x1xf32>
    %c3_800 = arith.constant 3 : index
    %c0_801 = arith.constant 0 : index
    %c1_802 = arith.constant 1 : index
    %1495 = vector.load %arg7[%c3_800, %c0_801, %c1_802] : memref<7x24x2xf32, #tpu.memory_space<vmem>>, vector<1x16x1xf32>
    %1496 = vector.shape_cast %1495 : vector<1x16x1xf32> to vector<16x1xf32>
    %cst_803 = arith.constant 9.99999974E-6 : f32
    %1497 = vector.broadcast %cst_803 : f32 to vector<16x1xf32>
    %1498 = arith.addf %1492, %1497 : vector<16x1xf32>
    %1499 = math.rsqrt %1498 : vector<16x1xf32>
    %1500 = vector.broadcast %1499 : vector<16x1xf32> to vector<16x256xf32>
    %1501 = arith.mulf %1487, %1500 : vector<16x256xf32>
    %1502 = vector.broadcast %1494 : vector<16x1xf32> to vector<16x256xf32>
    %1503 = arith.mulf %1501, %1502 : vector<16x256xf32>
    %1504 = vector.broadcast %1496 : vector<16x1xf32> to vector<16x256xf32>
    %1505 = arith.addf %1503, %1504 : vector<16x256xf32>
    %cst_804 = arith.constant 0.000000e+00 : f32
    %1506 = vector.broadcast %cst_804 : f32 to vector<16x256xf32>
    %1507 = arith.cmpf oge, %1505, %1506 : vector<16x256xf32>
    %cst_805 = arith.constant 0.00999999977 : f32
    %1508 = vector.broadcast %cst_805 : f32 to vector<16x256xf32>
    %1509 = arith.mulf %1508, %1505 : vector<16x256xf32>
    %1510 = arith.select %1507, %1505, %1509 : vector<16x256xi1>, vector<16x256xf32>
    %1511 = vector.broadcast %375 : vector<1x256xf32> to vector<16x256xf32>
    %1512 = arith.mulf %1510, %1511 : vector<16x256xf32>
    %c9_i32_806 = arith.constant 9 : i32
    %1513 = tpu.dynamic_rotate %1512 by %c9_i32_806 dim 1 : vector<16x256xf32>, i32 -> vector<16x256xf32>
    %cst_807 = arith.constant 0.000000e+00 : f32
    %1514 = vector.shape_cast %212 : vector<1x256xi1> to vector<1x256xi1>
    %1515 = vector.broadcast %1514 : vector<1x256xi1> to vector<16x256xi1>
    %1516 = vector.broadcast %cst_807 : f32 to vector<16x256xf32>
    %1517 = arith.select %1515, %1513, %1516 : vector<16x256xi1>, vector<16x256xf32>
    %c0_808 = arith.constant 0 : index
    %c0_809 = arith.constant 0 : index
    %1518 = vector.load %arg13[%c0_808, %c0_809] : memref<216x256xf32, #tpu.memory_space<vmem>>, vector<16x256xf32>
    tpu.vector_store %arg13[%c0_808, %c0_809], %1517 {strides = array<i32>} : memref<216x256xf32, #tpu.memory_space<vmem>>, vector<16x256xf32>,
    %c8_i32_810 = arith.constant 8 : i32
    %1519 = tpu.dynamic_rotate %1512 by %c8_i32_810 dim 1 : vector<16x256xf32>, i32 -> vector<16x256xf32>
    %cst_811 = arith.constant 0.000000e+00 : f32
    %1520 = vector.shape_cast %232 : vector<1x256xi1> to vector<1x256xi1>
    %1521 = vector.broadcast %1520 : vector<1x256xi1> to vector<16x256xi1>
    %1522 = vector.broadcast %cst_811 : f32 to vector<16x256xf32>
    %1523 = arith.select %1521, %1519, %1522 : vector<16x256xi1>, vector<16x256xf32>
    %c16_812 = arith.constant 16 : index
    %c0_813 = arith.constant 0 : index
    %1524 = vector.load %arg13[%c16_812, %c0_813] : memref<216x256xf32, #tpu.memory_space<vmem>>, vector<16x256xf32>
    tpu.vector_store %arg13[%c16_812, %c0_813], %1523 {strides = array<i32>} : memref<216x256xf32, #tpu.memory_space<vmem>>, vector<16x256xf32>,
    %c7_i32_814 = arith.constant 7 : i32
    %1525 = tpu.dynamic_rotate %1512 by %c7_i32_814 dim 1 : vector<16x256xf32>, i32 -> vector<16x256xf32>
    %cst_815 = arith.constant 0.000000e+00 : f32
    %1526 = vector.shape_cast %252 : vector<1x256xi1> to vector<1x256xi1>
    %1527 = vector.broadcast %1526 : vector<1x256xi1> to vector<16x256xi1>
    %1528 = vector.broadcast %cst_815 : f32 to vector<16x256xf32>
    %1529 = arith.select %1527, %1525, %1528 : vector<16x256xi1>, vector<16x256xf32>
    %c32_816 = arith.constant 32 : index
    %c0_817 = arith.constant 0 : index
    %1530 = vector.load %arg13[%c32_816, %c0_817] : memref<216x256xf32, #tpu.memory_space<vmem>>, vector<16x256xf32>
    tpu.vector_store %arg13[%c32_816, %c0_817], %1529 {strides = array<i32>} : memref<216x256xf32, #tpu.memory_space<vmem>>, vector<16x256xf32>,
    %c1_i32_818 = arith.constant 1 : i32
    %1531 = tpu.dynamic_rotate %1512 by %c1_i32_818 dim 1 : vector<16x256xf32>, i32 -> vector<16x256xf32>
    %cst_819 = arith.constant 0.000000e+00 : f32
    %1532 = vector.shape_cast %272 : vector<1x256xi1> to vector<1x256xi1>
    %1533 = vector.broadcast %1532 : vector<1x256xi1> to vector<16x256xi1>
    %1534 = vector.broadcast %cst_819 : f32 to vector<16x256xf32>
    %1535 = arith.select %1533, %1531, %1534 : vector<16x256xi1>, vector<16x256xf32>
    %c48_820 = arith.constant 48 : index
    %c0_821 = arith.constant 0 : index
    %1536 = vector.load %arg13[%c48_820, %c0_821] : memref<216x256xf32, #tpu.memory_space<vmem>>, vector<16x256xf32>
    tpu.vector_store %arg13[%c48_820, %c0_821], %1535 {strides = array<i32>} : memref<216x256xf32, #tpu.memory_space<vmem>>, vector<16x256xf32>,
    %cst_822 = arith.constant 0.000000e+00 : f32
    %1537 = vector.shape_cast %292 : vector<1x256xi1> to vector<1x256xi1>
    %1538 = vector.broadcast %1537 : vector<1x256xi1> to vector<16x256xi1>
    %1539 = vector.broadcast %cst_822 : f32 to vector<16x256xf32>
    %1540 = arith.select %1538, %1512, %1539 : vector<16x256xi1>, vector<16x256xf32>
    %c64_823 = arith.constant 64 : index
    %c0_824 = arith.constant 0 : index
    %1541 = vector.load %arg13[%c64_823, %c0_824] : memref<216x256xf32, #tpu.memory_space<vmem>>, vector<16x256xf32>
    tpu.vector_store %arg13[%c64_823, %c0_824], %1540 {strides = array<i32>} : memref<216x256xf32, #tpu.memory_space<vmem>>, vector<16x256xf32>,
    %c255_i32_825 = arith.constant 255 : i32
    %1542 = tpu.dynamic_rotate %1512 by %c255_i32_825 dim 1 : vector<16x256xf32>, i32 -> vector<16x256xf32>
    %cst_826 = arith.constant 0.000000e+00 : f32
    %1543 = vector.shape_cast %312 : vector<1x256xi1> to vector<1x256xi1>
    %1544 = vector.broadcast %1543 : vector<1x256xi1> to vector<16x256xi1>
    %1545 = vector.broadcast %cst_826 : f32 to vector<16x256xf32>
    %1546 = arith.select %1544, %1542, %1545 : vector<16x256xi1>, vector<16x256xf32>
    %c80_827 = arith.constant 80 : index
    %c0_828 = arith.constant 0 : index
    %1547 = vector.load %arg13[%c80_827, %c0_828] : memref<216x256xf32, #tpu.memory_space<vmem>>, vector<16x256xf32>
    tpu.vector_store %arg13[%c80_827, %c0_828], %1546 {strides = array<i32>} : memref<216x256xf32, #tpu.memory_space<vmem>>, vector<16x256xf32>,
    %c249_i32_829 = arith.constant 249 : i32
    %1548 = tpu.dynamic_rotate %1512 by %c249_i32_829 dim 1 : vector<16x256xf32>, i32 -> vector<16x256xf32>
    %cst_830 = arith.constant 0.000000e+00 : f32
    %1549 = vector.shape_cast %332 : vector<1x256xi1> to vector<1x256xi1>
    %1550 = vector.broadcast %1549 : vector<1x256xi1> to vector<16x256xi1>
    %1551 = vector.broadcast %cst_830 : f32 to vector<16x256xf32>
    %1552 = arith.select %1550, %1548, %1551 : vector<16x256xi1>, vector<16x256xf32>
    %c96_831 = arith.constant 96 : index
    %c0_832 = arith.constant 0 : index
    %1553 = vector.load %arg13[%c96_831, %c0_832] : memref<216x256xf32, #tpu.memory_space<vmem>>, vector<16x256xf32>
    tpu.vector_store %arg13[%c96_831, %c0_832], %1552 {strides = array<i32>} : memref<216x256xf32, #tpu.memory_space<vmem>>, vector<16x256xf32>,
    %c248_i32_833 = arith.constant 248 : i32
    %1554 = tpu.dynamic_rotate %1512 by %c248_i32_833 dim 1 : vector<16x256xf32>, i32 -> vector<16x256xf32>
    %cst_834 = arith.constant 0.000000e+00 : f32
    %1555 = vector.shape_cast %352 : vector<1x256xi1> to vector<1x256xi1>
    %1556 = vector.broadcast %1555 : vector<1x256xi1> to vector<16x256xi1>
    %1557 = vector.broadcast %cst_834 : f32 to vector<16x256xf32>
    %1558 = arith.select %1556, %1554, %1557 : vector<16x256xi1>, vector<16x256xf32>
    %c112_835 = arith.constant 112 : index
    %c0_836 = arith.constant 0 : index
    %1559 = vector.load %arg13[%c112_835, %c0_836] : memref<216x256xf32, #tpu.memory_space<vmem>>, vector<16x256xf32>
    tpu.vector_store %arg13[%c112_835, %c0_836], %1558 {strides = array<i32>} : memref<216x256xf32, #tpu.memory_space<vmem>>, vector<16x256xf32>,
    %c247_i32_837 = arith.constant 247 : i32
    %1560 = tpu.dynamic_rotate %1512 by %c247_i32_837 dim 1 : vector<16x256xf32>, i32 -> vector<16x256xf32>
    %cst_838 = arith.constant 0.000000e+00 : f32
    %1561 = vector.shape_cast %372 : vector<1x256xi1> to vector<1x256xi1>
    %1562 = vector.broadcast %1561 : vector<1x256xi1> to vector<16x256xi1>
    %1563 = vector.broadcast %cst_838 : f32 to vector<16x256xf32>
    %1564 = arith.select %1562, %1560, %1563 : vector<16x256xi1>, vector<16x256xf32>
    %c128_839 = arith.constant 128 : index
    %c0_840 = arith.constant 0 : index
    %1565 = vector.load %arg13[%c128_839, %c0_840] : memref<216x256xf32, #tpu.memory_space<vmem>>, vector<16x256xf32>
    tpu.vector_store %arg13[%c128_839, %c0_840], %1564 {strides = array<i32>} : memref<216x256xf32, #tpu.memory_space<vmem>>, vector<16x256xf32>,
    %c4_841 = arith.constant 4 : index
    %c0_842 = arith.constant 0 : index
    %c0_843 = arith.constant 0 : index
    %1566 = vector.load %arg6[%c4_841, %c0_842, %c0_843] : memref<7x24x216xbf16, #tpu.memory_space<vmem>>, vector<1x16x144xbf16>
    %1567 = vector.shape_cast %1566 : vector<1x16x144xbf16> to vector<16x144xbf16>
    %c0_844 = arith.constant 0 : index
    %c0_845 = arith.constant 0 : index
    %1568 = vector.load %arg13[%c0_844, %c0_845] : memref<216x256xf32, #tpu.memory_space<vmem>>, vector<144x256xf32>
    %1569 = arith.truncf %1568 : vector<144x256xf32> to vector<144x256xbf16>
    %cst_846 = arith.constant dense<0.000000e+00> : vector<16x256xf32>
    %1570 = tpu.matmul %1567, %1569, %cst_846 {dimension_numbers = #tpu.dot_dimension_numbers<[1], [0], [0], [1], [0, 0, 1, 1], [], []>} : vector<16x144xbf16>, vector<144x256xbf16>, vector<16x256xf32> -> vector<16x256xf32>
    %cst_847 = arith.constant dense<0.000000e+00> : vector<16xf32>
    %1571 = vector.multi_reduction <add>, %1570, %cst_847 [1] : vector<16x256xf32> to vector<16xf32>
    %1572 = vector.shape_cast %1571 : vector<16xf32> to vector<16x1xf32>
    %cst_848 = arith.constant 1.562500e-02 : f32
    %1573 = vector.broadcast %cst_848 : f32 to vector<16x1xf32>
    %1574 = arith.mulf %1572, %1573 : vector<16x1xf32>
    %1575 = vector.broadcast %1574 : vector<16x1xf32> to vector<16x256xf32>
    %1576 = arith.subf %1570, %1575 : vector<16x256xf32>
    %1577 = vector.broadcast %375 : vector<1x256xf32> to vector<16x256xf32>
    %1578 = arith.mulf %1576, %1577 : vector<16x256xf32>
    %1579 = arith.mulf %1578, %1578 : vector<16x256xf32>
    %cst_849 = arith.constant dense<0.000000e+00> : vector<16xf32>
    %1580 = vector.multi_reduction <add>, %1579, %cst_849 [1] : vector<16x256xf32> to vector<16xf32>
    %1581 = vector.shape_cast %1580 : vector<16xf32> to vector<16x1xf32>
    %cst_850 = arith.constant 1.562500e-02 : f32
    %1582 = vector.broadcast %cst_850 : f32 to vector<16x1xf32>
    %1583 = arith.mulf %1581, %1582 : vector<16x1xf32>
    %c4_851 = arith.constant 4 : index
    %c0_852 = arith.constant 0 : index
    %c0_853 = arith.constant 0 : index
    %1584 = vector.load %arg7[%c4_851, %c0_852, %c0_853] : memref<7x24x2xf32, #tpu.memory_space<vmem>>, vector<1x16x1xf32>
    %1585 = vector.shape_cast %1584 : vector<1x16x1xf32> to vector<16x1xf32>
    %c4_854 = arith.constant 4 : index
    %c0_855 = arith.constant 0 : index
    %c1_856 = arith.constant 1 : index
    %1586 = vector.load %arg7[%c4_854, %c0_855, %c1_856] : memref<7x24x2xf32, #tpu.memory_space<vmem>>, vector<1x16x1xf32>
    %1587 = vector.shape_cast %1586 : vector<1x16x1xf32> to vector<16x1xf32>
    %cst_857 = arith.constant 9.99999974E-6 : f32
    %1588 = vector.broadcast %cst_857 : f32 to vector<16x1xf32>
    %1589 = arith.addf %1583, %1588 : vector<16x1xf32>
    %1590 = math.rsqrt %1589 : vector<16x1xf32>
    %1591 = vector.broadcast %1590 : vector<16x1xf32> to vector<16x256xf32>
    %1592 = arith.mulf %1578, %1591 : vector<16x256xf32>
    %1593 = vector.broadcast %1585 : vector<16x1xf32> to vector<16x256xf32>
    %1594 = arith.mulf %1592, %1593 : vector<16x256xf32>
    %1595 = vector.broadcast %1587 : vector<16x1xf32> to vector<16x256xf32>
    %1596 = arith.addf %1594, %1595 : vector<16x256xf32>
    %cst_858 = arith.constant 0.000000e+00 : f32
    %1597 = vector.broadcast %cst_858 : f32 to vector<16x256xf32>
    %1598 = arith.cmpf oge, %1596, %1597 : vector<16x256xf32>
    %cst_859 = arith.constant 0.00999999977 : f32
    %1599 = vector.broadcast %cst_859 : f32 to vector<16x256xf32>
    %1600 = arith.mulf %1599, %1596 : vector<16x256xf32>
    %1601 = arith.select %1598, %1596, %1600 : vector<16x256xi1>, vector<16x256xf32>
    %1602 = vector.broadcast %375 : vector<1x256xf32> to vector<16x256xf32>
    %1603 = arith.mulf %1601, %1602 : vector<16x256xf32>
    %1604 = arith.truncf %1603 : vector<16x256xf32> to vector<16x256xbf16>
    %c0_860 = arith.constant 0 : index
    %c0_861 = arith.constant 0 : index
    %1605 = vector.load %arg11[%c0_860, %c0_861] : memref<256x256xbf16, #tpu.memory_space<vmem>>, vector<256x256xbf16>
    %cst_862 = arith.constant dense<0.000000e+00> : vector<16x256xf32>
    %1606 = tpu.matmul %1604, %1605, %cst_862 {dimension_numbers = #tpu.dot_dimension_numbers<[1], [0], [0], [1], [0, 0, 1, 1], [], []>} : vector<16x256xbf16>, vector<256x256xbf16>, vector<16x256xf32> -> vector<16x256xf32>
    %c17_i32_863 = arith.constant 17 : i32
    %1607 = tpu.dynamic_rotate %1606 by %c17_i32_863 dim 1 : vector<16x256xf32>, i32 -> vector<16x256xf32>
    %cst_864 = arith.constant 0.000000e+00 : f32
    %1608 = vector.shape_cast %26 : vector<1x256xi1> to vector<1x256xi1>
    %1609 = vector.broadcast %1608 : vector<1x256xi1> to vector<16x256xi1>
    %1610 = vector.broadcast %cst_864 : f32 to vector<16x256xf32>
    %1611 = arith.select %1609, %1607, %1610 : vector<16x256xi1>, vector<16x256xf32>
    %c0_865 = arith.constant 0 : index
    %c0_866 = arith.constant 0 : index
    %1612 = vector.load %arg13[%c0_865, %c0_866] : memref<216x256xf32, #tpu.memory_space<vmem>>, vector<16x256xf32>
    tpu.vector_store %arg13[%c0_865, %c0_866], %1611 {strides = array<i32>} : memref<216x256xf32, #tpu.memory_space<vmem>>, vector<16x256xf32>,
    %c17_i32_867 = arith.constant 17 : i32
    %1613 = tpu.dynamic_rotate %1331 by %c17_i32_867 dim 1 : vector<8x256xf32>, i32 -> vector<8x256xf32>
    %cst_868 = arith.constant 0.000000e+00 : f32
    %1614 = vector.shape_cast %26 : vector<1x256xi1> to vector<1x256xi1>
    %1615 = vector.broadcast %1614 : vector<1x256xi1> to vector<8x256xi1>
    %1616 = vector.broadcast %cst_868 : f32 to vector<8x256xf32>
    %1617 = arith.select %1615, %1613, %1616 : vector<8x256xi1>, vector<8x256xf32>
    %c16_869 = arith.constant 16 : index
    %c0_870 = arith.constant 0 : index
    %1618 = vector.load %arg13[%c16_869, %c0_870] : memref<216x256xf32, #tpu.memory_space<vmem>>, vector<8x256xf32>
    tpu.vector_store %arg13[%c16_869, %c0_870], %1617 {strides = array<i32>} : memref<216x256xf32, #tpu.memory_space<vmem>>, vector<8x256xf32>,
    %c16_i32_871 = arith.constant 16 : i32
    %1619 = tpu.dynamic_rotate %1606 by %c16_i32_871 dim 1 : vector<16x256xf32>, i32 -> vector<16x256xf32>
    %cst_872 = arith.constant 0.000000e+00 : f32
    %1620 = vector.shape_cast %46 : vector<1x256xi1> to vector<1x256xi1>
    %1621 = vector.broadcast %1620 : vector<1x256xi1> to vector<16x256xi1>
    %1622 = vector.broadcast %cst_872 : f32 to vector<16x256xf32>
    %1623 = arith.select %1621, %1619, %1622 : vector<16x256xi1>, vector<16x256xf32>
    %c24_873 = arith.constant 24 : index
    %c0_874 = arith.constant 0 : index
    %1624 = vector.load %arg13[%c24_873, %c0_874] : memref<216x256xf32, #tpu.memory_space<vmem>>, vector<16x256xf32>
    tpu.vector_store %arg13[%c24_873, %c0_874], %1623 {strides = array<i32>} : memref<216x256xf32, #tpu.memory_space<vmem>>, vector<16x256xf32>,
    %c16_i32_875 = arith.constant 16 : i32
    %1625 = tpu.dynamic_rotate %1331 by %c16_i32_875 dim 1 : vector<8x256xf32>, i32 -> vector<8x256xf32>
    %cst_876 = arith.constant 0.000000e+00 : f32
    %1626 = vector.shape_cast %46 : vector<1x256xi1> to vector<1x256xi1>
    %1627 = vector.broadcast %1626 : vector<1x256xi1> to vector<8x256xi1>
    %1628 = vector.broadcast %cst_876 : f32 to vector<8x256xf32>
    %1629 = arith.select %1627, %1625, %1628 : vector<8x256xi1>, vector<8x256xf32>
    %c40_877 = arith.constant 40 : index
    %c0_878 = arith.constant 0 : index
    %1630 = vector.load %arg13[%c40_877, %c0_878] : memref<216x256xf32, #tpu.memory_space<vmem>>, vector<8x256xf32>
    tpu.vector_store %arg13[%c40_877, %c0_878], %1629 {strides = array<i32>} : memref<216x256xf32, #tpu.memory_space<vmem>>, vector<8x256xf32>,
    %c15_i32_879 = arith.constant 15 : i32
    %1631 = tpu.dynamic_rotate %1606 by %c15_i32_879 dim 1 : vector<16x256xf32>, i32 -> vector<16x256xf32>
    %cst_880 = arith.constant 0.000000e+00 : f32
    %1632 = vector.shape_cast %66 : vector<1x256xi1> to vector<1x256xi1>
    %1633 = vector.broadcast %1632 : vector<1x256xi1> to vector<16x256xi1>
    %1634 = vector.broadcast %cst_880 : f32 to vector<16x256xf32>
    %1635 = arith.select %1633, %1631, %1634 : vector<16x256xi1>, vector<16x256xf32>
    %c48_881 = arith.constant 48 : index
    %c0_882 = arith.constant 0 : index
    %1636 = vector.load %arg13[%c48_881, %c0_882] : memref<216x256xf32, #tpu.memory_space<vmem>>, vector<16x256xf32>
    tpu.vector_store %arg13[%c48_881, %c0_882], %1635 {strides = array<i32>} : memref<216x256xf32, #tpu.memory_space<vmem>>, vector<16x256xf32>,
    %c15_i32_883 = arith.constant 15 : i32
    %1637 = tpu.dynamic_rotate %1331 by %c15_i32_883 dim 1 : vector<8x256xf32>, i32 -> vector<8x256xf32>
    %cst_884 = arith.constant 0.000000e+00 : f32
    %1638 = vector.shape_cast %66 : vector<1x256xi1> to vector<1x256xi1>
    %1639 = vector.broadcast %1638 : vector<1x256xi1> to vector<8x256xi1>
    %1640 = vector.broadcast %cst_884 : f32 to vector<8x256xf32>
    %1641 = arith.select %1639, %1637, %1640 : vector<8x256xi1>, vector<8x256xf32>
    %c64_885 = arith.constant 64 : index
    %c0_886 = arith.constant 0 : index
    %1642 = vector.load %arg13[%c64_885, %c0_886] : memref<216x256xf32, #tpu.memory_space<vmem>>, vector<8x256xf32>
    tpu.vector_store %arg13[%c64_885, %c0_886], %1641 {strides = array<i32>} : memref<216x256xf32, #tpu.memory_space<vmem>>, vector<8x256xf32>,
    %c1_i32_887 = arith.constant 1 : i32
    %1643 = tpu.dynamic_rotate %1606 by %c1_i32_887 dim 1 : vector<16x256xf32>, i32 -> vector<16x256xf32>
    %cst_888 = arith.constant 0.000000e+00 : f32
    %1644 = vector.shape_cast %86 : vector<1x256xi1> to vector<1x256xi1>
    %1645 = vector.broadcast %1644 : vector<1x256xi1> to vector<16x256xi1>
    %1646 = vector.broadcast %cst_888 : f32 to vector<16x256xf32>
    %1647 = arith.select %1645, %1643, %1646 : vector<16x256xi1>, vector<16x256xf32>
    %c72_889 = arith.constant 72 : index
    %c0_890 = arith.constant 0 : index
    %1648 = vector.load %arg13[%c72_889, %c0_890] : memref<216x256xf32, #tpu.memory_space<vmem>>, vector<16x256xf32>
    tpu.vector_store %arg13[%c72_889, %c0_890], %1647 {strides = array<i32>} : memref<216x256xf32, #tpu.memory_space<vmem>>, vector<16x256xf32>,
    %c1_i32_891 = arith.constant 1 : i32
    %1649 = tpu.dynamic_rotate %1331 by %c1_i32_891 dim 1 : vector<8x256xf32>, i32 -> vector<8x256xf32>
    %cst_892 = arith.constant 0.000000e+00 : f32
    %1650 = vector.shape_cast %86 : vector<1x256xi1> to vector<1x256xi1>
    %1651 = vector.broadcast %1650 : vector<1x256xi1> to vector<8x256xi1>
    %1652 = vector.broadcast %cst_892 : f32 to vector<8x256xf32>
    %1653 = arith.select %1651, %1649, %1652 : vector<8x256xi1>, vector<8x256xf32>
    %c88_893 = arith.constant 88 : index
    %c0_894 = arith.constant 0 : index
    %1654 = vector.load %arg13[%c88_893, %c0_894] : memref<216x256xf32, #tpu.memory_space<vmem>>, vector<8x256xf32>
    tpu.vector_store %arg13[%c88_893, %c0_894], %1653 {strides = array<i32>} : memref<216x256xf32, #tpu.memory_space<vmem>>, vector<8x256xf32>,
    %cst_895 = arith.constant 0.000000e+00 : f32
    %1655 = vector.shape_cast %106 : vector<1x256xi1> to vector<1x256xi1>
    %1656 = vector.broadcast %1655 : vector<1x256xi1> to vector<16x256xi1>
    %1657 = vector.broadcast %cst_895 : f32 to vector<16x256xf32>
    %1658 = arith.select %1656, %1606, %1657 : vector<16x256xi1>, vector<16x256xf32>
    %c96_896 = arith.constant 96 : index
    %c0_897 = arith.constant 0 : index
    %1659 = vector.load %arg13[%c96_896, %c0_897] : memref<216x256xf32, #tpu.memory_space<vmem>>, vector<16x256xf32>
    tpu.vector_store %arg13[%c96_896, %c0_897], %1658 {strides = array<i32>} : memref<216x256xf32, #tpu.memory_space<vmem>>, vector<16x256xf32>,
    %cst_898 = arith.constant 0.000000e+00 : f32
    %1660 = vector.shape_cast %106 : vector<1x256xi1> to vector<1x256xi1>
    %1661 = vector.broadcast %1660 : vector<1x256xi1> to vector<8x256xi1>
    %1662 = vector.broadcast %cst_898 : f32 to vector<8x256xf32>
    %1663 = arith.select %1661, %1331, %1662 : vector<8x256xi1>, vector<8x256xf32>
    %c112_899 = arith.constant 112 : index
    %c0_900 = arith.constant 0 : index
    %1664 = vector.load %arg13[%c112_899, %c0_900] : memref<216x256xf32, #tpu.memory_space<vmem>>, vector<8x256xf32>
    tpu.vector_store %arg13[%c112_899, %c0_900], %1663 {strides = array<i32>} : memref<216x256xf32, #tpu.memory_space<vmem>>, vector<8x256xf32>,
    %c255_i32_901 = arith.constant 255 : i32
    %1665 = tpu.dynamic_rotate %1606 by %c255_i32_901 dim 1 : vector<16x256xf32>, i32 -> vector<16x256xf32>
    %cst_902 = arith.constant 0.000000e+00 : f32
    %1666 = vector.shape_cast %126 : vector<1x256xi1> to vector<1x256xi1>
    %1667 = vector.broadcast %1666 : vector<1x256xi1> to vector<16x256xi1>
    %1668 = vector.broadcast %cst_902 : f32 to vector<16x256xf32>
    %1669 = arith.select %1667, %1665, %1668 : vector<16x256xi1>, vector<16x256xf32>
    %c120_903 = arith.constant 120 : index
    %c0_904 = arith.constant 0 : index
    %1670 = vector.load %arg13[%c120_903, %c0_904] : memref<216x256xf32, #tpu.memory_space<vmem>>, vector<16x256xf32>
    tpu.vector_store %arg13[%c120_903, %c0_904], %1669 {strides = array<i32>} : memref<216x256xf32, #tpu.memory_space<vmem>>, vector<16x256xf32>,
    %c255_i32_905 = arith.constant 255 : i32
    %1671 = tpu.dynamic_rotate %1331 by %c255_i32_905 dim 1 : vector<8x256xf32>, i32 -> vector<8x256xf32>
    %cst_906 = arith.constant 0.000000e+00 : f32
    %1672 = vector.shape_cast %126 : vector<1x256xi1> to vector<1x256xi1>
    %1673 = vector.broadcast %1672 : vector<1x256xi1> to vector<8x256xi1>
    %1674 = vector.broadcast %cst_906 : f32 to vector<8x256xf32>
    %1675 = arith.select %1673, %1671, %1674 : vector<8x256xi1>, vector<8x256xf32>
    %c136_907 = arith.constant 136 : index
    %c0_908 = arith.constant 0 : index
    %1676 = vector.load %arg13[%c136_907, %c0_908] : memref<216x256xf32, #tpu.memory_space<vmem>>, vector<8x256xf32>
    tpu.vector_store %arg13[%c136_907, %c0_908], %1675 {strides = array<i32>} : memref<216x256xf32, #tpu.memory_space<vmem>>, vector<8x256xf32>,
    %c241_i32_909 = arith.constant 241 : i32
    %1677 = tpu.dynamic_rotate %1606 by %c241_i32_909 dim 1 : vector<16x256xf32>, i32 -> vector<16x256xf32>
    %cst_910 = arith.constant 0.000000e+00 : f32
    %1678 = vector.shape_cast %146 : vector<1x256xi1> to vector<1x256xi1>
    %1679 = vector.broadcast %1678 : vector<1x256xi1> to vector<16x256xi1>
    %1680 = vector.broadcast %cst_910 : f32 to vector<16x256xf32>
    %1681 = arith.select %1679, %1677, %1680 : vector<16x256xi1>, vector<16x256xf32>
    %c144_911 = arith.constant 144 : index
    %c0_912 = arith.constant 0 : index
    %1682 = vector.load %arg13[%c144_911, %c0_912] : memref<216x256xf32, #tpu.memory_space<vmem>>, vector<16x256xf32>
    tpu.vector_store %arg13[%c144_911, %c0_912], %1681 {strides = array<i32>} : memref<216x256xf32, #tpu.memory_space<vmem>>, vector<16x256xf32>,
    %c241_i32_913 = arith.constant 241 : i32
    %1683 = tpu.dynamic_rotate %1331 by %c241_i32_913 dim 1 : vector<8x256xf32>, i32 -> vector<8x256xf32>
    %cst_914 = arith.constant 0.000000e+00 : f32
    %1684 = vector.shape_cast %146 : vector<1x256xi1> to vector<1x256xi1>
    %1685 = vector.broadcast %1684 : vector<1x256xi1> to vector<8x256xi1>
    %1686 = vector.broadcast %cst_914 : f32 to vector<8x256xf32>
    %1687 = arith.select %1685, %1683, %1686 : vector<8x256xi1>, vector<8x256xf32>
    %c160_915 = arith.constant 160 : index
    %c0_916 = arith.constant 0 : index
    %1688 = vector.load %arg13[%c160_915, %c0_916] : memref<216x256xf32, #tpu.memory_space<vmem>>, vector<8x256xf32>
    tpu.vector_store %arg13[%c160_915, %c0_916], %1687 {strides = array<i32>} : memref<216x256xf32, #tpu.memory_space<vmem>>, vector<8x256xf32>,
    %c240_i32_917 = arith.constant 240 : i32
    %1689 = tpu.dynamic_rotate %1606 by %c240_i32_917 dim 1 : vector<16x256xf32>, i32 -> vector<16x256xf32>
    %cst_918 = arith.constant 0.000000e+00 : f32
    %1690 = vector.shape_cast %166 : vector<1x256xi1> to vector<1x256xi1>
    %1691 = vector.broadcast %1690 : vector<1x256xi1> to vector<16x256xi1>
    %1692 = vector.broadcast %cst_918 : f32 to vector<16x256xf32>
    %1693 = arith.select %1691, %1689, %1692 : vector<16x256xi1>, vector<16x256xf32>
    %c168_919 = arith.constant 168 : index
    %c0_920 = arith.constant 0 : index
    %1694 = vector.load %arg13[%c168_919, %c0_920] : memref<216x256xf32, #tpu.memory_space<vmem>>, vector<16x256xf32>
    tpu.vector_store %arg13[%c168_919, %c0_920], %1693 {strides = array<i32>} : memref<216x256xf32, #tpu.memory_space<vmem>>, vector<16x256xf32>,
    %c240_i32_921 = arith.constant 240 : i32
    %1695 = tpu.dynamic_rotate %1331 by %c240_i32_921 dim 1 : vector<8x256xf32>, i32 -> vector<8x256xf32>
    %cst_922 = arith.constant 0.000000e+00 : f32
    %1696 = vector.shape_cast %166 : vector<1x256xi1> to vector<1x256xi1>
    %1697 = vector.broadcast %1696 : vector<1x256xi1> to vector<8x256xi1>
    %1698 = vector.broadcast %cst_922 : f32 to vector<8x256xf32>
    %1699 = arith.select %1697, %1695, %1698 : vector<8x256xi1>, vector<8x256xf32>
    %c184_923 = arith.constant 184 : index
    %c0_924 = arith.constant 0 : index
    %1700 = vector.load %arg13[%c184_923, %c0_924] : memref<216x256xf32, #tpu.memory_space<vmem>>, vector<8x256xf32>
    tpu.vector_store %arg13[%c184_923, %c0_924], %1699 {strides = array<i32>} : memref<216x256xf32, #tpu.memory_space<vmem>>, vector<8x256xf32>,
    %c239_i32_925 = arith.constant 239 : i32
    %1701 = tpu.dynamic_rotate %1606 by %c239_i32_925 dim 1 : vector<16x256xf32>, i32 -> vector<16x256xf32>
    %cst_926 = arith.constant 0.000000e+00 : f32
    %1702 = vector.shape_cast %186 : vector<1x256xi1> to vector<1x256xi1>
    %1703 = vector.broadcast %1702 : vector<1x256xi1> to vector<16x256xi1>
    %1704 = vector.broadcast %cst_926 : f32 to vector<16x256xf32>
    %1705 = arith.select %1703, %1701, %1704 : vector<16x256xi1>, vector<16x256xf32>
    %c192_927 = arith.constant 192 : index
    %c0_928 = arith.constant 0 : index
    %1706 = vector.load %arg13[%c192_927, %c0_928] : memref<216x256xf32, #tpu.memory_space<vmem>>, vector<16x256xf32>
    tpu.vector_store %arg13[%c192_927, %c0_928], %1705 {strides = array<i32>} : memref<216x256xf32, #tpu.memory_space<vmem>>, vector<16x256xf32>,
    %c239_i32_929 = arith.constant 239 : i32
    %1707 = tpu.dynamic_rotate %1331 by %c239_i32_929 dim 1 : vector<8x256xf32>, i32 -> vector<8x256xf32>
    %cst_930 = arith.constant 0.000000e+00 : f32
    %1708 = vector.shape_cast %186 : vector<1x256xi1> to vector<1x256xi1>
    %1709 = vector.broadcast %1708 : vector<1x256xi1> to vector<8x256xi1>
    %1710 = vector.broadcast %cst_930 : f32 to vector<8x256xf32>
    %1711 = arith.select %1709, %1707, %1710 : vector<8x256xi1>, vector<8x256xf32>
    %c208_931 = arith.constant 208 : index
    %c0_932 = arith.constant 0 : index
    %1712 = vector.load %arg13[%c208_931, %c0_932] : memref<216x256xf32, #tpu.memory_space<vmem>>, vector<8x256xf32>
    tpu.vector_store %arg13[%c208_931, %c0_932], %1711 {strides = array<i32>} : memref<216x256xf32, #tpu.memory_space<vmem>>, vector<8x256xf32>,
    %c5_933 = arith.constant 5 : index
    %c0_934 = arith.constant 0 : index
    %c0_935 = arith.constant 0 : index
    %1713 = vector.load %arg6[%c5_933, %c0_934, %c0_935] : memref<7x24x216xbf16, #tpu.memory_space<vmem>>, vector<1x8x216xbf16>
    %1714 = vector.shape_cast %1713 : vector<1x8x216xbf16> to vector<8x216xbf16>
    %c0_936 = arith.constant 0 : index
    %c0_937 = arith.constant 0 : index
    %1715 = vector.load %arg13[%c0_936, %c0_937] : memref<216x256xf32, #tpu.memory_space<vmem>>, vector<216x256xf32>
    %1716 = arith.truncf %1715 : vector<216x256xf32> to vector<216x256xbf16>
    %cst_938 = arith.constant dense<0.000000e+00> : vector<8x256xf32>
    %1717 = tpu.matmul %1714, %1716, %cst_938 {dimension_numbers = #tpu.dot_dimension_numbers<[1], [0], [0], [1], [0, 0, 1, 1], [], []>} : vector<8x216xbf16>, vector<216x256xbf16>, vector<8x256xf32> -> vector<8x256xf32>
    %cst_939 = arith.constant dense<0.000000e+00> : vector<8xf32>
    %1718 = vector.multi_reduction <add>, %1717, %cst_939 [1] : vector<8x256xf32> to vector<8xf32>
    %1719 = vector.shape_cast %1718 : vector<8xf32> to vector<8x1xf32>
    %cst_940 = arith.constant 3.906250e-03 : f32
    %1720 = vector.broadcast %cst_940 : f32 to vector<8x1xf32>
    %1721 = arith.mulf %1719, %1720 : vector<8x1xf32>
    %1722 = vector.broadcast %1721 : vector<8x1xf32> to vector<8x256xf32>
    %1723 = arith.subf %1717, %1722 : vector<8x256xf32>
    %1724 = arith.mulf %1723, %1723 : vector<8x256xf32>
    %cst_941 = arith.constant dense<0.000000e+00> : vector<8xf32>
    %1725 = vector.multi_reduction <add>, %1724, %cst_941 [1] : vector<8x256xf32> to vector<8xf32>
    %1726 = vector.shape_cast %1725 : vector<8xf32> to vector<8x1xf32>
    %cst_942 = arith.constant 3.906250e-03 : f32
    %1727 = vector.broadcast %cst_942 : f32 to vector<8x1xf32>
    %1728 = arith.mulf %1726, %1727 : vector<8x1xf32>
    %c5_943 = arith.constant 5 : index
    %c0_944 = arith.constant 0 : index
    %c0_945 = arith.constant 0 : index
    %1729 = vector.load %arg7[%c5_943, %c0_944, %c0_945] : memref<7x24x2xf32, #tpu.memory_space<vmem>>, vector<1x8x1xf32>
    %1730 = vector.shape_cast %1729 : vector<1x8x1xf32> to vector<8x1xf32>
    %c5_946 = arith.constant 5 : index
    %c0_947 = arith.constant 0 : index
    %c1_948 = arith.constant 1 : index
    %1731 = vector.load %arg7[%c5_946, %c0_947, %c1_948] : memref<7x24x2xf32, #tpu.memory_space<vmem>>, vector<1x8x1xf32>
    %1732 = vector.shape_cast %1731 : vector<1x8x1xf32> to vector<8x1xf32>
    %cst_949 = arith.constant 9.99999974E-6 : f32
    %1733 = vector.broadcast %cst_949 : f32 to vector<8x1xf32>
    %1734 = arith.addf %1728, %1733 : vector<8x1xf32>
    %1735 = math.rsqrt %1734 : vector<8x1xf32>
    %1736 = vector.broadcast %1735 : vector<8x1xf32> to vector<8x256xf32>
    %1737 = arith.mulf %1723, %1736 : vector<8x256xf32>
    %1738 = vector.broadcast %1730 : vector<8x1xf32> to vector<8x256xf32>
    %1739 = arith.mulf %1737, %1738 : vector<8x256xf32>
    %1740 = vector.broadcast %1732 : vector<8x1xf32> to vector<8x256xf32>
    %1741 = arith.addf %1739, %1740 : vector<8x256xf32>
    %cst_950 = arith.constant 0.000000e+00 : f32
    %1742 = vector.broadcast %cst_950 : f32 to vector<8x256xf32>
    %1743 = arith.cmpf oge, %1741, %1742 : vector<8x256xf32>
    %cst_951 = arith.constant 0.00999999977 : f32
    %1744 = vector.broadcast %cst_951 : f32 to vector<8x256xf32>
    %1745 = arith.mulf %1744, %1741 : vector<8x256xf32>
    %1746 = arith.select %1743, %1741, %1745 : vector<8x256xi1>, vector<8x256xf32>
    %c17_i32_952 = arith.constant 17 : i32
    %1747 = tpu.dynamic_rotate %1746 by %c17_i32_952 dim 1 : vector<8x256xf32>, i32 -> vector<8x256xf32>
    %cst_953 = arith.constant 0.000000e+00 : f32
    %1748 = vector.shape_cast %26 : vector<1x256xi1> to vector<1x256xi1>
    %1749 = vector.broadcast %1748 : vector<1x256xi1> to vector<8x256xi1>
    %1750 = vector.broadcast %cst_953 : f32 to vector<8x256xf32>
    %1751 = arith.select %1749, %1747, %1750 : vector<8x256xi1>, vector<8x256xf32>
    %c0_954 = arith.constant 0 : index
    %c0_955 = arith.constant 0 : index
    %1752 = vector.load %arg13[%c0_954, %c0_955] : memref<216x256xf32, #tpu.memory_space<vmem>>, vector<8x256xf32>
    tpu.vector_store %arg13[%c0_954, %c0_955], %1751 {strides = array<i32>} : memref<216x256xf32, #tpu.memory_space<vmem>>, vector<8x256xf32>,
    %c16_i32_956 = arith.constant 16 : i32
    %1753 = tpu.dynamic_rotate %1746 by %c16_i32_956 dim 1 : vector<8x256xf32>, i32 -> vector<8x256xf32>
    %cst_957 = arith.constant 0.000000e+00 : f32
    %1754 = vector.shape_cast %46 : vector<1x256xi1> to vector<1x256xi1>
    %1755 = vector.broadcast %1754 : vector<1x256xi1> to vector<8x256xi1>
    %1756 = vector.broadcast %cst_957 : f32 to vector<8x256xf32>
    %1757 = arith.select %1755, %1753, %1756 : vector<8x256xi1>, vector<8x256xf32>
    %c8_958 = arith.constant 8 : index
    %c0_959 = arith.constant 0 : index
    %1758 = vector.load %arg13[%c8_958, %c0_959] : memref<216x256xf32, #tpu.memory_space<vmem>>, vector<8x256xf32>
    tpu.vector_store %arg13[%c8_958, %c0_959], %1757 {strides = array<i32>} : memref<216x256xf32, #tpu.memory_space<vmem>>, vector<8x256xf32>,
    %c15_i32_960 = arith.constant 15 : i32
    %1759 = tpu.dynamic_rotate %1746 by %c15_i32_960 dim 1 : vector<8x256xf32>, i32 -> vector<8x256xf32>
    %cst_961 = arith.constant 0.000000e+00 : f32
    %1760 = vector.shape_cast %66 : vector<1x256xi1> to vector<1x256xi1>
    %1761 = vector.broadcast %1760 : vector<1x256xi1> to vector<8x256xi1>
    %1762 = vector.broadcast %cst_961 : f32 to vector<8x256xf32>
    %1763 = arith.select %1761, %1759, %1762 : vector<8x256xi1>, vector<8x256xf32>
    %c16_962 = arith.constant 16 : index
    %c0_963 = arith.constant 0 : index
    %1764 = vector.load %arg13[%c16_962, %c0_963] : memref<216x256xf32, #tpu.memory_space<vmem>>, vector<8x256xf32>
    tpu.vector_store %arg13[%c16_962, %c0_963], %1763 {strides = array<i32>} : memref<216x256xf32, #tpu.memory_space<vmem>>, vector<8x256xf32>,
    %c1_i32_964 = arith.constant 1 : i32
    %1765 = tpu.dynamic_rotate %1746 by %c1_i32_964 dim 1 : vector<8x256xf32>, i32 -> vector<8x256xf32>
    %cst_965 = arith.constant 0.000000e+00 : f32
    %1766 = vector.shape_cast %86 : vector<1x256xi1> to vector<1x256xi1>
    %1767 = vector.broadcast %1766 : vector<1x256xi1> to vector<8x256xi1>
    %1768 = vector.broadcast %cst_965 : f32 to vector<8x256xf32>
    %1769 = arith.select %1767, %1765, %1768 : vector<8x256xi1>, vector<8x256xf32>
    %c24_966 = arith.constant 24 : index
    %c0_967 = arith.constant 0 : index
    %1770 = vector.load %arg13[%c24_966, %c0_967] : memref<216x256xf32, #tpu.memory_space<vmem>>, vector<8x256xf32>
    tpu.vector_store %arg13[%c24_966, %c0_967], %1769 {strides = array<i32>} : memref<216x256xf32, #tpu.memory_space<vmem>>, vector<8x256xf32>,
    %cst_968 = arith.constant 0.000000e+00 : f32
    %1771 = vector.shape_cast %106 : vector<1x256xi1> to vector<1x256xi1>
    %1772 = vector.broadcast %1771 : vector<1x256xi1> to vector<8x256xi1>
    %1773 = vector.broadcast %cst_968 : f32 to vector<8x256xf32>
    %1774 = arith.select %1772, %1746, %1773 : vector<8x256xi1>, vector<8x256xf32>
    %c32_969 = arith.constant 32 : index
    %c0_970 = arith.constant 0 : index
    %1775 = vector.load %arg13[%c32_969, %c0_970] : memref<216x256xf32, #tpu.memory_space<vmem>>, vector<8x256xf32>
    tpu.vector_store %arg13[%c32_969, %c0_970], %1774 {strides = array<i32>} : memref<216x256xf32, #tpu.memory_space<vmem>>, vector<8x256xf32>,
    %c255_i32_971 = arith.constant 255 : i32
    %1776 = tpu.dynamic_rotate %1746 by %c255_i32_971 dim 1 : vector<8x256xf32>, i32 -> vector<8x256xf32>
    %cst_972 = arith.constant 0.000000e+00 : f32
    %1777 = vector.shape_cast %126 : vector<1x256xi1> to vector<1x256xi1>
    %1778 = vector.broadcast %1777 : vector<1x256xi1> to vector<8x256xi1>
    %1779 = vector.broadcast %cst_972 : f32 to vector<8x256xf32>
    %1780 = arith.select %1778, %1776, %1779 : vector<8x256xi1>, vector<8x256xf32>
    %c40_973 = arith.constant 40 : index
    %c0_974 = arith.constant 0 : index
    %1781 = vector.load %arg13[%c40_973, %c0_974] : memref<216x256xf32, #tpu.memory_space<vmem>>, vector<8x256xf32>
    tpu.vector_store %arg13[%c40_973, %c0_974], %1780 {strides = array<i32>} : memref<216x256xf32, #tpu.memory_space<vmem>>, vector<8x256xf32>,
    %c241_i32_975 = arith.constant 241 : i32
    %1782 = tpu.dynamic_rotate %1746 by %c241_i32_975 dim 1 : vector<8x256xf32>, i32 -> vector<8x256xf32>
    %cst_976 = arith.constant 0.000000e+00 : f32
    %1783 = vector.shape_cast %146 : vector<1x256xi1> to vector<1x256xi1>
    %1784 = vector.broadcast %1783 : vector<1x256xi1> to vector<8x256xi1>
    %1785 = vector.broadcast %cst_976 : f32 to vector<8x256xf32>
    %1786 = arith.select %1784, %1782, %1785 : vector<8x256xi1>, vector<8x256xf32>
    %c48_977 = arith.constant 48 : index
    %c0_978 = arith.constant 0 : index
    %1787 = vector.load %arg13[%c48_977, %c0_978] : memref<216x256xf32, #tpu.memory_space<vmem>>, vector<8x256xf32>
    tpu.vector_store %arg13[%c48_977, %c0_978], %1786 {strides = array<i32>} : memref<216x256xf32, #tpu.memory_space<vmem>>, vector<8x256xf32>,
    %c240_i32_979 = arith.constant 240 : i32
    %1788 = tpu.dynamic_rotate %1746 by %c240_i32_979 dim 1 : vector<8x256xf32>, i32 -> vector<8x256xf32>
    %cst_980 = arith.constant 0.000000e+00 : f32
    %1789 = vector.shape_cast %166 : vector<1x256xi1> to vector<1x256xi1>
    %1790 = vector.broadcast %1789 : vector<1x256xi1> to vector<8x256xi1>
    %1791 = vector.broadcast %cst_980 : f32 to vector<8x256xf32>
    %1792 = arith.select %1790, %1788, %1791 : vector<8x256xi1>, vector<8x256xf32>
    %c56_981 = arith.constant 56 : index
    %c0_982 = arith.constant 0 : index
    %1793 = vector.load %arg13[%c56_981, %c0_982] : memref<216x256xf32, #tpu.memory_space<vmem>>, vector<8x256xf32>
    tpu.vector_store %arg13[%c56_981, %c0_982], %1792 {strides = array<i32>} : memref<216x256xf32, #tpu.memory_space<vmem>>, vector<8x256xf32>,
    %c239_i32_983 = arith.constant 239 : i32
    %1794 = tpu.dynamic_rotate %1746 by %c239_i32_983 dim 1 : vector<8x256xf32>, i32 -> vector<8x256xf32>
    %cst_984 = arith.constant 0.000000e+00 : f32
    %1795 = vector.shape_cast %186 : vector<1x256xi1> to vector<1x256xi1>
    %1796 = vector.broadcast %1795 : vector<1x256xi1> to vector<8x256xi1>
    %1797 = vector.broadcast %cst_984 : f32 to vector<8x256xf32>
    %1798 = arith.select %1796, %1794, %1797 : vector<8x256xi1>, vector<8x256xf32>
    %c64_985 = arith.constant 64 : index
    %c0_986 = arith.constant 0 : index
    %1799 = vector.load %arg13[%c64_985, %c0_986] : memref<216x256xf32, #tpu.memory_space<vmem>>, vector<8x256xf32>
    tpu.vector_store %arg13[%c64_985, %c0_986], %1798 {strides = array<i32>} : memref<216x256xf32, #tpu.memory_space<vmem>>, vector<8x256xf32>,
    %c6_987 = arith.constant 6 : index
    %c0_988 = arith.constant 0 : index
    %c0_989 = arith.constant 0 : index
    %1800 = vector.load %arg6[%c6_987, %c0_988, %c0_989] : memref<7x24x216xbf16, #tpu.memory_space<vmem>>, vector<1x8x72xbf16>
    %1801 = vector.shape_cast %1800 : vector<1x8x72xbf16> to vector<8x72xbf16>
    %c0_990 = arith.constant 0 : index
    %c0_991 = arith.constant 0 : index
    %1802 = vector.load %arg13[%c0_990, %c0_991] : memref<216x256xf32, #tpu.memory_space<vmem>>, vector<72x256xf32>
    %1803 = arith.truncf %1802 : vector<72x256xf32> to vector<72x256xbf16>
    %cst_992 = arith.constant dense<0.000000e+00> : vector<8x256xf32>
    %1804 = tpu.matmul %1801, %1803, %cst_992 {dimension_numbers = #tpu.dot_dimension_numbers<[1], [0], [0], [1], [0, 0, 1, 1], [], []>} : vector<8x72xbf16>, vector<72x256xbf16>, vector<8x256xf32> -> vector<8x256xf32>
    %cst_993 = arith.constant dense<0.000000e+00> : vector<8xf32>
    %1805 = vector.multi_reduction <add>, %1804, %cst_993 [1] : vector<8x256xf32> to vector<8xf32>
    %1806 = vector.shape_cast %1805 : vector<8xf32> to vector<8x1xf32>
    %cst_994 = arith.constant 3.906250e-03 : f32
    %1807 = vector.broadcast %cst_994 : f32 to vector<8x1xf32>
    %1808 = arith.mulf %1806, %1807 : vector<8x1xf32>
    %1809 = vector.broadcast %1808 : vector<8x1xf32> to vector<8x256xf32>
    %1810 = arith.subf %1804, %1809 : vector<8x256xf32>
    %1811 = arith.mulf %1810, %1810 : vector<8x256xf32>
    %cst_995 = arith.constant dense<0.000000e+00> : vector<8xf32>
    %1812 = vector.multi_reduction <add>, %1811, %cst_995 [1] : vector<8x256xf32> to vector<8xf32>
    %1813 = vector.shape_cast %1812 : vector<8xf32> to vector<8x1xf32>
    %cst_996 = arith.constant 3.906250e-03 : f32
    %1814 = vector.broadcast %cst_996 : f32 to vector<8x1xf32>
    %1815 = arith.mulf %1813, %1814 : vector<8x1xf32>
    %c6_997 = arith.constant 6 : index
    %c0_998 = arith.constant 0 : index
    %c0_999 = arith.constant 0 : index
    %1816 = vector.load %arg7[%c6_997, %c0_998, %c0_999] : memref<7x24x2xf32, #tpu.memory_space<vmem>>, vector<1x8x1xf32>
    %1817 = vector.shape_cast %1816 : vector<1x8x1xf32> to vector<8x1xf32>
    %c6_1000 = arith.constant 6 : index
    %c0_1001 = arith.constant 0 : index
    %c1_1002 = arith.constant 1 : index
    %1818 = vector.load %arg7[%c6_1000, %c0_1001, %c1_1002] : memref<7x24x2xf32, #tpu.memory_space<vmem>>, vector<1x8x1xf32>
    %1819 = vector.shape_cast %1818 : vector<1x8x1xf32> to vector<8x1xf32>
    %cst_1003 = arith.constant 9.99999974E-6 : f32
    %1820 = vector.broadcast %cst_1003 : f32 to vector<8x1xf32>
    %1821 = arith.addf %1815, %1820 : vector<8x1xf32>
    %1822 = math.rsqrt %1821 : vector<8x1xf32>
    %1823 = vector.broadcast %1822 : vector<8x1xf32> to vector<8x256xf32>
    %1824 = arith.mulf %1810, %1823 : vector<8x256xf32>
    %1825 = vector.broadcast %1817 : vector<8x1xf32> to vector<8x256xf32>
    %1826 = arith.mulf %1824, %1825 : vector<8x256xf32>
    %1827 = vector.broadcast %1819 : vector<8x1xf32> to vector<8x256xf32>
    %1828 = arith.addf %1826, %1827 : vector<8x256xf32>
    %cst_1004 = arith.constant 0.000000e+00 : f32
    %1829 = vector.broadcast %cst_1004 : f32 to vector<8x256xf32>
    %1830 = arith.cmpf oge, %1828, %1829 : vector<8x256xf32>
    %cst_1005 = arith.constant 0.00999999977 : f32
    %1831 = vector.broadcast %cst_1005 : f32 to vector<8x256xf32>
    %1832 = arith.mulf %1831, %1828 : vector<8x256xf32>
    %1833 = arith.select %1830, %1828, %1832 : vector<8x256xi1>, vector<8x256xf32>
    %c0_1006 = arith.constant 0 : index
    %c0_1007 = arith.constant 0 : index
    %1834 = vector.load %arg8[%c0_1006, %c0_1007] : memref<2x8xbf16, #tpu.memory_space<vmem>>, vector<2x8xbf16>
    %1835 = arith.truncf %1833 : vector<8x256xf32> to vector<8x256xbf16>
    %cst_1008 = arith.constant dense<0.000000e+00> : vector<2x256xf32>
    %1836 = tpu.matmul %1834, %1835, %cst_1008 {dimension_numbers = #tpu.dot_dimension_numbers<[1], [0], [0], [1], [0, 0, 1, 1], [], []>} : vector<2x8xbf16>, vector<8x256xbf16>, vector<2x256xf32> -> vector<2x256xf32>
    %c0_1009 = arith.constant 0 : index
    %c0_1010 = arith.constant 0 : index
    %1837 = vector.load %arg9[%c0_1009, %c0_1010] : memref<2x1xf32, #tpu.memory_space<vmem>>, vector<2x1xf32>
    %1838 = vector.broadcast %1837 : vector<2x1xf32> to vector<2x256xf32>
    %1839 = arith.addf %1836, %1838 : vector<2x256xf32>
    %c0_1011 = arith.constant 0 : index
    %c0_1012 = arith.constant 0 : index
    %c0_1013 = arith.constant 0 : index
    %1840 = vector.load %arg12[%c0_1011, %c0_1012, %c0_1013] : memref<1x2x256xf32, #tpu.memory_space<vmem>>, vector<1x2x256xf32>
    %1841 = vector.shape_cast %1840 : vector<1x2x256xf32> to vector<2x256xf32>
    %1842 = vector.shape_cast %1839 : vector<2x256xf32> to vector<1x2x256xf32>
    tpu.vector_store %arg12[%c0_1011, %c0_1012, %c0_1013], %1842 {strides = array<i32>} : memref<1x2x256xf32, #tpu.memory_space<vmem>>, vector<1x2x256xf32>,
    return
  }
  func.func @transform_0(%arg0: i32) -> (i32, i32, i32) {
    %c0_i32 = arith.constant 0 : i32
    %c0_i32_0 = arith.constant 0 : i32
    %c0_i32_1 = arith.constant 0 : i32
    return %arg0, %c0_i32, %c0_i32_0 : i32, i32, i32
  }
  func.func @transform_1(%arg0: i32) -> (i32, i32, i32) {
    %c0_i32 = arith.constant 0 : i32
    %c0_i32_0 = arith.constant 0 : i32
    %c0_i32_1 = arith.constant 0 : i32
    %c0_i32_2 = arith.constant 0 : i32
    return %c0_i32, %c0_i32_0, %c0_i32_1 : i32, i32, i32
  }
  func.func @transform_2(%arg0: i32) -> (i32, i32, i32) {
    %c0_i32 = arith.constant 0 : i32
    %c0_i32_0 = arith.constant 0 : i32
    %c0_i32_1 = arith.constant 0 : i32
    %c0_i32_2 = arith.constant 0 : i32
    return %c0_i32, %c0_i32_0, %c0_i32_1 : i32, i32, i32
  }
  func.func @transform_3(%arg0: i32) -> (i32, i32) {
    %c0_i32 = arith.constant 0 : i32
    %c0_i32_0 = arith.constant 0 : i32
    %c0_i32_1 = arith.constant 0 : i32
    return %c0_i32, %c0_i32_0 : i32, i32
  }
  func.func @transform_4(%arg0: i32) -> (i32, i32) {
    %c0_i32 = arith.constant 0 : i32
    %c0_i32_0 = arith.constant 0 : i32
    %c0_i32_1 = arith.constant 0 : i32
    return %c0_i32, %c0_i32_0 : i32, i32
  }
  func.func @transform_5(%arg0: i32) -> (i32, i32, i32) {
    %c0_i32 = arith.constant 0 : i32
    %c0_i32_0 = arith.constant 0 : i32
    %c0_i32_1 = arith.constant 0 : i32
    %c0_i32_2 = arith.constant 0 : i32
    return %c0_i32, %c0_i32_0, %c0_i32_1 : i32, i32, i32
  }
  func.func @transform_6(%arg0: i32) -> (i32, i32, i32) {
    %c0_i32 = arith.constant 0 : i32
    %c0_i32_0 = arith.constant 0 : i32
    %c0_i32_1 = arith.constant 0 : i32
    %c0_i32_2 = arith.constant 0 : i32
    return %c0_i32, %c0_i32_0, %c0_i32_1 : i32, i32, i32
  }
  func.func @transform_7(%arg0: i32) -> (i32, i32) {
    %c0_i32 = arith.constant 0 : i32
    %c0_i32_0 = arith.constant 0 : i32
    %c0_i32_1 = arith.constant 0 : i32
    return %c0_i32, %c0_i32_0 : i32, i32
  }
  func.func @transform_8(%arg0: i32) -> (i32, i32) {
    %c0_i32 = arith.constant 0 : i32
    %c0_i32_0 = arith.constant 0 : i32
    %c0_i32_1 = arith.constant 0 : i32
    return %c0_i32, %c0_i32_0 : i32, i32
  }
  func.func @transform_9(%arg0: i32) -> (i32, i32) {
    %c0_i32 = arith.constant 0 : i32
    %c0_i32_0 = arith.constant 0 : i32
    %c0_i32_1 = arith.constant 0 : i32
    return %c0_i32, %c0_i32_0 : i32, i32
  }
  func.func @transform_10(%arg0: i32) -> (i32, i32) {
    %c0_i32 = arith.constant 0 : i32
    %c0_i32_0 = arith.constant 0 : i32
    %c0_i32_1 = arith.constant 0 : i32
    return %c0_i32, %c0_i32_0 : i32, i32
  }
  func.func @transform_11(%arg0: i32) -> (i32, i32, i32) {
    %c0_i32 = arith.constant 0 : i32
    %c0_i32_0 = arith.constant 0 : i32
    %c0_i32_1 = arith.constant 0 : i32
    return %arg0, %c0_i32, %c0_i32_0 : i32, i32, i32
  }
}

</mosaic_0001>

<llo_original>
// kernel: _lambda_.1
$region0: #{_lambda_.1}
  #allocation0 [shape = 'u32[]', space=smem, size = 0x4, offset = 0x4, fixed_abs, tag = 'smem constant byte address 0x4 - core index']
  #allocation1 [shape = 'u32[144,128]{1,0:T(1,128)}', space=vmem, size = 0x12000, scoped, tag = 'internal scratch']
  #allocation2 [shape = 'f32[216,256]{1,0:T(8,128)}', space=vmem, size = 0x36000, scoped, tag = 'scratch operand']
  %s0 = inlined_call_operand.vmem [shape: f32[2,4,256], index: 0, kind: input, shape index: {}]
  %s1 = inlined_call_operand.vmem [shape: bf16[7,24,216], index: 1, kind: input, shape index: {}]
  %s2 = inlined_call_operand.vmem [shape: f32[7,24,2], index: 2, kind: input, shape index: {}, may-alias: {2,6}]
  %s3 = inlined_call_operand.vmem [shape: bf16[2,8], index: 3, kind: input, shape index: {}]
  %s4 = inlined_call_operand.vmem [shape: f32[2,1], index: 4, kind: input, shape index: {}, may-alias: {4,8}]
  %s5 = inlined_call_operand.vmem [shape: bf16[7,24,216], index: 5, kind: input, shape index: {}]
  %s6 = inlined_call_operand.vmem [shape: f32[7,24,2], index: 6, kind: input, shape index: {}, may-alias: {2,6}]
  %s7 = inlined_call_operand.vmem [shape: bf16[2,8], index: 7, kind: input, shape index: {}]
  %s8 = inlined_call_operand.vmem [shape: f32[2,1], index: 8, kind: input, shape index: {}, may-alias: {4,8}]
  %s9 = inlined_call_operand.vmem [shape: bf16[256,256], index: 9, kind: input, shape index: {}]
  %s10 = inlined_call_operand.vmem [shape: bf16[256,256], index: 10, kind: input, shape index: {}]
  %s11 = inlined_call_operand.vmem [shape: f32[2,2,256], index: 11, kind: output, shape index: {}]
  %s12 = sld [smem:[#allocation0]]
  $region77: #{_lambda_.1} parent=0
    _
  %s14 = ssub.s32 1, %s12
  %s15 = scalar_select 0, %s14, %s12
  loop: start=0, step=1, limit=4
  $region2: #{_lambda_.1} parent=0 // loop_pre_header
    _
  $region3: #{_lambda_.1} parent=0 // loop_header
    %s17 = sphi 0, %s21
    %p18 = scmp.ge.s32.totalorder %s17, 4
    %s27 = sphi 0, %s29
    %s30 = sphi 0, %s27
    %s31 = sphi 0, %s30
    %s47 = sphi 0, %s31
    %s51 = sphi 0, %s51
    %s53 = sphi 0, %s51
    %s54 = sphi 0, %s53
    %s68 = sphi 0, %s54
    %s72 = sphi 0, %s72
    %s74 = sphi 0, %s72
    %s75 = sphi 0, %s74
    %s89 = sphi 0, %s75
    %s93 = sphi 0, %s93
    %s95 = sphi 0, %s93
    %s96 = sphi 0, %s95
    %s110 = sphi 0, %s96
    %s114 = sphi 0, %s114
    %s116 = sphi 0, %s114
    %s117 = sphi 0, %s116
    %s131 = sphi 0, %s117
    %s135 = sphi 0, %s135
    %s137 = sphi 0, %s135
    %s138 = sphi 0, %s137
    %s152 = sphi 0, %s138
    %s156 = sphi 0, %s156
    %s158 = sphi 0, %s156
    %s159 = sphi 0, %s158
    %s173 = sphi 0, %s159
    %s177 = sphi 0, %s177
    %s179 = sphi 0, %s177
    %s180 = sphi 0, %s179
    %s194 = sphi 0, %s180
    %s198 = sphi 0, %s198
    %s200 = sphi 0, %s198
    %s201 = sphi 0, %s200
    %s215 = sphi 0, %s201
    %s219 = sphi 0, %s219
    %s221 = sphi 0, %s219
    %s222 = sphi 0, %s221
    %s236 = sphi 0, %s222
    %s240 = sphi 0, %s240
    %s242 = sphi 0, %s240
    %s243 = sphi 0, %s242
    %s257 = sphi 0, %s243
    %s263 = sphi 0, %s265
    %s266 = sphi 0, %s263
    %s267 = sphi 0, %s266
    %s283 = sphi 0, %s267
  $region4: #{_lambda_.1} parent=0 // loop_header_branch
    %20 = sbr.rel (%p18) target = $region8
  $region5: #{_lambda_.1} parent=0 // loop_body
    %s22 = ssub.s32 %s17, 1
    %s23 = ssub.s32 %s17, 2
    %s24 = sadd.s32 %s17, 1
    %s25 = ssub.s32 %s17, %s24
    %p26 = scmp.eq.s32.totalorder %s25, 0
    %s28 = sadd.s32 %s27, 1
    %s29 = scalar_select %p26, %s27, %s28
    %p32 = pneg %p26
    %p33 = scmp.eq.s32.totalorder %s17, 1
    %p34 = por %p32, %p33
    %p35 = scmp.ne.s32.totalorder %s27, %s30
    %p36 = scmp.eq.s32.totalorder %s17, 0
    %p37 = por %p35, %p36
    %p38 = scmp.ne.s32.totalorder %s27, %s30
    %p39 = scmp.eq.s32.totalorder %s22, 1
    %p40 = por %p38, %p39
    %p41 = scmp.ne.s32.totalorder %s30, %s31
    %p42 = scmp.eq.s32.totalorder %s22, 0
    %p43 = por %p41, %p42
    %p44 = scmp.ne.s32.totalorder %s30, %s31
    %p45 = scmp.eq.s32.totalorder %s23, 1
    %p46 = por %p44, %p45
    %p48 = scmp.ne.s32.totalorder %s31, %s47
    %p49 = scmp.eq.s32.totalorder %s23, 0
    %p50 = por %p48, %p49
    %s52 = sadd.s32 %s51, 1
    %p55 = scmp.eq.s32.totalorder %s17, 1
    %p56 = scmp.ne.s32.totalorder %s51, %s53
    %p57 = scmp.eq.s32.totalorder %s17, 0
    %p58 = por %p56, %p57
    %p59 = scmp.ne.s32.totalorder %s51, %s53
    %p60 = scmp.eq.s32.totalorder %s22, 1
    %p61 = por %p59, %p60
    %p62 = scmp.ne.s32.totalorder %s53, %s54
    %p63 = scmp.eq.s32.totalorder %s22, 0
    %p64 = por %p62, %p63
    %p65 = scmp.ne.s32.totalorder %s53, %s54
    %p66 = scmp.eq.s32.totalorder %s23, 1
    %p67 = por %p65, %p66
    %p69 = scmp.ne.s32.totalorder %s54, %s68
    %p70 = scmp.eq.s32.totalorder %s23, 0
    %p71 = por %p69, %p70
    %s73 = sadd.s32 %s72, 1
    %p76 = scmp.eq.s32.totalorder %s17, 1
    %p77 = scmp.ne.s32.totalorder %s72, %s74
    %p78 = scmp.eq.s32.totalorder %s17, 0
    %p79 = por %p77, %p78
    %p80 = scmp.ne.s32.totalorder %s72, %s74
    %p81 = scmp.eq.s32.totalorder %s22, 1
    %p82 = por %p80, %p81
    %p83 = scmp.ne.s32.totalorder %s74, %s75
    %p84 = scmp.eq.s32.totalorder %s22, 0
    %p85 = por %p83, %p84
    %p86 = scmp.ne.s32.totalorder %s74, %s75
    %p87 = scmp.eq.s32.totalorder %s23, 1
    %p88 = por %p86, %p87
    %p90 = scmp.ne.s32.totalorder %s75, %s89
    %p91 = scmp.eq.s32.totalorder %s23, 0
    %p92 = por %p90, %p91
    %s94 = sadd.s32 %s93, 1
    %p97 = scmp.eq.s32.totalorder %s17, 1
    %p98 = scmp.ne.s32.totalorder %s93, %s95
    %p99 = scmp.eq.s32.totalorder %s17, 0
    %p100 = por %p98, %p99
    %p101 = scmp.ne.s32.totalorder %s93, %s95
    %p102 = scmp.eq.s32.totalorder %s22, 1
    %p103 = por %p101, %p102
    %p104 = scmp.ne.s32.totalorder %s95, %s96
    %p105 = scmp.eq.s32.totalorder %s22, 0
    %p106 = por %p104, %p105
    %p107 = scmp.ne.s32.totalorder %s95, %s96
    %p108 = scmp.eq.s32.totalorder %s23, 1
    %p109 = por %p107, %p108
    %p111 = scmp.ne.s32.totalorder %s96, %s110
    %p112 = scmp.eq.s32.totalorder %s23, 0
    %p113 = por %p111, %p112
    %s115 = sadd.s32 %s114, 1
    %p118 = scmp.eq.s32.totalorder %s17, 1
    %p119 = scmp.ne.s32.totalorder %s114, %s116
    %p120 = scmp.eq.s32.totalorder %s17, 0
    %p121 = por %p119, %p120
    %p122 = scmp.ne.s32.totalorder %s114, %s116
    %p123 = scmp.eq.s32.totalorder %s22, 1
    %p124 = por %p122, %p123
    %p125 = scmp.ne.s32.totalorder %s116, %s117
    %p126 = scmp.eq.s32.totalorder %s22, 0
    %p127 = por %p125, %p126
    %p128 = scmp.ne.s32.totalorder %s116, %s117
    %p129 = scmp.eq.s32.totalorder %s23, 1
    %p130 = por %p128, %p129
    %p132 = scmp.ne.s32.totalorder %s117, %s131
    %p133 = scmp.eq.s32.totalorder %s23, 0
    %p134 = por %p132, %p133
    %s136 = sadd.s32 %s135, 1
    %p139 = scmp.eq.s32.totalorder %s17, 1
    %p140 = scmp.ne.s32.totalorder %s135, %s137
    %p141 = scmp.eq.s32.totalorder %s17, 0
    %p142 = por %p140, %p141
    %p143 = scmp.ne.s32.totalorder %s135, %s137
    %p144 = scmp.eq.s32.totalorder %s22, 1
    %p145 = por %p143, %p144
    %p146 = scmp.ne.s32.totalorder %s137, %s138
    %p147 = scmp.eq.s32.totalorder %s22, 0
    %p148 = por %p146, %p147
    %p149 = scmp.ne.s32.totalorder %s137, %s138
    %p150 = scmp.eq.s32.totalorder %s23, 1
    %p151 = por %p149, %p150
    %p153 = scmp.ne.s32.totalorder %s138, %s152
    %p154 = scmp.eq.s32.totalorder %s23, 0
    %p155 = por %p153, %p154
    %s157 = sadd.s32 %s156, 1
    %p160 = scmp.eq.s32.totalorder %s17, 1
    %p161 = scmp.ne.s32.totalorder %s156, %s158
    %p162 = scmp.eq.s32.totalorder %s17, 0
    %p163 = por %p161, %p162
    %p164 = scmp.ne.s32.totalorder %s156, %s158
    %p165 = scmp.eq.s32.totalorder %s22, 1
    %p166 = por %p164, %p165
    %p167 = scmp.ne.s32.totalorder %s158, %s159
    %p168 = scmp.eq.s32.totalorder %s22, 0
    %p169 = por %p167, %p168
    %p170 = scmp.ne.s32.totalorder %s158, %s159
    %p171 = scmp.eq.s32.totalorder %s23, 1
    %p172 = por %p170, %p171
    %p174 = scmp.ne.s32.totalorder %s159, %s173
    %p175 = scmp.eq.s32.totalorder %s23, 0
    %p176 = por %p174, %p175
    %s178 = sadd.s32 %s177, 1
    %p181 = scmp.eq.s32.totalorder %s17, 1
    %p182 = scmp.ne.s32.totalorder %s177, %s179
    %p183 = scmp.eq.s32.totalorder %s17, 0
    %p184 = por %p182, %p183
    %p185 = scmp.ne.s32.totalorder %s177, %s179
    %p186 = scmp.eq.s32.totalorder %s22, 1
    %p187 = por %p185, %p186
    %p188 = scmp.ne.s32.totalorder %s179, %s180
    %p189 = scmp.eq.s32.totalorder %s22, 0
    %p190 = por %p188, %p189
    %p191 = scmp.ne.s32.totalorder %s179, %s180
    %p192 = scmp.eq.s32.totalorder %s23, 1
    %p193 = por %p191, %p192
    %p195 = scmp.ne.s32.totalorder %s180, %s194
    %p196 = scmp.eq.s32.totalorder %s23, 0
    %p197 = por %p195, %p196
    %s199 = sadd.s32 %s198, 1
    %p202 = scmp.eq.s32.totalorder %s17, 1
    %p203 = scmp.ne.s32.totalorder %s198, %s200
    %p204 = scmp.eq.s32.totalorder %s17, 0
    %p205 = por %p203, %p204
    %p206 = scmp.ne.s32.totalorder %s198, %s200
    %p207 = scmp.eq.s32.totalorder %s22, 1
    %p208 = por %p206, %p207
    %p209 = scmp.ne.s32.totalorder %s200, %s201
    %p210 = scmp.eq.s32.totalorder %s22, 0
    %p211 = por %p209, %p210
    %p212 = scmp.ne.s32.totalorder %s200, %s201
    %p213 = scmp.eq.s32.totalorder %s23, 1
    %p214 = por %p212, %p213
    %p216 = scmp.ne.s32.totalorder %s201, %s215
    %p217 = scmp.eq.s32.totalorder %s23, 0
    %p218 = por %p216, %p217
    %s220 = sadd.s32 %s219, 1
    %p223 = scmp.eq.s32.totalorder %s17, 1
    %p224 = scmp.ne.s32.totalorder %s219, %s221
    %p225 = scmp.eq.s32.totalorder %s17, 0
    %p226 = por %p224, %p225
    %p227 = scmp.ne.s32.totalorder %s219, %s221
    %p228 = scmp.eq.s32.totalorder %s22, 1
    %p229 = por %p227, %p228
    %p230 = scmp.ne.s32.totalorder %s221, %s222
    %p231 = scmp.eq.s32.totalorder %s22, 0
    %p232 = por %p230, %p231
    %p233 = scmp.ne.s32.totalorder %s221, %s222
    %p234 = scmp.eq.s32.totalorder %s23, 1
    %p235 = por %p233, %p234
    %p237 = scmp.ne.s32.totalorder %s222, %s236
    %p238 = scmp.eq.s32.totalorder %s23, 0
    %p239 = por %p237, %p238
    %s241 = sadd.s32 %s240, 1
    %p244 = scmp.eq.s32.totalorder %s17, 1
    %p245 = scmp.ne.s32.totalorder %s240, %s242
    %p246 = scmp.eq.s32.totalorder %s17, 0
    %p247 = por %p245, %p246
    %p248 = scmp.ne.s32.totalorder %s240, %s242
    %p249 = scmp.eq.s32.totalorder %s22, 1
    %p250 = por %p248, %p249
    %p251 = scmp.ne.s32.totalorder %s242, %s243
    %p252 = scmp.eq.s32.totalorder %s22, 0
    %p253 = por %p251, %p252
    %p254 = scmp.ne.s32.totalorder %s242, %s243
    %p255 = scmp.eq.s32.totalorder %s23, 1
    %p256 = por %p254, %p255
    %p258 = scmp.ne.s32.totalorder %s243, %s257
    %p259 = scmp.eq.s32.totalorder %s23, 0
    %p260 = por %p258, %p259
    %s261 = ssub.s32 %s17, %s24
    %p262 = scmp.eq.s32.totalorder %s261, 0
    %s264 = sadd.s32 %s263, 1
    %s265 = scalar_select %p262, %s263, %s264
    %p268 = pneg %p262
    %p269 = scmp.eq.s32.totalorder %s17, 1
    %p270 = por %p268, %p269
    %p271 = scmp.ne.s32.totalorder %s263, %s266
    %p272 = scmp.eq.s32.totalorder %s17, 0
    %p273 = por %p271, %p272
    %p274 = scmp.ne.s32.totalorder %s263, %s266
    %p275 = scmp.eq.s32.totalorder %s22, 1
    %p276 = por %p274, %p275
    %p277 = scmp.ne.s32.totalorder %s266, %s267
    %p278 = scmp.eq.s32.totalorder %s22, 0
    %p279 = por %p277, %p278
    %p280 = scmp.ne.s32.totalorder %s266, %s267
    %p281 = scmp.eq.s32.totalorder %s23, 1
    %p282 = por %p280, %p281
    %p284 = scmp.ne.s32.totalorder %s267, %s283
    %p285 = scmp.eq.s32.totalorder %s23, 0
    %p286 = por %p284, %p285
    %p287 = scmp.le.s32.totalorder 1, %s17
    %p288 = scmp.lt.s32.totalorder %s17, 3
    %p289 = pnand %p287, %p288
    %p290 = pneg %p289
    // Predicated region
    $region9: #{_lambda_.1} parent=5 // pred_check
      _
    $region10: #{_lambda_.1} parent=5 // pred_check_branch
      %292 = sbr.rel (%p289) target = $region12
    $region11: #{_lambda_.1} parent=5 // pred_region
      %s293 = ssub.s32 %s17, 1
      // Predicated region
      $region13: #{_lambda_.1} parent=11 // pred_check
        %p294 = pneg %p64
      $region14: #{_lambda_.1} parent=11 // pred_check_branch
        %296 = sbr.rel (%p294) target = $region16
      $region15: #{_lambda_.1} parent=11 // pred_region
        _
      $region16: #{_lambda_.1} parent=11 // pred_fallthru
        _
      // Predicated region
      $region17: #{_lambda_.1} parent=11 // pred_check
        %p297 = pneg %p85
      $region18: #{_lambda_.1} parent=11 // pred_check_branch
        %299 = sbr.rel (%p297) target = $region20
      $region19: #{_lambda_.1} parent=11 // pred_region
        _
      $region20: #{_lambda_.1} parent=11 // pred_fallthru
        _
      // Predicated region
      $region21: #{_lambda_.1} parent=11 // pred_check
        %p300 = pneg %p106
      $region22: #{_lambda_.1} parent=11 // pred_check_branch
        %302 = sbr.rel (%p300) target = $region24
      $region23: #{_lambda_.1} parent=11 // pred_region
        _
      $region24: #{_lambda_.1} parent=11 // pred_fallthru
        _
      // Predicated region
      $region25: #{_lambda_.1} parent=11 // pred_check
        %p303 = pneg %p127
      $region26: #{_lambda_.1} parent=11 // pred_check_branch
        %305 = sbr.rel (%p303) target = $region28
      $region27: #{_lambda_.1} parent=11 // pred_region
        _
      $region28: #{_lambda_.1} parent=11 // pred_fallthru
        _
      // Predicated region
      $region29: #{_lambda_.1} parent=11 // pred_check
        %p306 = pneg %p148
      $region30: #{_lambda_.1} parent=11 // pred_check_branch
        %308 = sbr.rel (%p306) target = $region32
      $region31: #{_lambda_.1} parent=11 // pred_region
        _
      $region32: #{_lambda_.1} parent=11 // pred_fallthru
        _
      // Predicated region
      $region33: #{_lambda_.1} parent=11 // pred_check
        %p309 = pneg %p169
      $region34: #{_lambda_.1} parent=11 // pred_check_branch
        %311 = sbr.rel (%p309) target = $region36
      $region35: #{_lambda_.1} parent=11 // pred_region
        _
      $region36: #{_lambda_.1} parent=11 // pred_fallthru
        _
      // Predicated region
      $region37: #{_lambda_.1} parent=11 // pred_check
        %p312 = pneg %p190
      $region38: #{_lambda_.1} parent=11 // pred_check_branch
        %314 = sbr.rel (%p312) target = $region40
      $region39: #{_lambda_.1} parent=11 // pred_region
        _
      $region40: #{_lambda_.1} parent=11 // pred_fallthru
        _
      // Predicated region
      $region41: #{_lambda_.1} parent=11 // pred_check
        %p315 = pneg %p211
      $region42: #{_lambda_.1} parent=11 // pred_check_branch
        %317 = sbr.rel (%p315) target = $region44
      $region43: #{_lambda_.1} parent=11 // pred_region
        _
      $region44: #{_lambda_.1} parent=11 // pred_fallthru
        _
      // Predicated region
      $region45: #{_lambda_.1} parent=11 // pred_check
        %p318 = pneg %p232
      $region46: #{_lambda_.1} parent=11 // pred_check_branch
        %320 = sbr.rel (%p318) target = $region48
      $region47: #{_lambda_.1} parent=11 // pred_region
        _
      $region48: #{_lambda_.1} parent=11 // pred_fallthru
        _
      // Predicated region
      $region49: #{_lambda_.1} parent=11 // pred_check
        %p321 = pneg %p253
      $region50: #{_lambda_.1} parent=11 // pred_check_branch
        %323 = sbr.rel (%p321) target = $region52
      $region51: #{_lambda_.1} parent=11 // pred_region
        _
      $region52: #{_lambda_.1} parent=11 // pred_fallthru
        _
    $region12: #{_lambda_.1} parent=5 // pred_fallthru
      _
    %p324 = scmp.lt.s32.totalorder %s17, 2
    // Predicated region
    $region53: #{_lambda_.1} parent=5 // pred_check
      %p325 = pneg %p324
    $region54: #{_lambda_.1} parent=5 // pred_check_branch
      %327 = sbr.rel (%p325) target = $region56
    $region55: #{_lambda_.1} parent=5 // pred_region
      // Predicated region
      $region57: #{_lambda_.1} parent=55 // pred_check
        %p328 = pneg %p37
      $region58: #{_lambda_.1} parent=55 // pred_check_branch
        %330 = sbr.rel (%p328) target = $region60
      $region59: #{_lambda_.1} parent=55 // pred_region
        %p331 = scmp.lt.s32.totalorder %s17, 1
        %s332 = scalar_select %p331, %s17, 1
        %s333 = smul.addr %s332, 2
        %s334 = smul.addr %s333, 4
        %s335 = scalar_lea.vmem %s0, %s334
      $region60: #{_lambda_.1} parent=55 // pred_fallthru
        _
    $region56: #{_lambda_.1} parent=5 // pred_fallthru
      _
    %p336 = scmp.le.s32.totalorder 1, %s17
    %p337 = scmp.lt.s32.totalorder %s17, 3
    %p338 = pnand %p336, %p337
    %p339 = pneg %p338
    // Predicated region
    $region61: #{_lambda_.1} parent=5 // pred_check
      _
    $region62: #{_lambda_.1} parent=5 // pred_check_branch
      %341 = sbr.rel (%p338) target = $region64
    $region63: #{_lambda_.1} parent=5 // pred_region
      %s342 = ssub.s32 %s17, 1
      %p343 = scmp.lt.s32.totalorder %s22, 1
      %s344 = scalar_select %p343, %s22, 1
      %s345 = smul.addr %s344, 2
      %s346 = smul.addr %s345, 4
      %s347 = scalar_lea.vmem %s0, %s346
      %p348 = pneg %p43
      %p349 = pneg %p40
      %p350 = pneg %p64
      %p351 = pneg %p61
      %p352 = pneg %p85
      %p353 = pneg %p82
      %p354 = pneg %p106
      %p355 = pneg %p103
      %p356 = pneg %p127
      %p357 = pneg %p124
      %p358 = pneg %p148
      %p359 = pneg %p145
      %p360 = pneg %p169
      %p361 = pneg %p166
      %p362 = pneg %p190
      %p363 = pneg %p187
      %p364 = pneg %p211
      %p365 = pneg %p208
      %p366 = pneg %p232
      %p367 = pneg %p229
      %p368 = pneg %p253
      %p369 = pneg %p250
      %p370 = pneg %p279
      %p371 = pneg %p276
      %p372 = scmp.lt.s32.totalorder %s22, 1
      %s373 = scalar_select %p372, %s22, 1
      %s374 = smul.addr %s373, 2
      %s375 = smul.addr %s374, 2
      %s376 = scalar_lea.vmem %s11, %s375
      %p377 = scmp.lt.s32.totalorder %s22, 1
      %s378 = scalar_select %p377, %s22, 1
      %s379 = smul.addr %s378, 2
      %s380 = smul.addr %s379, 4
      %s381 = scalar_lea.vmem %s0, %s380
      %p382 = scmp.lt.s32.totalorder %s22, 1
      %s383 = scalar_select %p382, %s22, 1
      %s384 = smul.addr %s383, 2
      %s385 = smul.addr %s384, 2
      %s386 = scalar_lea.vmem %s11, %s385
      %v388 = vlaneseq
      %v389 = vand.u32 %v388, 127
      %v390 = vadd.s32 %v389, 128
      %v391 = vshra.s32 %v389, 4
      %v392 = vshra.s32 %v390, 4
      %v393 = vand.u32 %v389, 15
      %v394 = vand.u32 %v390, 15
      %vm395 = vcmp.lt.s32.totalorder %v389, 256
      %vm396 = vcmp.lt.s32.totalorder %v390, 256
      %v397 = vadd.s32 %v391, 4294967295
      %v398 = vadd.s32 %v392, 4294967295
      %vm399 = vcmp.ge.s32.totalorder %v397, 0
      %vm400 = vcmp.ge.s32.totalorder %v398, 0
      %vm401 = vmand %vm395, %vm399
      %vm402 = vmand %vm396, %vm400
      %vm403 = vcmp.lt.s32.totalorder %v397, 16
      %vm404 = vcmp.lt.s32.totalorder %v398, 16
      %vm405 = vmand %vm401, %vm403
      %vm406 = vmand %vm402, %vm404
      %v407 = vadd.s32 %v393, 4294967295
      %v408 = vadd.s32 %v394, 4294967295
      %vm409 = vcmp.ge.s32.totalorder %v407, 0
      %vm410 = vcmp.ge.s32.totalorder %v408, 0
      %vm411 = vmand %vm405, %vm409
      %vm412 = vmand %vm406, %vm410
      %vm413 = vcmp.lt.s32.totalorder %v407, 16
      %vm414 = vcmp.lt.s32.totalorder %v408, 16
      %vm415 = vmand %vm411, %vm413
      %vm416 = vmand %vm412, %vm414
      %vm417 = vcmp.ge.s32.totalorder %v393, 0
      %vm418 = vcmp.ge.s32.totalorder %v394, 0
      %vm419 = vmand %vm405, %vm417
      %vm420 = vmand %vm406, %vm418
      %vm421 = vcmp.lt.s32.totalorder %v393, 16
      %vm422 = vcmp.lt.s32.totalorder %v394, 16
      %vm423 = vmand %vm419, %vm421
      %vm424 = vmand %vm420, %vm422
      %v425 = vadd.s32 %v393, 1
      %v426 = vadd.s32 %v394, 1
      %vm427 = vcmp.ge.s32.totalorder %v425, 0
      %vm428 = vcmp.ge.s32.totalorder %v426, 0
      %vm429 = vmand %vm405, %vm427
      %vm430 = vmand %vm406, %vm428
      %vm431 = vcmp.lt.s32.totalorder %v425, 16
      %vm432 = vcmp.lt.s32.totalorder %v426, 16
      %vm433 = vmand %vm429, %vm431
      %vm434 = vmand %vm430, %vm432
      %vm435 = vcmp.ge.s32.totalorder %v391, 0
      %vm436 = vcmp.ge.s32.totalorder %v392, 0
      %vm437 = vmand %vm395, %vm435
      %vm438 = vmand %vm396, %vm436
      %vm439 = vcmp.lt.s32.totalorder %v391, 16
      %vm440 = vcmp.lt.s32.totalorder %v392, 16
      %vm441 = vmand %vm437, %vm439
      %vm442 = vmand %vm438, %vm440
      %vm443 = vmand %vm441, %vm409
      %vm444 = vmand %vm442, %vm410
      %vm445 = vmand %vm443, %vm413
      %vm446 = vmand %vm444, %vm414
      %vm447 = vmand %vm441, %vm417
      %vm448 = vmand %vm442, %vm418
      %vm449 = vmand %vm447, %vm421
      %vm450 = vmand %vm448, %vm422
      %vm451 = vmand %vm441, %vm427
      %vm452 = vmand %vm442, %vm428
      %vm453 = vmand %vm451, %vm431
      %vm454 = vmand %vm452, %vm432
      %v455 = vadd.s32 %v391, 1
      %v456 = vadd.s32 %v392, 1
      %vm457 = vcmp.ge.s32.totalorder %v455, 0
      %vm458 = vcmp.ge.s32.totalorder %v456, 0
      %vm459 = vmand %vm395, %vm457
      %vm460 = vmand %vm396, %vm458
      %vm461 = vcmp.lt.s32.totalorder %v455, 16
      %vm462 = vcmp.lt.s32.totalorder %v456, 16
      %vm463 = vmand %vm459, %vm461
      %vm464 = vmand %vm460, %vm462
      %vm465 = vmand %vm463, %vm409
      %vm466 = vmand %vm464, %vm410
      %vm467 = vmand %vm465, %vm413
      %vm468 = vmand %vm466, %vm414
      %vm469 = vmand %vm463, %vm417
      %vm470 = vmand %vm464, %vm418
      %vm471 = vmand %vm469, %vm421
      %vm472 = vmand %vm470, %vm422
      %vm473 = vmand %vm463, %vm427
      %vm474 = vmand %vm464, %vm428
      %vm475 = vmand %vm473, %vm431
      %vm476 = vmand %vm474, %vm432
      %v477 = vshra.s32 %v389, 3
      %v478 = vshra.s32 %v390, 3
      %v479 = vand.u32 %v389, 7
      %v480 = vand.u32 %v390, 7
      %vm481 = vcmp.lt.s32.totalorder %v389, 64
      %vm482 = vcmp.lt.s32.totalorder %v390, 64
      %v483 = vadd.s32 %v477, 4294967295
      %v484 = vadd.s32 %v478, 4294967295
      %vm485 = vcmp.ge.s32.totalorder %v483, 0
      %vm486 = vcmp.ge.s32.totalorder %v484, 0
      %vm487 = vmand %vm481, %vm485
      %vm488 = vmand %vm482, %vm486
      %vm489 = vcmp.lt.s32.totalorder %v483, 8
      %vm490 = vcmp.lt.s32.totalorder %v484, 8
      %vm491 = vmand %vm487, %vm489
      %vm492 = vmand %vm488, %vm490
      %v493 = vadd.s32 %v479, 4294967295
      %v494 = vadd.s32 %v480, 4294967295
      %vm495 = vcmp.ge.s32.totalorder %v493, 0
      %vm496 = vcmp.ge.s32.totalorder %v494, 0
      %vm497 = vmand %vm491, %vm495
      %vm498 = vmand %vm492, %vm496
      %vm499 = vcmp.lt.s32.totalorder %v493, 8
      %vm500 = vcmp.lt.s32.totalorder %v494, 8
      %vm501 = vmand %vm497, %vm499
      %vm502 = vmand %vm498, %vm500
      %vm503 = vcmp.ge.s32.totalorder %v479, 0
      %vm504 = vcmp.ge.s32.totalorder %v480, 0
      %vm505 = vmand %vm491, %vm503
      %vm506 = vmand %vm492, %vm504
      %vm507 = vcmp.lt.s32.totalorder %v479, 8
      %vm508 = vcmp.lt.s32.totalorder %v480, 8
      %vm509 = vmand %vm505, %vm507
      %vm510 = vmand %vm506, %vm508
      %v511 = vadd.s32 %v479, 1
      %v512 = vadd.s32 %v480, 1
      %vm513 = vcmp.ge.s32.totalorder %v511, 0
      %vm514 = vcmp.ge.s32.totalorder %v512, 0
      %vm515 = vmand %vm491, %vm513
      %vm516 = vmand %vm492, %vm514
      %vm517 = vcmp.lt.s32.totalorder %v511, 8
      %vm518 = vcmp.lt.s32.totalorder %v512, 8
      %vm519 = vmand %vm515, %vm517
      %vm520 = vmand %vm516, %vm518
      %vm521 = vcmp.ge.s32.totalorder %v477, 0
      %vm522 = vcmp.ge.s32.totalorder %v478, 0
      %vm523 = vmand %vm481, %vm521
      %vm524 = vmand %vm482, %vm522
      %vm525 = vcmp.lt.s32.totalorder %v477, 8
      %vm526 = vcmp.lt.s32.totalorder %v478, 8
      %vm527 = vmand %vm523, %vm525
      %vm528 = vmand %vm524, %vm526
      %vm529 = vmand %vm527, %vm495
      %vm530 = vmand %vm528, %vm496
      %vm531 = vmand %vm529, %vm499
      %vm532 = vmand %vm530, %vm500
      %vm533 = vmand %vm527, %vm503
      %vm534 = vmand %vm528, %vm504
      %vm535 = vmand %vm533, %vm507
      %vm536 = vmand %vm534, %vm508
      %vm537 = vmand %vm527, %vm513
      %vm538 = vmand %vm528, %vm514
      %vm539 = vmand %vm537, %vm517
      %vm540 = vmand %vm538, %vm518
      %v541 = vadd.s32 %v477, 1
      %v542 = vadd.s32 %v478, 1
      %vm543 = vcmp.ge.s32.totalorder %v541, 0
      %vm544 = vcmp.ge.s32.totalorder %v542, 0
      %vm545 = vmand %vm481, %vm543
      %vm546 = vmand %vm482, %vm544
      %vm547 = vcmp.lt.s32.totalorder %v541, 8
      %vm548 = vcmp.lt.s32.totalorder %v542, 8
      %vm549 = vmand %vm545, %vm547
      %vm550 = vmand %vm546, %vm548
      %vm551 = vmand %vm549, %vm495
      %vm552 = vmand %vm550, %vm496
      %vm553 = vmand %vm551, %vm499
      %vm554 = vmand %vm552, %vm500
      %vm555 = vmand %vm549, %vm503
      %vm556 = vmand %vm550, %vm504
      %vm557 = vmand %vm555, %vm507
      %vm558 = vmand %vm556, %vm508
      %vm559 = vmand %vm549, %vm513
      %vm560 = vmand %vm550, %vm514
      %vm561 = vmand %vm559, %vm517
      %vm562 = vmand %vm560, %vm518
      %v563 = vsel %vm481, 1.0, 0.0
      %v564 = vsel %vm482, 1.0, 0.0
      %v565 = vld [vmem:[%s381] sm:$0xff]
      %v567 = vcombine.high %v565, %v565
      %569 = vrot.lane.b32.xlu0 %v565, 17
      %v570 = vpop.permute.xlu0 %569
      %571 = vrot.lane.b32.xlu0 %v567, 17
      %v572 = vpop.permute.xlu0 %571
      %vm573 = vcmp.lt.s32.totalorder %v389, 17
      %v574 = vsel %vm573, %v570, %v572
      %v575 = vsel %vm573, %v572, %v570
      %v576 = vsel %vm415, 1, 0
      %v577 = vsel %vm416, 1, 0
      %vm578 = vcmp.eq.s32.totalorder %v576, 1
      %vm579 = vcmp.eq.s32.totalorder %v577, 1
      %v580 = vsel %vm578, %v575, 0.0
      %v581 = vsel %vm579, %v574, 0.0
      %582 = vst [vmem:[#allocation2] sm:$0xf] %v580
      %583 = vst [vmem:[#allocation2 + $0x8] sm:$0xf] %v581
      %584 = vrot.lane.b32.xlu0 0.0, 17
      %v585 = vpop.permute.xlu0 %584
      %v586 = vsel %vm578, %v585, 0.0
      %v587 = vsel %vm579, %v585, 0.0
      %v590 = vrot.slane %v586, 4
      %v591 = vrot.slane %v587, 4
      %594 = vst [vmem:[#allocation2] sm:$0xf0] %v590
      %595 = vst [vmem:[#allocation2 + $0x8] sm:$0xf0] %v591
      %596 = vrot.lane.b32.xlu0 %v565, 16
      %v597 = vpop.permute.xlu0 %596
      %598 = vrot.lane.b32.xlu0 %v567, 16
      %v599 = vpop.permute.xlu0 %598
      %vm600 = vcmp.lt.s32.totalorder %v389, 16
      %v601 = vsel %vm600, %v597, %v599
      %v602 = vsel %vm600, %v599, %v597
      %v603 = vsel %vm423, 1, 0
      %v604 = vsel %vm424, 1, 0
      %vm605 = vcmp.eq.s32.totalorder %v603, 1
      %vm606 = vcmp.eq.s32.totalorder %v604, 1
      %v607 = vsel %vm605, %v602, 0.0
      %v608 = vsel %vm606, %v601, 0.0
      %609 = vst [vmem:[#allocation2 + $0x10] sm:$0xf] %v607
      %610 = vst [vmem:[#allocation2 + $0x18] sm:$0xf] %v608
      %611 = vrot.lane.b32.xlu0 0.0, 16
      %v612 = vpop.permute.xlu0 %611
      %v613 = vsel %vm605, %v612, 0.0
      %v614 = vsel %vm606, %v612, 0.0
      %v617 = vrot.slane %v613, 4
      %v618 = vrot.slane %v614, 4
      %621 = vst [vmem:[#allocation2 + $0x10] sm:$0xf0] %v617
      %622 = vst [vmem:[#allocation2 + $0x18] sm:$0xf0] %v618
      %623 = vrot.lane.b32.xlu0 %v565, 15
      %v624 = vpop.permute.xlu0 %623
      %625 = vrot.lane.b32.xlu0 %v567, 15
      %v626 = vpop.permute.xlu0 %625
      %vm627 = vcmp.lt.s32.totalorder %v389, 15
      %v628 = vsel %vm627, %v624, %v626
      %v629 = vsel %vm627, %v626, %v624
      %v630 = vsel %vm433, 1, 0
      %v631 = vsel %vm434, 1, 0
      %vm632 = vcmp.eq.s32.totalorder %v630, 1
      %vm633 = vcmp.eq.s32.totalorder %v631, 1
      %v634 = vsel %vm632, %v629, 0.0
      %v635 = vsel %vm633, %v628, 0.0
      %636 = vst [vmem:[#allocation2 + $0x20] sm:$0xf] %v634
      %637 = vst [vmem:[#allocation2 + $0x28] sm:$0xf] %v635
      %638 = vrot.lane.b32.xlu0 0.0, 15
      %v639 = vpop.permute.xlu0 %638
      %v640 = vsel %vm632, %v639, 0.0
      %v641 = vsel %vm633, %v639, 0.0
      %v644 = vrot.slane %v640, 4
      %v645 = vrot.slane %v641, 4
      %648 = vst [vmem:[#allocation2 + $0x20] sm:$0xf0] %v644
      %649 = vst [vmem:[#allocation2 + $0x28] sm:$0xf0] %v645
      %650 = vrot.lane.b32.xlu0 %v565, 1
      %v651 = vpop.permute.xlu0 %650
      %652 = vrot.lane.b32.xlu0 %v567, 1
      %v653 = vpop.permute.xlu0 %652
      %vm654 = vcmp.lt.s32.totalorder %v389, 1
      %v655 = vsel %vm654, %v651, %v653
      %v656 = vsel %vm654, %v653, %v651
      %v657 = vsel %vm445, 1, 0
      %v658 = vsel %vm446, 1, 0
      %vm659 = vcmp.eq.s32.totalorder %v657, 1
      %vm660 = vcmp.eq.s32.totalorder %v658, 1
      %v661 = vsel %vm659, %v656, 0.0
      %v662 = vsel %vm660, %v655, 0.0
      %663 = vst [vmem:[#allocation2 + $0x30] sm:$0xf] %v661
      %664 = vst [vmem:[#allocation2 + $0x38] sm:$0xf] %v662
      %665 = vrot.lane.b32.xlu0 0.0, 1
      %v666 = vpop.permute.xlu0 %665
      %v667 = vsel %vm659, %v666, 0.0
      %v668 = vsel %vm660, %v666, 0.0
      %v671 = vrot.slane %v667, 4
      %v672 = vrot.slane %v668, 4
      %675 = vst [vmem:[#allocation2 + $0x30] sm:$0xf0] %v671
      %676 = vst [vmem:[#allocation2 + $0x38] sm:$0xf0] %v672
      %v677 = vsel %vm449, 1, 0
      %v678 = vsel %vm450, 1, 0
      %vm679 = vcmp.eq.s32.totalorder %v677, 1
      %vm680 = vcmp.eq.s32.totalorder %v678, 1
      %v681 = vsel %vm679, %v565, 0.0
      %v682 = vsel %vm680, %v567, 0.0
      %683 = vst [vmem:[#allocation2 + $0x40] sm:$0xf] %v681
      %684 = vst [vmem:[#allocation2 + $0x48] sm:$0xf] %v682
      %685 = vst [vmem:[#allocation2 + $0x40] sm:$0xf0] 0.0
      %686 = vst [vmem:[#allocation2 + $0x48] sm:$0xf0] 0.0
      %687 = vrot.lane.b32.xlu0 %v565, 127
      %v688 = vpop.permute.xlu0 %687
      %689 = vrot.lane.b32.xlu0 %v567, 127
      %v690 = vpop.permute.xlu0 %689
      %vm691 = vcmp.lt.s32.totalorder %v389, 127
      %v692 = vsel %vm691, %v688, %v690
      %v693 = vsel %vm691, %v690, %v688
      %v694 = vsel %vm453, 1, 0
      %v695 = vsel %vm454, 1, 0
      %vm696 = vcmp.eq.s32.totalorder %v694, 1
      %vm697 = vcmp.eq.s32.totalorder %v695, 1
      %v698 = vsel %vm696, %v692, 0.0
      %v699 = vsel %vm697, %v693, 0.0
      %700 = vst [vmem:[#allocation2 + $0x50] sm:$0xf] %v698
      %701 = vst [vmem:[#allocation2 + $0x58] sm:$0xf] %v699
      %702 = vrot.lane.b32.xlu0 0.0, 127
      %v703 = vpop.permute.xlu0 %702
      %v704 = vsel %vm696, %v703, 0.0
      %v705 = vsel %vm697, %v703, 0.0
      %v708 = vrot.slane %v704, 4
      %v709 = vrot.slane %v705, 4
      %712 = vst [vmem:[#allocation2 + $0x50] sm:$0xf0] %v708
      %713 = vst [vmem:[#allocation2 + $0x58] sm:$0xf0] %v709
      %714 = vrot.lane.b32.xlu0 %v565, 113
      %v715 = vpop.permute.xlu0 %714
      %716 = vrot.lane.b32.xlu0 %v567, 113
      %v717 = vpop.permute.xlu0 %716
      %vm718 = vcmp.lt.s32.totalorder %v389, 113
      %v719 = vsel %vm718, %v715, %v717
      %v720 = vsel %vm718, %v717, %v715
      %v721 = vsel %vm467, 1, 0
      %v722 = vsel %vm468, 1, 0
      %vm723 = vcmp.eq.s32.totalorder %v721, 1
      %vm724 = vcmp.eq.s32.totalorder %v722, 1
      %v725 = vsel %vm723, %v719, 0.0
      %v726 = vsel %vm724, %v720, 0.0
      %727 = vst [vmem:[#allocation2 + $0x60] sm:$0xf] %v725
      %728 = vst [vmem:[#allocation2 + $0x68] sm:$0xf] %v726
      %729 = vrot.lane.b32.xlu0 0.0, 113
      %v730 = vpop.permute.xlu0 %729
      %v731 = vsel %vm723, %v730, 0.0
      %v732 = vsel %vm724, %v730, 0.0
      %v735 = vrot.slane %v731, 4
      %v736 = vrot.slane %v732, 4
      %739 = vst [vmem:[#allocation2 + $0x60] sm:$0xf0] %v735
      %740 = vst [vmem:[#allocation2 + $0x68] sm:$0xf0] %v736
      %741 = vrot.lane.b32.xlu0 %v565, 112
      %v742 = vpop.permute.xlu0 %741
      %743 = vrot.lane.b32.xlu0 %v567, 112
      %v744 = vpop.permute.xlu0 %743
      %vm745 = vcmp.lt.s32.totalorder %v389, 112
      %v746 = vsel %vm745, %v742, %v744
      %v747 = vsel %vm745, %v744, %v742
      %v748 = vsel %vm471, 1, 0
      %v749 = vsel %vm472, 1, 0
      %vm750 = vcmp.eq.s32.totalorder %v748, 1
      %vm751 = vcmp.eq.s32.totalorder %v749, 1
      %v752 = vsel %vm750, %v746, 0.0
      %v753 = vsel %vm751, %v747, 0.0
      %754 = vst [vmem:[#allocation2 + $0x70] sm:$0xf] %v752
      %755 = vst [vmem:[#allocation2 + $0x78] sm:$0xf] %v753
      %756 = vrot.lane.b32.xlu0 0.0, 112
      %v757 = vpop.permute.xlu0 %756
      %v758 = vsel %vm750, %v757, 0.0
      %v759 = vsel %vm751, %v757, 0.0
      %v762 = vrot.slane %v758, 4
      %v763 = vrot.slane %v759, 4
      %766 = vst [vmem:[#allocation2 + $0x70] sm:$0xf0] %v762
      %767 = vst [vmem:[#allocation2 + $0x78] sm:$0xf0] %v763
      %768 = vrot.lane.b32.xlu0 %v565, 111
      %v769 = vpop.permute.xlu0 %768
      %770 = vrot.lane.b32.xlu0 %v567, 111
      %v771 = vpop.permute.xlu0 %770
      %vm772 = vcmp.lt.s32.totalorder %v389, 111
      %v773 = vsel %vm772, %v769, %v771
      %v774 = vsel %vm772, %v771, %v769
      %v775 = vsel %vm475, 1, 0
      %v776 = vsel %vm476, 1, 0
      %vm777 = vcmp.eq.s32.totalorder %v775, 1
      %vm778 = vcmp.eq.s32.totalorder %v776, 1
      %v779 = vsel %vm777, %v773, 0.0
      %v780 = vsel %vm778, %v774, 0.0
      %781 = vst [vmem:[#allocation2 + $0x80] sm:$0xf] %v779
      %782 = vst [vmem:[#allocation2 + $0x88] sm:$0xf] %v780
      %783 = vrot.lane.b32.xlu0 0.0, 111
      %v784 = vpop.permute.xlu0 %783
      %v785 = vsel %vm777, %v784, 0.0
      %v786 = vsel %vm778, %v784, 0.0
      %v789 = vrot.slane %v785, 4
      %v790 = vrot.slane %v786, 4
      %793 = vst [vmem:[#allocation2 + $0x80] sm:$0xf0] %v789
      %794 = vst [vmem:[#allocation2 + $0x88] sm:$0xf0] %v790
      %v795 = vld [vmem:[%s1] sm:$0xf]
      %v796 = vld [vmem:[#allocation2] sm:$0xff]
      %v797 = vld [vmem:[#allocation2 + $0x8] sm:$0xff]
      %v798 = vld [vmem:[#allocation2 + $0x10] sm:$0xff]
      %v799 = vld [vmem:[#allocation2 + $0x18] sm:$0xff]
      %v800 = vld [vmem:[#allocation2 + $0x20] sm:$0xff]
      %v801 = vld [vmem:[#allocation2 + $0x28] sm:$0xff]
      %v802 = vld [vmem:[#allocation2 + $0x30] sm:$0xff]
      %v803 = vld [vmem:[#allocation2 + $0x38] sm:$0xff]
      %v804 = vld [vmem:[#allocation2 + $0x40] sm:$0xff]
      %v805 = vld [vmem:[#allocation2 + $0x48] sm:$0xff]
      %v806 = vld [vmem:[#allocation2 + $0x50] sm:$0xff]
      %v807 = vld [vmem:[#allocation2 + $0x58] sm:$0xff]
      %v808 = vld [vmem:[#allocation2 + $0x60] sm:$0xff]
      %v809 = vld [vmem:[#allocation2 + $0x68] sm:$0xff]
      %v810 = vld [vmem:[#allocation2 + $0x70] sm:$0xff]
      %v811 = vld [vmem:[#allocation2 + $0x78] sm:$0xff]
      %v812 = vld [vmem:[#allocation2 + $0x80] sm:$0xff]
      %v813 = vld [vmem:[#allocation2 + $0x88] sm:$0xff]
      %v814 = vpack.c.bf16 %v798, %v796
      %v815 = vpack.c.bf16 %v799, %v797
      %v816 = vpack.c.bf16 %v802, %v800
      %v817 = vpack.c.bf16 %v803, %v801
      %v818 = vpack.c.bf16 %v806, %v804
      %v819 = vpack.c.bf16 %v807, %v805
      %v820 = vpack.c.bf16 %v810, %v808
      %v821 = vpack.c.bf16 %v811, %v809
      %v822 = vpack.c.bf16 %v812, %v812
      %v823 = vpack.c.bf16 %v813, %v813
      %vm824 = vcmask 588800
      %v826 = vsel %vm824, %v795, 0
      %vm828 = vcmask 1043456
      %v830 = vsel %vm828, %v822, 0
      %v833 = vsel %vm828, %v823, 0
      %835 = vmatprep.subr.bf16.mxu0 %v815
      %836 = vmatpush1.bf16.msra.mxu0 %v814
      %837 = vmatprep.subr.bf16.mxu0 %v817
      %838 = vmatpush1.bf16.msra.mxu0 %v816
      %839 = vmatprep.subr.bf16.mxu0 %v819
      %840 = vmatpush1.bf16.msra.mxu0 %v818
      %841 = vmatprep.subr.bf16.mxu0 %v821
      %842 = vmatpush1.bf16.msra.mxu0 %v820
      %843 = vmatprep.subr.bf16.mxu0 %v833
      %844 = vmatpush1.bf16.msra.mxu0 %v830
      %845 = vmatprep.subr.bf16.mxu0 0
      %846 = vmatpush1.bf16.msra.mxu0 0
      %847 = vmatprep.subr.bf16.mxu0 0
      %848 = vmatpush1.bf16.msra.mxu0 0
      %849 = vmatprep.subr.bf16.mxu0 0
      %850 = vmatpush1.bf16.msra.mxu0 0
      %851 = vmatprep.subr.bf16.mxu0 0
      %852 = vmatpush1.bf16.msra.mxu0 0
      %853 = vmatprep.subr.bf16.mxu0 0
      %854 = vmatpush1.bf16.msra.mxu0 0
      %855 = vmatprep.subr.bf16.mxu0 0
      %856 = vmatpush1.bf16.msra.mxu0 0
      %857 = vmatprep.subr.bf16.mxu0 0
      %858 = vmatpush1.bf16.msra.mxu0 0
      %859 = vmatprep.subr.bf16.mxu0 0
      %860 = vmatpush1.bf16.msra.mxu0 0
      %861 = vmatprep.subr.bf16.mxu0 0
      %862 = vmatpush1.bf16.msra.mxu0 0
      %863 = vmatprep.subr.bf16.mxu0 0
      %864 = vmatpush1.bf16.msra.mxu0 0
      %865 = vmatprep.subr.bf16.mxu0 0
      %866 = vmatpush1.bf16.msra.mxu0 0
      %867 = vmatprep.mubr.bf16.mxu0 0
      %868 = vmatmul.mubr.bf16.gmra.mrb[0].mxu0 %v826
      %v869 = vpop.f32.mrb[0].mxu0
      %v870 = vadd.f32 0.0, %v869
      %v871 = vpop.f32.mrb[0].mxu0
      %v872 = vadd.f32 0.0, %v871
      %v873 = vpop.f32.mrb[0].mxu0
      %v874 = vpop.f32.mrb[0].mxu0
      %875 = vdwg.mxu0
      %v876 = vadd.f32 %v870, %v872
      %877 = vadd.xlane.f32.xlu0 %v876
      %v878 = vpop.xlane.xlu0 %877
      %v879 = vmul.f32 %v878, 0.00390625
      %v880 = vsub.f32 %v870, %v879
      %v881 = vsub.f32 %v872, %v879
      %v882 = vmul.f32 %v880, %v880
      %v883 = vmul.f32 %v881, %v881
      %v884 = vadd.f32 %v882, %v883
      %885 = vadd.xlane.f32.xlu0 %v884
      %v886 = vpop.xlane.xlu0 %885
      %v887 = vmul.f32 %v886, 0.00390625
      %v888 = vld [vmem:[%s2] sm:$0xff]
      %v889 = vadd.f32 %v887, 1e-05
      %v890 = vrsqrt.pop %v889
      %v891 = vmul.f32 %v880, %v890
      %v892 = vmul.f32 %v881, %v890
      %894 = vset.pattern.permute.xlu0 0
      %895 = vperm.xlu0 %894, %v888
      %v896 = vpop.permute.xlu0 %895
      %v898 = vmul.f32 %v891, %v896
      %v899 = vmul.f32 %v892, %v896
      %900 = vset.pattern.permute.xlu0 1
      %901 = vperm.xlu0 %900, %v888
      %v902 = vpop.permute.xlu0 %901
      %v904 = vadd.f32 %v898, %v902
      %v905 = vadd.f32 %v899, %v902
      %vm906 = vcmp.ge.f32.partialorder %v904, 0.0
      %vm907 = vcmp.ge.f32.partialorder %v905, 0.0
      %v908 = vmul.f32 %v904, 0.01
      %v909 = vmul.f32 %v905, 0.01
      %v910 = vsel %vm906, %v904, %v908
      %v911 = vsel %vm907, %v905, %v909
      %912 = vrot.lane.b32.xlu0 %v910, 17
      %v913 = vpop.permute.xlu0 %912
      %914 = vrot.lane.b32.xlu0 %v911, 17
      %v915 = vpop.permute.xlu0 %914
      %v916 = vsel %vm573, %v913, %v915
      %v917 = vsel %vm573, %v915, %v913
      %v918 = vsel %vm578, %v917, 0.0
      %v919 = vsel %vm579, %v916, 0.0
      %920 = vst [vmem:[#allocation2] sm:$0xff] %v918
      %921 = vst [vmem:[#allocation2 + $0x8] sm:$0xff] %v919
      %922 = vrot.lane.b32.xlu0 %v910, 16
      %v923 = vpop.permute.xlu0 %922
      %924 = vrot.lane.b32.xlu0 %v911, 16
      %v925 = vpop.permute.xlu0 %924
      %v926 = vsel %vm600, %v923, %v925
      %v927 = vsel %vm600, %v925, %v923
      %v928 = vsel %vm605, %v927, 0.0
      %v929 = vsel %vm606, %v926, 0.0
      %930 = vst [vmem:[#allocation2 + $0x10] sm:$0xff] %v928
      %931 = vst [vmem:[#allocation2 + $0x18] sm:$0xff] %v929
      %932 = vrot.lane.b32.xlu0 %v910, 15
      %v933 = vpop.permute.xlu0 %932
      %934 = vrot.lane.b32.xlu0 %v911, 15
      %v935 = vpop.permute.xlu0 %934
      %v936 = vsel %vm627, %v933, %v935
      %v937 = vsel %vm627, %v935, %v933
      %v938 = vsel %vm632, %v937, 0.0
      %v939 = vsel %vm633, %v936, 0.0
      %940 = vst [vmem:[#allocation2 + $0x20] sm:$0xff] %v938
      %941 = vst [vmem:[#allocation2 + $0x28] sm:$0xff] %v939
      %942 = vrot.lane.b32.xlu0 %v910, 1
      %v943 = vpop.permute.xlu0 %942
      %944 = vrot.lane.b32.xlu0 %v911, 1
      %v945 = vpop.permute.xlu0 %944
      %v946 = vsel %vm654, %v943, %v945
      %v947 = vsel %vm654, %v945, %v943
      %v948 = vsel %vm659, %v947, 0.0
      %v949 = vsel %vm660, %v946, 0.0
      %950 = vst [vmem:[#allocation2 + $0x30] sm:$0xff] %v948
      %951 = vst [vmem:[#allocation2 + $0x38] sm:$0xff] %v949
      %v952 = vsel %vm679, %v910, 0.0
      %v953 = vsel %vm680, %v911, 0.0
      %954 = vst [vmem:[#allocation2 + $0x40] sm:$0xff] %v952
      %955 = vst [vmem:[#allocation2 + $0x48] sm:$0xff] %v953
      %956 = vrot.lane.b32.xlu0 %v910, 127
      %v957 = vpop.permute.xlu0 %956
      %958 = vrot.lane.b32.xlu0 %v911, 127
      %v959 = vpop.permute.xlu0 %958
      %v960 = vsel %vm691, %v957, %v959
      %v961 = vsel %vm691, %v959, %v957
      %v962 = vsel %vm696, %v960, 0.0
      %v963 = vsel %vm697, %v961, 0.0
      %964 = vst [vmem:[#allocation2 + $0x50] sm:$0xff] %v962
      %965 = vst [vmem:[#allocation2 + $0x58] sm:$0xff] %v963
      %966 = vrot.lane.b32.xlu0 %v910, 113
      %v967 = vpop.permute.xlu0 %966
      %968 = vrot.lane.b32.xlu0 %v911, 113
      %v969 = vpop.permute.xlu0 %968
      %v970 = vsel %vm718, %v967, %v969
      %v971 = vsel %vm718, %v969, %v967
      %v972 = vsel %vm723, %v970, 0.0
      %v973 = vsel %vm724, %v971, 0.0
      %974 = vst [vmem:[#allocation2 + $0x60] sm:$0xff] %v972
      %975 = vst [vmem:[#allocation2 + $0x68] sm:$0xff] %v973
      %976 = vrot.lane.b32.xlu0 %v910, 112
      %v977 = vpop.permute.xlu0 %976
      %978 = vrot.lane.b32.xlu0 %v911, 112
      %v979 = vpop.permute.xlu0 %978
      %v980 = vsel %vm745, %v977, %v979
      %v981 = vsel %vm745, %v979, %v977
      %v982 = vsel %vm750, %v980, 0.0
      %v983 = vsel %vm751, %v981, 0.0
      %984 = vst [vmem:[#allocation2 + $0x70] sm:$0xff] %v982
      %985 = vst [vmem:[#allocation2 + $0x78] sm:$0xff] %v983
      %986 = vrot.lane.b32.xlu0 %v910, 111
      %v987 = vpop.permute.xlu0 %986
      %988 = vrot.lane.b32.xlu0 %v911, 111
      %v989 = vpop.permute.xlu0 %988
      %v990 = vsel %vm772, %v987, %v989
      %v991 = vsel %vm772, %v989, %v987
      %v992 = vsel %vm777, %v990, 0.0
      %v993 = vsel %vm778, %v991, 0.0
      %994 = vst [vmem:[#allocation2 + $0x80] sm:$0xff] %v992
      %995 = vst [vmem:[#allocation2 + $0x88] sm:$0xff] %v993
      %s996 = scalar_lea.vmem %s1, 24
      %v997 = vld [vmem:[%s996] sm:$0xf]
      %v998 = vld [vmem:[#allocation2] sm:$0xff]
      %v999 = vld [vmem:[#allocation2 + $0x8] sm:$0xff]
      %v1000 = vld [vmem:[#allocation2 + $0x10] sm:$0xff]
      %v1001 = vld [vmem:[#allocation2 + $0x18] sm:$0xff]
      %v1002 = vld [vmem:[#allocation2 + $0x20] sm:$0xff]
      %v1003 = vld [vmem:[#allocation2 + $0x28] sm:$0xff]
      %v1004 = vld [vmem:[#allocation2 + $0x30] sm:$0xff]
      %v1005 = vld [vmem:[#allocation2 + $0x38] sm:$0xff]
      %v1006 = vld [vmem:[#allocation2 + $0x40] sm:$0xff]
      %v1007 = vld [vmem:[#allocation2 + $0x48] sm:$0xff]
      %v1008 = vld [vmem:[#allocation2 + $0x50] sm:$0xff]
      %v1009 = vld [vmem:[#allocation2 + $0x58] sm:$0xff]
      %v1010 = vld [vmem:[#allocation2 + $0x60] sm:$0xff]
      %v1011 = vld [vmem:[#allocation2 + $0x68] sm:$0xff]
      %v1012 = vld [vmem:[#allocation2 + $0x70] sm:$0xff]
      %v1013 = vld [vmem:[#allocation2 + $0x78] sm:$0xff]
      %v1014 = vld [vmem:[#allocation2 + $0x80] sm:$0xff]
      %v1015 = vld [vmem:[#allocation2 + $0x88] sm:$0xff]
      %v1016 = vpack.c.bf16 %v1000, %v998
      %v1017 = vpack.c.bf16 %v1001, %v999
      %v1018 = vpack.c.bf16 %v1004, %v1002
      %v1019 = vpack.c.bf16 %v1005, %v1003
      %v1020 = vpack.c.bf16 %v1008, %v1006
      %v1021 = vpack.c.bf16 %v1009, %v1007
      %v1022 = vpack.c.bf16 %v1012, %v1010
      %v1023 = vpack.c.bf16 %v1013, %v1011
      %v1024 = vpack.c.bf16 %v1014, %v1014
      %v1025 = vpack.c.bf16 %v1015, %v1015
      %v1027 = vsel %vm824, %v997, 0
      %v1030 = vsel %vm828, %v1024, 0
      %v1033 = vsel %vm828, %v1025, 0
      %1035 = vmatprep.subr.bf16.mxu0 %v1017
      %1036 = vmatpush1.bf16.msra.mxu0 %v1016
      %1037 = vmatprep.subr.bf16.mxu0 %v1019
      %1038 = vmatpush1.bf16.msra.mxu0 %v1018
      %1039 = vmatprep.subr.bf16.mxu0 %v1021
      %1040 = vmatpush1.bf16.msra.mxu0 %v1020
      %1041 = vmatprep.subr.bf16.mxu0 %v1023
      %1042 = vmatpush1.bf16.msra.mxu0 %v1022
      %1043 = vmatprep.subr.bf16.mxu0 %v1033
      %1044 = vmatpush1.bf16.msra.mxu0 %v1030
      %1045 = vmatprep.subr.bf16.mxu0 0
      %1046 = vmatpush1.bf16.msra.mxu0 0
      %1047 = vmatprep.subr.bf16.mxu0 0
      %1048 = vmatpush1.bf16.msra.mxu0 0
      %1049 = vmatprep.subr.bf16.mxu0 0
      %1050 = vmatpush1.bf16.msra.mxu0 0
      %1051 = vmatprep.subr.bf16.mxu0 0
      %1052 = vmatpush1.bf16.msra.mxu0 0
      %1053 = vmatprep.subr.bf16.mxu0 0
      %1054 = vmatpush1.bf16.msra.mxu0 0
      %1055 = vmatprep.subr.bf16.mxu0 0
      %1056 = vmatpush1.bf16.msra.mxu0 0
      %1057 = vmatprep.subr.bf16.mxu0 0
      %1058 = vmatpush1.bf16.msra.mxu0 0
      %1059 = vmatprep.subr.bf16.mxu0 0
      %1060 = vmatpush1.bf16.msra.mxu0 0
      %1061 = vmatprep.subr.bf16.mxu0 0
      %1062 = vmatpush1.bf16.msra.mxu0 0
      %1063 = vmatprep.subr.bf16.mxu0 0
      %1064 = vmatpush1.bf16.msra.mxu0 0
      %1065 = vmatprep.subr.bf16.mxu0 0
      %1066 = vmatpush1.bf16.msra.mxu0 0
      %1067 = vmatprep.mubr.bf16.mxu0 0
      %1068 = vmatmul.mubr.bf16.gmra.mrb[0].mxu0 %v1027
      %v1069 = vpop.f32.mrb[0].mxu0
      %v1070 = vadd.f32 0.0, %v1069
      %v1071 = vpop.f32.mrb[0].mxu0
      %v1072 = vadd.f32 0.0, %v1071
      %v1073 = vpop.f32.mrb[0].mxu0
      %v1074 = vpop.f32.mrb[0].mxu0
      %1075 = vdwg.mxu0
      %v1076 = vadd.f32 %v1070, %v1072
      %1077 = vadd.xlane.f32.xlu0 %v1076
      %v1078 = vpop.xlane.xlu0 %1077
      %v1079 = vmul.f32 %v1078, 0.00390625
      %v1080 = vsub.f32 %v1070, %v1079
      %v1081 = vsub.f32 %v1072, %v1079
      %v1082 = vmul.f32 %v1080, %v1080
      %v1083 = vmul.f32 %v1081, %v1081
      %v1084 = vadd.f32 %v1082, %v1083
      %1085 = vadd.xlane.f32.xlu0 %v1084
      %v1086 = vpop.xlane.xlu0 %1085
      %v1087 = vmul.f32 %v1086, 0.00390625
      %s1088 = scalar_lea.vmem %s2, 24
      %v1089 = vld [vmem:[%s1088] sm:$0xff]
      %v1090 = vadd.f32 %v1087, 1e-05
      %v1091 = vrsqrt.pop %v1090
      %v1092 = vmul.f32 %v1080, %v1091
      %v1093 = vmul.f32 %v1081, %v1091
      %1095 = vset.pattern.permute.xlu0 0
      %1096 = vperm.xlu0 %1095, %v1089
      %v1097 = vpop.permute.xlu0 %1096
      %v1099 = vmul.f32 %v1092, %v1097
      %v1100 = vmul.f32 %v1093, %v1097
      %1101 = vset.pattern.permute.xlu0 1
      %1102 = vperm.xlu0 %1101, %v1089
      %v1103 = vpop.permute.xlu0 %1102
      %v1105 = vadd.f32 %v1099, %v1103
      %v1106 = vadd.f32 %v1100, %v1103
      %vm1107 = vcmp.ge.f32.partialorder %v1105, 0.0
      %vm1108 = vcmp.ge.f32.partialorder %v1106, 0.0
      %v1109 = vmul.f32 %v1105, 0.01
      %v1110 = vmul.f32 %v1106, 0.01
      %v1111 = vsel %vm1107, %v1105, %v1109
      %v1112 = vsel %vm1108, %v1106, %v1110
      %1113 = vrot.lane.b32.xlu0 %v1111, 17
      %v1114 = vpop.permute.xlu0 %1113
      %1115 = vrot.lane.b32.xlu0 %v1112, 17
      %v1116 = vpop.permute.xlu0 %1115
      %v1117 = vsel %vm573, %v1114, %v1116
      %v1118 = vsel %vm573, %v1116, %v1114
      %v1119 = vsel %vm578, %v1118, 0.0
      %v1120 = vsel %vm579, %v1117, 0.0
      %1121 = vst [vmem:[#allocation2] sm:$0xff] %v1119
      %1122 = vst [vmem:[#allocation2 + $0x8] sm:$0xff] %v1120
      %1123 = vrot.lane.b32.xlu0 %v1111, 16
      %v1124 = vpop.permute.xlu0 %1123
      %1125 = vrot.lane.b32.xlu0 %v1112, 16
      %v1126 = vpop.permute.xlu0 %1125
      %v1127 = vsel %vm600, %v1124, %v1126
      %v1128 = vsel %vm600, %v1126, %v1124
      %v1129 = vsel %vm605, %v1128, 0.0
      %v1130 = vsel %vm606, %v1127, 0.0
      %1131 = vst [vmem:[#allocation2 + $0x10] sm:$0xff] %v1129
      %1132 = vst [vmem:[#allocation2 + $0x18] sm:$0xff] %v1130
      %1133 = vrot.lane.b32.xlu0 %v1111, 15
      %v1134 = vpop.permute.xlu0 %1133
      %1135 = vrot.lane.b32.xlu0 %v1112, 15
      %v1136 = vpop.permute.xlu0 %1135
      %v1137 = vsel %vm627, %v1134, %v1136
      %v1138 = vsel %vm627, %v1136, %v1134
      %v1139 = vsel %vm632, %v1138, 0.0
      %v1140 = vsel %vm633, %v1137, 0.0
      %1141 = vst [vmem:[#allocation2 + $0x20] sm:$0xff] %v1139
      %1142 = vst [vmem:[#allocation2 + $0x28] sm:$0xff] %v1140
      %1143 = vrot.lane.b32.xlu0 %v1111, 1
      %v1144 = vpop.permute.xlu0 %1143
      %1145 = vrot.lane.b32.xlu0 %v1112, 1
      %v1146 = vpop.permute.xlu0 %1145
      %v1147 = vsel %vm654, %v1144, %v1146
      %v1148 = vsel %vm654, %v1146, %v1144
      %v1149 = vsel %vm659, %v1148, 0.0
      %v1150 = vsel %vm660, %v1147, 0.0
      %1151 = vst [vmem:[#allocation2 + $0x30] sm:$0xff] %v1149
      %1152 = vst [vmem:[#allocation2 + $0x38] sm:$0xff] %v1150
      %v1153 = vsel %vm679, %v1111, 0.0
      %v1154 = vsel %vm680, %v1112, 0.0
      %1155 = vst [vmem:[#allocation2 + $0x40] sm:$0xff] %v1153
      %1156 = vst [vmem:[#allocation2 + $0x48] sm:$0xff] %v1154
      %1157 = vrot.lane.b32.xlu0 %v1111, 127
      %v1158 = vpop.permute.xlu0 %1157
      %1159 = vrot.lane.b32.xlu0 %v1112, 127
      %v1160 = vpop.permute.xlu0 %1159
      %v1161 = vsel %vm691, %v1158, %v1160
      %v1162 = vsel %vm691, %v1160, %v1158
      %v1163 = vsel %vm696, %v1161, 0.0
      %v1164 = vsel %vm697, %v1162, 0.0
      %1165 = vst [vmem:[#allocation2 + $0x50] sm:$0xff] %v1163
      %1166 = vst [vmem:[#allocation2 + $0x58] sm:$0xff] %v1164
      %1167 = vrot.lane.b32.xlu0 %v1111, 113
      %v1168 = vpop.permute.xlu0 %1167
      %1169 = vrot.lane.b32.xlu0 %v1112, 113
      %v1170 = vpop.permute.xlu0 %1169
      %v1171 = vsel %vm718, %v1168, %v1170
      %v1172 = vsel %vm718, %v1170, %v1168
      %v1173 = vsel %vm723, %v1171, 0.0
      %v1174 = vsel %vm724, %v1172, 0.0
      %1175 = vst [vmem:[#allocation2 + $0x60] sm:$0xff] %v1173
      %1176 = vst [vmem:[#allocation2 + $0x68] sm:$0xff] %v1174
      %1177 = vrot.lane.b32.xlu0 %v1111, 112
      %v1178 = vpop.permute.xlu0 %1177
      %1179 = vrot.lane.b32.xlu0 %v1112, 112
      %v1180 = vpop.permute.xlu0 %1179
      %v1181 = vsel %vm745, %v1178, %v1180
      %v1182 = vsel %vm745, %v1180, %v1178
      %v1183 = vsel %vm750, %v1181, 0.0
      %v1184 = vsel %vm751, %v1182, 0.0
      %1185 = vst [vmem:[#allocation2 + $0x70] sm:$0xff] %v1183
      %1186 = vst [vmem:[#allocation2 + $0x78] sm:$0xff] %v1184
      %1187 = vrot.lane.b32.xlu0 %v1111, 111
      %v1188 = vpop.permute.xlu0 %1187
      %1189 = vrot.lane.b32.xlu0 %v1112, 111
      %v1190 = vpop.permute.xlu0 %1189
      %v1191 = vsel %vm772, %v1188, %v1190
      %v1192 = vsel %vm772, %v1190, %v1188
      %v1193 = vsel %vm777, %v1191, 0.0
      %v1194 = vsel %vm778, %v1192, 0.0
      %1195 = vst [vmem:[#allocation2 + $0x80] sm:$0xff] %v1193
      %1196 = vst [vmem:[#allocation2 + $0x88] sm:$0xff] %v1194
      %s1197 = scalar_lea.vmem %s1, 48
      %v1198 = vld [vmem:[%s1197] sm:$0xf]
      %v1199 = vld [vmem:[%s1197 + $0x8] sm:$0xf]
      %v1200 = vld [vmem:[#allocation2] sm:$0xff]
      %v1201 = vld [vmem:[#allocation2 + $0x8] sm:$0xff]
      %v1202 = vld [vmem:[#allocation2 + $0x10] sm:$0xff]
      %v1203 = vld [vmem:[#allocation2 + $0x18] sm:$0xff]
      %v1204 = vld [vmem:[#allocation2 + $0x20] sm:$0xff]
      %v1205 = vld [vmem:[#allocation2 + $0x28] sm:$0xff]
      %v1206 = vld [vmem:[#allocation2 + $0x30] sm:$0xff]
      %v1207 = vld [vmem:[#allocation2 + $0x38] sm:$0xff]
      %v1208 = vld [vmem:[#allocation2 + $0x40] sm:$0xff]
      %v1209 = vld [vmem:[#allocation2 + $0x48] sm:$0xff]
      %v1210 = vld [vmem:[#allocation2 + $0x50] sm:$0xff]
      %v1211 = vld [vmem:[#allocation2 + $0x58] sm:$0xff]
      %v1212 = vld [vmem:[#allocation2 + $0x60] sm:$0xff]
      %v1213 = vld [vmem:[#allocation2 + $0x68] sm:$0xff]
      %v1214 = vld [vmem:[#allocation2 + $0x70] sm:$0xff]
      %v1215 = vld [vmem:[#allocation2 + $0x78] sm:$0xff]
      %v1216 = vld [vmem:[#allocation2 + $0x80] sm:$0xff]
      %v1217 = vld [vmem:[#allocation2 + $0x88] sm:$0xff]
      %v1218 = vpack.c.bf16 %v1202, %v1200
      %v1219 = vpack.c.bf16 %v1203, %v1201
      %v1220 = vpack.c.bf16 %v1206, %v1204
      %v1221 = vpack.c.bf16 %v1207, %v1205
      %v1222 = vpack.c.bf16 %v1210, %v1208
      %v1223 = vpack.c.bf16 %v1211, %v1209
      %v1224 = vpack.c.bf16 %v1214, %v1212
      %v1225 = vpack.c.bf16 %v1215, %v1213
      %v1226 = vpack.c.bf16 %v1216, %v1216
      %v1227 = vpack.c.bf16 %v1217, %v1217
      %v1230 = vunpack.c.l.b16 %v1198
      %v1231 = vunpack.c.l.b16 %v1199
      %v1232 = vpack.c.b16 %v1231, %v1230
      %v1234 = vsel %vm824, %v1232, 0
      %v1237 = vsel %vm828, %v1226, 0
      %v1240 = vsel %vm828, %v1227, 0
      %1242 = vmatprep.subr.bf16.mxu0 %v1219
      %1243 = vmatpush1.bf16.msra.mxu0 %v1218
      %1244 = vmatprep.subr.bf16.mxu0 %v1221
      %1245 = vmatpush1.bf16.msra.mxu0 %v1220
      %1246 = vmatprep.subr.bf16.mxu0 %v1223
      %1247 = vmatpush1.bf16.msra.mxu0 %v1222
      %1248 = vmatprep.subr.bf16.mxu0 %v1225
      %1249 = vmatpush1.bf16.msra.mxu0 %v1224
      %1250 = vmatprep.subr.bf16.mxu0 %v1240
      %1251 = vmatpush1.bf16.msra.mxu0 %v1237
      %1252 = vmatprep.subr.bf16.mxu0 0
      %1253 = vmatpush1.bf16.msra.mxu0 0
      %1254 = vmatprep.subr.bf16.mxu0 0
      %1255 = vmatpush1.bf16.msra.mxu0 0
      %1256 = vmatprep.subr.bf16.mxu0 0
      %1257 = vmatpush1.bf16.msra.mxu0 0
      %1258 = vmatprep.subr.bf16.mxu0 0
      %1259 = vmatpush1.bf16.msra.mxu0 0
      %1260 = vmatprep.subr.bf16.mxu0 0
      %1261 = vmatpush1.bf16.msra.mxu0 0
      %1262 = vmatprep.subr.bf16.mxu0 0
      %1263 = vmatpush1.bf16.msra.mxu0 0
      %1264 = vmatprep.subr.bf16.mxu0 0
      %1265 = vmatpush1.bf16.msra.mxu0 0
      %1266 = vmatprep.subr.bf16.mxu0 0
      %1267 = vmatpush1.bf16.msra.mxu0 0
      %1268 = vmatprep.subr.bf16.mxu0 0
      %1269 = vmatpush1.bf16.msra.mxu0 0
      %1270 = vmatprep.subr.bf16.mxu0 0
      %1271 = vmatpush1.bf16.msra.mxu0 0
      %1272 = vmatprep.subr.bf16.mxu0 0
      %1273 = vmatpush1.bf16.msra.mxu0 0
      %1274 = vmatprep.mubr.bf16.mxu0 0
      %1275 = vmatmul.mubr.bf16.gmra.mrb[0].mxu0 %v1234
      %v1276 = vpop.f32.mrb[0].mxu0
      %v1277 = vadd.f32 0.0, %v1276
      %v1278 = vpop.f32.mrb[0].mxu0
      %v1279 = vadd.f32 0.0, %v1278
      %v1280 = vpop.f32.mrb[0].mxu0
      %v1281 = vadd.f32 0.0, %v1280
      %v1282 = vpop.f32.mrb[0].mxu0
      %v1283 = vadd.f32 0.0, %v1282
      %1284 = vdwg.mxu0
      %v1285 = vadd.f32 %v1277, %v1279
      %1286 = vadd.xlane.f32.xlu0 %v1285
      %v1287 = vpop.xlane.xlu0 %1286
      %v1288 = vadd.f32 %v1281, %v1283
      %1289 = vadd.xlane.f32.xlu0 %v1288
      %v1290 = vpop.xlane.xlu0 %1289
      %v1291 = vmul.f32 %v1287, 0.00390625
      %v1292 = vmul.f32 %v1290, 0.00390625
      %v1293 = vsub.f32 %v1277, %v1291
      %v1294 = vsub.f32 %v1279, %v1291
      %v1295 = vsub.f32 %v1281, %v1292
      %v1296 = vsub.f32 %v1283, %v1292
      %v1297 = vmul.f32 %v1293, %v1293
      %v1298 = vmul.f32 %v1294, %v1294
      %v1299 = vmul.f32 %v1295, %v1295
      %v1300 = vmul.f32 %v1296, %v1296
      %v1301 = vadd.f32 %v1297, %v1298
      %1302 = vadd.xlane.f32.xlu0 %v1301
      %v1303 = vpop.xlane.xlu0 %1302
      %v1304 = vadd.f32 %v1299, %v1300
      %1305 = vadd.xlane.f32.xlu0 %v1304
      %v1306 = vpop.xlane.xlu0 %1305
      %v1307 = vmul.f32 %v1303, 0.00390625
      %v1308 = vmul.f32 %v1306, 0.00390625
      %s1309 = scalar_lea.vmem %s2, 48
      %v1310 = vld [vmem:[%s1309] sm:$0xff]
      %v1311 = vld [vmem:[%s1309 + $0x8] sm:$0xff]
      %v1312 = vadd.f32 %v1307, 1e-05
      %v1313 = vadd.f32 %v1308, 1e-05
      %v1314 = vrsqrt.pop %v1312
      %v1315 = vrsqrt.pop %v1313
      %v1316 = vmul.f32 %v1293, %v1314
      %v1317 = vmul.f32 %v1294, %v1314
      %v1318 = vmul.f32 %v1295, %v1315
      %v1319 = vmul.f32 %v1296, %v1315
      %1321 = vset.pattern.permute.xlu0 0
      %1322 = vperm.xlu0 %1321, %v1310
      %v1323 = vpop.permute.xlu0 %1322
      %1326 = vset.pattern.permute.xlu0 0
      %1327 = vperm.xlu0 %1326, %v1311
      %v1328 = vpop.permute.xlu0 %1327
      %v1330 = vmul.f32 %v1316, %v1323
      %v1331 = vmul.f32 %v1317, %v1323
      %v1332 = vmul.f32 %v1318, %v1328
      %v1333 = vmul.f32 %v1319, %v1328
      %1334 = vset.pattern.permute.xlu0 1
      %1335 = vperm.xlu0 %1334, %v1310
      %v1336 = vpop.permute.xlu0 %1335
      %1338 = vset.pattern.permute.xlu0 1
      %1339 = vperm.xlu0 %1338, %v1311
      %v1340 = vpop.permute.xlu0 %1339
      %v1342 = vadd.f32 %v1330, %v1336
      %v1343 = vadd.f32 %v1331, %v1336
      %v1344 = vadd.f32 %v1332, %v1340
      %v1345 = vadd.f32 %v1333, %v1340
      %vm1346 = vcmp.ge.f32.partialorder %v1342, 0.0
      %vm1347 = vcmp.ge.f32.partialorder %v1343, 0.0
      %vm1348 = vcmp.ge.f32.partialorder %v1344, 0.0
      %vm1349 = vcmp.ge.f32.partialorder %v1345, 0.0
      %v1350 = vmul.f32 %v1342, 0.01
      %v1351 = vmul.f32 %v1343, 0.01
      %v1352 = vmul.f32 %v1344, 0.01
      %v1353 = vmul.f32 %v1345, 0.01
      %v1354 = vsel %vm1346, %v1342, %v1350
      %v1355 = vsel %vm1347, %v1343, %v1351
      %v1356 = vsel %vm1348, %v1344, %v1352
      %v1357 = vsel %vm1349, %v1345, %v1353
      %v1358 = vpack.c.bf16 %v1356, %v1354
      %v1359 = vpack.c.bf16 %v1357, %v1355
      %v1360 = vld [vmem:[%s9] sm:$0xff]
      %v1361 = vld [vmem:[%s9 + $0x8] sm:$0xff]
      %v1362 = vld [vmem:[%s9 + $0x10] sm:$0xff]
      %v1363 = vld [vmem:[%s9 + $0x18] sm:$0xff]
      %v1364 = vld [vmem:[%s9 + $0x20] sm:$0xff]
      %v1365 = vld [vmem:[%s9 + $0x28] sm:$0xff]
      %v1366 = vld [vmem:[%s9 + $0x30] sm:$0xff]
      %v1367 = vld [vmem:[%s9 + $0x38] sm:$0xff]
      %v1368 = vld [vmem:[%s9 + $0x40] sm:$0xff]
      %v1369 = vld [vmem:[%s9 + $0x48] sm:$0xff]
      %v1370 = vld [vmem:[%s9 + $0x50] sm:$0xff]
      %v1371 = vld [vmem:[%s9 + $0x58] sm:$0xff]
      %v1372 = vld [vmem:[%s9 + $0x60] sm:$0xff]
      %v1373 = vld [vmem:[%s9 + $0x68] sm:$0xff]
      %v1374 = vld [vmem:[%s9 + $0x70] sm:$0xff]
      %v1375 = vld [vmem:[%s9 + $0x78] sm:$0xff]
      %v1376 = vld [vmem:[%s9 + $0x80] sm:$0xff]
      %v1377 = vld [vmem:[%s9 + $0x88] sm:$0xff]
      %v1378 = vld [vmem:[%s9 + $0x90] sm:$0xff]
      %v1379 = vld [vmem:[%s9 + $0x98] sm:$0xff]
      %v1380 = vld [vmem:[%s9 + $0xa0] sm:$0xff]
      %v1381 = vld [vmem:[%s9 + $0xa8] sm:$0xff]
      %v1382 = vld [vmem:[%s9 + $0xb0] sm:$0xff]
      %v1383 = vld [vmem:[%s9 + $0xb8] sm:$0xff]
      %v1384 = vld [vmem:[%s9 + $0xc0] sm:$0xff]
      %v1385 = vld [vmem:[%s9 + $0xc8] sm:$0xff]
      %v1386 = vld [vmem:[%s9 + $0xd0] sm:$0xff]
      %v1387 = vld [vmem:[%s9 + $0xd8] sm:$0xff]
      %v1388 = vld [vmem:[%s9 + $0xe0] sm:$0xff]
      %v1389 = vld [vmem:[%s9 + $0xe8] sm:$0xff]
      %v1390 = vld [vmem:[%s9 + $0xf0] sm:$0xff]
      %v1391 = vld [vmem:[%s9 + $0xf8] sm:$0xff]
      %v1424 = vunpack.c.l.b16 %v1360
      %v1425 = vunpack.c.h.b16 %v1360
      %v1426 = vunpack.c.l.b16 %v1361
      %v1427 = vunpack.c.h.b16 %v1361
      %v1428 = vunpack.c.l.b16 %v1362
      %v1429 = vunpack.c.h.b16 %v1362
      %v1430 = vunpack.c.l.b16 %v1363
      %v1431 = vunpack.c.h.b16 %v1363
      %v1432 = vunpack.c.l.b16 %v1364
      %v1433 = vunpack.c.h.b16 %v1364
      %v1434 = vunpack.c.l.b16 %v1365
      %v1435 = vunpack.c.h.b16 %v1365
      %v1436 = vunpack.c.l.b16 %v1366
      %v1437 = vunpack.c.h.b16 %v1366
      %v1438 = vunpack.c.l.b16 %v1367
      %v1439 = vunpack.c.h.b16 %v1367
      %v1440 = vunpack.c.l.b16 %v1368
      %v1441 = vunpack.c.h.b16 %v1368
      %v1442 = vunpack.c.l.b16 %v1369
      %v1443 = vunpack.c.h.b16 %v1369
      %v1444 = vunpack.c.l.b16 %v1370
      %v1445 = vunpack.c.h.b16 %v1370
      %v1446 = vunpack.c.l.b16 %v1371
      %v1447 = vunpack.c.h.b16 %v1371
      %v1448 = vunpack.c.l.b16 %v1372
      %v1449 = vunpack.c.h.b16 %v1372
      %v1450 = vunpack.c.l.b16 %v1373
      %v1451 = vunpack.c.h.b16 %v1373
      %v1452 = vunpack.c.l.b16 %v1374
      %v1453 = vunpack.c.h.b16 %v1374
      %v1454 = vunpack.c.l.b16 %v1375
      %v1455 = vunpack.c.h.b16 %v1375
      %v1456 = vunpack.c.l.b16 %v1376
      %v1457 = vunpack.c.h.b16 %v1376
      %v1458 = vunpack.c.l.b16 %v1377
      %v1459 = vunpack.c.h.b16 %v1377
      %v1460 = vunpack.c.l.b16 %v1378
      %v1461 = vunpack.c.h.b16 %v1378
      %v1462 = vunpack.c.l.b16 %v1379
      %v1463 = vunpack.c.h.b16 %v1379
      %v1464 = vunpack.c.l.b16 %v1380
      %v1465 = vunpack.c.h.b16 %v1380
      %v1466 = vunpack.c.l.b16 %v1381
      %v1467 = vunpack.c.h.b16 %v1381
      %v1468 = vunpack.c.l.b16 %v1382
      %v1469 = vunpack.c.h.b16 %v1382
      %v1470 = vunpack.c.l.b16 %v1383
      %v1471 = vunpack.c.h.b16 %v1383
      %v1472 = vunpack.c.l.b16 %v1384
      %v1473 = vunpack.c.h.b16 %v1384
      %v1474 = vunpack.c.l.b16 %v1385
      %v1475 = vunpack.c.h.b16 %v1385
      %v1476 = vunpack.c.l.b16 %v1386
      %v1477 = vunpack.c.h.b16 %v1386
      %v1478 = vunpack.c.l.b16 %v1387
      %v1479 = vunpack.c.h.b16 %v1387
      %v1480 = vunpack.c.l.b16 %v1388
      %v1481 = vunpack.c.h.b16 %v1388
      %v1482 = vunpack.c.l.b16 %v1389
      %v1483 = vunpack.c.h.b16 %v1389
      %v1484 = vunpack.c.l.b16 %v1390
      %v1485 = vunpack.c.h.b16 %v1390
      %v1486 = vunpack.c.l.b16 %v1391
      %v1487 = vunpack.c.h.b16 %v1391
      %v1488 = vpack.c.b16 %v1426, %v1424
      %v1489 = vpack.c.b16 %v1427, %v1425
      %v1490 = vpack.c.b16 %v1430, %v1428
      %v1491 = vpack.c.b16 %v1431, %v1429
      %v1492 = vpack.c.b16 %v1434, %v1432
      %v1493 = vpack.c.b16 %v1435, %v1433
      %v1494 = vpack.c.b16 %v1438, %v1436
      %v1495 = vpack.c.b16 %v1439, %v1437
      %v1496 = vpack.c.b16 %v1442, %v1440
      %v1497 = vpack.c.b16 %v1443, %v1441
      %v1498 = vpack.c.b16 %v1446, %v1444
      %v1499 = vpack.c.b16 %v1447, %v1445
      %v1500 = vpack.c.b16 %v1450, %v1448
      %v1501 = vpack.c.b16 %v1451, %v1449
      %v1502 = vpack.c.b16 %v1454, %v1452
      %v1503 = vpack.c.b16 %v1455, %v1453
      %v1504 = vpack.c.b16 %v1458, %v1456
      %v1505 = vpack.c.b16 %v1459, %v1457
      %v1506 = vpack.c.b16 %v1462, %v1460
      %v1507 = vpack.c.b16 %v1463, %v1461
      %v1508 = vpack.c.b16 %v1466, %v1464
      %v1509 = vpack.c.b16 %v1467, %v1465
      %v1510 = vpack.c.b16 %v1470, %v1468
      %v1511 = vpack.c.b16 %v1471, %v1469
      %v1512 = vpack.c.b16 %v1474, %v1472
      %v1513 = vpack.c.b16 %v1475, %v1473
      %v1514 = vpack.c.b16 %v1478, %v1476
      %v1515 = vpack.c.b16 %v1479, %v1477
      %v1516 = vpack.c.b16 %v1482, %v1480
      %v1517 = vpack.c.b16 %v1483, %v1481
      %v1518 = vpack.c.b16 %v1486, %v1484
      %v1519 = vpack.c.b16 %v1487, %v1485
      %1552 = vmatprep.subr.bf16.mxu0 %v1489
      %1553 = vmatpush1.bf16.msra.mxu0 %v1488
      %1554 = vmatprep.subr.bf16.mxu0 %v1491
      %1555 = vmatpush1.bf16.msra.mxu0 %v1490
      %1556 = vmatprep.subr.bf16.mxu0 %v1493
      %1557 = vmatpush1.bf16.msra.mxu0 %v1492
      %1558 = vmatprep.subr.bf16.mxu0 %v1495
      %1559 = vmatpush1.bf16.msra.mxu0 %v1494
      %1560 = vmatprep.subr.bf16.mxu0 %v1497
      %1561 = vmatpush1.bf16.msra.mxu0 %v1496
      %1562 = vmatprep.subr.bf16.mxu0 %v1499
      %1563 = vmatpush1.bf16.msra.mxu0 %v1498
      %1564 = vmatprep.subr.bf16.mxu0 %v1501
      %1565 = vmatpush1.bf16.msra.mxu0 %v1500
      %1566 = vmatprep.subr.bf16.mxu0 %v1503
      %1567 = vmatpush1.bf16.msra.mxu0 %v1502
      %1568 = vmatprep.subr.bf16.mxu0 %v1505
      %1569 = vmatpush1.bf16.msra.mxu0 %v1504
      %1570 = vmatprep.subr.bf16.mxu0 %v1507
      %1571 = vmatpush1.bf16.msra.mxu0 %v1506
      %1572 = vmatprep.subr.bf16.mxu0 %v1509
      %1573 = vmatpush1.bf16.msra.mxu0 %v1508
      %1574 = vmatprep.subr.bf16.mxu0 %v1511
      %1575 = vmatpush1.bf16.msra.mxu0 %v1510
      %1576 = vmatprep.subr.bf16.mxu0 %v1513
      %1577 = vmatpush1.bf16.msra.mxu0 %v1512
      %1578 = vmatprep.subr.bf16.mxu0 %v1515
      %1579 = vmatpush1.bf16.msra.mxu0 %v1514
      %1580 = vmatprep.subr.bf16.mxu0 %v1517
      %1581 = vmatpush1.bf16.msra.mxu0 %v1516
      %1582 = vmatprep.subr.bf16.mxu0 %v1519
      %1583 = vmatpush1.bf16.msra.mxu0 %v1518
      %1584 = vmatprep.mubr.bf16.mxu0 %v1359
      %1585 = vmatmul.mubr.bf16.gmra.mrb[0].mxu0 %v1358
      %v1586 = vpop.f32.mrb[0].mxu0
      %v1587 = vadd.f32 0.0, %v1586
      %v1588 = vpop.f32.mrb[0].mxu0
      %v1589 = vadd.f32 0.0, %v1588
      %v1590 = vpop.f32.mrb[0].mxu0
      %v1591 = vadd.f32 0.0, %v1590
      %v1592 = vpop.f32.mrb[0].mxu0
      %v1593 = vadd.f32 0.0, %v1592
      %1594 = vdwg.mxu0
      %1595 = vrot.lane.b32.xlu0 %v1587, 9
      %v1596 = vpop.permute.xlu0 %1595
      %1597 = vrot.lane.b32.xlu0 %v1591, 9
      %v1598 = vpop.permute.xlu0 %1597
      %1599 = vrot.lane.b32.xlu0 %v1589, 9
      %v1600 = vpop.permute.xlu0 %1599
      %1601 = vrot.lane.b32.xlu0 %v1593, 9
      %v1602 = vpop.permute.xlu0 %1601
      %vm1603 = vcmp.lt.s32.totalorder %v389, 9
      %v1604 = vsel %vm1603, %v1596, %v1600
      %v1605 = vsel %vm1603, %v1598, %v1602
      %v1606 = vsel %vm1603, %v1600, %v1596
      %v1607 = vsel %vm1603, %v1602, %v1598
      %v1608 = vsel %vm501, 1, 0
      %v1609 = vsel %vm502, 1, 0
      %vm1610 = vcmp.eq.s32.totalorder %v1608, 1
      %vm1611 = vcmp.eq.s32.totalorder %v1609, 1
      %v1612 = vsel %vm1610, %v1606, 0.0
      %v1613 = vsel %vm1611, %v1604, 0.0
      %v1614 = vsel %vm1610, %v1607, 0.0
      %v1615 = vsel %vm1611, %v1605, 0.0
      %1616 = vst [vmem:[#allocation2] sm:$0xff] %v1612
      %1617 = vst [vmem:[#allocation2 + $0x8] sm:$0xff] %v1613
      %1618 = vst [vmem:[#allocation2 + $0x10] sm:$0xff] %v1614
      %1619 = vst [vmem:[#allocation2 + $0x18] sm:$0xff] %v1615
      %1620 = vrot.lane.b32.xlu0 %v1587, 8
      %v1621 = vpop.permute.xlu0 %1620
      %1622 = vrot.lane.b32.xlu0 %v1591, 8
      %v1623 = vpop.permute.xlu0 %1622
      %1624 = vrot.lane.b32.xlu0 %v1589, 8
      %v1625 = vpop.permute.xlu0 %1624
      %1626 = vrot.lane.b32.xlu0 %v1593, 8
      %v1627 = vpop.permute.xlu0 %1626
      %vm1628 = vcmp.lt.s32.totalorder %v389, 8
      %v1629 = vsel %vm1628, %v1621, %v1625
      %v1630 = vsel %vm1628, %v1623, %v1627
      %v1631 = vsel %vm1628, %v1625, %v1621
      %v1632 = vsel %vm1628, %v1627, %v1623
      %v1633 = vsel %vm509, 1, 0
      %v1634 = vsel %vm510, 1, 0
      %vm1635 = vcmp.eq.s32.totalorder %v1633, 1
      %vm1636 = vcmp.eq.s32.totalorder %v1634, 1
      %v1637 = vsel %vm1635, %v1631, 0.0
      %v1638 = vsel %vm1636, %v1629, 0.0
      %v1639 = vsel %vm1635, %v1632, 0.0
      %v1640 = vsel %vm1636, %v1630, 0.0
      %1641 = vst [vmem:[#allocation2 + $0x20] sm:$0xff] %v1637
      %1642 = vst [vmem:[#allocation2 + $0x28] sm:$0xff] %v1638
      %1643 = vst [vmem:[#allocation2 + $0x30] sm:$0xff] %v1639
      %1644 = vst [vmem:[#allocation2 + $0x38] sm:$0xff] %v1640
      %1645 = vrot.lane.b32.xlu0 %v1587, 7
      %v1646 = vpop.permute.xlu0 %1645
      %1647 = vrot.lane.b32.xlu0 %v1591, 7
      %v1648 = vpop.permute.xlu0 %1647
      %1649 = vrot.lane.b32.xlu0 %v1589, 7
      %v1650 = vpop.permute.xlu0 %1649
      %1651 = vrot.lane.b32.xlu0 %v1593, 7
      %v1652 = vpop.permute.xlu0 %1651
      %vm1653 = vcmp.lt.s32.totalorder %v389, 7
      %v1654 = vsel %vm1653, %v1646, %v1650
      %v1655 = vsel %vm1653, %v1648, %v1652
      %v1656 = vsel %vm1653, %v1650, %v1646
      %v1657 = vsel %vm1653, %v1652, %v1648
      %v1658 = vsel %vm519, 1, 0
      %v1659 = vsel %vm520, 1, 0
      %vm1660 = vcmp.eq.s32.totalorder %v1658, 1
      %vm1661 = vcmp.eq.s32.totalorder %v1659, 1
      %v1662 = vsel %vm1660, %v1656, 0.0
      %v1663 = vsel %vm1661, %v1654, 0.0
      %v1664 = vsel %vm1660, %v1657, 0.0
      %v1665 = vsel %vm1661, %v1655, 0.0
      %1666 = vst [vmem:[#allocation2 + $0x40] sm:$0xff] %v1662
      %1667 = vst [vmem:[#allocation2 + $0x48] sm:$0xff] %v1663
      %1668 = vst [vmem:[#allocation2 + $0x50] sm:$0xff] %v1664
      %1669 = vst [vmem:[#allocation2 + $0x58] sm:$0xff] %v1665
      %1670 = vrot.lane.b32.xlu0 %v1587, 1
      %v1671 = vpop.permute.xlu0 %1670
      %1672 = vrot.lane.b32.xlu0 %v1591, 1
      %v1673 = vpop.permute.xlu0 %1672
      %1674 = vrot.lane.b32.xlu0 %v1589, 1
      %v1675 = vpop.permute.xlu0 %1674
      %1676 = vrot.lane.b32.xlu0 %v1593, 1
      %v1677 = vpop.permute.xlu0 %1676
      %v1678 = vsel %vm654, %v1671, %v1675
      %v1679 = vsel %vm654, %v1673, %v1677
      %v1680 = vsel %vm654, %v1675, %v1671
      %v1681 = vsel %vm654, %v1677, %v1673
      %v1682 = vsel %vm531, 1, 0
      %v1683 = vsel %vm532, 1, 0
      %vm1684 = vcmp.eq.s32.totalorder %v1682, 1
      %vm1685 = vcmp.eq.s32.totalorder %v1683, 1
      %v1686 = vsel %vm1684, %v1680, 0.0
      %v1687 = vsel %vm1685, %v1678, 0.0
      %v1688 = vsel %vm1684, %v1681, 0.0
      %v1689 = vsel %vm1685, %v1679, 0.0
      %1690 = vst [vmem:[#allocation2 + $0x60] sm:$0xff] %v1686
      %1691 = vst [vmem:[#allocation2 + $0x68] sm:$0xff] %v1687
      %1692 = vst [vmem:[#allocation2 + $0x70] sm:$0xff] %v1688
      %1693 = vst [vmem:[#allocation2 + $0x78] sm:$0xff] %v1689
      %v1694 = vsel %vm535, 1, 0
      %v1695 = vsel %vm536, 1, 0
      %vm1696 = vcmp.eq.s32.totalorder %v1694, 1
      %vm1697 = vcmp.eq.s32.totalorder %v1695, 1
      %v1698 = vsel %vm1696, %v1587, 0.0
      %v1699 = vsel %vm1697, %v1589, 0.0
      %v1700 = vsel %vm1696, %v1591, 0.0
      %v1701 = vsel %vm1697, %v1593, 0.0
      %1702 = vst [vmem:[#allocation2 + $0x80] sm:$0xff] %v1698
      %1703 = vst [vmem:[#allocation2 + $0x88] sm:$0xff] %v1699
      %1704 = vst [vmem:[#allocation2 + $0x90] sm:$0xff] %v1700
      %1705 = vst [vmem:[#allocation2 + $0x98] sm:$0xff] %v1701
      %1706 = vrot.lane.b32.xlu0 %v1587, 127
      %v1707 = vpop.permute.xlu0 %1706
      %1708 = vrot.lane.b32.xlu0 %v1591, 127
      %v1709 = vpop.permute.xlu0 %1708
      %1710 = vrot.lane.b32.xlu0 %v1589, 127
      %v1711 = vpop.permute.xlu0 %1710
      %1712 = vrot.lane.b32.xlu0 %v1593, 127
      %v1713 = vpop.permute.xlu0 %1712
      %v1714 = vsel %vm691, %v1707, %v1711
      %v1715 = vsel %vm691, %v1709, %v1713
      %v1716 = vsel %vm691, %v1711, %v1707
      %v1717 = vsel %vm691, %v1713, %v1709
      %v1718 = vsel %vm539, 1, 0
      %v1719 = vsel %vm540, 1, 0
      %vm1720 = vcmp.eq.s32.totalorder %v1718, 1
      %vm1721 = vcmp.eq.s32.totalorder %v1719, 1
      %v1722 = vsel %vm1720, %v1714, 0.0
      %v1723 = vsel %vm1721, %v1716, 0.0
      %v1724 = vsel %vm1720, %v1715, 0.0
      %v1725 = vsel %vm1721, %v1717, 0.0
      %1726 = vst [vmem:[#allocation2 + $0xa0] sm:$0xff] %v1722
      %1727 = vst [vmem:[#allocation2 + $0xa8] sm:$0xff] %v1723
      %1728 = vst [vmem:[#allocation2 + $0xb0] sm:$0xff] %v1724
      %1729 = vst [vmem:[#allocation2 + $0xb8] sm:$0xff] %v1725
      %1730 = vrot.lane.b32.xlu0 %v1587, 121
      %v1731 = vpop.permute.xlu0 %1730
      %1732 = vrot.lane.b32.xlu0 %v1591, 121
      %v1733 = vpop.permute.xlu0 %1732
      %1734 = vrot.lane.b32.xlu0 %v1589, 121
      %v1735 = vpop.permute.xlu0 %1734
      %1736 = vrot.lane.b32.xlu0 %v1593, 121
      %v1737 = vpop.permute.xlu0 %1736
      %vm1738 = vcmp.lt.s32.totalorder %v389, 121
      %v1739 = vsel %vm1738, %v1731, %v1735
      %v1740 = vsel %vm1738, %v1733, %v1737
      %v1741 = vsel %vm1738, %v1735, %v1731
      %v1742 = vsel %vm1738, %v1737, %v1733
      %v1743 = vsel %vm553, 1, 0
      %v1744 = vsel %vm554, 1, 0
      %vm1745 = vcmp.eq.s32.totalorder %v1743, 1
      %vm1746 = vcmp.eq.s32.totalorder %v1744, 1
      %v1747 = vsel %vm1745, %v1739, 0.0
      %v1748 = vsel %vm1746, %v1741, 0.0
      %v1749 = vsel %vm1745, %v1740, 0.0
      %v1750 = vsel %vm1746, %v1742, 0.0
      %1751 = vst [vmem:[#allocation2 + $0xc0] sm:$0xff] %v1747
      %1752 = vst [vmem:[#allocation2 + $0xc8] sm:$0xff] %v1748
      %1753 = vst [vmem:[#allocation2 + $0xd0] sm:$0xff] %v1749
      %1754 = vst [vmem:[#allocation2 + $0xd8] sm:$0xff] %v1750
      %1755 = vrot.lane.b32.xlu0 %v1587, 120
      %v1756 = vpop.permute.xlu0 %1755
      %1757 = vrot.lane.b32.xlu0 %v1591, 120
      %v1758 = vpop.permute.xlu0 %1757
      %1759 = vrot.lane.b32.xlu0 %v1589, 120
      %v1760 = vpop.permute.xlu0 %1759
      %1761 = vrot.lane.b32.xlu0 %v1593, 120
      %v1762 = vpop.permute.xlu0 %1761
      %vm1763 = vcmp.lt.s32.totalorder %v389, 120
      %v1764 = vsel %vm1763, %v1756, %v1760
      %v1765 = vsel %vm1763, %v1758, %v1762
      %v1766 = vsel %vm1763, %v1760, %v1756
      %v1767 = vsel %vm1763, %v1762, %v1758
      %v1768 = vsel %vm557, 1, 0
      %v1769 = vsel %vm558, 1, 0
      %vm1770 = vcmp.eq.s32.totalorder %v1768, 1
      %vm1771 = vcmp.eq.s32.totalorder %v1769, 1
      %v1772 = vsel %vm1770, %v1764, 0.0
      %v1773 = vsel %vm1771, %v1766, 0.0
      %v1774 = vsel %vm1770, %v1765, 0.0
      %v1775 = vsel %vm1771, %v1767, 0.0
      %1776 = vst [vmem:[#allocation2 + $0xe0] sm:$0xff] %v1772
      %1777 = vst [vmem:[#allocation2 + $0xe8] sm:$0xff] %v1773
      %1778 = vst [vmem:[#allocation2 + $0xf0] sm:$0xff] %v1774
      %1779 = vst [vmem:[#allocation2 + $0xf8] sm:$0xff] %v1775
      %1780 = vrot.lane.b32.xlu0 %v1587, 119
      %v1781 = vpop.permute.xlu0 %1780
      %1782 = vrot.lane.b32.xlu0 %v1591, 119
      %v1783 = vpop.permute.xlu0 %1782
      %1784 = vrot.lane.b32.xlu0 %v1589, 119
      %v1785 = vpop.permute.xlu0 %1784
      %1786 = vrot.lane.b32.xlu0 %v1593, 119
      %v1787 = vpop.permute.xlu0 %1786
      %vm1788 = vcmp.lt.s32.totalorder %v389, 119
      %v1789 = vsel %vm1788, %v1781, %v1785
      %v1790 = vsel %vm1788, %v1783, %v1787
      %v1791 = vsel %vm1788, %v1785, %v1781
      %v1792 = vsel %vm1788, %v1787, %v1783
      %v1793 = vsel %vm561, 1, 0
      %v1794 = vsel %vm562, 1, 0
      %vm1795 = vcmp.eq.s32.totalorder %v1793, 1
      %vm1796 = vcmp.eq.s32.totalorder %v1794, 1
      %v1797 = vsel %vm1795, %v1789, 0.0
      %v1798 = vsel %vm1796, %v1791, 0.0
      %v1799 = vsel %vm1795, %v1790, 0.0
      %v1800 = vsel %vm1796, %v1792, 0.0
      %1801 = vst [vmem:[#allocation2 + $0x100] sm:$0xff] %v1797
      %1802 = vst [vmem:[#allocation2 + $0x108] sm:$0xff] %v1798
      %1803 = vst [vmem:[#allocation2 + $0x110] sm:$0xff] %v1799
      %1804 = vst [vmem:[#allocation2 + $0x118] sm:$0xff] %v1800
      %s1805 = scalar_lea.vmem %s1, 72
      %v1806 = vld [vmem:[%s1805] sm:$0xff]
      %v1807 = vld [vmem:[%s1805 + $0x8] sm:$0xff]
      %v1808 = vld [vmem:[#allocation2] sm:$0xff]
      %v1809 = vld [vmem:[#allocation2 + $0x8] sm:$0xff]
      %v1810 = vld [vmem:[#allocation2 + $0x10] sm:$0xff]
      %v1811 = vld [vmem:[#allocation2 + $0x18] sm:$0xff]
      %v1812 = vld [vmem:[#allocation2 + $0x20] sm:$0xff]
      %v1813 = vld [vmem:[#allocation2 + $0x28] sm:$0xff]
      %v1814 = vld [vmem:[#allocation2 + $0x30] sm:$0xff]
      %v1815 = vld [vmem:[#allocation2 + $0x38] sm:$0xff]
      %v1816 = vld [vmem:[#allocation2 + $0x40] sm:$0xff]
      %v1817 = vld [vmem:[#allocation2 + $0x48] sm:$0xff]
      %v1818 = vld [vmem:[#allocation2 + $0x50] sm:$0xff]
      %v1819 = vld [vmem:[#allocation2 + $0x58] sm:$0xff]
      %v1820 = vld [vmem:[#allocation2 + $0x60] sm:$0xff]
      %v1821 = vld [vmem:[#allocation2 + $0x68] sm:$0xff]
      %v1822 = vld [vmem:[#allocation2 + $0x70] sm:$0xff]
      %v1823 = vld [vmem:[#allocation2 + $0x78] sm:$0xff]
      %v1824 = vld [vmem:[#allocation2 + $0x80] sm:$0xff]
      %v1825 = vld [vmem:[#allocation2 + $0x88] sm:$0xff]
      %v1826 = vld [vmem:[#allocation2 + $0x90] sm:$0xff]
      %v1827 = vld [vmem:[#allocation2 + $0x98] sm:$0xff]
      %v1828 = vld [vmem:[#allocation2 + $0xa0] sm:$0xff]
      %v1829 = vld [vmem:[#allocation2 + $0xa8] sm:$0xff]
      %v1830 = vld [vmem:[#allocation2 + $0xb0] sm:$0xff]
      %v1831 = vld [vmem:[#allocation2 + $0xb8] sm:$0xff]
      %v1832 = vld [vmem:[#allocation2 + $0xc0] sm:$0xff]
      %v1833 = vld [vmem:[#allocation2 + $0xc8] sm:$0xff]
      %v1834 = vld [vmem:[#allocation2 + $0xd0] sm:$0xff]
      %v1835 = vld [vmem:[#allocation2 + $0xd8] sm:$0xff]
      %v1836 = vld [vmem:[#allocation2 + $0xe0] sm:$0xff]
      %v1837 = vld [vmem:[#allocation2 + $0xe8] sm:$0xff]
      %v1838 = vld [vmem:[#allocation2 + $0xf0] sm:$0xff]
      %v1839 = vld [vmem:[#allocation2 + $0xf8] sm:$0xff]
      %v1840 = vld [vmem:[#allocation2 + $0x100] sm:$0xff]
      %v1841 = vld [vmem:[#allocation2 + $0x108] sm:$0xff]
      %v1842 = vld [vmem:[#allocation2 + $0x110] sm:$0xff]
      %v1843 = vld [vmem:[#allocation2 + $0x118] sm:$0xff]
      %v1844 = vpack.c.bf16 %v1810, %v1808
      %v1845 = vpack.c.bf16 %v1811, %v1809
      %v1846 = vpack.c.bf16 %v1814, %v1812
      %v1847 = vpack.c.bf16 %v1815, %v1813
      %v1848 = vpack.c.bf16 %v1818, %v1816
      %v1849 = vpack.c.bf16 %v1819, %v1817
      %v1850 = vpack.c.bf16 %v1822, %v1820
      %v1851 = vpack.c.bf16 %v1823, %v1821
      %v1852 = vpack.c.bf16 %v1826, %v1824
      %v1853 = vpack.c.bf16 %v1827, %v1825
      %v1854 = vpack.c.bf16 %v1830, %v1828
      %v1855 = vpack.c.bf16 %v1831, %v1829
      %v1856 = vpack.c.bf16 %v1834, %v1832
      %v1857 = vpack.c.bf16 %v1835, %v1833
      %v1858 = vpack.c.bf16 %v1838, %v1836
      %v1859 = vpack.c.bf16 %v1839, %v1837
      %v1860 = vpack.c.bf16 %v1842, %v1840
      %v1861 = vpack.c.bf16 %v1843, %v1841
      %v1864 = vunpack.c.l.b16 %v1806
      %v1865 = vunpack.c.h.b16 %v1806
      %v1866 = vunpack.c.l.b16 %v1807
      %v1867 = vunpack.c.h.b16 %v1807
      %v1868 = vpack.c.b16 %v1866, %v1864
      %v1869 = vpack.c.b16 %v1867, %v1865
      %vm1871 = vcmask 130048
      %v1873 = vsel %vm1871, %v1869, 0
      %1875 = vmatprep.subr.bf16.mxu0 %v1845
      %1876 = vmatpush1.bf16.msra.mxu0 %v1844
      %1877 = vmatprep.subr.bf16.mxu0 %v1847
      %1878 = vmatpush1.bf16.msra.mxu0 %v1846
      %1879 = vmatprep.subr.bf16.mxu0 %v1849
      %1880 = vmatpush1.bf16.msra.mxu0 %v1848
      %1881 = vmatprep.subr.bf16.mxu0 %v1851
      %1882 = vmatpush1.bf16.msra.mxu0 %v1850
      %1883 = vmatprep.subr.bf16.mxu0 %v1853
      %1884 = vmatpush1.bf16.msra.mxu0 %v1852
      %1885 = vmatprep.subr.bf16.mxu0 %v1855
      %1886 = vmatpush1.bf16.msra.mxu0 %v1854
      %1887 = vmatprep.subr.bf16.mxu0 %v1857
      %1888 = vmatpush1.bf16.msra.mxu0 %v1856
      %1889 = vmatprep.subr.bf16.mxu0 %v1859
      %1890 = vmatpush1.bf16.msra.mxu0 %v1858
      %1891 = vmatprep.subr.bf16.mxu0 %v1861
      %1892 = vmatpush1.bf16.msra.mxu0 %v1860
      %1893 = vmatprep.subr.bf16.mxu0 0
      %1894 = vmatpush1.bf16.msra.mxu0 0
      %1895 = vmatprep.subr.bf16.mxu0 0
      %1896 = vmatpush1.bf16.msra.mxu0 0
      %1897 = vmatprep.subr.bf16.mxu0 0
      %1898 = vmatpush1.bf16.msra.mxu0 0
      %1899 = vmatprep.subr.bf16.mxu0 0
      %1900 = vmatpush1.bf16.msra.mxu0 0
      %1901 = vmatprep.subr.bf16.mxu0 0
      %1902 = vmatpush1.bf16.msra.mxu0 0
      %1903 = vmatprep.subr.bf16.mxu0 0
      %1904 = vmatpush1.bf16.msra.mxu0 0
      %1905 = vmatprep.subr.bf16.mxu0 0
      %1906 = vmatpush1.bf16.msra.mxu0 0
      %1907 = vmatprep.mubr.bf16.mxu0 %v1873
      %1908 = vmatmul.mubr.bf16.gmra.mrb[0].mxu0 %v1868
      %v1909 = vpop.f32.mrb[0].mxu0
      %v1910 = vadd.f32 0.0, %v1909
      %v1911 = vpop.f32.mrb[0].mxu0
      %v1912 = vadd.f32 0.0, %v1911
      %v1913 = vpop.f32.mrb[0].mxu0
      %v1914 = vadd.f32 0.0, %v1913
      %v1915 = vpop.f32.mrb[0].mxu0
      %v1916 = vadd.f32 0.0, %v1915
      %1917 = vdwg.mxu0
      %v1918 = vadd.f32 %v1910, %v1912
      %1919 = vadd.xlane.f32.xlu0 %v1918
      %v1920 = vpop.xlane.xlu0 %1919
      %v1921 = vadd.f32 %v1914, %v1916
      %1922 = vadd.xlane.f32.xlu0 %v1921
      %v1923 = vpop.xlane.xlu0 %1922
      %v1924 = vmul.f32 %v1920, 0.015625
      %v1925 = vmul.f32 %v1923, 0.015625
      %v1926 = vsub.f32 %v1910, %v1924
      %v1927 = vsub.f32 %v1912, %v1924
      %v1928 = vsub.f32 %v1914, %v1925
      %v1929 = vsub.f32 %v1916, %v1925
      %v1930 = vmul.f32 %v1926, %v563
      %v1931 = vmul.f32 %v1927, %v564
      %v1932 = vmul.f32 %v1928, %v563
      %v1933 = vmul.f32 %v1929, %v564
      %v1934 = vmul.f32 %v1930, %v1930
      %v1935 = vmul.f32 %v1931, %v1931
      %v1936 = vmul.f32 %v1932, %v1932
      %v1937 = vmul.f32 %v1933, %v1933
      %v1938 = vadd.f32 %v1934, %v1935
      %1939 = vadd.xlane.f32.xlu0 %v1938
      %v1940 = vpop.xlane.xlu0 %1939
      %v1941 = vadd.f32 %v1936, %v1937
      %1942 = vadd.xlane.f32.xlu0 %v1941
      %v1943 = vpop.xlane.xlu0 %1942
      %v1944 = vmul.f32 %v1940, 0.015625
      %v1945 = vmul.f32 %v1943, 0.015625
      %s1946 = scalar_lea.vmem %s2, 72
      %v1947 = vld [vmem:[%s1946] sm:$0xff]
      %v1948 = vld [vmem:[%s1946 + $0x8] sm:$0xff]
      %v1949 = vadd.f32 %v1944, 1e-05
      %v1950 = vadd.f32 %v1945, 1e-05
      %v1951 = vrsqrt.pop %v1949
      %v1952 = vrsqrt.pop %v1950
      %v1953 = vmul.f32 %v1930, %v1951
      %v1954 = vmul.f32 %v1931, %v1951
      %v1955 = vmul.f32 %v1932, %v1952
      %v1956 = vmul.f32 %v1933, %v1952
      %1958 = vset.pattern.permute.xlu0 0
      %1959 = vperm.xlu0 %1958, %v1947
      %v1960 = vpop.permute.xlu0 %1959
      %1963 = vset.pattern.permute.xlu0 0
      %1964 = vperm.xlu0 %1963, %v1948
      %v1965 = vpop.permute.xlu0 %1964
      %v1967 = vmul.f32 %v1953, %v1960
      %v1968 = vmul.f32 %v1954, %v1960
      %v1969 = vmul.f32 %v1955, %v1965
      %v1970 = vmul.f32 %v1956, %v1965
      %1971 = vset.pattern.permute.xlu0 1
      %1972 = vperm.xlu0 %1971, %v1947
      %v1973 = vpop.permute.xlu0 %1972
      %1975 = vset.pattern.permute.xlu0 1
      %1976 = vperm.xlu0 %1975, %v1948
      %v1977 = vpop.permute.xlu0 %1976
      %v1979 = vadd.f32 %v1967, %v1973
      %v1980 = vadd.f32 %v1968, %v1973
      %v1981 = vadd.f32 %v1969, %v1977
      %v1982 = vadd.f32 %v1970, %v1977
      %vm1983 = vcmp.ge.f32.partialorder %v1979, 0.0
      %vm1984 = vcmp.ge.f32.partialorder %v1980, 0.0
      %vm1985 = vcmp.ge.f32.partialorder %v1981, 0.0
      %vm1986 = vcmp.ge.f32.partialorder %v1982, 0.0
      %v1987 = vmul.f32 %v1979, 0.01
      %v1988 = vmul.f32 %v1980, 0.01
      %v1989 = vmul.f32 %v1981, 0.01
      %v1990 = vmul.f32 %v1982, 0.01
      %v1991 = vsel %vm1983, %v1979, %v1987
      %v1992 = vsel %vm1984, %v1980, %v1988
      %v1993 = vsel %vm1985, %v1981, %v1989
      %v1994 = vsel %vm1986, %v1982, %v1990
      %v1995 = vmul.f32 %v1991, %v563
      %v1996 = vmul.f32 %v1992, %v564
      %v1997 = vmul.f32 %v1993, %v563
      %v1998 = vmul.f32 %v1994, %v564
      %1999 = vrot.lane.b32.xlu0 %v1995, 9
      %v2000 = vpop.permute.xlu0 %1999
      %2001 = vrot.lane.b32.xlu0 %v1997, 9
      %v2002 = vpop.permute.xlu0 %2001
      %2003 = vrot.lane.b32.xlu0 %v1996, 9
      %v2004 = vpop.permute.xlu0 %2003
      %2005 = vrot.lane.b32.xlu0 %v1998, 9
      %v2006 = vpop.permute.xlu0 %2005
      %v2007 = vsel %vm1603, %v2000, %v2004
      %v2008 = vsel %vm1603, %v2002, %v2006
      %v2009 = vsel %vm1603, %v2004, %v2000
      %v2010 = vsel %vm1603, %v2006, %v2002
      %v2011 = vsel %vm1610, %v2009, 0.0
      %v2012 = vsel %vm1611, %v2007, 0.0
      %v2013 = vsel %vm1610, %v2010, 0.0
      %v2014 = vsel %vm1611, %v2008, 0.0
      %2015 = vst [vmem:[#allocation2] sm:$0xff] %v2011
      %2016 = vst [vmem:[#allocation2 + $0x8] sm:$0xff] %v2012
      %2017 = vst [vmem:[#allocation2 + $0x10] sm:$0xff] %v2013
      %2018 = vst [vmem:[#allocation2 + $0x18] sm:$0xff] %v2014
      %2019 = vrot.lane.b32.xlu0 %v1995, 8
      %v2020 = vpop.permute.xlu0 %2019
      %2021 = vrot.lane.b32.xlu0 %v1997, 8
      %v2022 = vpop.permute.xlu0 %2021
      %2023 = vrot.lane.b32.xlu0 %v1996, 8
      %v2024 = vpop.permute.xlu0 %2023
      %2025 = vrot.lane.b32.xlu0 %v1998, 8
      %v2026 = vpop.permute.xlu0 %2025
      %v2027 = vsel %vm1628, %v2020, %v2024
      %v2028 = vsel %vm1628, %v2022, %v2026
      %v2029 = vsel %vm1628, %v2024, %v2020
      %v2030 = vsel %vm1628, %v2026, %v2022
      %v2031 = vsel %vm1635, %v2029, 0.0
      %v2032 = vsel %vm1636, %v2027, 0.0
      %v2033 = vsel %vm1635, %v2030, 0.0
      %v2034 = vsel %vm1636, %v2028, 0.0
      %2035 = vst [vmem:[#allocation2 + $0x20] sm:$0xff] %v2031
      %2036 = vst [vmem:[#allocation2 + $0x28] sm:$0xff] %v2032
      %2037 = vst [vmem:[#allocation2 + $0x30] sm:$0xff] %v2033
      %2038 = vst [vmem:[#allocation2 + $0x38] sm:$0xff] %v2034
      %2039 = vrot.lane.b32.xlu0 %v1995, 7
      %v2040 = vpop.permute.xlu0 %2039
      %2041 = vrot.lane.b32.xlu0 %v1997, 7
      %v2042 = vpop.permute.xlu0 %2041
      %2043 = vrot.lane.b32.xlu0 %v1996, 7
      %v2044 = vpop.permute.xlu0 %2043
      %2045 = vrot.lane.b32.xlu0 %v1998, 7
      %v2046 = vpop.permute.xlu0 %2045
      %v2047 = vsel %vm1653, %v2040, %v2044
      %v2048 = vsel %vm1653, %v2042, %v2046
      %v2049 = vsel %vm1653, %v2044, %v2040
      %v2050 = vsel %vm1653, %v2046, %v2042
      %v2051 = vsel %vm1660, %v2049, 0.0
      %v2052 = vsel %vm1661, %v2047, 0.0
      %v2053 = vsel %vm1660, %v2050, 0.0
      %v2054 = vsel %vm1661, %v2048, 0.0
      %2055 = vst [vmem:[#allocation2 + $0x40] sm:$0xff] %v2051
      %2056 = vst [vmem:[#allocation2 + $0x48] sm:$0xff] %v2052
      %2057 = vst [vmem:[#allocation2 + $0x50] sm:$0xff] %v2053
      %2058 = vst [vmem:[#allocation2 + $0x58] sm:$0xff] %v2054
      %2059 = vrot.lane.b32.xlu0 %v1995, 1
      %v2060 = vpop.permute.xlu0 %2059
      %2061 = vrot.lane.b32.xlu0 %v1997, 1
      %v2062 = vpop.permute.xlu0 %2061
      %2063 = vrot.lane.b32.xlu0 %v1996, 1
      %v2064 = vpop.permute.xlu0 %2063
      %2065 = vrot.lane.b32.xlu0 %v1998, 1
      %v2066 = vpop.permute.xlu0 %2065
      %v2067 = vsel %vm654, %v2060, %v2064
      %v2068 = vsel %vm654, %v2062, %v2066
      %v2069 = vsel %vm654, %v2064, %v2060
      %v2070 = vsel %vm654, %v2066, %v2062
      %v2071 = vsel %vm1684, %v2069, 0.0
      %v2072 = vsel %vm1685, %v2067, 0.0
      %v2073 = vsel %vm1684, %v2070, 0.0
      %v2074 = vsel %vm1685, %v2068, 0.0
      %2075 = vst [vmem:[#allocation2 + $0x60] sm:$0xff] %v2071
      %2076 = vst [vmem:[#allocation2 + $0x68] sm:$0xff] %v2072
      %2077 = vst [vmem:[#allocation2 + $0x70] sm:$0xff] %v2073
      %2078 = vst [vmem:[#allocation2 + $0x78] sm:$0xff] %v2074
      %v2079 = vsel %vm1696, %v1995, 0.0
      %v2080 = vsel %vm1697, %v1996, 0.0
      %v2081 = vsel %vm1696, %v1997, 0.0
      %v2082 = vsel %vm1697, %v1998, 0.0
      %2083 = vst [vmem:[#allocation2 + $0x80] sm:$0xff] %v2079
      %2084 = vst [vmem:[#allocation2 + $0x88] sm:$0xff] %v2080
      %2085 = vst [vmem:[#allocation2 + $0x90] sm:$0xff] %v2081
      %2086 = vst [vmem:[#allocation2 + $0x98] sm:$0xff] %v2082
      %2087 = vrot.lane.b32.xlu0 %v1995, 127
      %v2088 = vpop.permute.xlu0 %2087
      %2089 = vrot.lane.b32.xlu0 %v1997, 127
      %v2090 = vpop.permute.xlu0 %2089
      %2091 = vrot.lane.b32.xlu0 %v1996, 127
      %v2092 = vpop.permute.xlu0 %2091
      %2093 = vrot.lane.b32.xlu0 %v1998, 127
      %v2094 = vpop.permute.xlu0 %2093
      %v2095 = vsel %vm691, %v2088, %v2092
      %v2096 = vsel %vm691, %v2090, %v2094
      %v2097 = vsel %vm691, %v2092, %v2088
      %v2098 = vsel %vm691, %v2094, %v2090
      %v2099 = vsel %vm1720, %v2095, 0.0
      %v2100 = vsel %vm1721, %v2097, 0.0
      %v2101 = vsel %vm1720, %v2096, 0.0
      %v2102 = vsel %vm1721, %v2098, 0.0
      %2103 = vst [vmem:[#allocation2 + $0xa0] sm:$0xff] %v2099
      %2104 = vst [vmem:[#allocation2 + $0xa8] sm:$0xff] %v2100
      %2105 = vst [vmem:[#allocation2 + $0xb0] sm:$0xff] %v2101
      %2106 = vst [vmem:[#allocation2 + $0xb8] sm:$0xff] %v2102
      %2107 = vrot.lane.b32.xlu0 %v1995, 121
      %v2108 = vpop.permute.xlu0 %2107
      %2109 = vrot.lane.b32.xlu0 %v1997, 121
      %v2110 = vpop.permute.xlu0 %2109
      %2111 = vrot.lane.b32.xlu0 %v1996, 121
      %v2112 = vpop.permute.xlu0 %2111
      %2113 = vrot.lane.b32.xlu0 %v1998, 121
      %v2114 = vpop.permute.xlu0 %2113
      %v2115 = vsel %vm1738, %v2108, %v2112
      %v2116 = vsel %vm1738, %v2110, %v2114
      %v2117 = vsel %vm1738, %v2112, %v2108
      %v2118 = vsel %vm1738, %v2114, %v2110
      %v2119 = vsel %vm1745, %v2115, 0.0
      %v2120 = vsel %vm1746, %v2117, 0.0
      %v2121 = vsel %vm1745, %v2116, 0.0
      %v2122 = vsel %vm1746, %v2118, 0.0
      %2123 = vst [vmem:[#allocation2 + $0xc0] sm:$0xff] %v2119
      %2124 = vst [vmem:[#allocation2 + $0xc8] sm:$0xff] %v2120
      %2125 = vst [vmem:[#allocation2 + $0xd0] sm:$0xff] %v2121
      %2126 = vst [vmem:[#allocation2 + $0xd8] sm:$0xff] %v2122
      %2127 = vrot.lane.b32.xlu0 %v1995, 120
      %v2128 = vpop.permute.xlu0 %2127
      %2129 = vrot.lane.b32.xlu0 %v1997, 120
      %v2130 = vpop.permute.xlu0 %2129
      %2131 = vrot.lane.b32.xlu0 %v1996, 120
      %v2132 = vpop.permute.xlu0 %2131
      %2133 = vrot.lane.b32.xlu0 %v1998, 120
      %v2134 = vpop.permute.xlu0 %2133
      %v2135 = vsel %vm1763, %v2128, %v2132
      %v2136 = vsel %vm1763, %v2130, %v2134
      %v2137 = vsel %vm1763, %v2132, %v2128
      %v2138 = vsel %vm1763, %v2134, %v2130
      %v2139 = vsel %vm1770, %v2135, 0.0
      %v2140 = vsel %vm1771, %v2137, 0.0
      %v2141 = vsel %vm1770, %v2136, 0.0
      %v2142 = vsel %vm1771, %v2138, 0.0
      %2143 = vst [vmem:[#allocation2 + $0xe0] sm:$0xff] %v2139
      %2144 = vst [vmem:[#allocation2 + $0xe8] sm:$0xff] %v2140
      %2145 = vst [vmem:[#allocation2 + $0xf0] sm:$0xff] %v2141
      %2146 = vst [vmem:[#allocation2 + $0xf8] sm:$0xff] %v2142
      %2147 = vrot.lane.b32.xlu0 %v1995, 119
      %v2148 = vpop.permute.xlu0 %2147
      %2149 = vrot.lane.b32.xlu0 %v1997, 119
      %v2150 = vpop.permute.xlu0 %2149
      %2151 = vrot.lane.b32.xlu0 %v1996, 119
      %v2152 = vpop.permute.xlu0 %2151
      %2153 = vrot.lane.b32.xlu0 %v1998, 119
      %v2154 = vpop.permute.xlu0 %2153
      %v2155 = vsel %vm1788, %v2148, %v2152
      %v2156 = vsel %vm1788, %v2150, %v2154
      %v2157 = vsel %vm1788, %v2152, %v2148
      %v2158 = vsel %vm1788, %v2154, %v2150
      %v2159 = vsel %vm1795, %v2155, 0.0
      %v2160 = vsel %vm1796, %v2157, 0.0
      %v2161 = vsel %vm1795, %v2156, 0.0
      %v2162 = vsel %vm1796, %v2158, 0.0
      %2163 = vst [vmem:[#allocation2 + $0x100] sm:$0xff] %v2159
      %2164 = vst [vmem:[#allocation2 + $0x108] sm:$0xff] %v2160
      %2165 = vst [vmem:[#allocation2 + $0x110] sm:$0xff] %v2161
      %2166 = vst [vmem:[#allocation2 + $0x118] sm:$0xff] %v2162
      %s2167 = scalar_lea.vmem %s1, 96
      %v2168 = vld [vmem:[%s2167] sm:$0xff]
      %v2169 = vld [vmem:[%s2167 + $0x8] sm:$0xff]
      %v2170 = vld [vmem:[#allocation2] sm:$0xff]
      %v2171 = vld [vmem:[#allocation2 + $0x8] sm:$0xff]
      %v2172 = vld [vmem:[#allocation2 + $0x10] sm:$0xff]
      %v2173 = vld [vmem:[#allocation2 + $0x18] sm:$0xff]
      %v2174 = vld [vmem:[#allocation2 + $0x20] sm:$0xff]
      %v2175 = vld [vmem:[#allocation2 + $0x28] sm:$0xff]
      %v2176 = vld [vmem:[#allocation2 + $0x30] sm:$0xff]
      %v2177 = vld [vmem:[#allocation2 + $0x38] sm:$0xff]
      %v2178 = vld [vmem:[#allocation2 + $0x40] sm:$0xff]
      %v2179 = vld [vmem:[#allocation2 + $0x48] sm:$0xff]
      %v2180 = vld [vmem:[#allocation2 + $0x50] sm:$0xff]
      %v2181 = vld [vmem:[#allocation2 + $0x58] sm:$0xff]
      %v2182 = vld [vmem:[#allocation2 + $0x60] sm:$0xff]
      %v2183 = vld [vmem:[#allocation2 + $0x68] sm:$0xff]
      %v2184 = vld [vmem:[#allocation2 + $0x70] sm:$0xff]
      %v2185 = vld [vmem:[#allocation2 + $0x78] sm:$0xff]
      %v2186 = vld [vmem:[#allocation2 + $0x80] sm:$0xff]
      %v2187 = vld [vmem:[#allocation2 + $0x88] sm:$0xff]
      %v2188 = vld [vmem:[#allocation2 + $0x90] sm:$0xff]
      %v2189 = vld [vmem:[#allocation2 + $0x98] sm:$0xff]
      %v2190 = vld [vmem:[#allocation2 + $0xa0] sm:$0xff]
      %v2191 = vld [vmem:[#allocation2 + $0xa8] sm:$0xff]
      %v2192 = vld [vmem:[#allocation2 + $0xb0] sm:$0xff]
      %v2193 = vld [vmem:[#allocation2 + $0xb8] sm:$0xff]
      %v2194 = vld [vmem:[#allocation2 + $0xc0] sm:$0xff]
      %v2195 = vld [vmem:[#allocation2 + $0xc8] sm:$0xff]
      %v2196 = vld [vmem:[#allocation2 + $0xd0] sm:$0xff]
      %v2197 = vld [vmem:[#allocation2 + $0xd8] sm:$0xff]
      %v2198 = vld [vmem:[#allocation2 + $0xe0] sm:$0xff]
      %v2199 = vld [vmem:[#allocation2 + $0xe8] sm:$0xff]
      %v2200 = vld [vmem:[#allocation2 + $0xf0] sm:$0xff]
      %v2201 = vld [vmem:[#allocation2 + $0xf8] sm:$0xff]
      %v2202 = vld [vmem:[#allocation2 + $0x100] sm:$0xff]
      %v2203 = vld [vmem:[#allocation2 + $0x108] sm:$0xff]
      %v2204 = vld [vmem:[#allocation2 + $0x110] sm:$0xff]
      %v2205 = vld [vmem:[#allocation2 + $0x118] sm:$0xff]
      %v2206 = vpack.c.bf16 %v2172, %v2170
      %v2207 = vpack.c.bf16 %v2173, %v2171
      %v2208 = vpack.c.bf16 %v2176, %v2174
      %v2209 = vpack.c.bf16 %v2177, %v2175
      %v2210 = vpack.c.bf16 %v2180, %v2178
      %v2211 = vpack.c.bf16 %v2181, %v2179
      %v2212 = vpack.c.bf16 %v2184, %v2182
      %v2213 = vpack.c.bf16 %v2185, %v2183
      %v2214 = vpack.c.bf16 %v2188, %v2186
      %v2215 = vpack.c.bf16 %v2189, %v2187
      %v2216 = vpack.c.bf16 %v2192, %v2190
      %v2217 = vpack.c.bf16 %v2193, %v2191
      %v2218 = vpack.c.bf16 %v2196, %v2194
      %v2219 = vpack.c.bf16 %v2197, %v2195
      %v2220 = vpack.c.bf16 %v2200, %v2198
      %v2221 = vpack.c.bf16 %v2201, %v2199
      %v2222 = vpack.c.bf16 %v2204, %v2202
      %v2223 = vpack.c.bf16 %v2205, %v2203
      %v2226 = vunpack.c.l.b16 %v2168
      %v2227 = vunpack.c.h.b16 %v2168
      %v2228 = vunpack.c.l.b16 %v2169
      %v2229 = vunpack.c.h.b16 %v2169
      %v2230 = vpack.c.b16 %v2228, %v2226
      %v2231 = vpack.c.b16 %v2229, %v2227
      %v2234 = vsel %vm1871, %v2231, 0
      %2236 = vmatprep.subr.bf16.mxu0 %v2207
      %2237 = vmatpush1.bf16.msra.mxu0 %v2206
      %2238 = vmatprep.subr.bf16.mxu0 %v2209
      %2239 = vmatpush1.bf16.msra.mxu0 %v2208
      %2240 = vmatprep.subr.bf16.mxu0 %v2211
      %2241 = vmatpush1.bf16.msra.mxu0 %v2210
      %2242 = vmatprep.subr.bf16.mxu0 %v2213
      %2243 = vmatpush1.bf16.msra.mxu0 %v2212
      %2244 = vmatprep.subr.bf16.mxu0 %v2215
      %2245 = vmatpush1.bf16.msra.mxu0 %v2214
      %2246 = vmatprep.subr.bf16.mxu0 %v2217
      %2247 = vmatpush1.bf16.msra.mxu0 %v2216
      %2248 = vmatprep.subr.bf16.mxu0 %v2219
      %2249 = vmatpush1.bf16.msra.mxu0 %v2218
      %2250 = vmatprep.subr.bf16.mxu0 %v2221
      %2251 = vmatpush1.bf16.msra.mxu0 %v2220
      %2252 = vmatprep.subr.bf16.mxu0 %v2223
      %2253 = vmatpush1.bf16.msra.mxu0 %v2222
      %2254 = vmatprep.subr.bf16.mxu0 0
      %2255 = vmatpush1.bf16.msra.mxu0 0
      %2256 = vmatprep.subr.bf16.mxu0 0
      %2257 = vmatpush1.bf16.msra.mxu0 0
      %2258 = vmatprep.subr.bf16.mxu0 0
      %2259 = vmatpush1.bf16.msra.mxu0 0
      %2260 = vmatprep.subr.bf16.mxu0 0
      %2261 = vmatpush1.bf16.msra.mxu0 0
      %2262 = vmatprep.subr.bf16.mxu0 0
      %2263 = vmatpush1.bf16.msra.mxu0 0
      %2264 = vmatprep.subr.bf16.mxu0 0
      %2265 = vmatpush1.bf16.msra.mxu0 0
      %2266 = vmatprep.subr.bf16.mxu0 0
      %2267 = vmatpush1.bf16.msra.mxu0 0
      %2268 = vmatprep.mubr.bf16.mxu0 %v2234
      %2269 = vmatmul.mubr.bf16.gmra.mrb[0].mxu0 %v2230
      %v2270 = vpop.f32.mrb[0].mxu0
      %v2271 = vadd.f32 0.0, %v2270
      %v2272 = vpop.f32.mrb[0].mxu0
      %v2273 = vadd.f32 0.0, %v2272
      %v2274 = vpop.f32.mrb[0].mxu0
      %v2275 = vadd.f32 0.0, %v2274
      %v2276 = vpop.f32.mrb[0].mxu0
      %v2277 = vadd.f32 0.0, %v2276
      %2278 = vdwg.mxu0
      %v2279 = vadd.f32 %v2271, %v2273
      %2280 = vadd.xlane.f32.xlu0 %v2279
      %v2281 = vpop.xlane.xlu0 %2280
      %v2282 = vadd.f32 %v2275, %v2277
      %2283 = vadd.xlane.f32.xlu0 %v2282
      %v2284 = vpop.xlane.xlu0 %2283
      %v2285 = vmul.f32 %v2281, 0.015625
      %v2286 = vmul.f32 %v2284, 0.015625
      %v2287 = vsub.f32 %v2271, %v2285
      %v2288 = vsub.f32 %v2273, %v2285
      %v2289 = vsub.f32 %v2275, %v2286
      %v2290 = vsub.f32 %v2277, %v2286
      %v2291 = vmul.f32 %v2287, %v563
      %v2292 = vmul.f32 %v2288, %v564
      %v2293 = vmul.f32 %v2289, %v563
      %v2294 = vmul.f32 %v2290, %v564
      %v2295 = vmul.f32 %v2291, %v2291
      %v2296 = vmul.f32 %v2292, %v2292
      %v2297 = vmul.f32 %v2293, %v2293
      %v2298 = vmul.f32 %v2294, %v2294
      %v2299 = vadd.f32 %v2295, %v2296
      %2300 = vadd.xlane.f32.xlu0 %v2299
      %v2301 = vpop.xlane.xlu0 %2300
      %v2302 = vadd.f32 %v2297, %v2298
      %2303 = vadd.xlane.f32.xlu0 %v2302
      %v2304 = vpop.xlane.xlu0 %2303
      %v2305 = vmul.f32 %v2301, 0.015625
      %v2306 = vmul.f32 %v2304, 0.015625
      %s2307 = scalar_lea.vmem %s2, 96
      %v2308 = vld [vmem:[%s2307] sm:$0xff]
      %v2309 = vld [vmem:[%s2307 + $0x8] sm:$0xff]
      %v2310 = vadd.f32 %v2305, 1e-05
      %v2311 = vadd.f32 %v2306, 1e-05
      %v2312 = vrsqrt.pop %v2310
      %v2313 = vrsqrt.pop %v2311
      %v2314 = vmul.f32 %v2291, %v2312
      %v2315 = vmul.f32 %v2292, %v2312
      %v2316 = vmul.f32 %v2293, %v2313
      %v2317 = vmul.f32 %v2294, %v2313
      %2319 = vset.pattern.permute.xlu0 0
      %2320 = vperm.xlu0 %2319, %v2308
      %v2321 = vpop.permute.xlu0 %2320
      %2324 = vset.pattern.permute.xlu0 0
      %2325 = vperm.xlu0 %2324, %v2309
      %v2326 = vpop.permute.xlu0 %2325
      %v2328 = vmul.f32 %v2314, %v2321
      %v2329 = vmul.f32 %v2315, %v2321
      %v2330 = vmul.f32 %v2316, %v2326
      %v2331 = vmul.f32 %v2317, %v2326
      %2332 = vset.pattern.permute.xlu0 1
      %2333 = vperm.xlu0 %2332, %v2308
      %v2334 = vpop.permute.xlu0 %2333
      %2336 = vset.pattern.permute.xlu0 1
      %2337 = vperm.xlu0 %2336, %v2309
      %v2338 = vpop.permute.xlu0 %2337
      %v2340 = vadd.f32 %v2328, %v2334
      %v2341 = vadd.f32 %v2329, %v2334
      %v2342 = vadd.f32 %v2330, %v2338
      %v2343 = vadd.f32 %v2331, %v2338
      %vm2344 = vcmp.ge.f32.partialorder %v2340, 0.0
      %vm2345 = vcmp.ge.f32.partialorder %v2341, 0.0
      %vm2346 = vcmp.ge.f32.partialorder %v2342, 0.0
      %vm2347 = vcmp.ge.f32.partialorder %v2343, 0.0
      %v2348 = vmul.f32 %v2340, 0.01
      %v2349 = vmul.f32 %v2341, 0.01
      %v2350 = vmul.f32 %v2342, 0.01
      %v2351 = vmul.f32 %v2343, 0.01
      %v2352 = vsel %vm2344, %v2340, %v2348
      %v2353 = vsel %vm2345, %v2341, %v2349
      %v2354 = vsel %vm2346, %v2342, %v2350
      %v2355 = vsel %vm2347, %v2343, %v2351
      %v2356 = vmul.f32 %v2352, %v563
      %v2357 = vmul.f32 %v2353, %v564
      %v2358 = vmul.f32 %v2354, %v563
      %v2359 = vmul.f32 %v2355, %v564
      %v2360 = vpack.c.bf16 %v2358, %v2356
      %v2361 = vpack.c.bf16 %v2359, %v2357
      %v2362 = vld [vmem:[%s10] sm:$0xff]
      %v2363 = vld [vmem:[%s10 + $0x8] sm:$0xff]
      %v2364 = vld [vmem:[%s10 + $0x10] sm:$0xff]
      %v2365 = vld [vmem:[%s10 + $0x18] sm:$0xff]
      %v2366 = vld [vmem:[%s10 + $0x20] sm:$0xff]
      %v2367 = vld [vmem:[%s10 + $0x28] sm:$0xff]
      %v2368 = vld [vmem:[%s10 + $0x30] sm:$0xff]
      %v2369 = vld [vmem:[%s10 + $0x38] sm:$0xff]
      %v2370 = vld [vmem:[%s10 + $0x40] sm:$0xff]
      %v2371 = vld [vmem:[%s10 + $0x48] sm:$0xff]
      %v2372 = vld [vmem:[%s10 + $0x50] sm:$0xff]
      %v2373 = vld [vmem:[%s10 + $0x58] sm:$0xff]
      %v2374 = vld [vmem:[%s10 + $0x60] sm:$0xff]
      %v2375 = vld [vmem:[%s10 + $0x68] sm:$0xff]
      %v2376 = vld [vmem:[%s10 + $0x70] sm:$0xff]
      %v2377 = vld [vmem:[%s10 + $0x78] sm:$0xff]
      %v2378 = vld [vmem:[%s10 + $0x80] sm:$0xff]
      %v2379 = vld [vmem:[%s10 + $0x88] sm:$0xff]
      %v2380 = vld [vmem:[%s10 + $0x90] sm:$0xff]
      %v2381 = vld [vmem:[%s10 + $0x98] sm:$0xff]
      %v2382 = vld [vmem:[%s10 + $0xa0] sm:$0xff]
      %v2383 = vld [vmem:[%s10 + $0xa8] sm:$0xff]
      %v2384 = vld [vmem:[%s10 + $0xb0] sm:$0xff]
      %v2385 = vld [vmem:[%s10 + $0xb8] sm:$0xff]
      %v2386 = vld [vmem:[%s10 + $0xc0] sm:$0xff]
      %v2387 = vld [vmem:[%s10 + $0xc8] sm:$0xff]
      %v2388 = vld [vmem:[%s10 + $0xd0] sm:$0xff]
      %v2389 = vld [vmem:[%s10 + $0xd8] sm:$0xff]
      %v2390 = vld [vmem:[%s10 + $0xe0] sm:$0xff]
      %v2391 = vld [vmem:[%s10 + $0xe8] sm:$0xff]
      %v2392 = vld [vmem:[%s10 + $0xf0] sm:$0xff]
      %v2393 = vld [vmem:[%s10 + $0xf8] sm:$0xff]
      %v2426 = vunpack.c.l.b16 %v2362
      %v2427 = vunpack.c.h.b16 %v2362
      %v2428 = vunpack.c.l.b16 %v2363
      %v2429 = vunpack.c.h.b16 %v2363
      %v2430 = vunpack.c.l.b16 %v2364
      %v2431 = vunpack.c.h.b16 %v2364
      %v2432 = vunpack.c.l.b16 %v2365
      %v2433 = vunpack.c.h.b16 %v2365
      %v2434 = vunpack.c.l.b16 %v2366
      %v2435 = vunpack.c.h.b16 %v2366
      %v2436 = vunpack.c.l.b16 %v2367
      %v2437 = vunpack.c.h.b16 %v2367
      %v2438 = vunpack.c.l.b16 %v2368
      %v2439 = vunpack.c.h.b16 %v2368
      %v2440 = vunpack.c.l.b16 %v2369
      %v2441 = vunpack.c.h.b16 %v2369
      %v2442 = vunpack.c.l.b16 %v2370
      %v2443 = vunpack.c.h.b16 %v2370
      %v2444 = vunpack.c.l.b16 %v2371
      %v2445 = vunpack.c.h.b16 %v2371
      %v2446 = vunpack.c.l.b16 %v2372
      %v2447 = vunpack.c.h.b16 %v2372
      %v2448 = vunpack.c.l.b16 %v2373
      %v2449 = vunpack.c.h.b16 %v2373
      %v2450 = vunpack.c.l.b16 %v2374
      %v2451 = vunpack.c.h.b16 %v2374
      %v2452 = vunpack.c.l.b16 %v2375
      %v2453 = vunpack.c.h.b16 %v2375
      %v2454 = vunpack.c.l.b16 %v2376
      %v2455 = vunpack.c.h.b16 %v2376
      %v2456 = vunpack.c.l.b16 %v2377
      %v2457 = vunpack.c.h.b16 %v2377
      %v2458 = vunpack.c.l.b16 %v2378
      %v2459 = vunpack.c.h.b16 %v2378
      %v2460 = vunpack.c.l.b16 %v2379
      %v2461 = vunpack.c.h.b16 %v2379
      %v2462 = vunpack.c.l.b16 %v2380
      %v2463 = vunpack.c.h.b16 %v2380
      %v2464 = vunpack.c.l.b16 %v2381
      %v2465 = vunpack.c.h.b16 %v2381
      %v2466 = vunpack.c.l.b16 %v2382
      %v2467 = vunpack.c.h.b16 %v2382
      %v2468 = vunpack.c.l.b16 %v2383
      %v2469 = vunpack.c.h.b16 %v2383
      %v2470 = vunpack.c.l.b16 %v2384
      %v2471 = vunpack.c.h.b16 %v2384
      %v2472 = vunpack.c.l.b16 %v2385
      %v2473 = vunpack.c.h.b16 %v2385
      %v2474 = vunpack.c.l.b16 %v2386
      %v2475 = vunpack.c.h.b16 %v2386
      %v2476 = vunpack.c.l.b16 %v2387
      %v2477 = vunpack.c.h.b16 %v2387
      %v2478 = vunpack.c.l.b16 %v2388
      %v2479 = vunpack.c.h.b16 %v2388
      %v2480 = vunpack.c.l.b16 %v2389
      %v2481 = vunpack.c.h.b16 %v2389
      %v2482 = vunpack.c.l.b16 %v2390
      %v2483 = vunpack.c.h.b16 %v2390
      %v2484 = vunpack.c.l.b16 %v2391
      %v2485 = vunpack.c.h.b16 %v2391
      %v2486 = vunpack.c.l.b16 %v2392
      %v2487 = vunpack.c.h.b16 %v2392
      %v2488 = vunpack.c.l.b16 %v2393
      %v2489 = vunpack.c.h.b16 %v2393
      %v2490 = vpack.c.b16 %v2428, %v2426
      %v2491 = vpack.c.b16 %v2429, %v2427
      %v2492 = vpack.c.b16 %v2432, %v2430
      %v2493 = vpack.c.b16 %v2433, %v2431
      %v2494 = vpack.c.b16 %v2436, %v2434
      %v2495 = vpack.c.b16 %v2437, %v2435
      %v2496 = vpack.c.b16 %v2440, %v2438
      %v2497 = vpack.c.b16 %v2441, %v2439
      %v2498 = vpack.c.b16 %v2444, %v2442
      %v2499 = vpack.c.b16 %v2445, %v2443
      %v2500 = vpack.c.b16 %v2448, %v2446
      %v2501 = vpack.c.b16 %v2449, %v2447
      %v2502 = vpack.c.b16 %v2452, %v2450
      %v2503 = vpack.c.b16 %v2453, %v2451
      %v2504 = vpack.c.b16 %v2456, %v2454
      %v2505 = vpack.c.b16 %v2457, %v2455
      %v2506 = vpack.c.b16 %v2460, %v2458
      %v2507 = vpack.c.b16 %v2461, %v2459
      %v2508 = vpack.c.b16 %v2464, %v2462
      %v2509 = vpack.c.b16 %v2465, %v2463
      %v2510 = vpack.c.b16 %v2468, %v2466
      %v2511 = vpack.c.b16 %v2469, %v2467
      %v2512 = vpack.c.b16 %v2472, %v2470
      %v2513 = vpack.c.b16 %v2473, %v2471
      %v2514 = vpack.c.b16 %v2476, %v2474
      %v2515 = vpack.c.b16 %v2477, %v2475
      %v2516 = vpack.c.b16 %v2480, %v2478
      %v2517 = vpack.c.b16 %v2481, %v2479
      %v2518 = vpack.c.b16 %v2484, %v2482
      %v2519 = vpack.c.b16 %v2485, %v2483
      %v2520 = vpack.c.b16 %v2488, %v2486
      %v2521 = vpack.c.b16 %v2489, %v2487
      %2554 = vmatprep.subr.bf16.mxu0 %v2491
      %2555 = vmatpush1.bf16.msra.mxu0 %v2490
      %2556 = vmatprep.subr.bf16.mxu0 %v2493
      %2557 = vmatpush1.bf16.msra.mxu0 %v2492
      %2558 = vmatprep.subr.bf16.mxu0 %v2495
      %2559 = vmatpush1.bf16.msra.mxu0 %v2494
      %2560 = vmatprep.subr.bf16.mxu0 %v2497
      %2561 = vmatpush1.bf16.msra.mxu0 %v2496
      %2562 = vmatprep.subr.bf16.mxu0 %v2499
      %2563 = vmatpush1.bf16.msra.mxu0 %v2498
      %2564 = vmatprep.subr.bf16.mxu0 %v2501
      %2565 = vmatpush1.bf16.msra.mxu0 %v2500
      %2566 = vmatprep.subr.bf16.mxu0 %v2503
      %2567 = vmatpush1.bf16.msra.mxu0 %v2502
      %2568 = vmatprep.subr.bf16.mxu0 %v2505
      %2569 = vmatpush1.bf16.msra.mxu0 %v2504
      %2570 = vmatprep.subr.bf16.mxu0 %v2507
      %2571 = vmatpush1.bf16.msra.mxu0 %v2506
      %2572 = vmatprep.subr.bf16.mxu0 %v2509
      %2573 = vmatpush1.bf16.msra.mxu0 %v2508
      %2574 = vmatprep.subr.bf16.mxu0 %v2511
      %2575 = vmatpush1.bf16.msra.mxu0 %v2510
      %2576 = vmatprep.subr.bf16.mxu0 %v2513
      %2577 = vmatpush1.bf16.msra.mxu0 %v2512
      %2578 = vmatprep.subr.bf16.mxu0 %v2515
      %2579 = vmatpush1.bf16.msra.mxu0 %v2514
      %2580 = vmatprep.subr.bf16.mxu0 %v2517
      %2581 = vmatpush1.bf16.msra.mxu0 %v2516
      %2582 = vmatprep.subr.bf16.mxu0 %v2519
      %2583 = vmatpush1.bf16.msra.mxu0 %v2518
      %2584 = vmatprep.subr.bf16.mxu0 %v2521
      %2585 = vmatpush1.bf16.msra.mxu0 %v2520
      %2586 = vmatprep.mubr.bf16.mxu0 %v2361
      %2587 = vmatmul.mubr.bf16.gmra.mrb[0].mxu0 %v2360
      %v2588 = vpop.f32.mrb[0].mxu0
      %v2589 = vadd.f32 0.0, %v2588
      %v2590 = vpop.f32.mrb[0].mxu0
      %v2591 = vadd.f32 0.0, %v2590
      %v2592 = vpop.f32.mrb[0].mxu0
      %v2593 = vadd.f32 0.0, %v2592
      %v2594 = vpop.f32.mrb[0].mxu0
      %v2595 = vadd.f32 0.0, %v2594
      %2596 = vdwg.mxu0
      %2597 = vrot.lane.b32.xlu0 %v2589, 17
      %v2598 = vpop.permute.xlu0 %2597
      %2599 = vrot.lane.b32.xlu0 %v2593, 17
      %v2600 = vpop.permute.xlu0 %2599
      %2601 = vrot.lane.b32.xlu0 %v2591, 17
      %v2602 = vpop.permute.xlu0 %2601
      %2603 = vrot.lane.b32.xlu0 %v2595, 17
      %v2604 = vpop.permute.xlu0 %2603
      %v2605 = vsel %vm573, %v2598, %v2602
      %v2606 = vsel %vm573, %v2600, %v2604
      %v2607 = vsel %vm573, %v2602, %v2598
      %v2608 = vsel %vm573, %v2604, %v2600
      %v2609 = vsel %vm578, %v2607, 0.0
      %v2610 = vsel %vm579, %v2605, 0.0
      %v2611 = vsel %vm578, %v2608, 0.0
      %v2612 = vsel %vm579, %v2606, 0.0
      %2613 = vst [vmem:[#allocation2] sm:$0xff] %v2609
      %2614 = vst [vmem:[#allocation2 + $0x8] sm:$0xff] %v2610
      %2615 = vst [vmem:[#allocation2 + $0x10] sm:$0xff] %v2611
      %2616 = vst [vmem:[#allocation2 + $0x18] sm:$0xff] %v2612
      %2617 = vst [vmem:[#allocation2 + $0x20] sm:$0xff] %v1119
      %2618 = vst [vmem:[#allocation2 + $0x28] sm:$0xff] %v1120
      %2619 = vrot.lane.b32.xlu0 %v2589, 16
      %v2620 = vpop.permute.xlu0 %2619
      %2621 = vrot.lane.b32.xlu0 %v2593, 16
      %v2622 = vpop.permute.xlu0 %2621
      %2623 = vrot.lane.b32.xlu0 %v2591, 16
      %v2624 = vpop.permute.xlu0 %2623
      %2625 = vrot.lane.b32.xlu0 %v2595, 16
      %v2626 = vpop.permute.xlu0 %2625
      %v2627 = vsel %vm600, %v2620, %v2624
      %v2628 = vsel %vm600, %v2622, %v2626
      %v2629 = vsel %vm600, %v2624, %v2620
      %v2630 = vsel %vm600, %v2626, %v2622
      %v2631 = vsel %vm605, %v2629, 0.0
      %v2632 = vsel %vm606, %v2627, 0.0
      %v2633 = vsel %vm605, %v2630, 0.0
      %v2634 = vsel %vm606, %v2628, 0.0
      %2635 = vst [vmem:[#allocation2 + $0x30] sm:$0xff] %v2631
      %2636 = vst [vmem:[#allocation2 + $0x38] sm:$0xff] %v2632
      %2637 = vst [vmem:[#allocation2 + $0x40] sm:$0xff] %v2633
      %2638 = vst [vmem:[#allocation2 + $0x48] sm:$0xff] %v2634
      %2639 = vst [vmem:[#allocation2 + $0x50] sm:$0xff] %v1129
      %2640 = vst [vmem:[#allocation2 + $0x58] sm:$0xff] %v1130
      %2641 = vrot.lane.b32.xlu0 %v2589, 15
      %v2642 = vpop.permute.xlu0 %2641
      %2643 = vrot.lane.b32.xlu0 %v2593, 15
      %v2644 = vpop.permute.xlu0 %2643
      %2645 = vrot.lane.b32.xlu0 %v2591, 15
      %v2646 = vpop.permute.xlu0 %2645
      %2647 = vrot.lane.b32.xlu0 %v2595, 15
      %v2648 = vpop.permute.xlu0 %2647
      %v2649 = vsel %vm627, %v2642, %v2646
      %v2650 = vsel %vm627, %v2644, %v2648
      %v2651 = vsel %vm627, %v2646, %v2642
      %v2652 = vsel %vm627, %v2648, %v2644
      %v2653 = vsel %vm632, %v2651, 0.0
      %v2654 = vsel %vm633, %v2649, 0.0
      %v2655 = vsel %vm632, %v2652, 0.0
      %v2656 = vsel %vm633, %v2650, 0.0
      %2657 = vst [vmem:[#allocation2 + $0x60] sm:$0xff] %v2653
      %2658 = vst [vmem:[#allocation2 + $0x68] sm:$0xff] %v2654
      %2659 = vst [vmem:[#allocation2 + $0x70] sm:$0xff] %v2655
      %2660 = vst [vmem:[#allocation2 + $0x78] sm:$0xff] %v2656
      %2661 = vst [vmem:[#allocation2 + $0x80] sm:$0xff] %v1139
      %2662 = vst [vmem:[#allocation2 + $0x88] sm:$0xff] %v1140
      %2663 = vrot.lane.b32.xlu0 %v2589, 1
      %v2664 = vpop.permute.xlu0 %2663
      %2665 = vrot.lane.b32.xlu0 %v2593, 1
      %v2666 = vpop.permute.xlu0 %2665
      %2667 = vrot.lane.b32.xlu0 %v2591, 1
      %v2668 = vpop.permute.xlu0 %2667
      %2669 = vrot.lane.b32.xlu0 %v2595, 1
      %v2670 = vpop.permute.xlu0 %2669
      %v2671 = vsel %vm654, %v2664, %v2668
      %v2672 = vsel %vm654, %v2666, %v2670
      %v2673 = vsel %vm654, %v2668, %v2664
      %v2674 = vsel %vm654, %v2670, %v2666
      %v2675 = vsel %vm659, %v2673, 0.0
      %v2676 = vsel %vm660, %v2671, 0.0
      %v2677 = vsel %vm659, %v2674, 0.0
      %v2678 = vsel %vm660, %v2672, 0.0
      %2679 = vst [vmem:[#allocation2 + $0x90] sm:$0xff] %v2675
      %2680 = vst [vmem:[#allocation2 + $0x98] sm:$0xff] %v2676
      %2681 = vst [vmem:[#allocation2 + $0xa0] sm:$0xff] %v2677
      %2682 = vst [vmem:[#allocation2 + $0xa8] sm:$0xff] %v2678
      %2683 = vst [vmem:[#allocation2 + $0xb0] sm:$0xff] %v1149
      %2684 = vst [vmem:[#allocation2 + $0xb8] sm:$0xff] %v1150
      %v2685 = vsel %vm679, %v2589, 0.0
      %v2686 = vsel %vm680, %v2591, 0.0
      %v2687 = vsel %vm679, %v2593, 0.0
      %v2688 = vsel %vm680, %v2595, 0.0
      %2689 = vst [vmem:[#allocation2 + $0xc0] sm:$0xff] %v2685
      %2690 = vst [vmem:[#allocation2 + $0xc8] sm:$0xff] %v2686
      %2691 = vst [vmem:[#allocation2 + $0xd0] sm:$0xff] %v2687
      %2692 = vst [vmem:[#allocation2 + $0xd8] sm:$0xff] %v2688
      %2693 = vst [vmem:[#allocation2 + $0xe0] sm:$0xff] %v1153
      %2694 = vst [vmem:[#allocation2 + $0xe8] sm:$0xff] %v1154
      %2695 = vrot.lane.b32.xlu0 %v2589, 127
      %v2696 = vpop.permute.xlu0 %2695
      %2697 = vrot.lane.b32.xlu0 %v2593, 127
      %v2698 = vpop.permute.xlu0 %2697
      %2699 = vrot.lane.b32.xlu0 %v2591, 127
      %v2700 = vpop.permute.xlu0 %2699
      %2701 = vrot.lane.b32.xlu0 %v2595, 127
      %v2702 = vpop.permute.xlu0 %2701
      %v2703 = vsel %vm691, %v2696, %v2700
      %v2704 = vsel %vm691, %v2698, %v2702
      %v2705 = vsel %vm691, %v2700, %v2696
      %v2706 = vsel %vm691, %v2702, %v2698
      %v2707 = vsel %vm696, %v2703, 0.0
      %v2708 = vsel %vm697, %v2705, 0.0
      %v2709 = vsel %vm696, %v2704, 0.0
      %v2710 = vsel %vm697, %v2706, 0.0
      %2711 = vst [vmem:[#allocation2 + $0xf0] sm:$0xff] %v2707
      %2712 = vst [vmem:[#allocation2 + $0xf8] sm:$0xff] %v2708
      %2713 = vst [vmem:[#allocation2 + $0x100] sm:$0xff] %v2709
      %2714 = vst [vmem:[#allocation2 + $0x108] sm:$0xff] %v2710
      %2715 = vst [vmem:[#allocation2 + $0x110] sm:$0xff] %v1163
      %2716 = vst [vmem:[#allocation2 + $0x118] sm:$0xff] %v1164
      %2717 = vrot.lane.b32.xlu0 %v2589, 113
      %v2718 = vpop.permute.xlu0 %2717
      %2719 = vrot.lane.b32.xlu0 %v2593, 113
      %v2720 = vpop.permute.xlu0 %2719
      %2721 = vrot.lane.b32.xlu0 %v2591, 113
      %v2722 = vpop.permute.xlu0 %2721
      %2723 = vrot.lane.b32.xlu0 %v2595, 113
      %v2724 = vpop.permute.xlu0 %2723
      %v2725 = vsel %vm718, %v2718, %v2722
      %v2726 = vsel %vm718, %v2720, %v2724
      %v2727 = vsel %vm718, %v2722, %v2718
      %v2728 = vsel %vm718, %v2724, %v2720
      %v2729 = vsel %vm723, %v2725, 0.0
      %v2730 = vsel %vm724, %v2727, 0.0
      %v2731 = vsel %vm723, %v2726, 0.0
      %v2732 = vsel %vm724, %v2728, 0.0
      %2733 = vst [vmem:[#allocation2 + $0x120] sm:$0xff] %v2729
      %2734 = vst [vmem:[#allocation2 + $0x128] sm:$0xff] %v2730
      %2735 = vst [vmem:[#allocation2 + $0x130] sm:$0xff] %v2731
      %2736 = vst [vmem:[#allocation2 + $0x138] sm:$0xff] %v2732
      %2737 = vst [vmem:[#allocation2 + $0x140] sm:$0xff] %v1173
      %2738 = vst [vmem:[#allocation2 + $0x148] sm:$0xff] %v1174
      %2739 = vrot.lane.b32.xlu0 %v2589, 112
      %v2740 = vpop.permute.xlu0 %2739
      %2741 = vrot.lane.b32.xlu0 %v2593, 112
      %v2742 = vpop.permute.xlu0 %2741
      %2743 = vrot.lane.b32.xlu0 %v2591, 112
      %v2744 = vpop.permute.xlu0 %2743
      %2745 = vrot.lane.b32.xlu0 %v2595, 112
      %v2746 = vpop.permute.xlu0 %2745
      %v2747 = vsel %vm745, %v2740, %v2744
      %v2748 = vsel %vm745, %v2742, %v2746
      %v2749 = vsel %vm745, %v2744, %v2740
      %v2750 = vsel %vm745, %v2746, %v2742
      %v2751 = vsel %vm750, %v2747, 0.0
      %v2752 = vsel %vm751, %v2749, 0.0
      %v2753 = vsel %vm750, %v2748, 0.0
      %v2754 = vsel %vm751, %v2750, 0.0
      %2755 = vst [vmem:[#allocation2 + $0x150] sm:$0xff] %v2751
      %2756 = vst [vmem:[#allocation2 + $0x158] sm:$0xff] %v2752
      %2757 = vst [vmem:[#allocation2 + $0x160] sm:$0xff] %v2753
      %2758 = vst [vmem:[#allocation2 + $0x168] sm:$0xff] %v2754
      %2759 = vst [vmem:[#allocation2 + $0x170] sm:$0xff] %v1183
      %2760 = vst [vmem:[#allocation2 + $0x178] sm:$0xff] %v1184
      %2761 = vrot.lane.b32.xlu0 %v2589, 111
      %v2762 = vpop.permute.xlu0 %2761
      %2763 = vrot.lane.b32.xlu0 %v2593, 111
      %v2764 = vpop.permute.xlu0 %2763
      %2765 = vrot.lane.b32.xlu0 %v2591, 111
      %v2766 = vpop.permute.xlu0 %2765
      %2767 = vrot.lane.b32.xlu0 %v2595, 111
      %v2768 = vpop.permute.xlu0 %2767
      %v2769 = vsel %vm772, %v2762, %v2766
      %v2770 = vsel %vm772, %v2764, %v2768
      %v2771 = vsel %vm772, %v2766, %v2762
      %v2772 = vsel %vm772, %v2768, %v2764
      %v2773 = vsel %vm777, %v2769, 0.0
      %v2774 = vsel %vm778, %v2771, 0.0
      %v2775 = vsel %vm777, %v2770, 0.0
      %v2776 = vsel %vm778, %v2772, 0.0
      %2777 = vst [vmem:[#allocation2 + $0x180] sm:$0xff] %v2773
      %2778 = vst [vmem:[#allocation2 + $0x188] sm:$0xff] %v2774
      %2779 = vst [vmem:[#allocation2 + $0x190] sm:$0xff] %v2775
      %2780 = vst [vmem:[#allocation2 + $0x198] sm:$0xff] %v2776
      %2781 = vst [vmem:[#allocation2 + $0x1a0] sm:$0xff] %v1193
      %2782 = vst [vmem:[#allocation2 + $0x1a8] sm:$0xff] %v1194
      %s2783 = scalar_lea.vmem %s1, 120
      %v2784 = vld [vmem:[%s2783] sm:$0xff]
      %v2785 = vld [vmem:[#allocation2] sm:$0xff]
      %v2786 = vld [vmem:[#allocation2 + $0x8] sm:$0xff]
      %v2787 = vld [vmem:[#allocation2 + $0x10] sm:$0xff]
      %v2788 = vld [vmem:[#allocation2 + $0x18] sm:$0xff]
      %v2789 = vld [vmem:[#allocation2 + $0x20] sm:$0xff]
      %v2790 = vld [vmem:[#allocation2 + $0x28] sm:$0xff]
      %v2791 = vld [vmem:[#allocation2 + $0x30] sm:$0xff]
      %v2792 = vld [vmem:[#allocation2 + $0x38] sm:$0xff]
      %v2793 = vld [vmem:[#allocation2 + $0x40] sm:$0xff]
      %v2794 = vld [vmem:[#allocation2 + $0x48] sm:$0xff]
      %v2795 = vld [vmem:[#allocation2 + $0x50] sm:$0xff]
      %v2796 = vld [vmem:[#allocation2 + $0x58] sm:$0xff]
      %v2797 = vld [vmem:[#allocation2 + $0x60] sm:$0xff]
      %v2798 = vld [vmem:[#allocation2 + $0x68] sm:$0xff]
      %v2799 = vld [vmem:[#allocation2 + $0x70] sm:$0xff]
      %v2800 = vld [vmem:[#allocation2 + $0x78] sm:$0xff]
      %v2801 = vld [vmem:[#allocation2 + $0x80] sm:$0xff]
      %v2802 = vld [vmem:[#allocation2 + $0x88] sm:$0xff]
      %v2803 = vld [vmem:[#allocation2 + $0x90] sm:$0xff]
      %v2804 = vld [vmem:[#allocation2 + $0x98] sm:$0xff]
      %v2805 = vld [vmem:[#allocation2 + $0xa0] sm:$0xff]
      %v2806 = vld [vmem:[#allocation2 + $0xa8] sm:$0xff]
      %v2807 = vld [vmem:[#allocation2 + $0xb0] sm:$0xff]
      %v2808 = vld [vmem:[#allocation2 + $0xb8] sm:$0xff]
      %v2809 = vld [vmem:[#allocation2 + $0xc0] sm:$0xff]
      %v2810 = vld [vmem:[#allocation2 + $0xc8] sm:$0xff]
      %v2811 = vld [vmem:[#allocation2 + $0xd0] sm:$0xff]
      %v2812 = vld [vmem:[#allocation2 + $0xd8] sm:$0xff]
      %v2813 = vld [vmem:[#allocation2 + $0xe0] sm:$0xff]
      %v2814 = vld [vmem:[#allocation2 + $0xe8] sm:$0xff]
      %v2815 = vld [vmem:[#allocation2 + $0xf0] sm:$0xff]
      %v2816 = vld [vmem:[#allocation2 + $0xf8] sm:$0xff]
      %v2817 = vld [vmem:[#allocation2 + $0x100] sm:$0xff]
      %v2818 = vld [vmem:[#allocation2 + $0x108] sm:$0xff]
      %v2819 = vld [vmem:[#allocation2 + $0x110] sm:$0xff]
      %v2820 = vld [vmem:[#allocation2 + $0x118] sm:$0xff]
      %v2821 = vld [vmem:[#allocation2 + $0x120] sm:$0xff]
      %v2822 = vld [vmem:[#allocation2 + $0x128] sm:$0xff]
      %v2823 = vld [vmem:[#allocation2 + $0x130] sm:$0xff]
      %v2824 = vld [vmem:[#allocation2 + $0x138] sm:$0xff]
      %v2825 = vld [vmem:[#allocation2 + $0x140] sm:$0xff]
      %v2826 = vld [vmem:[#allocation2 + $0x148] sm:$0xff]
      %v2827 = vld [vmem:[#allocation2 + $0x150] sm:$0xff]
      %v2828 = vld [vmem:[#allocation2 + $0x158] sm:$0xff]
      %v2829 = vld [vmem:[#allocation2 + $0x160] sm:$0xff]
      %v2830 = vld [vmem:[#allocation2 + $0x168] sm:$0xff]
      %v2831 = vld [vmem:[#allocation2 + $0x170] sm:$0xff]
      %v2832 = vld [vmem:[#allocation2 + $0x178] sm:$0xff]
      %v2833 = vld [vmem:[#allocation2 + $0x180] sm:$0xff]
      %v2834 = vld [vmem:[#allocation2 + $0x188] sm:$0xff]
      %v2835 = vld [vmem:[#allocation2 + $0x190] sm:$0xff]
      %v2836 = vld [vmem:[#allocation2 + $0x198] sm:$0xff]
      %v2837 = vld [vmem:[#allocation2 + $0x1a0] sm:$0xff]
      %v2838 = vld [vmem:[#allocation2 + $0x1a8] sm:$0xff]
      %v2839 = vpack.c.bf16 %v2787, %v2785
      %v2840 = vpack.c.bf16 %v2788, %v2786
      %v2841 = vpack.c.bf16 %v2791, %v2789
      %v2842 = vpack.c.bf16 %v2792, %v2790
      %v2843 = vpack.c.bf16 %v2795, %v2793
      %v2844 = vpack.c.bf16 %v2796, %v2794
      %v2845 = vpack.c.bf16 %v2799, %v2797
      %v2846 = vpack.c.bf16 %v2800, %v2798
      %v2847 = vpack.c.bf16 %v2803, %v2801
      %v2848 = vpack.c.bf16 %v2804, %v2802
      %v2849 = vpack.c.bf16 %v2807, %v2805
      %v2850 = vpack.c.bf16 %v2808, %v2806
      %v2851 = vpack.c.bf16 %v2811, %v2809
      %v2852 = vpack.c.bf16 %v2812, %v2810
      %v2853 = vpack.c.bf16 %v2815, %v2813
      %v2854 = vpack.c.bf16 %v2816, %v2814
      %v2855 = vpack.c.bf16 %v2819, %v2817
      %v2856 = vpack.c.bf16 %v2820, %v2818
      %v2857 = vpack.c.bf16 %v2823, %v2821
      %v2858 = vpack.c.bf16 %v2824, %v2822
      %v2859 = vpack.c.bf16 %v2827, %v2825
      %v2860 = vpack.c.bf16 %v2828, %v2826
      %v2861 = vpack.c.bf16 %v2831, %v2829
      %v2862 = vpack.c.bf16 %v2832, %v2830
      %v2863 = vpack.c.bf16 %v2835, %v2833
      %v2864 = vpack.c.bf16 %v2836, %v2834
      %v2865 = vpack.c.bf16 %v2837, %v2837
      %v2866 = vpack.c.bf16 %v2838, %v2838
      %v2868 = vunpack.c.l.b16 %v2784
      %v2869 = vunpack.c.h.b16 %v2784
      %v2870 = vpack.c.b16 %v2868, %v2868
      %v2871 = vpack.c.b16 %v2869, %v2869
      %vm2873 = vcmask 719872
      %v2875 = vsel %vm2873, %v2871, 0
      %v2878 = vsel %vm828, %v2865, 0
      %v2881 = vsel %vm828, %v2866, 0
      %2883 = vmatprep.subr.bf16.mxu0 %v2840
      %2884 = vmatpush1.bf16.msra.mxu0 %v2839
      %2885 = vmatprep.subr.bf16.mxu0 %v2842
      %2886 = vmatpush1.bf16.msra.mxu0 %v2841
      %2887 = vmatprep.subr.bf16.mxu0 %v2844
      %2888 = vmatpush1.bf16.msra.mxu0 %v2843
      %2889 = vmatprep.subr.bf16.mxu0 %v2846
      %2890 = vmatpush1.bf16.msra.mxu0 %v2845
      %2891 = vmatprep.subr.bf16.mxu0 %v2848
      %2892 = vmatpush1.bf16.msra.mxu0 %v2847
      %2893 = vmatprep.subr.bf16.mxu0 %v2850
      %2894 = vmatpush1.bf16.msra.mxu0 %v2849
      %2895 = vmatprep.subr.bf16.mxu0 %v2852
      %2896 = vmatpush1.bf16.msra.mxu0 %v2851
      %2897 = vmatprep.subr.bf16.mxu0 %v2854
      %2898 = vmatpush1.bf16.msra.mxu0 %v2853
      %2899 = vmatprep.subr.bf16.mxu0 %v2856
      %2900 = vmatpush1.bf16.msra.mxu0 %v2855
      %2901 = vmatprep.subr.bf16.mxu0 %v2858
      %2902 = vmatpush1.bf16.msra.mxu0 %v2857
      %2903 = vmatprep.subr.bf16.mxu0 %v2860
      %2904 = vmatpush1.bf16.msra.mxu0 %v2859
      %2905 = vmatprep.subr.bf16.mxu0 %v2862
      %2906 = vmatpush1.bf16.msra.mxu0 %v2861
      %2907 = vmatprep.subr.bf16.mxu0 %v2864
      %2908 = vmatpush1.bf16.msra.mxu0 %v2863
      %2909 = vmatprep.subr.bf16.mxu0 %v2881
      %2910 = vmatpush1.bf16.msra.mxu0 %v2878
      %2911 = vmatprep.subr.bf16.mxu0 0
      %2912 = vmatpush1.bf16.msra.mxu0 0
      %2913 = vmatprep.subr.bf16.mxu0 0
      %2914 = vmatpush1.bf16.msra.mxu0 0
      %2915 = vmatprep.mubr.bf16.mxu0 %v2875
      %2916 = vmatmul.mubr.bf16.gmra.mrb[0].mxu0 %v2870
      %v2917 = vpop.f32.mrb[0].mxu0
      %v2918 = vadd.f32 0.0, %v2917
      %v2919 = vpop.f32.mrb[0].mxu0
      %v2920 = vadd.f32 0.0, %v2919
      %v2921 = vpop.f32.mrb[0].mxu0
      %v2922 = vpop.f32.mrb[0].mxu0
      %2923 = vdwg.mxu0
      %v2924 = vadd.f32 %v2918, %v2920
      %2925 = vadd.xlane.f32.xlu0 %v2924
      %v2926 = vpop.xlane.xlu0 %2925
      %v2927 = vmul.f32 %v2926, 0.00390625
      %v2928 = vsub.f32 %v2918, %v2927
      %v2929 = vsub.f32 %v2920, %v2927
      %v2930 = vmul.f32 %v2928, %v2928
      %v2931 = vmul.f32 %v2929, %v2929
      %v2932 = vadd.f32 %v2930, %v2931
      %2933 = vadd.xlane.f32.xlu0 %v2932
      %v2934 = vpop.xlane.xlu0 %2933
      %v2935 = vmul.f32 %v2934, 0.00390625
      %s2936 = scalar_lea.vmem %s2, 120
      %v2937 = vld [vmem:[%s2936] sm:$0xff]
      %v2938 = vadd.f32 %v2935, 1e-05
      %v2939 = vrsqrt.pop %v2938
      %v2940 = vmul.f32 %v2928, %v2939
      %v2941 = vmul.f32 %v2929, %v2939
      %2943 = vset.pattern.permute.xlu0 0
      %2944 = vperm.xlu0 %2943, %v2937
      %v2945 = vpop.permute.xlu0 %2944
      %v2947 = vmul.f32 %v2940, %v2945
      %v2948 = vmul.f32 %v2941, %v2945
      %2949 = vset.pattern.permute.xlu0 1
      %2950 = vperm.xlu0 %2949, %v2937
      %v2951 = vpop.permute.xlu0 %2950
      %v2953 = vadd.f32 %v2947, %v2951
      %v2954 = vadd.f32 %v2948, %v2951
      %vm2955 = vcmp.ge.f32.partialorder %v2953, 0.0
      %vm2956 = vcmp.ge.f32.partialorder %v2954, 0.0
      %v2957 = vmul.f32 %v2953, 0.01
      %v2958 = vmul.f32 %v2954, 0.01
      %v2959 = vsel %vm2955, %v2953, %v2957
      %v2960 = vsel %vm2956, %v2954, %v2958
      %2961 = vrot.lane.b32.xlu0 %v2959, 17
      %v2962 = vpop.permute.xlu0 %2961
      %2963 = vrot.lane.b32.xlu0 %v2960, 17
      %v2964 = vpop.permute.xlu0 %2963
      %v2965 = vsel %vm573, %v2962, %v2964
      %v2966 = vsel %vm573, %v2964, %v2962
      %v2967 = vsel %vm578, %v2966, 0.0
      %v2968 = vsel %vm579, %v2965, 0.0
      %2969 = vst [vmem:[#allocation2] sm:$0xff] %v2967
      %2970 = vst [vmem:[#allocation2 + $0x8] sm:$0xff] %v2968
      %2971 = vrot.lane.b32.xlu0 %v2959, 16
      %v2972 = vpop.permute.xlu0 %2971
      %2973 = vrot.lane.b32.xlu0 %v2960, 16
      %v2974 = vpop.permute.xlu0 %2973
      %v2975 = vsel %vm600, %v2972, %v2974
      %v2976 = vsel %vm600, %v2974, %v2972
      %v2977 = vsel %vm605, %v2976, 0.0
      %v2978 = vsel %vm606, %v2975, 0.0
      %2979 = vst [vmem:[#allocation2 + $0x10] sm:$0xff] %v2977
      %2980 = vst [vmem:[#allocation2 + $0x18] sm:$0xff] %v2978
      %2981 = vrot.lane.b32.xlu0 %v2959, 15
      %v2982 = vpop.permute.xlu0 %2981
      %2983 = vrot.lane.b32.xlu0 %v2960, 15
      %v2984 = vpop.permute.xlu0 %2983
      %v2985 = vsel %vm627, %v2982, %v2984
      %v2986 = vsel %vm627, %v2984, %v2982
      %v2987 = vsel %vm632, %v2986, 0.0
      %v2988 = vsel %vm633, %v2985, 0.0
      %2989 = vst [vmem:[#allocation2 + $0x20] sm:$0xff] %v2987
      %2990 = vst [vmem:[#allocation2 + $0x28] sm:$0xff] %v2988
      %2991 = vrot.lane.b32.xlu0 %v2959, 1
      %v2992 = vpop.permute.xlu0 %2991
      %2993 = vrot.lane.b32.xlu0 %v2960, 1
      %v2994 = vpop.permute.xlu0 %2993
      %v2995 = vsel %vm654, %v2992, %v2994
      %v2996 = vsel %vm654, %v2994, %v2992
      %v2997 = vsel %vm659, %v2996, 0.0
      %v2998 = vsel %vm660, %v2995, 0.0
      %2999 = vst [vmem:[#allocation2 + $0x30] sm:$0xff] %v2997
      %3000 = vst [vmem:[#allocation2 + $0x38] sm:$0xff] %v2998
      %v3001 = vsel %vm679, %v2959, 0.0
      %v3002 = vsel %vm680, %v2960, 0.0
      %3003 = vst [vmem:[#allocation2 + $0x40] sm:$0xff] %v3001
      %3004 = vst [vmem:[#allocation2 + $0x48] sm:$0xff] %v3002
      %3005 = vrot.lane.b32.xlu0 %v2959, 127
      %v3006 = vpop.permute.xlu0 %3005
      %3007 = vrot.lane.b32.xlu0 %v2960, 127
      %v3008 = vpop.permute.xlu0 %3007
      %v3009 = vsel %vm691, %v3006, %v3008
      %v3010 = vsel %vm691, %v3008, %v3006
      %v3011 = vsel %vm696, %v3009, 0.0
      %v3012 = vsel %vm697, %v3010, 0.0
      %3013 = vst [vmem:[#allocation2 + $0x50] sm:$0xff] %v3011
      %3014 = vst [vmem:[#allocation2 + $0x58] sm:$0xff] %v3012
      %3015 = vrot.lane.b32.xlu0 %v2959, 113
      %v3016 = vpop.permute.xlu0 %3015
      %3017 = vrot.lane.b32.xlu0 %v2960, 113
      %v3018 = vpop.permute.xlu0 %3017
      %v3019 = vsel %vm718, %v3016, %v3018
      %v3020 = vsel %vm718, %v3018, %v3016
      %v3021 = vsel %vm723, %v3019, 0.0
      %v3022 = vsel %vm724, %v3020, 0.0
      %3023 = vst [vmem:[#allocation2 + $0x60] sm:$0xff] %v3021
      %3024 = vst [vmem:[#allocation2 + $0x68] sm:$0xff] %v3022
      %3025 = vrot.lane.b32.xlu0 %v2959, 112
      %v3026 = vpop.permute.xlu0 %3025
      %3027 = vrot.lane.b32.xlu0 %v2960, 112
      %v3028 = vpop.permute.xlu0 %3027
      %v3029 = vsel %vm745, %v3026, %v3028
      %v3030 = vsel %vm745, %v3028, %v3026
      %v3031 = vsel %vm750, %v3029, 0.0
      %v3032 = vsel %vm751, %v3030, 0.0
      %3033 = vst [vmem:[#allocation2 + $0x70] sm:$0xff] %v3031
      %3034 = vst [vmem:[#allocation2 + $0x78] sm:$0xff] %v3032
      %3035 = vrot.lane.b32.xlu0 %v2959, 111
      %v3036 = vpop.permute.xlu0 %3035
      %3037 = vrot.lane.b32.xlu0 %v2960, 111
      %v3038 = vpop.permute.xlu0 %3037
      %v3039 = vsel %vm772, %v3036, %v3038
      %v3040 = vsel %vm772, %v3038, %v3036
      %v3041 = vsel %vm777, %v3039, 0.0
      %v3042 = vsel %vm778, %v3040, 0.0
      %3043 = vst [vmem:[#allocation2 + $0x80] sm:$0xff] %v3041
      %3044 = vst [vmem:[#allocation2 + $0x88] sm:$0xff] %v3042
      %s3045 = scalar_lea.vmem %s1, 144
      %v3046 = vld [vmem:[%s3045] sm:$0xf]
      %v3047 = vld [vmem:[#allocation2] sm:$0xff]
      %v3048 = vld [vmem:[#allocation2 + $0x8] sm:$0xff]
      %v3049 = vld [vmem:[#allocation2 + $0x10] sm:$0xff]
      %v3050 = vld [vmem:[#allocation2 + $0x18] sm:$0xff]
      %v3051 = vld [vmem:[#allocation2 + $0x20] sm:$0xff]
      %v3052 = vld [vmem:[#allocation2 + $0x28] sm:$0xff]
      %v3053 = vld [vmem:[#allocation2 + $0x30] sm:$0xff]
      %v3054 = vld [vmem:[#allocation2 + $0x38] sm:$0xff]
      %v3055 = vld [vmem:[#allocation2 + $0x40] sm:$0xff]
      %v3056 = vld [vmem:[#allocation2 + $0x48] sm:$0xff]
      %v3057 = vld [vmem:[#allocation2 + $0x50] sm:$0xff]
      %v3058 = vld [vmem:[#allocation2 + $0x58] sm:$0xff]
      %v3059 = vld [vmem:[#allocation2 + $0x60] sm:$0xff]
      %v3060 = vld [vmem:[#allocation2 + $0x68] sm:$0xff]
      %v3061 = vld [vmem:[#allocation2 + $0x70] sm:$0xff]
      %v3062 = vld [vmem:[#allocation2 + $0x78] sm:$0xff]
      %v3063 = vld [vmem:[#allocation2 + $0x80] sm:$0xff]
      %v3064 = vld [vmem:[#allocation2 + $0x88] sm:$0xff]
      %v3065 = vpack.c.bf16 %v3049, %v3047
      %v3066 = vpack.c.bf16 %v3050, %v3048
      %v3067 = vpack.c.bf16 %v3053, %v3051
      %v3068 = vpack.c.bf16 %v3054, %v3052
      %v3069 = vpack.c.bf16 %v3057, %v3055
      %v3070 = vpack.c.bf16 %v3058, %v3056
      %v3071 = vpack.c.bf16 %v3061, %v3059
      %v3072 = vpack.c.bf16 %v3062, %v3060
      %v3073 = vpack.c.bf16 %v3063, %v3063
      %v3074 = vpack.c.bf16 %v3064, %v3064
      %v3076 = vsel %vm824, %v3046, 0
      %v3079 = vsel %vm828, %v3073, 0
      %v3082 = vsel %vm828, %v3074, 0
      %3084 = vmatprep.subr.bf16.mxu0 %v3066
      %3085 = vmatpush1.bf16.msra.mxu0 %v3065
      %3086 = vmatprep.subr.bf16.mxu0 %v3068
      %3087 = vmatpush1.bf16.msra.mxu0 %v3067
      %3088 = vmatprep.subr.bf16.mxu0 %v3070
      %3089 = vmatpush1.bf16.msra.mxu0 %v3069
      %3090 = vmatprep.subr.bf16.mxu0 %v3072
      %3091 = vmatpush1.bf16.msra.mxu0 %v3071
      %3092 = vmatprep.subr.bf16.mxu0 %v3082
      %3093 = vmatpush1.bf16.msra.mxu0 %v3079
      %3094 = vmatprep.subr.bf16.mxu0 0
      %3095 = vmatpush1.bf16.msra.mxu0 0
      %3096 = vmatprep.subr.bf16.mxu0 0
      %3097 = vmatpush1.bf16.msra.mxu0 0
      %3098 = vmatprep.subr.bf16.mxu0 0
      %3099 = vmatpush1.bf16.msra.mxu0 0
      %3100 = vmatprep.subr.bf16.mxu0 0
      %3101 = vmatpush1.bf16.msra.mxu0 0
      %3102 = vmatprep.subr.bf16.mxu0 0
      %3103 = vmatpush1.bf16.msra.mxu0 0
      %3104 = vmatprep.subr.bf16.mxu0 0
      %3105 = vmatpush1.bf16.msra.mxu0 0
      %3106 = vmatprep.subr.bf16.mxu0 0
      %3107 = vmatpush1.bf16.msra.mxu0 0
      %3108 = vmatprep.subr.bf16.mxu0 0
      %3109 = vmatpush1.bf16.msra.mxu0 0
      %3110 = vmatprep.subr.bf16.mxu0 0
      %3111 = vmatpush1.bf16.msra.mxu0 0
      %3112 = vmatprep.subr.bf16.mxu0 0
      %3113 = vmatpush1.bf16.msra.mxu0 0
      %3114 = vmatprep.subr.bf16.mxu0 0
      %3115 = vmatpush1.bf16.msra.mxu0 0
      %3116 = vmatprep.mubr.bf16.mxu0 0
      %3117 = vmatmul.mubr.bf16.gmra.mrb[0].mxu0 %v3076
      %v3118 = vpop.f32.mrb[0].mxu0
      %v3119 = vadd.f32 0.0, %v3118
      %v3120 = vpop.f32.mrb[0].mxu0
      %v3121 = vadd.f32 0.0, %v3120
      %v3122 = vpop.f32.mrb[0].mxu0
      %v3123 = vpop.f32.mrb[0].mxu0
      %3124 = vdwg.mxu0
      %v3125 = vadd.f32 %v3119, %v3121
      %3126 = vadd.xlane.f32.xlu0 %v3125
      %v3127 = vpop.xlane.xlu0 %3126
      %v3128 = vmul.f32 %v3127, 0.00390625
      %v3129 = vsub.f32 %v3119, %v3128
      %v3130 = vsub.f32 %v3121, %v3128
      %v3131 = vmul.f32 %v3129, %v3129
      %v3132 = vmul.f32 %v3130, %v3130
      %v3133 = vadd.f32 %v3131, %v3132
      %3134 = vadd.xlane.f32.xlu0 %v3133
      %v3135 = vpop.xlane.xlu0 %3134
      %v3136 = vmul.f32 %v3135, 0.00390625
      %s3137 = scalar_lea.vmem %s2, 144
      %v3138 = vld [vmem:[%s3137] sm:$0xff]
      %v3139 = vadd.f32 %v3136, 1e-05
      %v3140 = vrsqrt.pop %v3139
      %v3141 = vmul.f32 %v3129, %v3140
      %v3142 = vmul.f32 %v3130, %v3140
      %3144 = vset.pattern.permute.xlu0 0
      %3145 = vperm.xlu0 %3144, %v3138
      %v3146 = vpop.permute.xlu0 %3145
      %v3148 = vmul.f32 %v3141, %v3146
      %v3149 = vmul.f32 %v3142, %v3146
      %3150 = vset.pattern.permute.xlu0 1
      %3151 = vperm.xlu0 %3150, %v3138
      %v3152 = vpop.permute.xlu0 %3151
      %v3154 = vadd.f32 %v3148, %v3152
      %v3155 = vadd.f32 %v3149, %v3152
      %vm3156 = vcmp.ge.f32.partialorder %v3154, 0.0
      %vm3157 = vcmp.ge.f32.partialorder %v3155, 0.0
      %v3158 = vmul.f32 %v3154, 0.01
      %v3159 = vmul.f32 %v3155, 0.01
      %v3160 = vsel %vm3156, %v3154, %v3158
      %v3161 = vsel %vm3157, %v3155, %v3159
      %v3162 = vld [vmem:[%s3] sm:$0x1]
      %v3163 = vpack.c.bf16 %v3160, %v3160
      %v3164 = vpack.c.bf16 %v3161, %v3161
      %v3165 = vld [vmem:[%s4] sm:$0x3]
      %3167 = vset.pattern.permute.xlu0 0
      %3168 = vperm.xlu0 %3167, %v3165
      %v3169 = vpop.permute.xlu0 %3168
      %vm3171 = vcmask 64512
      %v3173 = vsel %vm3171, %v3162, 0
      %v3176 = vsel %vm828, %v3163, 0
      %v3179 = vsel %vm828, %v3164, 0
      %3181 = vmatprep.subr.bf16.mxu0 %v3179
      %3182 = vmatpush1.bf16.msra.mxu0 %v3176
      %3183 = vmatprep.subr.bf16.mxu0 0
      %3184 = vmatpush1.bf16.msra.mxu0 0
      %3185 = vmatprep.subr.bf16.mxu0 0
      %3186 = vmatpush1.bf16.msra.mxu0 0
      %3187 = vmatprep.subr.bf16.mxu0 0
      %3188 = vmatpush1.bf16.msra.mxu0 0
      %3189 = vmatprep.subr.bf16.mxu0 0
      %3190 = vmatpush1.bf16.msra.mxu0 0
      %3191 = vmatprep.subr.bf16.mxu0 0
      %3192 = vmatpush1.bf16.msra.mxu0 0
      %3193 = vmatprep.subr.bf16.mxu0 0
      %3194 = vmatpush1.bf16.msra.mxu0 0
      %3195 = vmatprep.subr.bf16.mxu0 0
      %3196 = vmatpush1.bf16.msra.mxu0 0
      %3197 = vmatprep.subr.bf16.mxu0 0
      %3198 = vmatpush1.bf16.msra.mxu0 0
      %3199 = vmatprep.subr.bf16.mxu0 0
      %3200 = vmatpush1.bf16.msra.mxu0 0
      %3201 = vmatprep.subr.bf16.mxu0 0
      %3202 = vmatpush1.bf16.msra.mxu0 0
      %3203 = vmatprep.subr.bf16.mxu0 0
      %3204 = vmatpush1.bf16.msra.mxu0 0
      %3205 = vmatprep.subr.bf16.mxu0 0
      %3206 = vmatpush1.bf16.msra.mxu0 0
      %3207 = vmatprep.subr.bf16.mxu0 0
      %3208 = vmatpush1.bf16.msra.mxu0 0
      %3209 = vmatprep.subr.bf16.mxu0 0
      %3210 = vmatpush1.bf16.msra.mxu0 0
      %3211 = vmatprep.subr.bf16.mxu0 0
      %3212 = vmatpush1.bf16.msra.mxu0 0
      %3213 = vmatprep.mubr.bf16.mxu0 0
      %3214 = vmatmul.mubr.bf16.gmra.mrb[0].mxu0 %v3173
      %v3215 = vpop.f32.mrb[0].mxu0
      %v3216 = vadd.f32 %v3169, %v3215
      %v3217 = vpop.f32.mrb[0].mxu0
      %v3218 = vadd.f32 %v3169, %v3217
      %v3219 = vpop.f32.mrb[0].mxu0
      %v3220 = vpop.f32.mrb[0].mxu0
      %3221 = vdwg.mxu0
      %v3224 = vrot.slane %v3216, 1
      %v3225 = vrot.slane %v3218, 1
      %v3228 = vsub.f32 %v3216, %v3224
      %v3229 = vsub.f32 %v3218, %v3225
      %v3230 = vmul.f32 %v3228, 1.442695
      %v3231 = vpow.pop %v3230
      %v3232 = vmul.f32 %v3229, 1.442695
      %v3233 = vpow.pop %v3232
      %v3234 = vadd.f32 %v3231, 1.0
      %v3235 = vadd.f32 %v3233, 1.0
      %v3236 = vrcp.pop %v3234
      %v3237 = vmul.f32 1.0, %v3236
      %v3238 = vrcp.pop %v3235
      %v3239 = vmul.f32 1.0, %v3238
      %3240 = vrot.lane.b32.xlu0 %v3237, 17
      %v3241 = vpop.permute.xlu0 %3240
      %3242 = vrot.lane.b32.xlu0 %v3239, 17
      %v3243 = vpop.permute.xlu0 %3242
      %v3244 = vsel %vm573, %v3241, %v3243
      %v3245 = vsel %vm573, %v3243, %v3241
      %v3246 = vsel %vm415, %v3245, 0.0
      %v3247 = vsel %vm416, %v3244, 0.0
      %v3250 = vcombine.low %v3246, %v3247
      %v3252 = vunpack.c.l.s4 1966171168
      %v3253 = vunpack.c.0.s8 %v3252
      %v3254 = vlaneseq
      %v3255 = vshrl.u32 %v3254, 7
      %v3256 = vsub.s32 %v3253, %v3255
      %v3257 = vrot.slane %v3250, %v3256
      %v3259 = vunpack.c.l.s4 1966171168
      %v3260 = vunpack.c.0.s8 %v3259
      %v3261 = vlaneseq
      %v3262 = vshrl.u32 %v3261, 7
      %v3263 = vsub.s32 %v3260, %v3262
      %v3264 = vrot.slane %v3257, %v3263
      %v3266 = vlaneseq
      %vm3267 = vcmp.ge.s32.totalorder %v3266, 0
      %vm3268 = vcmp.lt.s32.totalorder %v3266, 256
      %vm3269 = vmand %vm3267, %vm3268
      %3270 = vst.msk [vmem:[#allocation2] ss:$8 sm:$0x3] %vm3269, %v3264
      %3271 = vst.msk [vmem:[#allocation2] ss:$8 sm:$0x0] %vm3269, %v3264
      %v3272 = vrot.slane %v586, 7
      %v3273 = vrot.slane %v587, 7
      %3276 = vst [vmem:[#allocation2] sm:$0xfe] %v3272
      %3277 = vst [vmem:[#allocation2 + $0x8] sm:$0xfe] %v3273
      %3278 = vrot.lane.b32.xlu0 %v3237, 16
      %v3279 = vpop.permute.xlu0 %3278
      %3280 = vrot.lane.b32.xlu0 %v3239, 16
      %v3281 = vpop.permute.xlu0 %3280
      %v3282 = vsel %vm600, %v3279, %v3281
      %v3283 = vsel %vm600, %v3281, %v3279
      %v3284 = vsel %vm423, %v3283, 0.0
      %v3285 = vsel %vm424, %v3282, 0.0
      %v3288 = vcombine.low %v3284, %v3285
      %v3290 = vunpack.c.l.s4 1966171168
      %v3291 = vunpack.c.0.s8 %v3290
      %v3292 = vlaneseq
      %v3293 = vshrl.u32 %v3292, 7
      %v3294 = vsub.s32 %v3291, %v3293
      %v3295 = vrot.slane %v3288, %v3294
      %v3297 = vunpack.c.l.s4 1966171168
      %v3298 = vunpack.c.0.s8 %v3297
      %v3299 = vlaneseq
      %v3300 = vshrl.u32 %v3299, 7
      %v3301 = vsub.s32 %v3298, %v3300
      %v3302 = vrot.slane %v3295, %v3301
      %s3304 = scalar_lea.vmem [#allocation2], 16
      %3305 = vst.msk [vmem:[%s3304] ss:$8 sm:$0x3] %vm3269, %v3302
      %3306 = vst.msk [vmem:[%s3304] ss:$8 sm:$0x0] %vm3269, %v3302
      %v3307 = vrot.slane %v613, 7
      %v3308 = vrot.slane %v614, 7
      %3311 = vst [vmem:[#allocation2 + $0x10] sm:$0xfe] %v3307
      %3312 = vst [vmem:[#allocation2 + $0x18] sm:$0xfe] %v3308
      %3313 = vrot.lane.b32.xlu0 %v3237, 15
      %v3314 = vpop.permute.xlu0 %3313
      %3315 = vrot.lane.b32.xlu0 %v3239, 15
      %v3316 = vpop.permute.xlu0 %3315
      %v3317 = vsel %vm627, %v3314, %v3316
      %v3318 = vsel %vm627, %v3316, %v3314
      %v3319 = vsel %vm433, %v3318, 0.0
      %v3320 = vsel %vm434, %v3317, 0.0
      %v3323 = vcombine.low %v3319, %v3320
      %v3325 = vunpack.c.l.s4 1966171168
      %v3326 = vunpack.c.0.s8 %v3325
      %v3327 = vlaneseq
      %v3328 = vshrl.u32 %v3327, 7
      %v3329 = vsub.s32 %v3326, %v3328
      %v3330 = vrot.slane %v3323, %v3329
      %v3332 = vunpack.c.l.s4 1966171168
      %v3333 = vunpack.c.0.s8 %v3332
      %v3334 = vlaneseq
      %v3335 = vshrl.u32 %v3334, 7
      %v3336 = vsub.s32 %v3333, %v3335
      %v3337 = vrot.slane %v3330, %v3336
      %s3339 = scalar_lea.vmem [#allocation2], 32
      %3340 = vst.msk [vmem:[%s3339] ss:$8 sm:$0x3] %vm3269, %v3337
      %3341 = vst.msk [vmem:[%s3339] ss:$8 sm:$0x0] %vm3269, %v3337
      %v3342 = vrot.slane %v640, 7
      %v3343 = vrot.slane %v641, 7
      %3346 = vst [vmem:[#allocation2 + $0x20] sm:$0xfe] %v3342
      %3347 = vst [vmem:[#allocation2 + $0x28] sm:$0xfe] %v3343
      %3348 = vrot.lane.b32.xlu0 %v3237, 1
      %v3349 = vpop.permute.xlu0 %3348
      %3350 = vrot.lane.b32.xlu0 %v3239, 1
      %v3351 = vpop.permute.xlu0 %3350
      %v3352 = vsel %vm654, %v3349, %v3351
      %v3353 = vsel %vm654, %v3351, %v3349
      %v3354 = vsel %vm445, %v3353, 0.0
      %v3355 = vsel %vm446, %v3352, 0.0
      %v3358 = vcombine.low %v3354, %v3355
      %v3360 = vunpack.c.l.s4 1966171168
      %v3361 = vunpack.c.0.s8 %v3360
      %v3362 = vlaneseq
      %v3363 = vshrl.u32 %v3362, 7
      %v3364 = vsub.s32 %v3361, %v3363
      %v3365 = vrot.slane %v3358, %v3364
      %v3367 = vunpack.c.l.s4 1966171168
      %v3368 = vunpack.c.0.s8 %v3367
      %v3369 = vlaneseq
      %v3370 = vshrl.u32 %v3369, 7
      %v3371 = vsub.s32 %v3368, %v3370
      %v3372 = vrot.slane %v3365, %v3371
      %s3374 = scalar_lea.vmem [#allocation2], 48
      %3375 = vst.msk [vmem:[%s3374] ss:$8 sm:$0x3] %vm3269, %v3372
      %3376 = vst.msk [vmem:[%s3374] ss:$8 sm:$0x0] %vm3269, %v3372
      %v3377 = vrot.slane %v667, 7
      %v3378 = vrot.slane %v668, 7
      %3381 = vst [vmem:[#allocation2 + $0x30] sm:$0xfe] %v3377
      %3382 = vst [vmem:[#allocation2 + $0x38] sm:$0xfe] %v3378
      %v3383 = vsel %vm449, %v3237, 0.0
      %v3384 = vsel %vm450, %v3239, 0.0
      %v3387 = vcombine.low %v3383, %v3384
      %v3389 = vunpack.c.l.s4 1966171168
      %v3390 = vunpack.c.0.s8 %v3389
      %v3391 = vlaneseq
      %v3392 = vshrl.u32 %v3391, 7
      %v3393 = vsub.s32 %v3390, %v3392
      %v3394 = vrot.slane %v3387, %v3393
      %v3396 = vunpack.c.l.s4 1966171168
      %v3397 = vunpack.c.0.s8 %v3396
      %v3398 = vlaneseq
      %v3399 = vshrl.u32 %v3398, 7
      %v3400 = vsub.s32 %v3397, %v3399
      %v3401 = vrot.slane %v3394, %v3400
      %s3403 = scalar_lea.vmem [#allocation2], 64
      %3404 = vst.msk [vmem:[%s3403] ss:$8 sm:$0x3] %vm3269, %v3401
      %3405 = vst.msk [vmem:[%s3403] ss:$8 sm:$0x0] %vm3269, %v3401
      %3406 = vst [vmem:[#allocation2 + $0x40] sm:$0xfe] 0.0
      %3407 = vst [vmem:[#allocation2 + $0x48] sm:$0xfe] 0.0
      %3408 = vrot.lane.b32.xlu0 %v3237, 127
      %v3409 = vpop.permute.xlu0 %3408
      %3410 = vrot.lane.b32.xlu0 %v3239, 127
      %v3411 = vpop.permute.xlu0 %3410
      %v3412 = vsel %vm691, %v3409, %v3411
      %v3413 = vsel %vm691, %v3411, %v3409
      %v3414 = vsel %vm453, %v3412, 0.0
      %v3415 = vsel %vm454, %v3413, 0.0
      %v3418 = vcombine.low %v3414, %v3415
      %v3420 = vunpack.c.l.s4 1966171168
      %v3421 = vunpack.c.0.s8 %v3420
      %v3422 = vlaneseq
      %v3423 = vshrl.u32 %v3422, 7
      %v3424 = vsub.s32 %v3421, %v3423
      %v3425 = vrot.slane %v3418, %v3424
      %v3427 = vunpack.c.l.s4 1966171168
      %v3428 = vunpack.c.0.s8 %v3427
      %v3429 = vlaneseq
      %v3430 = vshrl.u32 %v3429, 7
      %v3431 = vsub.s32 %v3428, %v3430
      %v3432 = vrot.slane %v3425, %v3431
      %s3434 = scalar_lea.vmem [#allocation2], 80
      %3435 = vst.msk [vmem:[%s3434] ss:$8 sm:$0x3] %vm3269, %v3432
      %3436 = vst.msk [vmem:[%s3434] ss:$8 sm:$0x0] %vm3269, %v3432
      %v3437 = vrot.slane %v704, 7
      %v3438 = vrot.slane %v705, 7
      %3441 = vst [vmem:[#allocation2 + $0x50] sm:$0xfe] %v3437
      %3442 = vst [vmem:[#allocation2 + $0x58] sm:$0xfe] %v3438
      %3443 = vrot.lane.b32.xlu0 %v3237, 113
      %v3444 = vpop.permute.xlu0 %3443
      %3445 = vrot.lane.b32.xlu0 %v3239, 113
      %v3446 = vpop.permute.xlu0 %3445
      %v3447 = vsel %vm718, %v3444, %v3446
      %v3448 = vsel %vm718, %v3446, %v3444
      %v3449 = vsel %vm467, %v3447, 0.0
      %v3450 = vsel %vm468, %v3448, 0.0
      %v3453 = vcombine.low %v3449, %v3450
      %v3455 = vunpack.c.l.s4 1966171168
      %v3456 = vunpack.c.0.s8 %v3455
      %v3457 = vlaneseq
      %v3458 = vshrl.u32 %v3457, 7
      %v3459 = vsub.s32 %v3456, %v3458
      %v3460 = vrot.slane %v3453, %v3459
      %v3462 = vunpack.c.l.s4 1966171168
      %v3463 = vunpack.c.0.s8 %v3462
      %v3464 = vlaneseq
      %v3465 = vshrl.u32 %v3464, 7
      %v3466 = vsub.s32 %v3463, %v3465
      %v3467 = vrot.slane %v3460, %v3466
      %s3469 = scalar_lea.vmem [#allocation2], 96
      %3470 = vst.msk [vmem:[%s3469] ss:$8 sm:$0x3] %vm3269, %v3467
      %3471 = vst.msk [vmem:[%s3469] ss:$8 sm:$0x0] %vm3269, %v3467
      %v3472 = vrot.slane %v731, 7
      %v3473 = vrot.slane %v732, 7
      %3476 = vst [vmem:[#allocation2 + $0x60] sm:$0xfe] %v3472
      %3477 = vst [vmem:[#allocation2 + $0x68] sm:$0xfe] %v3473
      %3478 = vrot.lane.b32.xlu0 %v3237, 112
      %v3479 = vpop.permute.xlu0 %3478
      %3480 = vrot.lane.b32.xlu0 %v3239, 112
      %v3481 = vpop.permute.xlu0 %3480
      %v3482 = vsel %vm745, %v3479, %v3481
      %v3483 = vsel %vm745, %v3481, %v3479
      %v3484 = vsel %vm471, %v3482, 0.0
      %v3485 = vsel %vm472, %v3483, 0.0
      %v3488 = vcombine.low %v3484, %v3485
      %v3490 = vunpack.c.l.s4 1966171168
      %v3491 = vunpack.c.0.s8 %v3490
      %v3492 = vlaneseq
      %v3493 = vshrl.u32 %v3492, 7
      %v3494 = vsub.s32 %v3491, %v3493
      %v3495 = vrot.slane %v3488, %v3494
      %v3497 = vunpack.c.l.s4 1966171168
      %v3498 = vunpack.c.0.s8 %v3497
      %v3499 = vlaneseq
      %v3500 = vshrl.u32 %v3499, 7
      %v3501 = vsub.s32 %v3498, %v3500
      %v3502 = vrot.slane %v3495, %v3501
      %s3504 = scalar_lea.vmem [#allocation2], 112
      %3505 = vst.msk [vmem:[%s3504] ss:$8 sm:$0x3] %vm3269, %v3502
      %3506 = vst.msk [vmem:[%s3504] ss:$8 sm:$0x0] %vm3269, %v3502
      %v3507 = vrot.slane %v758, 7
      %v3508 = vrot.slane %v759, 7
      %3511 = vst [vmem:[#allocation2 + $0x70] sm:$0xfe] %v3507
      %3512 = vst [vmem:[#allocation2 + $0x78] sm:$0xfe] %v3508
      %3513 = vrot.lane.b32.xlu0 %v3237, 111
      %v3514 = vpop.permute.xlu0 %3513
      %3515 = vrot.lane.b32.xlu0 %v3239, 111
      %v3516 = vpop.permute.xlu0 %3515
      %v3517 = vsel %vm772, %v3514, %v3516
      %v3518 = vsel %vm772, %v3516, %v3514
      %v3519 = vsel %vm475, %v3517, 0.0
      %v3520 = vsel %vm476, %v3518, 0.0
      %v3523 = vcombine.low %v3519, %v3520
      %v3525 = vunpack.c.l.s4 1966171168
      %v3526 = vunpack.c.0.s8 %v3525
      %v3527 = vlaneseq
      %v3528 = vshrl.u32 %v3527, 7
      %v3529 = vsub.s32 %v3526, %v3528
      %v3530 = vrot.slane %v3523, %v3529
      %v3532 = vunpack.c.l.s4 1966171168
      %v3533 = vunpack.c.0.s8 %v3532
      %v3534 = vlaneseq
      %v3535 = vshrl.u32 %v3534, 7
      %v3536 = vsub.s32 %v3533, %v3535
      %v3537 = vrot.slane %v3530, %v3536
      %s3539 = scalar_lea.vmem [#allocation2], 128
      %3540 = vst.msk [vmem:[%s3539] ss:$8 sm:$0x3] %vm3269, %v3537
      %3541 = vst.msk [vmem:[%s3539] ss:$8 sm:$0x0] %vm3269, %v3537
      %v3542 = vrot.slane %v785, 7
      %v3543 = vrot.slane %v786, 7
      %3546 = vst [vmem:[#allocation2 + $0x80] sm:$0xfe] %v3542
      %3547 = vst [vmem:[#allocation2 + $0x88] sm:$0xfe] %v3543
      %v3548 = vld [vmem:[%s5] sm:$0xf]
      %v3549 = vld [vmem:[#allocation2] sm:$0xff]
      %v3550 = vld [vmem:[#allocation2 + $0x8] sm:$0xff]
      %v3551 = vld [vmem:[#allocation2 + $0x10] sm:$0xff]
      %v3552 = vld [vmem:[#allocation2 + $0x18] sm:$0xff]
      %v3553 = vld [vmem:[#allocation2 + $0x20] sm:$0xff]
      %v3554 = vld [vmem:[#allocation2 + $0x28] sm:$0xff]
      %v3555 = vld [vmem:[#allocation2 + $0x30] sm:$0xff]
      %v3556 = vld [vmem:[#allocation2 + $0x38] sm:$0xff]
      %v3557 = vld [vmem:[#allocation2 + $0x40] sm:$0xff]
      %v3558 = vld [vmem:[#allocation2 + $0x48] sm:$0xff]
      %v3559 = vld [vmem:[#allocation2 + $0x50] sm:$0xff]
      %v3560 = vld [vmem:[#allocation2 + $0x58] sm:$0xff]
      %v3561 = vld [vmem:[#allocation2 + $0x60] sm:$0xff]
      %v3562 = vld [vmem:[#allocation2 + $0x68] sm:$0xff]
      %v3563 = vld [vmem:[#allocation2 + $0x70] sm:$0xff]
      %v3564 = vld [vmem:[#allocation2 + $0x78] sm:$0xff]
      %v3565 = vld [vmem:[#allocation2 + $0x80] sm:$0xff]
      %v3566 = vld [vmem:[#allocation2 + $0x88] sm:$0xff]
      %v3567 = vpack.c.bf16 %v3551, %v3549
      %v3568 = vpack.c.bf16 %v3552, %v3550
      %v3569 = vpack.c.bf16 %v3555, %v3553
      %v3570 = vpack.c.bf16 %v3556, %v3554
      %v3571 = vpack.c.bf16 %v3559, %v3557
      %v3572 = vpack.c.bf16 %v3560, %v3558
      %v3573 = vpack.c.bf16 %v3563, %v3561
      %v3574 = vpack.c.bf16 %v3564, %v3562
      %v3575 = vpack.c.bf16 %v3565, %v3565
      %v3576 = vpack.c.bf16 %v3566, %v3566
      %v3578 = vsel %vm824, %v3548, 0
      %v3581 = vsel %vm828, %v3575, 0
      %v3584 = vsel %vm828, %v3576, 0
      %3586 = vmatprep.subr.bf16.mxu0 %v3568
      %3587 = vmatpush1.bf16.msra.mxu0 %v3567
      %3588 = vmatprep.subr.bf16.mxu0 %v3570
      %3589 = vmatpush1.bf16.msra.mxu0 %v3569
      %3590 = vmatprep.subr.bf16.mxu0 %v3572
      %3591 = vmatpush1.bf16.msra.mxu0 %v3571
      %3592 = vmatprep.subr.bf16.mxu0 %v3574
      %3593 = vmatpush1.bf16.msra.mxu0 %v3573
      %3594 = vmatprep.subr.bf16.mxu0 %v3584
      %3595 = vmatpush1.bf16.msra.mxu0 %v3581
      %3596 = vmatprep.subr.bf16.mxu0 0
      %3597 = vmatpush1.bf16.msra.mxu0 0
      %3598 = vmatprep.subr.bf16.mxu0 0
      %3599 = vmatpush1.bf16.msra.mxu0 0
      %3600 = vmatprep.subr.bf16.mxu0 0
      %3601 = vmatpush1.bf16.msra.mxu0 0
      %3602 = vmatprep.subr.bf16.mxu0 0
      %3603 = vmatpush1.bf16.msra.mxu0 0
      %3604 = vmatprep.subr.bf16.mxu0 0
      %3605 = vmatpush1.bf16.msra.mxu0 0
      %3606 = vmatprep.subr.bf16.mxu0 0
      %3607 = vmatpush1.bf16.msra.mxu0 0
      %3608 = vmatprep.subr.bf16.mxu0 0
      %3609 = vmatpush1.bf16.msra.mxu0 0
      %3610 = vmatprep.subr.bf16.mxu0 0
      %3611 = vmatpush1.bf16.msra.mxu0 0
      %3612 = vmatprep.subr.bf16.mxu0 0
      %3613 = vmatpush1.bf16.msra.mxu0 0
      %3614 = vmatprep.subr.bf16.mxu0 0
      %3615 = vmatpush1.bf16.msra.mxu0 0
      %3616 = vmatprep.subr.bf16.mxu0 0
      %3617 = vmatpush1.bf16.msra.mxu0 0
      %3618 = vmatprep.mubr.bf16.mxu0 0
      %3619 = vmatmul.mubr.bf16.gmra.mrb[0].mxu0 %v3578
      %v3620 = vpop.f32.mrb[0].mxu0
      %v3621 = vadd.f32 0.0, %v3620
      %v3622 = vpop.f32.mrb[0].mxu0
      %v3623 = vadd.f32 0.0, %v3622
      %v3624 = vpop.f32.mrb[0].mxu0
      %v3625 = vpop.f32.mrb[0].mxu0
      %3626 = vdwg.mxu0
      %v3627 = vadd.f32 %v3621, %v3623
      %3628 = vadd.xlane.f32.xlu0 %v3627
      %v3629 = vpop.xlane.xlu0 %3628
      %v3630 = vmul.f32 %v3629, 0.00390625
      %v3631 = vsub.f32 %v3621, %v3630
      %v3632 = vsub.f32 %v3623, %v3630
      %v3633 = vmul.f32 %v3631, %v3631
      %v3634 = vmul.f32 %v3632, %v3632
      %v3635 = vadd.f32 %v3633, %v3634
      %3636 = vadd.xlane.f32.xlu0 %v3635
      %v3637 = vpop.xlane.xlu0 %3636
      %v3638 = vmul.f32 %v3637, 0.00390625
      %v3639 = vld [vmem:[%s6] sm:$0xff]
      %v3640 = vadd.f32 %v3638, 1e-05
      %v3641 = vrsqrt.pop %v3640
      %v3642 = vmul.f32 %v3631, %v3641
      %v3643 = vmul.f32 %v3632, %v3641
      %3645 = vset.pattern.permute.xlu0 0
      %3646 = vperm.xlu0 %3645, %v3639
      %v3647 = vpop.permute.xlu0 %3646
      %v3649 = vmul.f32 %v3642, %v3647
      %v3650 = vmul.f32 %v3643, %v3647
      %3651 = vset.pattern.permute.xlu0 1
      %3652 = vperm.xlu0 %3651, %v3639
      %v3653 = vpop.permute.xlu0 %3652
      %v3655 = vadd.f32 %v3649, %v3653
      %v3656 = vadd.f32 %v3650, %v3653
      %vm3657 = vcmp.ge.f32.partialorder %v3655, 0.0
      %vm3658 = vcmp.ge.f32.partialorder %v3656, 0.0
      %v3659 = vmul.f32 %v3655, 0.01
      %v3660 = vmul.f32 %v3656, 0.01
      %v3661 = vsel %vm3657, %v3655, %v3659
      %v3662 = vsel %vm3658, %v3656, %v3660
      %3663 = vrot.lane.b32.xlu0 %v3661, 17
      %v3664 = vpop.permute.xlu0 %3663
      %3665 = vrot.lane.b32.xlu0 %v3662, 17
      %v3666 = vpop.permute.xlu0 %3665
      %v3667 = vsel %vm573, %v3664, %v3666
      %v3668 = vsel %vm573, %v3666, %v3664
      %v3669 = vsel %vm578, %v3668, 0.0
      %v3670 = vsel %vm579, %v3667, 0.0
      %3671 = vst [vmem:[#allocation2] sm:$0xff] %v3669
      %3672 = vst [vmem:[#allocation2 + $0x8] sm:$0xff] %v3670
      %3673 = vrot.lane.b32.xlu0 %v3661, 16
      %v3674 = vpop.permute.xlu0 %3673
      %3675 = vrot.lane.b32.xlu0 %v3662, 16
      %v3676 = vpop.permute.xlu0 %3675
      %v3677 = vsel %vm600, %v3674, %v3676
      %v3678 = vsel %vm600, %v3676, %v3674
      %v3679 = vsel %vm605, %v3678, 0.0
      %v3680 = vsel %vm606, %v3677, 0.0
      %3681 = vst [vmem:[#allocation2 + $0x10] sm:$0xff] %v3679
      %3682 = vst [vmem:[#allocation2 + $0x18] sm:$0xff] %v3680
      %3683 = vrot.lane.b32.xlu0 %v3661, 15
      %v3684 = vpop.permute.xlu0 %3683
      %3685 = vrot.lane.b32.xlu0 %v3662, 15
      %v3686 = vpop.permute.xlu0 %3685
      %v3687 = vsel %vm627, %v3684, %v3686
      %v3688 = vsel %vm627, %v3686, %v3684
      %v3689 = vsel %vm632, %v3688, 0.0
      %v3690 = vsel %vm633, %v3687, 0.0
      %3691 = vst [vmem:[#allocation2 + $0x20] sm:$0xff] %v3689
      %3692 = vst [vmem:[#allocation2 + $0x28] sm:$0xff] %v3690
      %3693 = vrot.lane.b32.xlu0 %v3661, 1
      %v3694 = vpop.permute.xlu0 %3693
      %3695 = vrot.lane.b32.xlu0 %v3662, 1
      %v3696 = vpop.permute.xlu0 %3695
      %v3697 = vsel %vm654, %v3694, %v3696
      %v3698 = vsel %vm654, %v3696, %v3694
      %v3699 = vsel %vm659, %v3698, 0.0
      %v3700 = vsel %vm660, %v3697, 0.0
      %3701 = vst [vmem:[#allocation2 + $0x30] sm:$0xff] %v3699
      %3702 = vst [vmem:[#allocation2 + $0x38] sm:$0xff] %v3700
      %v3703 = vsel %vm679, %v3661, 0.0
      %v3704 = vsel %vm680, %v3662, 0.0
      %3705 = vst [vmem:[#allocation2 + $0x40] sm:$0xff] %v3703
      %3706 = vst [vmem:[#allocation2 + $0x48] sm:$0xff] %v3704
      %3707 = vrot.lane.b32.xlu0 %v3661, 127
      %v3708 = vpop.permute.xlu0 %3707
      %3709 = vrot.lane.b32.xlu0 %v3662, 127
      %v3710 = vpop.permute.xlu0 %3709
      %v3711 = vsel %vm691, %v3708, %v3710
      %v3712 = vsel %vm691, %v3710, %v3708
      %v3713 = vsel %vm696, %v3711, 0.0
      %v3714 = vsel %vm697, %v3712, 0.0
      %3715 = vst [vmem:[#allocation2 + $0x50] sm:$0xff] %v3713
      %3716 = vst [vmem:[#allocation2 + $0x58] sm:$0xff] %v3714
      %3717 = vrot.lane.b32.xlu0 %v3661, 113
      %v3718 = vpop.permute.xlu0 %3717
      %3719 = vrot.lane.b32.xlu0 %v3662, 113
      %v3720 = vpop.permute.xlu0 %3719
      %v3721 = vsel %vm718, %v3718, %v3720
      %v3722 = vsel %vm718, %v3720, %v3718
      %v3723 = vsel %vm723, %v3721, 0.0
      %v3724 = vsel %vm724, %v3722, 0.0
      %3725 = vst [vmem:[#allocation2 + $0x60] sm:$0xff] %v3723
      %3726 = vst [vmem:[#allocation2 + $0x68] sm:$0xff] %v3724
      %3727 = vrot.lane.b32.xlu0 %v3661, 112
      %v3728 = vpop.permute.xlu0 %3727
      %3729 = vrot.lane.b32.xlu0 %v3662, 112
      %v3730 = vpop.permute.xlu0 %3729
      %v3731 = vsel %vm745, %v3728, %v3730
      %v3732 = vsel %vm745, %v3730, %v3728
      %v3733 = vsel %vm750, %v3731, 0.0
      %v3734 = vsel %vm751, %v3732, 0.0
      %3735 = vst [vmem:[#allocation2 + $0x70] sm:$0xff] %v3733
      %3736 = vst [vmem:[#allocation2 + $0x78] sm:$0xff] %v3734
      %3737 = vrot.lane.b32.xlu0 %v3661, 111
      %v3738 = vpop.permute.xlu0 %3737
      %3739 = vrot.lane.b32.xlu0 %v3662, 111
      %v3740 = vpop.permute.xlu0 %3739
      %v3741 = vsel %vm772, %v3738, %v3740
      %v3742 = vsel %vm772, %v3740, %v3738
      %v3743 = vsel %vm777, %v3741, 0.0
      %v3744 = vsel %vm778, %v3742, 0.0
      %3745 = vst [vmem:[#allocation2 + $0x80] sm:$0xff] %v3743
      %3746 = vst [vmem:[#allocation2 + $0x88] sm:$0xff] %v3744
      %s3747 = scalar_lea.vmem %s5, 24
      %v3748 = vld [vmem:[%s3747] sm:$0xf]
      %v3749 = vld [vmem:[#allocation2] sm:$0xff]
      %v3750 = vld [vmem:[#allocation2 + $0x8] sm:$0xff]
      %v3751 = vld [vmem:[#allocation2 + $0x10] sm:$0xff]
      %v3752 = vld [vmem:[#allocation2 + $0x18] sm:$0xff]
      %v3753 = vld [vmem:[#allocation2 + $0x20] sm:$0xff]
      %v3754 = vld [vmem:[#allocation2 + $0x28] sm:$0xff]
      %v3755 = vld [vmem:[#allocation2 + $0x30] sm:$0xff]
      %v3756 = vld [vmem:[#allocation2 + $0x38] sm:$0xff]
      %v3757 = vld [vmem:[#allocation2 + $0x40] sm:$0xff]
      %v3758 = vld [vmem:[#allocation2 + $0x48] sm:$0xff]
      %v3759 = vld [vmem:[#allocation2 + $0x50] sm:$0xff]
      %v3760 = vld [vmem:[#allocation2 + $0x58] sm:$0xff]
      %v3761 = vld [vmem:[#allocation2 + $0x60] sm:$0xff]
      %v3762 = vld [vmem:[#allocation2 + $0x68] sm:$0xff]
      %v3763 = vld [vmem:[#allocation2 + $0x70] sm:$0xff]
      %v3764 = vld [vmem:[#allocation2 + $0x78] sm:$0xff]
      %v3765 = vld [vmem:[#allocation2 + $0x80] sm:$0xff]
      %v3766 = vld [vmem:[#allocation2 + $0x88] sm:$0xff]
      %v3767 = vpack.c.bf16 %v3751, %v3749
      %v3768 = vpack.c.bf16 %v3752, %v3750
      %v3769 = vpack.c.bf16 %v3755, %v3753
      %v3770 = vpack.c.bf16 %v3756, %v3754
      %v3771 = vpack.c.bf16 %v3759, %v3757
      %v3772 = vpack.c.bf16 %v3760, %v3758
      %v3773 = vpack.c.bf16 %v3763, %v3761
      %v3774 = vpack.c.bf16 %v3764, %v3762
      %v3775 = vpack.c.bf16 %v3765, %v3765
      %v3776 = vpack.c.bf16 %v3766, %v3766
      %v3778 = vsel %vm824, %v3748, 0
      %v3781 = vsel %vm828, %v3775, 0
      %v3784 = vsel %vm828, %v3776, 0
      %3786 = vmatprep.subr.bf16.mxu0 %v3768
      %3787 = vmatpush1.bf16.msra.mxu0 %v3767
      %3788 = vmatprep.subr.bf16.mxu0 %v3770
      %3789 = vmatpush1.bf16.msra.mxu0 %v3769
      %3790 = vmatprep.subr.bf16.mxu0 %v3772
      %3791 = vmatpush1.bf16.msra.mxu0 %v3771
      %3792 = vmatprep.subr.bf16.mxu0 %v3774
      %3793 = vmatpush1.bf16.msra.mxu0 %v3773
      %3794 = vmatprep.subr.bf16.mxu0 %v3784
      %3795 = vmatpush1.bf16.msra.mxu0 %v3781
      %3796 = vmatprep.subr.bf16.mxu0 0
      %3797 = vmatpush1.bf16.msra.mxu0 0
      %3798 = vmatprep.subr.bf16.mxu0 0
      %3799 = vmatpush1.bf16.msra.mxu0 0
      %3800 = vmatprep.subr.bf16.mxu0 0
      %3801 = vmatpush1.bf16.msra.mxu0 0
      %3802 = vmatprep.subr.bf16.mxu0 0
      %3803 = vmatpush1.bf16.msra.mxu0 0
      %3804 = vmatprep.subr.bf16.mxu0 0
      %3805 = vmatpush1.bf16.msra.mxu0 0
      %3806 = vmatprep.subr.bf16.mxu0 0
      %3807 = vmatpush1.bf16.msra.mxu0 0
      %3808 = vmatprep.subr.bf16.mxu0 0
      %3809 = vmatpush1.bf16.msra.mxu0 0
      %3810 = vmatprep.subr.bf16.mxu0 0
      %3811 = vmatpush1.bf16.msra.mxu0 0
      %3812 = vmatprep.subr.bf16.mxu0 0
      %3813 = vmatpush1.bf16.msra.mxu0 0
      %3814 = vmatprep.subr.bf16.mxu0 0
      %3815 = vmatpush1.bf16.msra.mxu0 0
      %3816 = vmatprep.subr.bf16.mxu0 0
      %3817 = vmatpush1.bf16.msra.mxu0 0
      %3818 = vmatprep.mubr.bf16.mxu0 0
      %3819 = vmatmul.mubr.bf16.gmra.mrb[0].mxu0 %v3778
      %v3820 = vpop.f32.mrb[0].mxu0
      %v3821 = vadd.f32 0.0, %v3820
      %v3822 = vpop.f32.mrb[0].mxu0
      %v3823 = vadd.f32 0.0, %v3822
      %v3824 = vpop.f32.mrb[0].mxu0
      %v3825 = vpop.f32.mrb[0].mxu0
      %3826 = vdwg.mxu0
      %v3827 = vadd.f32 %v3821, %v3823
      %3828 = vadd.xlane.f32.xlu0 %v3827
      %v3829 = vpop.xlane.xlu0 %3828
      %v3830 = vmul.f32 %v3829, 0.00390625
      %v3831 = vsub.f32 %v3821, %v3830
      %v3832 = vsub.f32 %v3823, %v3830
      %v3833 = vmul.f32 %v3831, %v3831
      %v3834 = vmul.f32 %v3832, %v3832
      %v3835 = vadd.f32 %v3833, %v3834
      %3836 = vadd.xlane.f32.xlu0 %v3835
      %v3837 = vpop.xlane.xlu0 %3836
      %v3838 = vmul.f32 %v3837, 0.00390625
      %s3839 = scalar_lea.vmem %s6, 24
      %v3840 = vld [vmem:[%s3839] sm:$0xff]
      %v3841 = vadd.f32 %v3838, 1e-05
      %v3842 = vrsqrt.pop %v3841
      %v3843 = vmul.f32 %v3831, %v3842
      %v3844 = vmul.f32 %v3832, %v3842
      %3846 = vset.pattern.permute.xlu0 0
      %3847 = vperm.xlu0 %3846, %v3840
      %v3848 = vpop.permute.xlu0 %3847
      %v3850 = vmul.f32 %v3843, %v3848
      %v3851 = vmul.f32 %v3844, %v3848
      %3852 = vset.pattern.permute.xlu0 1
      %3853 = vperm.xlu0 %3852, %v3840
      %v3854 = vpop.permute.xlu0 %3853
      %v3856 = vadd.f32 %v3850, %v3854
      %v3857 = vadd.f32 %v3851, %v3854
      %vm3858 = vcmp.ge.f32.partialorder %v3856, 0.0
      %vm3859 = vcmp.ge.f32.partialorder %v3857, 0.0
      %v3860 = vmul.f32 %v3856, 0.01
      %v3861 = vmul.f32 %v3857, 0.01
      %v3862 = vsel %vm3858, %v3856, %v3860
      %v3863 = vsel %vm3859, %v3857, %v3861
      %3864 = vrot.lane.b32.xlu0 %v3862, 17
      %v3865 = vpop.permute.xlu0 %3864
      %3866 = vrot.lane.b32.xlu0 %v3863, 17
      %v3867 = vpop.permute.xlu0 %3866
      %v3868 = vsel %vm573, %v3865, %v3867
      %v3869 = vsel %vm573, %v3867, %v3865
      %v3870 = vsel %vm578, %v3869, 0.0
      %v3871 = vsel %vm579, %v3868, 0.0
      %3872 = vst [vmem:[#allocation2] sm:$0xff] %v3870
      %3873 = vst [vmem:[#allocation2 + $0x8] sm:$0xff] %v3871
      %3874 = vrot.lane.b32.xlu0 %v3862, 16
      %v3875 = vpop.permute.xlu0 %3874
      %3876 = vrot.lane.b32.xlu0 %v3863, 16
      %v3877 = vpop.permute.xlu0 %3876
      %v3878 = vsel %vm600, %v3875, %v3877
      %v3879 = vsel %vm600, %v3877, %v3875
      %v3880 = vsel %vm605, %v3879, 0.0
      %v3881 = vsel %vm606, %v3878, 0.0
      %3882 = vst [vmem:[#allocation2 + $0x10] sm:$0xff] %v3880
      %3883 = vst [vmem:[#allocation2 + $0x18] sm:$0xff] %v3881
      %3884 = vrot.lane.b32.xlu0 %v3862, 15
      %v3885 = vpop.permute.xlu0 %3884
      %3886 = vrot.lane.b32.xlu0 %v3863, 15
      %v3887 = vpop.permute.xlu0 %3886
      %v3888 = vsel %vm627, %v3885, %v3887
      %v3889 = vsel %vm627, %v3887, %v3885
      %v3890 = vsel %vm632, %v3889, 0.0
      %v3891 = vsel %vm633, %v3888, 0.0
      %3892 = vst [vmem:[#allocation2 + $0x20] sm:$0xff] %v3890
      %3893 = vst [vmem:[#allocation2 + $0x28] sm:$0xff] %v3891
      %3894 = vrot.lane.b32.xlu0 %v3862, 1
      %v3895 = vpop.permute.xlu0 %3894
      %3896 = vrot.lane.b32.xlu0 %v3863, 1
      %v3897 = vpop.permute.xlu0 %3896
      %v3898 = vsel %vm654, %v3895, %v3897
      %v3899 = vsel %vm654, %v3897, %v3895
      %v3900 = vsel %vm659, %v3899, 0.0
      %v3901 = vsel %vm660, %v3898, 0.0
      %3902 = vst [vmem:[#allocation2 + $0x30] sm:$0xff] %v3900
      %3903 = vst [vmem:[#allocation2 + $0x38] sm:$0xff] %v3901
      %v3904 = vsel %vm679, %v3862, 0.0
      %v3905 = vsel %vm680, %v3863, 0.0
      %3906 = vst [vmem:[#allocation2 + $0x40] sm:$0xff] %v3904
      %3907 = vst [vmem:[#allocation2 + $0x48] sm:$0xff] %v3905
      %3908 = vrot.lane.b32.xlu0 %v3862, 127
      %v3909 = vpop.permute.xlu0 %3908
      %3910 = vrot.lane.b32.xlu0 %v3863, 127
      %v3911 = vpop.permute.xlu0 %3910
      %v3912 = vsel %vm691, %v3909, %v3911
      %v3913 = vsel %vm691, %v3911, %v3909
      %v3914 = vsel %vm696, %v3912, 0.0
      %v3915 = vsel %vm697, %v3913, 0.0
      %3916 = vst [vmem:[#allocation2 + $0x50] sm:$0xff] %v3914
      %3917 = vst [vmem:[#allocation2 + $0x58] sm:$0xff] %v3915
      %3918 = vrot.lane.b32.xlu0 %v3862, 113
      %v3919 = vpop.permute.xlu0 %3918
      %3920 = vrot.lane.b32.xlu0 %v3863, 113
      %v3921 = vpop.permute.xlu0 %3920
      %v3922 = vsel %vm718, %v3919, %v3921
      %v3923 = vsel %vm718, %v3921, %v3919
      %v3924 = vsel %vm723, %v3922, 0.0
      %v3925 = vsel %vm724, %v3923, 0.0
      %3926 = vst [vmem:[#allocation2 + $0x60] sm:$0xff] %v3924
      %3927 = vst [vmem:[#allocation2 + $0x68] sm:$0xff] %v3925
      %3928 = vrot.lane.b32.xlu0 %v3862, 112
      %v3929 = vpop.permute.xlu0 %3928
      %3930 = vrot.lane.b32.xlu0 %v3863, 112
      %v3931 = vpop.permute.xlu0 %3930
      %v3932 = vsel %vm745, %v3929, %v3931
      %v3933 = vsel %vm745, %v3931, %v3929
      %v3934 = vsel %vm750, %v3932, 0.0
      %v3935 = vsel %vm751, %v3933, 0.0
      %3936 = vst [vmem:[#allocation2 + $0x70] sm:$0xff] %v3934
      %3937 = vst [vmem:[#allocation2 + $0x78] sm:$0xff] %v3935
      %3938 = vrot.lane.b32.xlu0 %v3862, 111
      %v3939 = vpop.permute.xlu0 %3938
      %3940 = vrot.lane.b32.xlu0 %v3863, 111
      %v3941 = vpop.permute.xlu0 %3940
      %v3942 = vsel %vm772, %v3939, %v3941
      %v3943 = vsel %vm772, %v3941, %v3939
      %v3944 = vsel %vm777, %v3942, 0.0
      %v3945 = vsel %vm778, %v3943, 0.0
      %3946 = vst [vmem:[#allocation2 + $0x80] sm:$0xff] %v3944
      %3947 = vst [vmem:[#allocation2 + $0x88] sm:$0xff] %v3945
      %s3948 = scalar_lea.vmem %s5, 48
      %v3949 = vld [vmem:[%s3948] sm:$0xf]
      %v3950 = vld [vmem:[%s3948 + $0x8] sm:$0xf]
      %v3951 = vld [vmem:[#allocation2] sm:$0xff]
      %v3952 = vld [vmem:[#allocation2 + $0x8] sm:$0xff]
      %v3953 = vld [vmem:[#allocation2 + $0x10] sm:$0xff]
      %v3954 = vld [vmem:[#allocation2 + $0x18] sm:$0xff]
      %v3955 = vld [vmem:[#allocation2 + $0x20] sm:$0xff]
      %v3956 = vld [vmem:[#allocation2 + $0x28] sm:$0xff]
      %v3957 = vld [vmem:[#allocation2 + $0x30] sm:$0xff]
      %v3958 = vld [vmem:[#allocation2 + $0x38] sm:$0xff]
      %v3959 = vld [vmem:[#allocation2 + $0x40] sm:$0xff]
      %v3960 = vld [vmem:[#allocation2 + $0x48] sm:$0xff]
      %v3961 = vld [vmem:[#allocation2 + $0x50] sm:$0xff]
      %v3962 = vld [vmem:[#allocation2 + $0x58] sm:$0xff]
      %v3963 = vld [vmem:[#allocation2 + $0x60] sm:$0xff]
      %v3964 = vld [vmem:[#allocation2 + $0x68] sm:$0xff]
      %v3965 = vld [vmem:[#allocation2 + $0x70] sm:$0xff]
      %v3966 = vld [vmem:[#allocation2 + $0x78] sm:$0xff]
      %v3967 = vld [vmem:[#allocation2 + $0x80] sm:$0xff]
      %v3968 = vld [vmem:[#allocation2 + $0x88] sm:$0xff]
      %v3969 = vpack.c.bf16 %v3953, %v3951
      %v3970 = vpack.c.bf16 %v3954, %v3952
      %v3971 = vpack.c.bf16 %v3957, %v3955
      %v3972 = vpack.c.bf16 %v3958, %v3956
      %v3973 = vpack.c.bf16 %v3961, %v3959
      %v3974 = vpack.c.bf16 %v3962, %v3960
      %v3975 = vpack.c.bf16 %v3965, %v3963
      %v3976 = vpack.c.bf16 %v3966, %v3964
      %v3977 = vpack.c.bf16 %v3967, %v3967
      %v3978 = vpack.c.bf16 %v3968, %v3968
      %v3981 = vunpack.c.l.b16 %v3949
      %v3982 = vunpack.c.l.b16 %v3950
      %v3983 = vpack.c.b16 %v3982, %v3981
      %v3985 = vsel %vm824, %v3983, 0
      %v3988 = vsel %vm828, %v3977, 0
      %v3991 = vsel %vm828, %v3978, 0
      %3993 = vmatprep.subr.bf16.mxu0 %v3970
      %3994 = vmatpush1.bf16.msra.mxu0 %v3969
      %3995 = vmatprep.subr.bf16.mxu0 %v3972
      %3996 = vmatpush1.bf16.msra.mxu0 %v3971
      %3997 = vmatprep.subr.bf16.mxu0 %v3974
      %3998 = vmatpush1.bf16.msra.mxu0 %v3973
      %3999 = vmatprep.subr.bf16.mxu0 %v3976
      %4000 = vmatpush1.bf16.msra.mxu0 %v3975
      %4001 = vmatprep.subr.bf16.mxu0 %v3991
      %4002 = vmatpush1.bf16.msra.mxu0 %v3988
      %4003 = vmatprep.subr.bf16.mxu0 0
      %4004 = vmatpush1.bf16.msra.mxu0 0
      %4005 = vmatprep.subr.bf16.mxu0 0
      %4006 = vmatpush1.bf16.msra.mxu0 0
      %4007 = vmatprep.subr.bf16.mxu0 0
      %4008 = vmatpush1.bf16.msra.mxu0 0
      %4009 = vmatprep.subr.bf16.mxu0 0
      %4010 = vmatpush1.bf16.msra.mxu0 0
      %4011 = vmatprep.subr.bf16.mxu0 0
      %4012 = vmatpush1.bf16.msra.mxu0 0
      %4013 = vmatprep.subr.bf16.mxu0 0
      %4014 = vmatpush1.bf16.msra.mxu0 0
      %4015 = vmatprep.subr.bf16.mxu0 0
      %4016 = vmatpush1.bf16.msra.mxu0 0
      %4017 = vmatprep.subr.bf16.mxu0 0
      %4018 = vmatpush1.bf16.msra.mxu0 0
      %4019 = vmatprep.subr.bf16.mxu0 0
      %4020 = vmatpush1.bf16.msra.mxu0 0
      %4021 = vmatprep.subr.bf16.mxu0 0
      %4022 = vmatpush1.bf16.msra.mxu0 0
      %4023 = vmatprep.subr.bf16.mxu0 0
      %4024 = vmatpush1.bf16.msra.mxu0 0
      %4025 = vmatprep.mubr.bf16.mxu0 0
      %4026 = vmatmul.mubr.bf16.gmra.mrb[0].mxu0 %v3985
      %v4027 = vpop.f32.mrb[0].mxu0
      %v4028 = vadd.f32 0.0, %v4027
      %v4029 = vpop.f32.mrb[0].mxu0
      %v4030 = vadd.f32 0.0, %v4029
      %v4031 = vpop.f32.mrb[0].mxu0
      %v4032 = vadd.f32 0.0, %v4031
      %v4033 = vpop.f32.mrb[0].mxu0
      %v4034 = vadd.f32 0.0, %v4033
      %4035 = vdwg.mxu0
      %v4036 = vadd.f32 %v4028, %v4030
      %4037 = vadd.xlane.f32.xlu0 %v4036
      %v4038 = vpop.xlane.xlu0 %4037
      %v4039 = vadd.f32 %v4032, %v4034
      %4040 = vadd.xlane.f32.xlu0 %v4039
      %v4041 = vpop.xlane.xlu0 %4040
      %v4042 = vmul.f32 %v4038, 0.00390625
      %v4043 = vmul.f32 %v4041, 0.00390625
      %v4044 = vsub.f32 %v4028, %v4042
      %v4045 = vsub.f32 %v4030, %v4042
      %v4046 = vsub.f32 %v4032, %v4043
      %v4047 = vsub.f32 %v4034, %v4043
      %v4048 = vmul.f32 %v4044, %v4044
      %v4049 = vmul.f32 %v4045, %v4045
      %v4050 = vmul.f32 %v4046, %v4046
      %v4051 = vmul.f32 %v4047, %v4047
      %v4052 = vadd.f32 %v4048, %v4049
      %4053 = vadd.xlane.f32.xlu0 %v4052
      %v4054 = vpop.xlane.xlu0 %4053
      %v4055 = vadd.f32 %v4050, %v4051
      %4056 = vadd.xlane.f32.xlu0 %v4055
      %v4057 = vpop.xlane.xlu0 %4056
      %v4058 = vmul.f32 %v4054, 0.00390625
      %v4059 = vmul.f32 %v4057, 0.00390625
      %s4060 = scalar_lea.vmem %s6, 48
      %v4061 = vld [vmem:[%s4060] sm:$0xff]
      %v4062 = vld [vmem:[%s4060 + $0x8] sm:$0xff]
      %v4063 = vadd.f32 %v4058, 1e-05
      %v4064 = vadd.f32 %v4059, 1e-05
      %v4065 = vrsqrt.pop %v4063
      %v4066 = vrsqrt.pop %v4064
      %v4067 = vmul.f32 %v4044, %v4065
      %v4068 = vmul.f32 %v4045, %v4065
      %v4069 = vmul.f32 %v4046, %v4066
      %v4070 = vmul.f32 %v4047, %v4066
      %4072 = vset.pattern.permute.xlu0 0
      %4073 = vperm.xlu0 %4072, %v4061
      %v4074 = vpop.permute.xlu0 %4073
      %4077 = vset.pattern.permute.xlu0 0
      %4078 = vperm.xlu0 %4077, %v4062
      %v4079 = vpop.permute.xlu0 %4078
      %v4081 = vmul.f32 %v4067, %v4074
      %v4082 = vmul.f32 %v4068, %v4074
      %v4083 = vmul.f32 %v4069, %v4079
      %v4084 = vmul.f32 %v4070, %v4079
      %4085 = vset.pattern.permute.xlu0 1
      %4086 = vperm.xlu0 %4085, %v4061
      %v4087 = vpop.permute.xlu0 %4086
      %4089 = vset.pattern.permute.xlu0 1
      %4090 = vperm.xlu0 %4089, %v4062
      %v4091 = vpop.permute.xlu0 %4090
      %v4093 = vadd.f32 %v4081, %v4087
      %v4094 = vadd.f32 %v4082, %v4087
      %v4095 = vadd.f32 %v4083, %v4091
      %v4096 = vadd.f32 %v4084, %v4091
      %vm4097 = vcmp.ge.f32.partialorder %v4093, 0.0
      %vm4098 = vcmp.ge.f32.partialorder %v4094, 0.0
      %vm4099 = vcmp.ge.f32.partialorder %v4095, 0.0
      %vm4100 = vcmp.ge.f32.partialorder %v4096, 0.0
      %v4101 = vmul.f32 %v4093, 0.01
      %v4102 = vmul.f32 %v4094, 0.01
      %v4103 = vmul.f32 %v4095, 0.01
      %v4104 = vmul.f32 %v4096, 0.01
      %v4105 = vsel %vm4097, %v4093, %v4101
      %v4106 = vsel %vm4098, %v4094, %v4102
      %v4107 = vsel %vm4099, %v4095, %v4103
      %v4108 = vsel %vm4100, %v4096, %v4104
      %v4109 = vpack.c.bf16 %v4107, %v4105
      %v4110 = vpack.c.bf16 %v4108, %v4106
      %v4111 = vld [vmem:[%s9] sm:$0xff]
      %v4112 = vld [vmem:[%s9 + $0x8] sm:$0xff]
      %v4113 = vld [vmem:[%s9 + $0x10] sm:$0xff]
      %v4114 = vld [vmem:[%s9 + $0x18] sm:$0xff]
      %v4115 = vld [vmem:[%s9 + $0x20] sm:$0xff]
      %v4116 = vld [vmem:[%s9 + $0x28] sm:$0xff]
      %v4117 = vld [vmem:[%s9 + $0x30] sm:$0xff]
      %v4118 = vld [vmem:[%s9 + $0x38] sm:$0xff]
      %v4119 = vld [vmem:[%s9 + $0x40] sm:$0xff]
      %v4120 = vld [vmem:[%s9 + $0x48] sm:$0xff]
      %v4121 = vld [vmem:[%s9 + $0x50] sm:$0xff]
      %v4122 = vld [vmem:[%s9 + $0x58] sm:$0xff]
      %v4123 = vld [vmem:[%s9 + $0x60] sm:$0xff]
      %v4124 = vld [vmem:[%s9 + $0x68] sm:$0xff]
      %v4125 = vld [vmem:[%s9 + $0x70] sm:$0xff]
      %v4126 = vld [vmem:[%s9 + $0x78] sm:$0xff]
      %v4127 = vld [vmem:[%s9 + $0x80] sm:$0xff]
      %v4128 = vld [vmem:[%s9 + $0x88] sm:$0xff]
      %v4129 = vld [vmem:[%s9 + $0x90] sm:$0xff]
      %v4130 = vld [vmem:[%s9 + $0x98] sm:$0xff]
      %v4131 = vld [vmem:[%s9 + $0xa0] sm:$0xff]
      %v4132 = vld [vmem:[%s9 + $0xa8] sm:$0xff]
      %v4133 = vld [vmem:[%s9 + $0xb0] sm:$0xff]
      %v4134 = vld [vmem:[%s9 + $0xb8] sm:$0xff]
      %v4135 = vld [vmem:[%s9 + $0xc0] sm:$0xff]
      %v4136 = vld [vmem:[%s9 + $0xc8] sm:$0xff]
      %v4137 = vld [vmem:[%s9 + $0xd0] sm:$0xff]
      %v4138 = vld [vmem:[%s9 + $0xd8] sm:$0xff]
      %v4139 = vld [vmem:[%s9 + $0xe0] sm:$0xff]
      %v4140 = vld [vmem:[%s9 + $0xe8] sm:$0xff]
      %v4141 = vld [vmem:[%s9 + $0xf0] sm:$0xff]
      %v4142 = vld [vmem:[%s9 + $0xf8] sm:$0xff]
      %v4175 = vunpack.c.l.b16 %v4111
      %v4176 = vunpack.c.h.b16 %v4111
      %v4177 = vunpack.c.l.b16 %v4112
      %v4178 = vunpack.c.h.b16 %v4112
      %v4179 = vunpack.c.l.b16 %v4113
      %v4180 = vunpack.c.h.b16 %v4113
      %v4181 = vunpack.c.l.b16 %v4114
      %v4182 = vunpack.c.h.b16 %v4114
      %v4183 = vunpack.c.l.b16 %v4115
      %v4184 = vunpack.c.h.b16 %v4115
      %v4185 = vunpack.c.l.b16 %v4116
      %v4186 = vunpack.c.h.b16 %v4116
      %v4187 = vunpack.c.l.b16 %v4117
      %v4188 = vunpack.c.h.b16 %v4117
      %v4189 = vunpack.c.l.b16 %v4118
      %v4190 = vunpack.c.h.b16 %v4118
      %v4191 = vunpack.c.l.b16 %v4119
      %v4192 = vunpack.c.h.b16 %v4119
      %v4193 = vunpack.c.l.b16 %v4120
      %v4194 = vunpack.c.h.b16 %v4120
      %v4195 = vunpack.c.l.b16 %v4121
      %v4196 = vunpack.c.h.b16 %v4121
      %v4197 = vunpack.c.l.b16 %v4122
      %v4198 = vunpack.c.h.b16 %v4122
      %v4199 = vunpack.c.l.b16 %v4123
      %v4200 = vunpack.c.h.b16 %v4123
      %v4201 = vunpack.c.l.b16 %v4124
      %v4202 = vunpack.c.h.b16 %v4124
      %v4203 = vunpack.c.l.b16 %v4125
      %v4204 = vunpack.c.h.b16 %v4125
      %v4205 = vunpack.c.l.b16 %v4126
      %v4206 = vunpack.c.h.b16 %v4126
      %v4207 = vunpack.c.l.b16 %v4127
      %v4208 = vunpack.c.h.b16 %v4127
      %v4209 = vunpack.c.l.b16 %v4128
      %v4210 = vunpack.c.h.b16 %v4128
      %v4211 = vunpack.c.l.b16 %v4129
      %v4212 = vunpack.c.h.b16 %v4129
      %v4213 = vunpack.c.l.b16 %v4130
      %v4214 = vunpack.c.h.b16 %v4130
      %v4215 = vunpack.c.l.b16 %v4131
      %v4216 = vunpack.c.h.b16 %v4131
      %v4217 = vunpack.c.l.b16 %v4132
      %v4218 = vunpack.c.h.b16 %v4132
      %v4219 = vunpack.c.l.b16 %v4133
      %v4220 = vunpack.c.h.b16 %v4133
      %v4221 = vunpack.c.l.b16 %v4134
      %v4222 = vunpack.c.h.b16 %v4134
      %v4223 = vunpack.c.l.b16 %v4135
      %v4224 = vunpack.c.h.b16 %v4135
      %v4225 = vunpack.c.l.b16 %v4136
      %v4226 = vunpack.c.h.b16 %v4136
      %v4227 = vunpack.c.l.b16 %v4137
      %v4228 = vunpack.c.h.b16 %v4137
      %v4229 = vunpack.c.l.b16 %v4138
      %v4230 = vunpack.c.h.b16 %v4138
      %v4231 = vunpack.c.l.b16 %v4139
      %v4232 = vunpack.c.h.b16 %v4139
      %v4233 = vunpack.c.l.b16 %v4140
      %v4234 = vunpack.c.h.b16 %v4140
      %v4235 = vunpack.c.l.b16 %v4141
      %v4236 = vunpack.c.h.b16 %v4141
      %v4237 = vunpack.c.l.b16 %v4142
      %v4238 = vunpack.c.h.b16 %v4142
      %v4239 = vpack.c.b16 %v4177, %v4175
      %v4240 = vpack.c.b16 %v4178, %v4176
      %v4241 = vpack.c.b16 %v4181, %v4179
      %v4242 = vpack.c.b16 %v4182, %v4180
      %v4243 = vpack.c.b16 %v4185, %v4183
      %v4244 = vpack.c.b16 %v4186, %v4184
      %v4245 = vpack.c.b16 %v4189, %v4187
      %v4246 = vpack.c.b16 %v4190, %v4188
      %v4247 = vpack.c.b16 %v4193, %v4191
      %v4248 = vpack.c.b16 %v4194, %v4192
      %v4249 = vpack.c.b16 %v4197, %v4195
      %v4250 = vpack.c.b16 %v4198, %v4196
      %v4251 = vpack.c.b16 %v4201, %v4199
      %v4252 = vpack.c.b16 %v4202, %v4200
      %v4253 = vpack.c.b16 %v4205, %v4203
      %v4254 = vpack.c.b16 %v4206, %v4204
      %v4255 = vpack.c.b16 %v4209, %v4207
      %v4256 = vpack.c.b16 %v4210, %v4208
      %v4257 = vpack.c.b16 %v4213, %v4211
      %v4258 = vpack.c.b16 %v4214, %v4212
      %v4259 = vpack.c.b16 %v4217, %v4215
      %v4260 = vpack.c.b16 %v4218, %v4216
      %v4261 = vpack.c.b16 %v4221, %v4219
      %v4262 = vpack.c.b16 %v4222, %v4220
      %v4263 = vpack.c.b16 %v4225, %v4223
      %v4264 = vpack.c.b16 %v4226, %v4224
      %v4265 = vpack.c.b16 %v4229, %v4227
      %v4266 = vpack.c.b16 %v4230, %v4228
      %v4267 = vpack.c.b16 %v4233, %v4231
      %v4268 = vpack.c.b16 %v4234, %v4232
      %v4269 = vpack.c.b16 %v4237, %v4235
      %v4270 = vpack.c.b16 %v4238, %v4236
      %4303 = vmatprep.subr.bf16.mxu0 %v4240
      %4304 = vmatpush1.bf16.msra.mxu0 %v4239
      %4305 = vmatprep.subr.bf16.mxu0 %v4242
      %4306 = vmatpush1.bf16.msra.mxu0 %v4241
      %4307 = vmatprep.subr.bf16.mxu0 %v4244
      %4308 = vmatpush1.bf16.msra.mxu0 %v4243
      %4309 = vmatprep.subr.bf16.mxu0 %v4246
      %4310 = vmatpush1.bf16.msra.mxu0 %v4245
      %4311 = vmatprep.subr.bf16.mxu0 %v4248
      %4312 = vmatpush1.bf16.msra.mxu0 %v4247
      %4313 = vmatprep.subr.bf16.mxu0 %v4250
      %4314 = vmatpush1.bf16.msra.mxu0 %v4249
      %4315 = vmatprep.subr.bf16.mxu0 %v4252
      %4316 = vmatpush1.bf16.msra.mxu0 %v4251
      %4317 = vmatprep.subr.bf16.mxu0 %v4254
      %4318 = vmatpush1.bf16.msra.mxu0 %v4253
      %4319 = vmatprep.subr.bf16.mxu0 %v4256
      %4320 = vmatpush1.bf16.msra.mxu0 %v4255
      %4321 = vmatprep.subr.bf16.mxu0 %v4258
      %4322 = vmatpush1.bf16.msra.mxu0 %v4257
      %4323 = vmatprep.subr.bf16.mxu0 %v4260
      %4324 = vmatpush1.bf16.msra.mxu0 %v4259
      %4325 = vmatprep.subr.bf16.mxu0 %v4262
      %4326 = vmatpush1.bf16.msra.mxu0 %v4261
      %4327 = vmatprep.subr.bf16.mxu0 %v4264
      %4328 = vmatpush1.bf16.msra.mxu0 %v4263
      %4329 = vmatprep.subr.bf16.mxu0 %v4266
      %4330 = vmatpush1.bf16.msra.mxu0 %v4265
      %4331 = vmatprep.subr.bf16.mxu0 %v4268
      %4332 = vmatpush1.bf16.msra.mxu0 %v4267
      %4333 = vmatprep.subr.bf16.mxu0 %v4270
      %4334 = vmatpush1.bf16.msra.mxu0 %v4269
      %4335 = vmatprep.mubr.bf16.mxu0 %v4110
      %4336 = vmatmul.mubr.bf16.gmra.mrb[0].mxu0 %v4109
      %v4337 = vpop.f32.mrb[0].mxu0
      %v4338 = vadd.f32 0.0, %v4337
      %v4339 = vpop.f32.mrb[0].mxu0
      %v4340 = vadd.f32 0.0, %v4339
      %v4341 = vpop.f32.mrb[0].mxu0
      %v4342 = vadd.f32 0.0, %v4341
      %v4343 = vpop.f32.mrb[0].mxu0
      %v4344 = vadd.f32 0.0, %v4343
      %4345 = vdwg.mxu0
      %4346 = vrot.lane.b32.xlu0 %v4338, 9
      %v4347 = vpop.permute.xlu0 %4346
      %4348 = vrot.lane.b32.xlu0 %v4342, 9
      %v4349 = vpop.permute.xlu0 %4348
      %4350 = vrot.lane.b32.xlu0 %v4340, 9
      %v4351 = vpop.permute.xlu0 %4350
      %4352 = vrot.lane.b32.xlu0 %v4344, 9
      %v4353 = vpop.permute.xlu0 %4352
      %v4354 = vsel %vm1603, %v4347, %v4351
      %v4355 = vsel %vm1603, %v4349, %v4353
      %v4356 = vsel %vm1603, %v4351, %v4347
      %v4357 = vsel %vm1603, %v4353, %v4349
      %v4358 = vsel %vm1610, %v4356, 0.0
      %v4359 = vsel %vm1611, %v4354, 0.0
      %v4360 = vsel %vm1610, %v4357, 0.0
      %v4361 = vsel %vm1611, %v4355, 0.0
      %4362 = vst [vmem:[#allocation2] sm:$0xff] %v4358
      %4363 = vst [vmem:[#allocation2 + $0x8] sm:$0xff] %v4359
      %4364 = vst [vmem:[#allocation2 + $0x10] sm:$0xff] %v4360
      %4365 = vst [vmem:[#allocation2 + $0x18] sm:$0xff] %v4361
      %4366 = vrot.lane.b32.xlu0 %v4338, 8
      %v4367 = vpop.permute.xlu0 %4366
      %4368 = vrot.lane.b32.xlu0 %v4342, 8
      %v4369 = vpop.permute.xlu0 %4368
      %4370 = vrot.lane.b32.xlu0 %v4340, 8
      %v4371 = vpop.permute.xlu0 %4370
      %4372 = vrot.lane.b32.xlu0 %v4344, 8
      %v4373 = vpop.permute.xlu0 %4372
      %v4374 = vsel %vm1628, %v4367, %v4371
      %v4375 = vsel %vm1628, %v4369, %v4373
      %v4376 = vsel %vm1628, %v4371, %v4367
      %v4377 = vsel %vm1628, %v4373, %v4369
      %v4378 = vsel %vm1635, %v4376, 0.0
      %v4379 = vsel %vm1636, %v4374, 0.0
      %v4380 = vsel %vm1635, %v4377, 0.0
      %v4381 = vsel %vm1636, %v4375, 0.0
      %4382 = vst [vmem:[#allocation2 + $0x20] sm:$0xff] %v4378
      %4383 = vst [vmem:[#allocation2 + $0x28] sm:$0xff] %v4379
      %4384 = vst [vmem:[#allocation2 + $0x30] sm:$0xff] %v4380
      %4385 = vst [vmem:[#allocation2 + $0x38] sm:$0xff] %v4381
      %4386 = vrot.lane.b32.xlu0 %v4338, 7
      %v4387 = vpop.permute.xlu0 %4386
      %4388 = vrot.lane.b32.xlu0 %v4342, 7
      %v4389 = vpop.permute.xlu0 %4388
      %4390 = vrot.lane.b32.xlu0 %v4340, 7
      %v4391 = vpop.permute.xlu0 %4390
      %4392 = vrot.lane.b32.xlu0 %v4344, 7
      %v4393 = vpop.permute.xlu0 %4392
      %v4394 = vsel %vm1653, %v4387, %v4391
      %v4395 = vsel %vm1653, %v4389, %v4393
      %v4396 = vsel %vm1653, %v4391, %v4387
      %v4397 = vsel %vm1653, %v4393, %v4389
      %v4398 = vsel %vm1660, %v4396, 0.0
      %v4399 = vsel %vm1661, %v4394, 0.0
      %v4400 = vsel %vm1660, %v4397, 0.0
      %v4401 = vsel %vm1661, %v4395, 0.0
      %4402 = vst [vmem:[#allocation2 + $0x40] sm:$0xff] %v4398
      %4403 = vst [vmem:[#allocation2 + $0x48] sm:$0xff] %v4399
      %4404 = vst [vmem:[#allocation2 + $0x50] sm:$0xff] %v4400
      %4405 = vst [vmem:[#allocation2 + $0x58] sm:$0xff] %v4401
      %4406 = vrot.lane.b32.xlu0 %v4338, 1
      %v4407 = vpop.permute.xlu0 %4406
      %4408 = vrot.lane.b32.xlu0 %v4342, 1
      %v4409 = vpop.permute.xlu0 %4408
      %4410 = vrot.lane.b32.xlu0 %v4340, 1
      %v4411 = vpop.permute.xlu0 %4410
      %4412 = vrot.lane.b32.xlu0 %v4344, 1
      %v4413 = vpop.permute.xlu0 %4412
      %v4414 = vsel %vm654, %v4407, %v4411
      %v4415 = vsel %vm654, %v4409, %v4413
      %v4416 = vsel %vm654, %v4411, %v4407
      %v4417 = vsel %vm654, %v4413, %v4409
      %v4418 = vsel %vm1684, %v4416, 0.0
      %v4419 = vsel %vm1685, %v4414, 0.0
      %v4420 = vsel %vm1684, %v4417, 0.0
      %v4421 = vsel %vm1685, %v4415, 0.0
      %4422 = vst [vmem:[#allocation2 + $0x60] sm:$0xff] %v4418
      %4423 = vst [vmem:[#allocation2 + $0x68] sm:$0xff] %v4419
      %4424 = vst [vmem:[#allocation2 + $0x70] sm:$0xff] %v4420
      %4425 = vst [vmem:[#allocation2 + $0x78] sm:$0xff] %v4421
      %v4426 = vsel %vm1696, %v4338, 0.0
      %v4427 = vsel %vm1697, %v4340, 0.0
      %v4428 = vsel %vm1696, %v4342, 0.0
      %v4429 = vsel %vm1697, %v4344, 0.0
      %4430 = vst [vmem:[#allocation2 + $0x80] sm:$0xff] %v4426
      %4431 = vst [vmem:[#allocation2 + $0x88] sm:$0xff] %v4427
      %4432 = vst [vmem:[#allocation2 + $0x90] sm:$0xff] %v4428
      %4433 = vst [vmem:[#allocation2 + $0x98] sm:$0xff] %v4429
      %4434 = vrot.lane.b32.xlu0 %v4338, 127
      %v4435 = vpop.permute.xlu0 %4434
      %4436 = vrot.lane.b32.xlu0 %v4342, 127
      %v4437 = vpop.permute.xlu0 %4436
      %4438 = vrot.lane.b32.xlu0 %v4340, 127
      %v4439 = vpop.permute.xlu0 %4438
      %4440 = vrot.lane.b32.xlu0 %v4344, 127
      %v4441 = vpop.permute.xlu0 %4440
      %v4442 = vsel %vm691, %v4435, %v4439
      %v4443 = vsel %vm691, %v4437, %v4441
      %v4444 = vsel %vm691, %v4439, %v4435
      %v4445 = vsel %vm691, %v4441, %v4437
      %v4446 = vsel %vm1720, %v4442, 0.0
      %v4447 = vsel %vm1721, %v4444, 0.0
      %v4448 = vsel %vm1720, %v4443, 0.0
      %v4449 = vsel %vm1721, %v4445, 0.0
      %4450 = vst [vmem:[#allocation2 + $0xa0] sm:$0xff] %v4446
      %4451 = vst [vmem:[#allocation2 + $0xa8] sm:$0xff] %v4447
      %4452 = vst [vmem:[#allocation2 + $0xb0] sm:$0xff] %v4448
      %4453 = vst [vmem:[#allocation2 + $0xb8] sm:$0xff] %v4449
      %4454 = vrot.lane.b32.xlu0 %v4338, 121
      %v4455 = vpop.permute.xlu0 %4454
      %4456 = vrot.lane.b32.xlu0 %v4342, 121
      %v4457 = vpop.permute.xlu0 %4456
      %4458 = vrot.lane.b32.xlu0 %v4340, 121
      %v4459 = vpop.permute.xlu0 %4458
      %4460 = vrot.lane.b32.xlu0 %v4344, 121
      %v4461 = vpop.permute.xlu0 %4460
      %v4462 = vsel %vm1738, %v4455, %v4459
      %v4463 = vsel %vm1738, %v4457, %v4461
      %v4464 = vsel %vm1738, %v4459, %v4455
      %v4465 = vsel %vm1738, %v4461, %v4457
      %v4466 = vsel %vm1745, %v4462, 0.0
      %v4467 = vsel %vm1746, %v4464, 0.0
      %v4468 = vsel %vm1745, %v4463, 0.0
      %v4469 = vsel %vm1746, %v4465, 0.0
      %4470 = vst [vmem:[#allocation2 + $0xc0] sm:$0xff] %v4466
      %4471 = vst [vmem:[#allocation2 + $0xc8] sm:$0xff] %v4467
      %4472 = vst [vmem:[#allocation2 + $0xd0] sm:$0xff] %v4468
      %4473 = vst [vmem:[#allocation2 + $0xd8] sm:$0xff] %v4469
      %4474 = vrot.lane.b32.xlu0 %v4338, 120
      %v4475 = vpop.permute.xlu0 %4474
      %4476 = vrot.lane.b32.xlu0 %v4342, 120
      %v4477 = vpop.permute.xlu0 %4476
      %4478 = vrot.lane.b32.xlu0 %v4340, 120
      %v4479 = vpop.permute.xlu0 %4478
      %4480 = vrot.lane.b32.xlu0 %v4344, 120
      %v4481 = vpop.permute.xlu0 %4480
      %v4482 = vsel %vm1763, %v4475, %v4479
      %v4483 = vsel %vm1763, %v4477, %v4481
      %v4484 = vsel %vm1763, %v4479, %v4475
      %v4485 = vsel %vm1763, %v4481, %v4477
      %v4486 = vsel %vm1770, %v4482, 0.0
      %v4487 = vsel %vm1771, %v4484, 0.0
      %v4488 = vsel %vm1770, %v4483, 0.0
      %v4489 = vsel %vm1771, %v4485, 0.0
      %4490 = vst [vmem:[#allocation2 + $0xe0] sm:$0xff] %v4486
      %4491 = vst [vmem:[#allocation2 + $0xe8] sm:$0xff] %v4487
      %4492 = vst [vmem:[#allocation2 + $0xf0] sm:$0xff] %v4488
      %4493 = vst [vmem:[#allocation2 + $0xf8] sm:$0xff] %v4489
      %4494 = vrot.lane.b32.xlu0 %v4338, 119
      %v4495 = vpop.permute.xlu0 %4494
      %4496 = vrot.lane.b32.xlu0 %v4342, 119
      %v4497 = vpop.permute.xlu0 %4496
      %4498 = vrot.lane.b32.xlu0 %v4340, 119
      %v4499 = vpop.permute.xlu0 %4498
      %4500 = vrot.lane.b32.xlu0 %v4344, 119
      %v4501 = vpop.permute.xlu0 %4500
      %v4502 = vsel %vm1788, %v4495, %v4499
      %v4503 = vsel %vm1788, %v4497, %v4501
      %v4504 = vsel %vm1788, %v4499, %v4495
      %v4505 = vsel %vm1788, %v4501, %v4497
      %v4506 = vsel %vm1795, %v4502, 0.0
      %v4507 = vsel %vm1796, %v4504, 0.0
      %v4508 = vsel %vm1795, %v4503, 0.0
      %v4509 = vsel %vm1796, %v4505, 0.0
      %4510 = vst [vmem:[#allocation2 + $0x100] sm:$0xff] %v4506
      %4511 = vst [vmem:[#allocation2 + $0x108] sm:$0xff] %v4507
      %4512 = vst [vmem:[#allocation2 + $0x110] sm:$0xff] %v4508
      %4513 = vst [vmem:[#allocation2 + $0x118] sm:$0xff] %v4509
      %s4514 = scalar_lea.vmem %s5, 72
      %v4515 = vld [vmem:[%s4514] sm:$0xff]
      %v4516 = vld [vmem:[%s4514 + $0x8] sm:$0xff]
      %v4517 = vld [vmem:[#allocation2] sm:$0xff]
      %v4518 = vld [vmem:[#allocation2 + $0x8] sm:$0xff]
      %v4519 = vld [vmem:[#allocation2 + $0x10] sm:$0xff]
      %v4520 = vld [vmem:[#allocation2 + $0x18] sm:$0xff]
      %v4521 = vld [vmem:[#allocation2 + $0x20] sm:$0xff]
      %v4522 = vld [vmem:[#allocation2 + $0x28] sm:$0xff]
      %v4523 = vld [vmem:[#allocation2 + $0x30] sm:$0xff]
      %v4524 = vld [vmem:[#allocation2 + $0x38] sm:$0xff]
      %v4525 = vld [vmem:[#allocation2 + $0x40] sm:$0xff]
      %v4526 = vld [vmem:[#allocation2 + $0x48] sm:$0xff]
      %v4527 = vld [vmem:[#allocation2 + $0x50] sm:$0xff]
      %v4528 = vld [vmem:[#allocation2 + $0x58] sm:$0xff]
      %v4529 = vld [vmem:[#allocation2 + $0x60] sm:$0xff]
      %v4530 = vld [vmem:[#allocation2 + $0x68] sm:$0xff]
      %v4531 = vld [vmem:[#allocation2 + $0x70] sm:$0xff]
      %v4532 = vld [vmem:[#allocation2 + $0x78] sm:$0xff]
      %v4533 = vld [vmem:[#allocation2 + $0x80] sm:$0xff]
      %v4534 = vld [vmem:[#allocation2 + $0x88] sm:$0xff]
      %v4535 = vld [vmem:[#allocation2 + $0x90] sm:$0xff]
      %v4536 = vld [vmem:[#allocation2 + $0x98] sm:$0xff]
      %v4537 = vld [vmem:[#allocation2 + $0xa0] sm:$0xff]
      %v4538 = vld [vmem:[#allocation2 + $0xa8] sm:$0xff]
      %v4539 = vld [vmem:[#allocation2 + $0xb0] sm:$0xff]
      %v4540 = vld [vmem:[#allocation2 + $0xb8] sm:$0xff]
      %v4541 = vld [vmem:[#allocation2 + $0xc0] sm:$0xff]
      %v4542 = vld [vmem:[#allocation2 + $0xc8] sm:$0xff]
      %v4543 = vld [vmem:[#allocation2 + $0xd0] sm:$0xff]
      %v4544 = vld [vmem:[#allocation2 + $0xd8] sm:$0xff]
      %v4545 = vld [vmem:[#allocation2 + $0xe0] sm:$0xff]
      %v4546 = vld [vmem:[#allocation2 + $0xe8] sm:$0xff]
      %v4547 = vld [vmem:[#allocation2 + $0xf0] sm:$0xff]
      %v4548 = vld [vmem:[#allocation2 + $0xf8] sm:$0xff]
      %v4549 = vld [vmem:[#allocation2 + $0x100] sm:$0xff]
      %v4550 = vld [vmem:[#allocation2 + $0x108] sm:$0xff]
      %v4551 = vld [vmem:[#allocation2 + $0x110] sm:$0xff]
      %v4552 = vld [vmem:[#allocation2 + $0x118] sm:$0xff]
      %v4553 = vpack.c.bf16 %v4519, %v4517
      %v4554 = vpack.c.bf16 %v4520, %v4518
      %v4555 = vpack.c.bf16 %v4523, %v4521
      %v4556 = vpack.c.bf16 %v4524, %v4522
      %v4557 = vpack.c.bf16 %v4527, %v4525
      %v4558 = vpack.c.bf16 %v4528, %v4526
      %v4559 = vpack.c.bf16 %v4531, %v4529
      %v4560 = vpack.c.bf16 %v4532, %v4530
      %v4561 = vpack.c.bf16 %v4535, %v4533
      %v4562 = vpack.c.bf16 %v4536, %v4534
      %v4563 = vpack.c.bf16 %v4539, %v4537
      %v4564 = vpack.c.bf16 %v4540, %v4538
      %v4565 = vpack.c.bf16 %v4543, %v4541
      %v4566 = vpack.c.bf16 %v4544, %v4542
      %v4567 = vpack.c.bf16 %v4547, %v4545
      %v4568 = vpack.c.bf16 %v4548, %v4546
      %v4569 = vpack.c.bf16 %v4551, %v4549
      %v4570 = vpack.c.bf16 %v4552, %v4550
      %v4573 = vunpack.c.l.b16 %v4515
      %v4574 = vunpack.c.h.b16 %v4515
      %v4575 = vunpack.c.l.b16 %v4516
      %v4576 = vunpack.c.h.b16 %v4516
      %v4577 = vpack.c.b16 %v4575, %v4573
      %v4578 = vpack.c.b16 %v4576, %v4574
      %v4581 = vsel %vm1871, %v4578, 0
      %4583 = vmatprep.subr.bf16.mxu0 %v4554
      %4584 = vmatpush1.bf16.msra.mxu0 %v4553
      %4585 = vmatprep.subr.bf16.mxu0 %v4556
      %4586 = vmatpush1.bf16.msra.mxu0 %v4555
      %4587 = vmatprep.subr.bf16.mxu0 %v4558
      %4588 = vmatpush1.bf16.msra.mxu0 %v4557
      %4589 = vmatprep.subr.bf16.mxu0 %v4560
      %4590 = vmatpush1.bf16.msra.mxu0 %v4559
      %4591 = vmatprep.subr.bf16.mxu0 %v4562
      %4592 = vmatpush1.bf16.msra.mxu0 %v4561
      %4593 = vmatprep.subr.bf16.mxu0 %v4564
      %4594 = vmatpush1.bf16.msra.mxu0 %v4563
      %4595 = vmatprep.subr.bf16.mxu0 %v4566
      %4596 = vmatpush1.bf16.msra.mxu0 %v4565
      %4597 = vmatprep.subr.bf16.mxu0 %v4568
      %4598 = vmatpush1.bf16.msra.mxu0 %v4567
      %4599 = vmatprep.subr.bf16.mxu0 %v4570
      %4600 = vmatpush1.bf16.msra.mxu0 %v4569
      %4601 = vmatprep.subr.bf16.mxu0 0
      %4602 = vmatpush1.bf16.msra.mxu0 0
      %4603 = vmatprep.subr.bf16.mxu0 0
      %4604 = vmatpush1.bf16.msra.mxu0 0
      %4605 = vmatprep.subr.bf16.mxu0 0
      %4606 = vmatpush1.bf16.msra.mxu0 0
      %4607 = vmatprep.subr.bf16.mxu0 0
      %4608 = vmatpush1.bf16.msra.mxu0 0
      %4609 = vmatprep.subr.bf16.mxu0 0
      %4610 = vmatpush1.bf16.msra.mxu0 0
      %4611 = vmatprep.subr.bf16.mxu0 0
      %4612 = vmatpush1.bf16.msra.mxu0 0
      %4613 = vmatprep.subr.bf16.mxu0 0
      %4614 = vmatpush1.bf16.msra.mxu0 0
      %4615 = vmatprep.mubr.bf16.mxu0 %v4581
      %4616 = vmatmul.mubr.bf16.gmra.mrb[0].mxu0 %v4577
      %v4617 = vpop.f32.mrb[0].mxu0
      %v4618 = vadd.f32 0.0, %v4617
      %v4619 = vpop.f32.mrb[0].mxu0
      %v4620 = vadd.f32 0.0, %v4619
      %v4621 = vpop.f32.mrb[0].mxu0
      %v4622 = vadd.f32 0.0, %v4621
      %v4623 = vpop.f32.mrb[0].mxu0
      %v4624 = vadd.f32 0.0, %v4623
      %4625 = vdwg.mxu0
      %v4626 = vadd.f32 %v4618, %v4620
      %4627 = vadd.xlane.f32.xlu0 %v4626
      %v4628 = vpop.xlane.xlu0 %4627
      %v4629 = vadd.f32 %v4622, %v4624
      %4630 = vadd.xlane.f32.xlu0 %v4629
      %v4631 = vpop.xlane.xlu0 %4630
      %v4632 = vmul.f32 %v4628, 0.015625
      %v4633 = vmul.f32 %v4631, 0.015625
      %v4634 = vsub.f32 %v4618, %v4632
      %v4635 = vsub.f32 %v4620, %v4632
      %v4636 = vsub.f32 %v4622, %v4633
      %v4637 = vsub.f32 %v4624, %v4633
      %v4638 = vmul.f32 %v4634, %v563
      %v4639 = vmul.f32 %v4635, %v564
      %v4640 = vmul.f32 %v4636, %v563
      %v4641 = vmul.f32 %v4637, %v564
      %v4642 = vmul.f32 %v4638, %v4638
      %v4643 = vmul.f32 %v4639, %v4639
      %v4644 = vmul.f32 %v4640, %v4640
      %v4645 = vmul.f32 %v4641, %v4641
      %v4646 = vadd.f32 %v4642, %v4643
      %4647 = vadd.xlane.f32.xlu0 %v4646
      %v4648 = vpop.xlane.xlu0 %4647
      %v4649 = vadd.f32 %v4644, %v4645
      %4650 = vadd.xlane.f32.xlu0 %v4649
      %v4651 = vpop.xlane.xlu0 %4650
      %v4652 = vmul.f32 %v4648, 0.015625
      %v4653 = vmul.f32 %v4651, 0.015625
      %s4654 = scalar_lea.vmem %s6, 72
      %v4655 = vld [vmem:[%s4654] sm:$0xff]
      %v4656 = vld [vmem:[%s4654 + $0x8] sm:$0xff]
      %v4657 = vadd.f32 %v4652, 1e-05
      %v4658 = vadd.f32 %v4653, 1e-05
      %v4659 = vrsqrt.pop %v4657
      %v4660 = vrsqrt.pop %v4658
      %v4661 = vmul.f32 %v4638, %v4659
      %v4662 = vmul.f32 %v4639, %v4659
      %v4663 = vmul.f32 %v4640, %v4660
      %v4664 = vmul.f32 %v4641, %v4660
      %4666 = vset.pattern.permute.xlu0 0
      %4667 = vperm.xlu0 %4666, %v4655
      %v4668 = vpop.permute.xlu0 %4667
      %4671 = vset.pattern.permute.xlu0 0
      %4672 = vperm.xlu0 %4671, %v4656
      %v4673 = vpop.permute.xlu0 %4672
      %v4675 = vmul.f32 %v4661, %v4668
      %v4676 = vmul.f32 %v4662, %v4668
      %v4677 = vmul.f32 %v4663, %v4673
      %v4678 = vmul.f32 %v4664, %v4673
      %4679 = vset.pattern.permute.xlu0 1
      %4680 = vperm.xlu0 %4679, %v4655
      %v4681 = vpop.permute.xlu0 %4680
      %4683 = vset.pattern.permute.xlu0 1
      %4684 = vperm.xlu0 %4683, %v4656
      %v4685 = vpop.permute.xlu0 %4684
      %v4687 = vadd.f32 %v4675, %v4681
      %v4688 = vadd.f32 %v4676, %v4681
      %v4689 = vadd.f32 %v4677, %v4685
      %v4690 = vadd.f32 %v4678, %v4685
      %vm4691 = vcmp.ge.f32.partialorder %v4687, 0.0
      %vm4692 = vcmp.ge.f32.partialorder %v4688, 0.0
      %vm4693 = vcmp.ge.f32.partialorder %v4689, 0.0
      %vm4694 = vcmp.ge.f32.partialorder %v4690, 0.0
      %v4695 = vmul.f32 %v4687, 0.01
      %v4696 = vmul.f32 %v4688, 0.01
      %v4697 = vmul.f32 %v4689, 0.01
      %v4698 = vmul.f32 %v4690, 0.01
      %v4699 = vsel %vm4691, %v4687, %v4695
      %v4700 = vsel %vm4692, %v4688, %v4696
      %v4701 = vsel %vm4693, %v4689, %v4697
      %v4702 = vsel %vm4694, %v4690, %v4698
      %v4703 = vmul.f32 %v4699, %v563
      %v4704 = vmul.f32 %v4700, %v564
      %v4705 = vmul.f32 %v4701, %v563
      %v4706 = vmul.f32 %v4702, %v564
      %4707 = vrot.lane.b32.xlu0 %v4703, 9
      %v4708 = vpop.permute.xlu0 %4707
      %4709 = vrot.lane.b32.xlu0 %v4705, 9
      %v4710 = vpop.permute.xlu0 %4709
      %4711 = vrot.lane.b32.xlu0 %v4704, 9
      %v4712 = vpop.permute.xlu0 %4711
      %4713 = vrot.lane.b32.xlu0 %v4706, 9
      %v4714 = vpop.permute.xlu0 %4713
      %v4715 = vsel %vm1603, %v4708, %v4712
      %v4716 = vsel %vm1603, %v4710, %v4714
      %v4717 = vsel %vm1603, %v4712, %v4708
      %v4718 = vsel %vm1603, %v4714, %v4710
      %v4719 = vsel %vm1610, %v4717, 0.0
      %v4720 = vsel %vm1611, %v4715, 0.0
      %v4721 = vsel %vm1610, %v4718, 0.0
      %v4722 = vsel %vm1611, %v4716, 0.0
      %4723 = vst [vmem:[#allocation2] sm:$0xff] %v4719
      %4724 = vst [vmem:[#allocation2 + $0x8] sm:$0xff] %v4720
      %4725 = vst [vmem:[#allocation2 + $0x10] sm:$0xff] %v4721
      %4726 = vst [vmem:[#allocation2 + $0x18] sm:$0xff] %v4722
      %4727 = vrot.lane.b32.xlu0 %v4703, 8
      %v4728 = vpop.permute.xlu0 %4727
      %4729 = vrot.lane.b32.xlu0 %v4705, 8
      %v4730 = vpop.permute.xlu0 %4729
      %4731 = vrot.lane.b32.xlu0 %v4704, 8
      %v4732 = vpop.permute.xlu0 %4731
      %4733 = vrot.lane.b32.xlu0 %v4706, 8
      %v4734 = vpop.permute.xlu0 %4733
      %v4735 = vsel %vm1628, %v4728, %v4732
      %v4736 = vsel %vm1628, %v4730, %v4734
      %v4737 = vsel %vm1628, %v4732, %v4728
      %v4738 = vsel %vm1628, %v4734, %v4730
      %v4739 = vsel %vm1635, %v4737, 0.0
      %v4740 = vsel %vm1636, %v4735, 0.0
      %v4741 = vsel %vm1635, %v4738, 0.0
      %v4742 = vsel %vm1636, %v4736, 0.0
      %4743 = vst [vmem:[#allocation2 + $0x20] sm:$0xff] %v4739
      %4744 = vst [vmem:[#allocation2 + $0x28] sm:$0xff] %v4740
      %4745 = vst [vmem:[#allocation2 + $0x30] sm:$0xff] %v4741
      %4746 = vst [vmem:[#allocation2 + $0x38] sm:$0xff] %v4742
      %4747 = vrot.lane.b32.xlu0 %v4703, 7
      %v4748 = vpop.permute.xlu0 %4747
      %4749 = vrot.lane.b32.xlu0 %v4705, 7
      %v4750 = vpop.permute.xlu0 %4749
      %4751 = vrot.lane.b32.xlu0 %v4704, 7
      %v4752 = vpop.permute.xlu0 %4751
      %4753 = vrot.lane.b32.xlu0 %v4706, 7
      %v4754 = vpop.permute.xlu0 %4753
      %v4755 = vsel %vm1653, %v4748, %v4752
      %v4756 = vsel %vm1653, %v4750, %v4754
      %v4757 = vsel %vm1653, %v4752, %v4748
      %v4758 = vsel %vm1653, %v4754, %v4750
      %v4759 = vsel %vm1660, %v4757, 0.0
      %v4760 = vsel %vm1661, %v4755, 0.0
      %v4761 = vsel %vm1660, %v4758, 0.0
      %v4762 = vsel %vm1661, %v4756, 0.0
      %4763 = vst [vmem:[#allocation2 + $0x40] sm:$0xff] %v4759
      %4764 = vst [vmem:[#allocation2 + $0x48] sm:$0xff] %v4760
      %4765 = vst [vmem:[#allocation2 + $0x50] sm:$0xff] %v4761
      %4766 = vst [vmem:[#allocation2 + $0x58] sm:$0xff] %v4762
      %4767 = vrot.lane.b32.xlu0 %v4703, 1
      %v4768 = vpop.permute.xlu0 %4767
      %4769 = vrot.lane.b32.xlu0 %v4705, 1
      %v4770 = vpop.permute.xlu0 %4769
      %4771 = vrot.lane.b32.xlu0 %v4704, 1
      %v4772 = vpop.permute.xlu0 %4771
      %4773 = vrot.lane.b32.xlu0 %v4706, 1
      %v4774 = vpop.permute.xlu0 %4773
      %v4775 = vsel %vm654, %v4768, %v4772
      %v4776 = vsel %vm654, %v4770, %v4774
      %v4777 = vsel %vm654, %v4772, %v4768
      %v4778 = vsel %vm654, %v4774, %v4770
      %v4779 = vsel %vm1684, %v4777, 0.0
      %v4780 = vsel %vm1685, %v4775, 0.0
      %v4781 = vsel %vm1684, %v4778, 0.0
      %v4782 = vsel %vm1685, %v4776, 0.0
      %4783 = vst [vmem:[#allocation2 + $0x60] sm:$0xff] %v4779
      %4784 = vst [vmem:[#allocation2 + $0x68] sm:$0xff] %v4780
      %4785 = vst [vmem:[#allocation2 + $0x70] sm:$0xff] %v4781
      %4786 = vst [vmem:[#allocation2 + $0x78] sm:$0xff] %v4782
      %v4787 = vsel %vm1696, %v4703, 0.0
      %v4788 = vsel %vm1697, %v4704, 0.0
      %v4789 = vsel %vm1696, %v4705, 0.0
      %v4790 = vsel %vm1697, %v4706, 0.0
      %4791 = vst [vmem:[#allocation2 + $0x80] sm:$0xff] %v4787
      %4792 = vst [vmem:[#allocation2 + $0x88] sm:$0xff] %v4788
      %4793 = vst [vmem:[#allocation2 + $0x90] sm:$0xff] %v4789
      %4794 = vst [vmem:[#allocation2 + $0x98] sm:$0xff] %v4790
      %4795 = vrot.lane.b32.xlu0 %v4703, 127
      %v4796 = vpop.permute.xlu0 %4795
      %4797 = vrot.lane.b32.xlu0 %v4705, 127
      %v4798 = vpop.permute.xlu0 %4797
      %4799 = vrot.lane.b32.xlu0 %v4704, 127
      %v4800 = vpop.permute.xlu0 %4799
      %4801 = vrot.lane.b32.xlu0 %v4706, 127
      %v4802 = vpop.permute.xlu0 %4801
      %v4803 = vsel %vm691, %v4796, %v4800
      %v4804 = vsel %vm691, %v4798, %v4802
      %v4805 = vsel %vm691, %v4800, %v4796
      %v4806 = vsel %vm691, %v4802, %v4798
      %v4807 = vsel %vm1720, %v4803, 0.0
      %v4808 = vsel %vm1721, %v4805, 0.0
      %v4809 = vsel %vm1720, %v4804, 0.0
      %v4810 = vsel %vm1721, %v4806, 0.0
      %4811 = vst [vmem:[#allocation2 + $0xa0] sm:$0xff] %v4807
      %4812 = vst [vmem:[#allocation2 + $0xa8] sm:$0xff] %v4808
      %4813 = vst [vmem:[#allocation2 + $0xb0] sm:$0xff] %v4809
      %4814 = vst [vmem:[#allocation2 + $0xb8] sm:$0xff] %v4810
      %4815 = vrot.lane.b32.xlu0 %v4703, 121
      %v4816 = vpop.permute.xlu0 %4815
      %4817 = vrot.lane.b32.xlu0 %v4705, 121
      %v4818 = vpop.permute.xlu0 %4817
      %4819 = vrot.lane.b32.xlu0 %v4704, 121
      %v4820 = vpop.permute.xlu0 %4819
      %4821 = vrot.lane.b32.xlu0 %v4706, 121
      %v4822 = vpop.permute.xlu0 %4821
      %v4823 = vsel %vm1738, %v4816, %v4820
      %v4824 = vsel %vm1738, %v4818, %v4822
      %v4825 = vsel %vm1738, %v4820, %v4816
      %v4826 = vsel %vm1738, %v4822, %v4818
      %v4827 = vsel %vm1745, %v4823, 0.0
      %v4828 = vsel %vm1746, %v4825, 0.0
      %v4829 = vsel %vm1745, %v4824, 0.0
      %v4830 = vsel %vm1746, %v4826, 0.0
      %4831 = vst [vmem:[#allocation2 + $0xc0] sm:$0xff] %v4827
      %4832 = vst [vmem:[#allocation2 + $0xc8] sm:$0xff] %v4828
      %4833 = vst [vmem:[#allocation2 + $0xd0] sm:$0xff] %v4829
      %4834 = vst [vmem:[#allocation2 + $0xd8] sm:$0xff] %v4830
      %4835 = vrot.lane.b32.xlu0 %v4703, 120
      %v4836 = vpop.permute.xlu0 %4835
      %4837 = vrot.lane.b32.xlu0 %v4705, 120
      %v4838 = vpop.permute.xlu0 %4837
      %4839 = vrot.lane.b32.xlu0 %v4704, 120
      %v4840 = vpop.permute.xlu0 %4839
      %4841 = vrot.lane.b32.xlu0 %v4706, 120
      %v4842 = vpop.permute.xlu0 %4841
      %v4843 = vsel %vm1763, %v4836, %v4840
      %v4844 = vsel %vm1763, %v4838, %v4842
      %v4845 = vsel %vm1763, %v4840, %v4836
      %v4846 = vsel %vm1763, %v4842, %v4838
      %v4847 = vsel %vm1770, %v4843, 0.0
      %v4848 = vsel %vm1771, %v4845, 0.0
      %v4849 = vsel %vm1770, %v4844, 0.0
      %v4850 = vsel %vm1771, %v4846, 0.0
      %4851 = vst [vmem:[#allocation2 + $0xe0] sm:$0xff] %v4847
      %4852 = vst [vmem:[#allocation2 + $0xe8] sm:$0xff] %v4848
      %4853 = vst [vmem:[#allocation2 + $0xf0] sm:$0xff] %v4849
      %4854 = vst [vmem:[#allocation2 + $0xf8] sm:$0xff] %v4850
      %4855 = vrot.lane.b32.xlu0 %v4703, 119
      %v4856 = vpop.permute.xlu0 %4855
      %4857 = vrot.lane.b32.xlu0 %v4705, 119
      %v4858 = vpop.permute.xlu0 %4857
      %4859 = vrot.lane.b32.xlu0 %v4704, 119
      %v4860 = vpop.permute.xlu0 %4859
      %4861 = vrot.lane.b32.xlu0 %v4706, 119
      %v4862 = vpop.permute.xlu0 %4861
      %v4863 = vsel %vm1788, %v4856, %v4860
      %v4864 = vsel %vm1788, %v4858, %v4862
      %v4865 = vsel %vm1788, %v4860, %v4856
      %v4866 = vsel %vm1788, %v4862, %v4858
      %v4867 = vsel %vm1795, %v4863, 0.0
      %v4868 = vsel %vm1796, %v4865, 0.0
      %v4869 = vsel %vm1795, %v4864, 0.0
      %v4870 = vsel %vm1796, %v4866, 0.0
      %4871 = vst [vmem:[#allocation2 + $0x100] sm:$0xff] %v4867
      %4872 = vst [vmem:[#allocation2 + $0x108] sm:$0xff] %v4868
      %4873 = vst [vmem:[#allocation2 + $0x110] sm:$0xff] %v4869
      %4874 = vst [vmem:[#allocation2 + $0x118] sm:$0xff] %v4870
      %s4875 = scalar_lea.vmem %s5, 96
      %v4876 = vld [vmem:[%s4875] sm:$0xff]
      %v4877 = vld [vmem:[%s4875 + $0x8] sm:$0xff]
      %v4878 = vld [vmem:[#allocation2] sm:$0xff]
      %v4879 = vld [vmem:[#allocation2 + $0x8] sm:$0xff]
      %v4880 = vld [vmem:[#allocation2 + $0x10] sm:$0xff]
      %v4881 = vld [vmem:[#allocation2 + $0x18] sm:$0xff]
      %v4882 = vld [vmem:[#allocation2 + $0x20] sm:$0xff]
      %v4883 = vld [vmem:[#allocation2 + $0x28] sm:$0xff]
      %v4884 = vld [vmem:[#allocation2 + $0x30] sm:$0xff]
      %v4885 = vld [vmem:[#allocation2 + $0x38] sm:$0xff]
      %v4886 = vld [vmem:[#allocation2 + $0x40] sm:$0xff]
      %v4887 = vld [vmem:[#allocation2 + $0x48] sm:$0xff]
      %v4888 = vld [vmem:[#allocation2 + $0x50] sm:$0xff]
      %v4889 = vld [vmem:[#allocation2 + $0x58] sm:$0xff]
      %v4890 = vld [vmem:[#allocation2 + $0x60] sm:$0xff]
      %v4891 = vld [vmem:[#allocation2 + $0x68] sm:$0xff]
      %v4892 = vld [vmem:[#allocation2 + $0x70] sm:$0xff]
      %v4893 = vld [vmem:[#allocation2 + $0x78] sm:$0xff]
      %v4894 = vld [vmem:[#allocation2 + $0x80] sm:$0xff]
      %v4895 = vld [vmem:[#allocation2 + $0x88] sm:$0xff]
      %v4896 = vld [vmem:[#allocation2 + $0x90] sm:$0xff]
      %v4897 = vld [vmem:[#allocation2 + $0x98] sm:$0xff]
      %v4898 = vld [vmem:[#allocation2 + $0xa0] sm:$0xff]
      %v4899 = vld [vmem:[#allocation2 + $0xa8] sm:$0xff]
      %v4900 = vld [vmem:[#allocation2 + $0xb0] sm:$0xff]
      %v4901 = vld [vmem:[#allocation2 + $0xb8] sm:$0xff]
      %v4902 = vld [vmem:[#allocation2 + $0xc0] sm:$0xff]
      %v4903 = vld [vmem:[#allocation2 + $0xc8] sm:$0xff]
      %v4904 = vld [vmem:[#allocation2 + $0xd0] sm:$0xff]
      %v4905 = vld [vmem:[#allocation2 + $0xd8] sm:$0xff]
      %v4906 = vld [vmem:[#allocation2 + $0xe0] sm:$0xff]
      %v4907 = vld [vmem:[#allocation2 + $0xe8] sm:$0xff]
      %v4908 = vld [vmem:[#allocation2 + $0xf0] sm:$0xff]
      %v4909 = vld [vmem:[#allocation2 + $0xf8] sm:$0xff]
      %v4910 = vld [vmem:[#allocation2 + $0x100] sm:$0xff]
      %v4911 = vld [vmem:[#allocation2 + $0x108] sm:$0xff]
      %v4912 = vld [vmem:[#allocation2 + $0x110] sm:$0xff]
      %v4913 = vld [vmem:[#allocation2 + $0x118] sm:$0xff]
      %v4914 = vpack.c.bf16 %v4880, %v4878
      %v4915 = vpack.c.bf16 %v4881, %v4879
      %v4916 = vpack.c.bf16 %v4884, %v4882
      %v4917 = vpack.c.bf16 %v4885, %v4883
      %v4918 = vpack.c.bf16 %v4888, %v4886
      %v4919 = vpack.c.bf16 %v4889, %v4887
      %v4920 = vpack.c.bf16 %v4892, %v4890
      %v4921 = vpack.c.bf16 %v4893, %v4891
      %v4922 = vpack.c.bf16 %v4896, %v4894
      %v4923 = vpack.c.bf16 %v4897, %v4895
      %v4924 = vpack.c.bf16 %v4900, %v4898
      %v4925 = vpack.c.bf16 %v4901, %v4899
      %v4926 = vpack.c.bf16 %v4904, %v4902
      %v4927 = vpack.c.bf16 %v4905, %v4903
      %v4928 = vpack.c.bf16 %v4908, %v4906
      %v4929 = vpack.c.bf16 %v4909, %v4907
      %v4930 = vpack.c.bf16 %v4912, %v4910
      %v4931 = vpack.c.bf16 %v4913, %v4911
      %v4934 = vunpack.c.l.b16 %v4876
      %v4935 = vunpack.c.h.b16 %v4876
      %v4936 = vunpack.c.l.b16 %v4877
      %v4937 = vunpack.c.h.b16 %v4877
      %v4938 = vpack.c.b16 %v4936, %v4934
      %v4939 = vpack.c.b16 %v4937, %v4935
      %v4942 = vsel %vm1871, %v4939, 0
      %4944 = vmatprep.subr.bf16.mxu0 %v4915
      %4945 = vmatpush1.bf16.msra.mxu0 %v4914
      %4946 = vmatprep.subr.bf16.mxu0 %v4917
      %4947 = vmatpush1.bf16.msra.mxu0 %v4916
      %4948 = vmatprep.subr.bf16.mxu0 %v4919
      %4949 = vmatpush1.bf16.msra.mxu0 %v4918
      %4950 = vmatprep.subr.bf16.mxu0 %v4921
      %4951 = vmatpush1.bf16.msra.mxu0 %v4920
      %4952 = vmatprep.subr.bf16.mxu0 %v4923
      %4953 = vmatpush1.bf16.msra.mxu0 %v4922
      %4954 = vmatprep.subr.bf16.mxu0 %v4925
      %4955 = vmatpush1.bf16.msra.mxu0 %v4924
      %4956 = vmatprep.subr.bf16.mxu0 %v4927
      %4957 = vmatpush1.bf16.msra.mxu0 %v4926
      %4958 = vmatprep.subr.bf16.mxu0 %v4929
      %4959 = vmatpush1.bf16.msra.mxu0 %v4928
      %4960 = vmatprep.subr.bf16.mxu0 %v4931
      %4961 = vmatpush1.bf16.msra.mxu0 %v4930
      %4962 = vmatprep.subr.bf16.mxu0 0
      %4963 = vmatpush1.bf16.msra.mxu0 0
      %4964 = vmatprep.subr.bf16.mxu0 0
      %4965 = vmatpush1.bf16.msra.mxu0 0
      %4966 = vmatprep.subr.bf16.mxu0 0
      %4967 = vmatpush1.bf16.msra.mxu0 0
      %4968 = vmatprep.subr.bf16.mxu0 0
      %4969 = vmatpush1.bf16.msra.mxu0 0
      %4970 = vmatprep.subr.bf16.mxu0 0
      %4971 = vmatpush1.bf16.msra.mxu0 0
      %4972 = vmatprep.subr.bf16.mxu0 0
      %4973 = vmatpush1.bf16.msra.mxu0 0
      %4974 = vmatprep.subr.bf16.mxu0 0
      %4975 = vmatpush1.bf16.msra.mxu0 0
      %4976 = vmatprep.mubr.bf16.mxu0 %v4942
      %4977 = vmatmul.mubr.bf16.gmra.mrb[0].mxu0 %v4938
      %v4978 = vpop.f32.mrb[0].mxu0
      %v4979 = vadd.f32 0.0, %v4978
      %v4980 = vpop.f32.mrb[0].mxu0
      %v4981 = vadd.f32 0.0, %v4980
      %v4982 = vpop.f32.mrb[0].mxu0
      %v4983 = vadd.f32 0.0, %v4982
      %v4984 = vpop.f32.mrb[0].mxu0
      %v4985 = vadd.f32 0.0, %v4984
      %4986 = vdwg.mxu0
      %v4987 = vadd.f32 %v4979, %v4981
      %4988 = vadd.xlane.f32.xlu0 %v4987
      %v4989 = vpop.xlane.xlu0 %4988
      %v4990 = vadd.f32 %v4983, %v4985
      %4991 = vadd.xlane.f32.xlu0 %v4990
      %v4992 = vpop.xlane.xlu0 %4991
      %v4993 = vmul.f32 %v4989, 0.015625
      %v4994 = vmul.f32 %v4992, 0.015625
      %v4995 = vsub.f32 %v4979, %v4993
      %v4996 = vsub.f32 %v4981, %v4993
      %v4997 = vsub.f32 %v4983, %v4994
      %v4998 = vsub.f32 %v4985, %v4994
      %v4999 = vmul.f32 %v4995, %v563
      %v5000 = vmul.f32 %v4996, %v564
      %v5001 = vmul.f32 %v4997, %v563
      %v5002 = vmul.f32 %v4998, %v564
      %v5003 = vmul.f32 %v4999, %v4999
      %v5004 = vmul.f32 %v5000, %v5000
      %v5005 = vmul.f32 %v5001, %v5001
      %v5006 = vmul.f32 %v5002, %v5002
      %v5007 = vadd.f32 %v5003, %v5004
      %5008 = vadd.xlane.f32.xlu0 %v5007
      %v5009 = vpop.xlane.xlu0 %5008
      %v5010 = vadd.f32 %v5005, %v5006
      %5011 = vadd.xlane.f32.xlu0 %v5010
      %v5012 = vpop.xlane.xlu0 %5011
      %v5013 = vmul.f32 %v5009, 0.015625
      %v5014 = vmul.f32 %v5012, 0.015625
      %s5015 = scalar_lea.vmem %s6, 96
      %v5016 = vld [vmem:[%s5015] sm:$0xff]
      %v5017 = vld [vmem:[%s5015 + $0x8] sm:$0xff]
      %v5018 = vadd.f32 %v5013, 1e-05
      %v5019 = vadd.f32 %v5014, 1e-05
      %v5020 = vrsqrt.pop %v5018
      %v5021 = vrsqrt.pop %v5019
      %v5022 = vmul.f32 %v4999, %v5020
      %v5023 = vmul.f32 %v5000, %v5020
      %v5024 = vmul.f32 %v5001, %v5021
      %v5025 = vmul.f32 %v5002, %v5021
      %5027 = vset.pattern.permute.xlu0 0
      %5028 = vperm.xlu0 %5027, %v5016
      %v5029 = vpop.permute.xlu0 %5028
      %5032 = vset.pattern.permute.xlu0 0
      %5033 = vperm.xlu0 %5032, %v5017
      %v5034 = vpop.permute.xlu0 %5033
      %v5036 = vmul.f32 %v5022, %v5029
      %v5037 = vmul.f32 %v5023, %v5029
      %v5038 = vmul.f32 %v5024, %v5034
      %v5039 = vmul.f32 %v5025, %v5034
      %5040 = vset.pattern.permute.xlu0 1
      %5041 = vperm.xlu0 %5040, %v5016
      %v5042 = vpop.permute.xlu0 %5041
      %5044 = vset.pattern.permute.xlu0 1
      %5045 = vperm.xlu0 %5044, %v5017
      %v5046 = vpop.permute.xlu0 %5045
      %v5048 = vadd.f32 %v5036, %v5042
      %v5049 = vadd.f32 %v5037, %v5042
      %v5050 = vadd.f32 %v5038, %v5046
      %v5051 = vadd.f32 %v5039, %v5046
      %vm5052 = vcmp.ge.f32.partialorder %v5048, 0.0
      %vm5053 = vcmp.ge.f32.partialorder %v5049, 0.0
      %vm5054 = vcmp.ge.f32.partialorder %v5050, 0.0
      %vm5055 = vcmp.ge.f32.partialorder %v5051, 0.0
      %v5056 = vmul.f32 %v5048, 0.01
      %v5057 = vmul.f32 %v5049, 0.01
      %v5058 = vmul.f32 %v5050, 0.01
      %v5059 = vmul.f32 %v5051, 0.01
      %v5060 = vsel %vm5052, %v5048, %v5056
      %v5061 = vsel %vm5053, %v5049, %v5057
      %v5062 = vsel %vm5054, %v5050, %v5058
      %v5063 = vsel %vm5055, %v5051, %v5059
      %v5064 = vmul.f32 %v5060, %v563
      %v5065 = vmul.f32 %v5061, %v564
      %v5066 = vmul.f32 %v5062, %v563
      %v5067 = vmul.f32 %v5063, %v564
      %v5068 = vpack.c.bf16 %v5066, %v5064
      %v5069 = vpack.c.bf16 %v5067, %v5065
      %v5070 = vld [vmem:[%s10] sm:$0xff]
      %v5071 = vld [vmem:[%s10 + $0x8] sm:$0xff]
      %v5072 = vld [vmem:[%s10 + $0x10] sm:$0xff]
      %v5073 = vld [vmem:[%s10 + $0x18] sm:$0xff]
      %v5074 = vld [vmem:[%s10 + $0x20] sm:$0xff]
      %v5075 = vld [vmem:[%s10 + $0x28] sm:$0xff]
      %v5076 = vld [vmem:[%s10 + $0x30] sm:$0xff]
      %v5077 = vld [vmem:[%s10 + $0x38] sm:$0xff]
      %v5078 = vld [vmem:[%s10 + $0x40] sm:$0xff]
      %v5079 = vld [vmem:[%s10 + $0x48] sm:$0xff]
      %v5080 = vld [vmem:[%s10 + $0x50] sm:$0xff]
      %v5081 = vld [vmem:[%s10 + $0x58] sm:$0xff]
      %v5082 = vld [vmem:[%s10 + $0x60] sm:$0xff]
      %v5083 = vld [vmem:[%s10 + $0x68] sm:$0xff]
      %v5084 = vld [vmem:[%s10 + $0x70] sm:$0xff]
      %v5085 = vld [vmem:[%s10 + $0x78] sm:$0xff]
      %v5086 = vld [vmem:[%s10 + $0x80] sm:$0xff]
      %v5087 = vld [vmem:[%s10 + $0x88] sm:$0xff]
      %v5088 = vld [vmem:[%s10 + $0x90] sm:$0xff]
      %v5089 = vld [vmem:[%s10 + $0x98] sm:$0xff]
      %v5090 = vld [vmem:[%s10 + $0xa0] sm:$0xff]
      %v5091 = vld [vmem:[%s10 + $0xa8] sm:$0xff]
      %v5092 = vld [vmem:[%s10 + $0xb0] sm:$0xff]
      %v5093 = vld [vmem:[%s10 + $0xb8] sm:$0xff]
      %v5094 = vld [vmem:[%s10 + $0xc0] sm:$0xff]
      %v5095 = vld [vmem:[%s10 + $0xc8] sm:$0xff]
      %v5096 = vld [vmem:[%s10 + $0xd0] sm:$0xff]
      %v5097 = vld [vmem:[%s10 + $0xd8] sm:$0xff]
      %v5098 = vld [vmem:[%s10 + $0xe0] sm:$0xff]
      %v5099 = vld [vmem:[%s10 + $0xe8] sm:$0xff]
      %v5100 = vld [vmem:[%s10 + $0xf0] sm:$0xff]
      %v5101 = vld [vmem:[%s10 + $0xf8] sm:$0xff]
      %v5134 = vunpack.c.l.b16 %v5070
      %v5135 = vunpack.c.h.b16 %v5070
      %v5136 = vunpack.c.l.b16 %v5071
      %v5137 = vunpack.c.h.b16 %v5071
      %v5138 = vunpack.c.l.b16 %v5072
      %v5139 = vunpack.c.h.b16 %v5072
      %v5140 = vunpack.c.l.b16 %v5073
      %v5141 = vunpack.c.h.b16 %v5073
      %v5142 = vunpack.c.l.b16 %v5074
      %v5143 = vunpack.c.h.b16 %v5074
      %v5144 = vunpack.c.l.b16 %v5075
      %v5145 = vunpack.c.h.b16 %v5075
      %v5146 = vunpack.c.l.b16 %v5076
      %v5147 = vunpack.c.h.b16 %v5076
      %v5148 = vunpack.c.l.b16 %v5077
      %v5149 = vunpack.c.h.b16 %v5077
      %v5150 = vunpack.c.l.b16 %v5078
      %v5151 = vunpack.c.h.b16 %v5078
      %v5152 = vunpack.c.l.b16 %v5079
      %v5153 = vunpack.c.h.b16 %v5079
      %v5154 = vunpack.c.l.b16 %v5080
      %v5155 = vunpack.c.h.b16 %v5080
      %v5156 = vunpack.c.l.b16 %v5081
      %v5157 = vunpack.c.h.b16 %v5081
      %v5158 = vunpack.c.l.b16 %v5082
      %v5159 = vunpack.c.h.b16 %v5082
      %v5160 = vunpack.c.l.b16 %v5083
      %v5161 = vunpack.c.h.b16 %v5083
      %v5162 = vunpack.c.l.b16 %v5084
      %v5163 = vunpack.c.h.b16 %v5084
      %v5164 = vunpack.c.l.b16 %v5085
      %v5165 = vunpack.c.h.b16 %v5085
      %v5166 = vunpack.c.l.b16 %v5086
      %v5167 = vunpack.c.h.b16 %v5086
      %v5168 = vunpack.c.l.b16 %v5087
      %v5169 = vunpack.c.h.b16 %v5087
      %v5170 = vunpack.c.l.b16 %v5088
      %v5171 = vunpack.c.h.b16 %v5088
      %v5172 = vunpack.c.l.b16 %v5089
      %v5173 = vunpack.c.h.b16 %v5089
      %v5174 = vunpack.c.l.b16 %v5090
      %v5175 = vunpack.c.h.b16 %v5090
      %v5176 = vunpack.c.l.b16 %v5091
      %v5177 = vunpack.c.h.b16 %v5091
      %v5178 = vunpack.c.l.b16 %v5092
      %v5179 = vunpack.c.h.b16 %v5092
      %v5180 = vunpack.c.l.b16 %v5093
      %v5181 = vunpack.c.h.b16 %v5093
      %v5182 = vunpack.c.l.b16 %v5094
      %v5183 = vunpack.c.h.b16 %v5094
      %v5184 = vunpack.c.l.b16 %v5095
      %v5185 = vunpack.c.h.b16 %v5095
      %v5186 = vunpack.c.l.b16 %v5096
      %v5187 = vunpack.c.h.b16 %v5096
      %v5188 = vunpack.c.l.b16 %v5097
      %v5189 = vunpack.c.h.b16 %v5097
      %v5190 = vunpack.c.l.b16 %v5098
      %v5191 = vunpack.c.h.b16 %v5098
      %v5192 = vunpack.c.l.b16 %v5099
      %v5193 = vunpack.c.h.b16 %v5099
      %v5194 = vunpack.c.l.b16 %v5100
      %v5195 = vunpack.c.h.b16 %v5100
      %v5196 = vunpack.c.l.b16 %v5101
      %v5197 = vunpack.c.h.b16 %v5101
      %v5198 = vpack.c.b16 %v5136, %v5134
      %v5199 = vpack.c.b16 %v5137, %v5135
      %v5200 = vpack.c.b16 %v5140, %v5138
      %v5201 = vpack.c.b16 %v5141, %v5139
      %v5202 = vpack.c.b16 %v5144, %v5142
      %v5203 = vpack.c.b16 %v5145, %v5143
      %v5204 = vpack.c.b16 %v5148, %v5146
      %v5205 = vpack.c.b16 %v5149, %v5147
      %v5206 = vpack.c.b16 %v5152, %v5150
      %v5207 = vpack.c.b16 %v5153, %v5151
      %v5208 = vpack.c.b16 %v5156, %v5154
      %v5209 = vpack.c.b16 %v5157, %v5155
      %v5210 = vpack.c.b16 %v5160, %v5158
      %v5211 = vpack.c.b16 %v5161, %v5159
      %v5212 = vpack.c.b16 %v5164, %v5162
      %v5213 = vpack.c.b16 %v5165, %v5163
      %v5214 = vpack.c.b16 %v5168, %v5166
      %v5215 = vpack.c.b16 %v5169, %v5167
      %v5216 = vpack.c.b16 %v5172, %v5170
      %v5217 = vpack.c.b16 %v5173, %v5171
      %v5218 = vpack.c.b16 %v5176, %v5174
      %v5219 = vpack.c.b16 %v5177, %v5175
      %v5220 = vpack.c.b16 %v5180, %v5178
      %v5221 = vpack.c.b16 %v5181, %v5179
      %v5222 = vpack.c.b16 %v5184, %v5182
      %v5223 = vpack.c.b16 %v5185, %v5183
      %v5224 = vpack.c.b16 %v5188, %v5186
      %v5225 = vpack.c.b16 %v5189, %v5187
      %v5226 = vpack.c.b16 %v5192, %v5190
      %v5227 = vpack.c.b16 %v5193, %v5191
      %v5228 = vpack.c.b16 %v5196, %v5194
      %v5229 = vpack.c.b16 %v5197, %v5195
      %5262 = vmatprep.subr.bf16.mxu0 %v5199
      %5263 = vmatpush1.bf16.msra.mxu0 %v5198
      %5264 = vmatprep.subr.bf16.mxu0 %v5201
      %5265 = vmatpush1.bf16.msra.mxu0 %v5200
      %5266 = vmatprep.subr.bf16.mxu0 %v5203
      %5267 = vmatpush1.bf16.msra.mxu0 %v5202
      %5268 = vmatprep.subr.bf16.mxu0 %v5205
      %5269 = vmatpush1.bf16.msra.mxu0 %v5204
      %5270 = vmatprep.subr.bf16.mxu0 %v5207
      %5271 = vmatpush1.bf16.msra.mxu0 %v5206
      %5272 = vmatprep.subr.bf16.mxu0 %v5209
      %5273 = vmatpush1.bf16.msra.mxu0 %v5208
      %5274 = vmatprep.subr.bf16.mxu0 %v5211
      %5275 = vmatpush1.bf16.msra.mxu0 %v5210
      %5276 = vmatprep.subr.bf16.mxu0 %v5213
      %5277 = vmatpush1.bf16.msra.mxu0 %v5212
      %5278 = vmatprep.subr.bf16.mxu0 %v5215
      %5279 = vmatpush1.bf16.msra.mxu0 %v5214
      %5280 = vmatprep.subr.bf16.mxu0 %v5217
      %5281 = vmatpush1.bf16.msra.mxu0 %v5216
      %5282 = vmatprep.subr.bf16.mxu0 %v5219
      %5283 = vmatpush1.bf16.msra.mxu0 %v5218
      %5284 = vmatprep.subr.bf16.mxu0 %v5221
      %5285 = vmatpush1.bf16.msra.mxu0 %v5220
      %5286 = vmatprep.subr.bf16.mxu0 %v5223
      %5287 = vmatpush1.bf16.msra.mxu0 %v5222
      %5288 = vmatprep.subr.bf16.mxu0 %v5225
      %5289 = vmatpush1.bf16.msra.mxu0 %v5224
      %5290 = vmatprep.subr.bf16.mxu0 %v5227
      %5291 = vmatpush1.bf16.msra.mxu0 %v5226
      %5292 = vmatprep.subr.bf16.mxu0 %v5229
      %5293 = vmatpush1.bf16.msra.mxu0 %v5228
      %5294 = vmatprep.mubr.bf16.mxu0 %v5069
      %5295 = vmatmul.mubr.bf16.gmra.mrb[0].mxu0 %v5068
      %v5296 = vpop.f32.mrb[0].mxu0
      %v5297 = vadd.f32 0.0, %v5296
      %v5298 = vpop.f32.mrb[0].mxu0
      %v5299 = vadd.f32 0.0, %v5298
      %v5300 = vpop.f32.mrb[0].mxu0
      %v5301 = vadd.f32 0.0, %v5300
      %v5302 = vpop.f32.mrb[0].mxu0
      %v5303 = vadd.f32 0.0, %v5302
      %5304 = vdwg.mxu0
      %5305 = vrot.lane.b32.xlu0 %v5297, 17
      %v5306 = vpop.permute.xlu0 %5305
      %5307 = vrot.lane.b32.xlu0 %v5301, 17
      %v5308 = vpop.permute.xlu0 %5307
      %5309 = vrot.lane.b32.xlu0 %v5299, 17
      %v5310 = vpop.permute.xlu0 %5309
      %5311 = vrot.lane.b32.xlu0 %v5303, 17
      %v5312 = vpop.permute.xlu0 %5311
      %v5313 = vsel %vm573, %v5306, %v5310
      %v5314 = vsel %vm573, %v5308, %v5312
      %v5315 = vsel %vm573, %v5310, %v5306
      %v5316 = vsel %vm573, %v5312, %v5308
      %v5317 = vsel %vm578, %v5315, 0.0
      %v5318 = vsel %vm579, %v5313, 0.0
      %v5319 = vsel %vm578, %v5316, 0.0
      %v5320 = vsel %vm579, %v5314, 0.0
      %5321 = vst [vmem:[#allocation2] sm:$0xff] %v5317
      %5322 = vst [vmem:[#allocation2 + $0x8] sm:$0xff] %v5318
      %5323 = vst [vmem:[#allocation2 + $0x10] sm:$0xff] %v5319
      %5324 = vst [vmem:[#allocation2 + $0x18] sm:$0xff] %v5320
      %5325 = vst [vmem:[#allocation2 + $0x20] sm:$0xff] %v3870
      %5326 = vst [vmem:[#allocation2 + $0x28] sm:$0xff] %v3871
      %5327 = vrot.lane.b32.xlu0 %v5297, 16
      %v5328 = vpop.permute.xlu0 %5327
      %5329 = vrot.lane.b32.xlu0 %v5301, 16
      %v5330 = vpop.permute.xlu0 %5329
      %5331 = vrot.lane.b32.xlu0 %v5299, 16
      %v5332 = vpop.permute.xlu0 %5331
      %5333 = vrot.lane.b32.xlu0 %v5303, 16
      %v5334 = vpop.permute.xlu0 %5333
      %v5335 = vsel %vm600, %v5328, %v5332
      %v5336 = vsel %vm600, %v5330, %v5334
      %v5337 = vsel %vm600, %v5332, %v5328
      %v5338 = vsel %vm600, %v5334, %v5330
      %v5339 = vsel %vm605, %v5337, 0.0
      %v5340 = vsel %vm606, %v5335, 0.0
      %v5341 = vsel %vm605, %v5338, 0.0
      %v5342 = vsel %vm606, %v5336, 0.0
      %5343 = vst [vmem:[#allocation2 + $0x30] sm:$0xff] %v5339
      %5344 = vst [vmem:[#allocation2 + $0x38] sm:$0xff] %v5340
      %5345 = vst [vmem:[#allocation2 + $0x40] sm:$0xff] %v5341
      %5346 = vst [vmem:[#allocation2 + $0x48] sm:$0xff] %v5342
      %5347 = vst [vmem:[#allocation2 + $0x50] sm:$0xff] %v3880
      %5348 = vst [vmem:[#allocation2 + $0x58] sm:$0xff] %v3881
      %5349 = vrot.lane.b32.xlu0 %v5297, 15
      %v5350 = vpop.permute.xlu0 %5349
      %5351 = vrot.lane.b32.xlu0 %v5301, 15
      %v5352 = vpop.permute.xlu0 %5351
      %5353 = vrot.lane.b32.xlu0 %v5299, 15
      %v5354 = vpop.permute.xlu0 %5353
      %5355 = vrot.lane.b32.xlu0 %v5303, 15
      %v5356 = vpop.permute.xlu0 %5355
      %v5357 = vsel %vm627, %v5350, %v5354
      %v5358 = vsel %vm627, %v5352, %v5356
      %v5359 = vsel %vm627, %v5354, %v5350
      %v5360 = vsel %vm627, %v5356, %v5352
      %v5361 = vsel %vm632, %v5359, 0.0
      %v5362 = vsel %vm633, %v5357, 0.0
      %v5363 = vsel %vm632, %v5360, 0.0
      %v5364 = vsel %vm633, %v5358, 0.0
      %5365 = vst [vmem:[#allocation2 + $0x60] sm:$0xff] %v5361
      %5366 = vst [vmem:[#allocation2 + $0x68] sm:$0xff] %v5362
      %5367 = vst [vmem:[#allocation2 + $0x70] sm:$0xff] %v5363
      %5368 = vst [vmem:[#allocation2 + $0x78] sm:$0xff] %v5364
      %5369 = vst [vmem:[#allocation2 + $0x80] sm:$0xff] %v3890
      %5370 = vst [vmem:[#allocation2 + $0x88] sm:$0xff] %v3891
      %5371 = vrot.lane.b32.xlu0 %v5297, 1
      %v5372 = vpop.permute.xlu0 %5371
      %5373 = vrot.lane.b32.xlu0 %v5301, 1
      %v5374 = vpop.permute.xlu0 %5373
      %5375 = vrot.lane.b32.xlu0 %v5299, 1
      %v5376 = vpop.permute.xlu0 %5375
      %5377 = vrot.lane.b32.xlu0 %v5303, 1
      %v5378 = vpop.permute.xlu0 %5377
      %v5379 = vsel %vm654, %v5372, %v5376
      %v5380 = vsel %vm654, %v5374, %v5378
      %v5381 = vsel %vm654, %v5376, %v5372
      %v5382 = vsel %vm654, %v5378, %v5374
      %v5383 = vsel %vm659, %v5381, 0.0
      %v5384 = vsel %vm660, %v5379, 0.0
      %v5385 = vsel %vm659, %v5382, 0.0
      %v5386 = vsel %vm660, %v5380, 0.0
      %5387 = vst [vmem:[#allocation2 + $0x90] sm:$0xff] %v5383
      %5388 = vst [vmem:[#allocation2 + $0x98] sm:$0xff] %v5384
      %5389 = vst [vmem:[#allocation2 + $0xa0] sm:$0xff] %v5385
      %5390 = vst [vmem:[#allocation2 + $0xa8] sm:$0xff] %v5386
      %5391 = vst [vmem:[#allocation2 + $0xb0] sm:$0xff] %v3900
      %5392 = vst [vmem:[#allocation2 + $0xb8] sm:$0xff] %v3901
      %v5393 = vsel %vm679, %v5297, 0.0
      %v5394 = vsel %vm680, %v5299, 0.0
      %v5395 = vsel %vm679, %v5301, 0.0
      %v5396 = vsel %vm680, %v5303, 0.0
      %5397 = vst [vmem:[#allocation2 + $0xc0] sm:$0xff] %v5393
      %5398 = vst [vmem:[#allocation2 + $0xc8] sm:$0xff] %v5394
      %5399 = vst [vmem:[#allocation2 + $0xd0] sm:$0xff] %v5395
      %5400 = vst [vmem:[#allocation2 + $0xd8] sm:$0xff] %v5396
      %5401 = vst [vmem:[#allocation2 + $0xe0] sm:$0xff] %v3904
      %5402 = vst [vmem:[#allocation2 + $0xe8] sm:$0xff] %v3905
      %5403 = vrot.lane.b32.xlu0 %v5297, 127
      %v5404 = vpop.permute.xlu0 %5403
      %5405 = vrot.lane.b32.xlu0 %v5301, 127
      %v5406 = vpop.permute.xlu0 %5405
      %5407 = vrot.lane.b32.xlu0 %v5299, 127
      %v5408 = vpop.permute.xlu0 %5407
      %5409 = vrot.lane.b32.xlu0 %v5303, 127
      %v5410 = vpop.permute.xlu0 %5409
      %v5411 = vsel %vm691, %v5404, %v5408
      %v5412 = vsel %vm691, %v5406, %v5410
      %v5413 = vsel %vm691, %v5408, %v5404
      %v5414 = vsel %vm691, %v5410, %v5406
      %v5415 = vsel %vm696, %v5411, 0.0
      %v5416 = vsel %vm697, %v5413, 0.0
      %v5417 = vsel %vm696, %v5412, 0.0
      %v5418 = vsel %vm697, %v5414, 0.0
      %5419 = vst [vmem:[#allocation2 + $0xf0] sm:$0xff] %v5415
      %5420 = vst [vmem:[#allocation2 + $0xf8] sm:$0xff] %v5416
      %5421 = vst [vmem:[#allocation2 + $0x100] sm:$0xff] %v5417
      %5422 = vst [vmem:[#allocation2 + $0x108] sm:$0xff] %v5418
      %5423 = vst [vmem:[#allocation2 + $0x110] sm:$0xff] %v3914
      %5424 = vst [vmem:[#allocation2 + $0x118] sm:$0xff] %v3915
      %5425 = vrot.lane.b32.xlu0 %v5297, 113
      %v5426 = vpop.permute.xlu0 %5425
      %5427 = vrot.lane.b32.xlu0 %v5301, 113
      %v5428 = vpop.permute.xlu0 %5427
      %5429 = vrot.lane.b32.xlu0 %v5299, 113
      %v5430 = vpop.permute.xlu0 %5429
      %5431 = vrot.lane.b32.xlu0 %v5303, 113
      %v5432 = vpop.permute.xlu0 %5431
      %v5433 = vsel %vm718, %v5426, %v5430
      %v5434 = vsel %vm718, %v5428, %v5432
      %v5435 = vsel %vm718, %v5430, %v5426
      %v5436 = vsel %vm718, %v5432, %v5428
      %v5437 = vsel %vm723, %v5433, 0.0
      %v5438 = vsel %vm724, %v5435, 0.0
      %v5439 = vsel %vm723, %v5434, 0.0
      %v5440 = vsel %vm724, %v5436, 0.0
      %5441 = vst [vmem:[#allocation2 + $0x120] sm:$0xff] %v5437
      %5442 = vst [vmem:[#allocation2 + $0x128] sm:$0xff] %v5438
      %5443 = vst [vmem:[#allocation2 + $0x130] sm:$0xff] %v5439
      %5444 = vst [vmem:[#allocation2 + $0x138] sm:$0xff] %v5440
      %5445 = vst [vmem:[#allocation2 + $0x140] sm:$0xff] %v3924
      %5446 = vst [vmem:[#allocation2 + $0x148] sm:$0xff] %v3925
      %5447 = vrot.lane.b32.xlu0 %v5297, 112
      %v5448 = vpop.permute.xlu0 %5447
      %5449 = vrot.lane.b32.xlu0 %v5301, 112
      %v5450 = vpop.permute.xlu0 %5449
      %5451 = vrot.lane.b32.xlu0 %v5299, 112
      %v5452 = vpop.permute.xlu0 %5451
      %5453 = vrot.lane.b32.xlu0 %v5303, 112
      %v5454 = vpop.permute.xlu0 %5453
      %v5455 = vsel %vm745, %v5448, %v5452
      %v5456 = vsel %vm745, %v5450, %v5454
      %v5457 = vsel %vm745, %v5452, %v5448
      %v5458 = vsel %vm745, %v5454, %v5450
      %v5459 = vsel %vm750, %v5455, 0.0
      %v5460 = vsel %vm751, %v5457, 0.0
      %v5461 = vsel %vm750, %v5456, 0.0
      %v5462 = vsel %vm751, %v5458, 0.0
      %5463 = vst [vmem:[#allocation2 + $0x150] sm:$0xff] %v5459
      %5464 = vst [vmem:[#allocation2 + $0x158] sm:$0xff] %v5460
      %5465 = vst [vmem:[#allocation2 + $0x160] sm:$0xff] %v5461
      %5466 = vst [vmem:[#allocation2 + $0x168] sm:$0xff] %v5462
      %5467 = vst [vmem:[#allocation2 + $0x170] sm:$0xff] %v3934
      %5468 = vst [vmem:[#allocation2 + $0x178] sm:$0xff] %v3935
      %5469 = vrot.lane.b32.xlu0 %v5297, 111
      %v5470 = vpop.permute.xlu0 %5469
      %5471 = vrot.lane.b32.xlu0 %v5301, 111
      %v5472 = vpop.permute.xlu0 %5471
      %5473 = vrot.lane.b32.xlu0 %v5299, 111
      %v5474 = vpop.permute.xlu0 %5473
      %5475 = vrot.lane.b32.xlu0 %v5303, 111
      %v5476 = vpop.permute.xlu0 %5475
      %v5477 = vsel %vm772, %v5470, %v5474
      %v5478 = vsel %vm772, %v5472, %v5476
      %v5479 = vsel %vm772, %v5474, %v5470
      %v5480 = vsel %vm772, %v5476, %v5472
      %v5481 = vsel %vm777, %v5477, 0.0
      %v5482 = vsel %vm778, %v5479, 0.0
      %v5483 = vsel %vm777, %v5478, 0.0
      %v5484 = vsel %vm778, %v5480, 0.0
      %5485 = vst [vmem:[#allocation2 + $0x180] sm:$0xff] %v5481
      %5486 = vst [vmem:[#allocation2 + $0x188] sm:$0xff] %v5482
      %5487 = vst [vmem:[#allocation2 + $0x190] sm:$0xff] %v5483
      %5488 = vst [vmem:[#allocation2 + $0x198] sm:$0xff] %v5484
      %5489 = vst [vmem:[#allocation2 + $0x1a0] sm:$0xff] %v3944
      %5490 = vst [vmem:[#allocation2 + $0x1a8] sm:$0xff] %v3945
      %s5491 = scalar_lea.vmem %s5, 120
      %v5492 = vld [vmem:[%s5491] sm:$0xff]
      %v5493 = vld [vmem:[#allocation2] sm:$0xff]
      %v5494 = vld [vmem:[#allocation2 + $0x8] sm:$0xff]
      %v5495 = vld [vmem:[#allocation2 + $0x10] sm:$0xff]
      %v5496 = vld [vmem:[#allocation2 + $0x18] sm:$0xff]
      %v5497 = vld [vmem:[#allocation2 + $0x20] sm:$0xff]
      %v5498 = vld [vmem:[#allocation2 + $0x28] sm:$0xff]
      %v5499 = vld [vmem:[#allocation2 + $0x30] sm:$0xff]
      %v5500 = vld [vmem:[#allocation2 + $0x38] sm:$0xff]
      %v5501 = vld [vmem:[#allocation2 + $0x40] sm:$0xff]
      %v5502 = vld [vmem:[#allocation2 + $0x48] sm:$0xff]
      %v5503 = vld [vmem:[#allocation2 + $0x50] sm:$0xff]
      %v5504 = vld [vmem:[#allocation2 + $0x58] sm:$0xff]
      %v5505 = vld [vmem:[#allocation2 + $0x60] sm:$0xff]
      %v5506 = vld [vmem:[#allocation2 + $0x68] sm:$0xff]
      %v5507 = vld [vmem:[#allocation2 + $0x70] sm:$0xff]
      %v5508 = vld [vmem:[#allocation2 + $0x78] sm:$0xff]
      %v5509 = vld [vmem:[#allocation2 + $0x80] sm:$0xff]
      %v5510 = vld [vmem:[#allocation2 + $0x88] sm:$0xff]
      %v5511 = vld [vmem:[#allocation2 + $0x90] sm:$0xff]
      %v5512 = vld [vmem:[#allocation2 + $0x98] sm:$0xff]
      %v5513 = vld [vmem:[#allocation2 + $0xa0] sm:$0xff]
      %v5514 = vld [vmem:[#allocation2 + $0xa8] sm:$0xff]
      %v5515 = vld [vmem:[#allocation2 + $0xb0] sm:$0xff]
      %v5516 = vld [vmem:[#allocation2 + $0xb8] sm:$0xff]
      %v5517 = vld [vmem:[#allocation2 + $0xc0] sm:$0xff]
      %v5518 = vld [vmem:[#allocation2 + $0xc8] sm:$0xff]
      %v5519 = vld [vmem:[#allocation2 + $0xd0] sm:$0xff]
      %v5520 = vld [vmem:[#allocation2 + $0xd8] sm:$0xff]
      %v5521 = vld [vmem:[#allocation2 + $0xe0] sm:$0xff]
      %v5522 = vld [vmem:[#allocation2 + $0xe8] sm:$0xff]
      %v5523 = vld [vmem:[#allocation2 + $0xf0] sm:$0xff]
      %v5524 = vld [vmem:[#allocation2 + $0xf8] sm:$0xff]
      %v5525 = vld [vmem:[#allocation2 + $0x100] sm:$0xff]
      %v5526 = vld [vmem:[#allocation2 + $0x108] sm:$0xff]
      %v5527 = vld [vmem:[#allocation2 + $0x110] sm:$0xff]
      %v5528 = vld [vmem:[#allocation2 + $0x118] sm:$0xff]
      %v5529 = vld [vmem:[#allocation2 + $0x120] sm:$0xff]
      %v5530 = vld [vmem:[#allocation2 + $0x128] sm:$0xff]
      %v5531 = vld [vmem:[#allocation2 + $0x130] sm:$0xff]
      %v5532 = vld [vmem:[#allocation2 + $0x138] sm:$0xff]
      %v5533 = vld [vmem:[#allocation2 + $0x140] sm:$0xff]
      %v5534 = vld [vmem:[#allocation2 + $0x148] sm:$0xff]
      %v5535 = vld [vmem:[#allocation2 + $0x150] sm:$0xff]
      %v5536 = vld [vmem:[#allocation2 + $0x158] sm:$0xff]
      %v5537 = vld [vmem:[#allocation2 + $0x160] sm:$0xff]
      %v5538 = vld [vmem:[#allocation2 + $0x168] sm:$0xff]
      %v5539 = vld [vmem:[#allocation2 + $0x170] sm:$0xff]
      %v5540 = vld [vmem:[#allocation2 + $0x178] sm:$0xff]
      %v5541 = vld [vmem:[#allocation2 + $0x180] sm:$0xff]
      %v5542 = vld [vmem:[#allocation2 + $0x188] sm:$0xff]
      %v5543 = vld [vmem:[#allocation2 + $0x190] sm:$0xff]
      %v5544 = vld [vmem:[#allocation2 + $0x198] sm:$0xff]
      %v5545 = vld [vmem:[#allocation2 + $0x1a0] sm:$0xff]
      %v5546 = vld [vmem:[#allocation2 + $0x1a8] sm:$0xff]
      %v5547 = vpack.c.bf16 %v5495, %v5493
      %v5548 = vpack.c.bf16 %v5496, %v5494
      %v5549 = vpack.c.bf16 %v5499, %v5497
      %v5550 = vpack.c.bf16 %v5500, %v5498
      %v5551 = vpack.c.bf16 %v5503, %v5501
      %v5552 = vpack.c.bf16 %v5504, %v5502
      %v5553 = vpack.c.bf16 %v5507, %v5505
      %v5554 = vpack.c.bf16 %v5508, %v5506
      %v5555 = vpack.c.bf16 %v5511, %v5509
      %v5556 = vpack.c.bf16 %v5512, %v5510
      %v5557 = vpack.c.bf16 %v5515, %v5513
      %v5558 = vpack.c.bf16 %v5516, %v5514
      %v5559 = vpack.c.bf16 %v5519, %v5517
      %v5560 = vpack.c.bf16 %v5520, %v5518
      %v5561 = vpack.c.bf16 %v5523, %v5521
      %v5562 = vpack.c.bf16 %v5524, %v5522
      %v5563 = vpack.c.bf16 %v5527, %v5525
      %v5564 = vpack.c.bf16 %v5528, %v5526
      %v5565 = vpack.c.bf16 %v5531, %v5529
      %v5566 = vpack.c.bf16 %v5532, %v5530
      %v5567 = vpack.c.bf16 %v5535, %v5533
      %v5568 = vpack.c.bf16 %v5536, %v5534
      %v5569 = vpack.c.bf16 %v5539, %v5537
      %v5570 = vpack.c.bf16 %v5540, %v5538
      %v5571 = vpack.c.bf16 %v5543, %v5541
      %v5572 = vpack.c.bf16 %v5544, %v5542
      %v5573 = vpack.c.bf16 %v5545, %v5545
      %v5574 = vpack.c.bf16 %v5546, %v5546
      %v5576 = vunpack.c.l.b16 %v5492
      %v5577 = vunpack.c.h.b16 %v5492
      %v5578 = vpack.c.b16 %v5576, %v5576
      %v5579 = vpack.c.b16 %v5577, %v5577
      %v5582 = vsel %vm2873, %v5579, 0
      %v5585 = vsel %vm828, %v5573, 0
      %v5588 = vsel %vm828, %v5574, 0
      %5590 = vmatprep.subr.bf16.mxu0 %v5548
      %5591 = vmatpush1.bf16.msra.mxu0 %v5547
      %5592 = vmatprep.subr.bf16.mxu0 %v5550
      %5593 = vmatpush1.bf16.msra.mxu0 %v5549
      %5594 = vmatprep.subr.bf16.mxu0 %v5552
      %5595 = vmatpush1.bf16.msra.mxu0 %v5551
      %5596 = vmatprep.subr.bf16.mxu0 %v5554
      %5597 = vmatpush1.bf16.msra.mxu0 %v5553
      %5598 = vmatprep.subr.bf16.mxu0 %v5556
      %5599 = vmatpush1.bf16.msra.mxu0 %v5555
      %5600 = vmatprep.subr.bf16.mxu0 %v5558
      %5601 = vmatpush1.bf16.msra.mxu0 %v5557
      %5602 = vmatprep.subr.bf16.mxu0 %v5560
      %5603 = vmatpush1.bf16.msra.mxu0 %v5559
      %5604 = vmatprep.subr.bf16.mxu0 %v5562
      %5605 = vmatpush1.bf16.msra.mxu0 %v5561
      %5606 = vmatprep.subr.bf16.mxu0 %v5564
      %5607 = vmatpush1.bf16.msra.mxu0 %v5563
      %5608 = vmatprep.subr.bf16.mxu0 %v5566
      %5609 = vmatpush1.bf16.msra.mxu0 %v5565
      %5610 = vmatprep.subr.bf16.mxu0 %v5568
      %5611 = vmatpush1.bf16.msra.mxu0 %v5567
      %5612 = vmatprep.subr.bf16.mxu0 %v5570
      %5613 = vmatpush1.bf16.msra.mxu0 %v5569
      %5614 = vmatprep.subr.bf16.mxu0 %v5572
      %5615 = vmatpush1.bf16.msra.mxu0 %v5571
      %5616 = vmatprep.subr.bf16.mxu0 %v5588
      %5617 = vmatpush1.bf16.msra.mxu0 %v5585
      %5618 = vmatprep.subr.bf16.mxu0 0
      %5619 = vmatpush1.bf16.msra.mxu0 0
      %5620 = vmatprep.subr.bf16.mxu0 0
      %5621 = vmatpush1.bf16.msra.mxu0 0
      %5622 = vmatprep.mubr.bf16.mxu0 %v5582
      %5623 = vmatmul.mubr.bf16.gmra.mrb[0].mxu0 %v5578
      %v5624 = vpop.f32.mrb[0].mxu0
      %v5625 = vadd.f32 0.0, %v5624
      %v5626 = vpop.f32.mrb[0].mxu0
      %v5627 = vadd.f32 0.0, %v5626
      %v5628 = vpop.f32.mrb[0].mxu0
      %v5629 = vpop.f32.mrb[0].mxu0
      %5630 = vdwg.mxu0
      %v5631 = vadd.f32 %v5625, %v5627
      %5632 = vadd.xlane.f32.xlu0 %v5631
      %v5633 = vpop.xlane.xlu0 %5632
      %v5634 = vmul.f32 %v5633, 0.00390625
      %v5635 = vsub.f32 %v5625, %v5634
      %v5636 = vsub.f32 %v5627, %v5634
      %v5637 = vmul.f32 %v5635, %v5635
      %v5638 = vmul.f32 %v5636, %v5636
      %v5639 = vadd.f32 %v5637, %v5638
      %5640 = vadd.xlane.f32.xlu0 %v5639
      %v5641 = vpop.xlane.xlu0 %5640
      %v5642 = vmul.f32 %v5641, 0.00390625
      %s5643 = scalar_lea.vmem %s6, 120
      %v5644 = vld [vmem:[%s5643] sm:$0xff]
      %v5645 = vadd.f32 %v5642, 1e-05
      %v5646 = vrsqrt.pop %v5645
      %v5647 = vmul.f32 %v5635, %v5646
      %v5648 = vmul.f32 %v5636, %v5646
      %5650 = vset.pattern.permute.xlu0 0
      %5651 = vperm.xlu0 %5650, %v5644
      %v5652 = vpop.permute.xlu0 %5651
      %v5654 = vmul.f32 %v5647, %v5652
      %v5655 = vmul.f32 %v5648, %v5652
      %5656 = vset.pattern.permute.xlu0 1
      %5657 = vperm.xlu0 %5656, %v5644
      %v5658 = vpop.permute.xlu0 %5657
      %v5660 = vadd.f32 %v5654, %v5658
      %v5661 = vadd.f32 %v5655, %v5658
      %vm5662 = vcmp.ge.f32.partialorder %v5660, 0.0
      %vm5663 = vcmp.ge.f32.partialorder %v5661, 0.0
      %v5664 = vmul.f32 %v5660, 0.01
      %v5665 = vmul.f32 %v5661, 0.01
      %v5666 = vsel %vm5662, %v5660, %v5664
      %v5667 = vsel %vm5663, %v5661, %v5665
      %5668 = vrot.lane.b32.xlu0 %v5666, 17
      %v5669 = vpop.permute.xlu0 %5668
      %5670 = vrot.lane.b32.xlu0 %v5667, 17
      %v5671 = vpop.permute.xlu0 %5670
      %v5672 = vsel %vm573, %v5669, %v5671
      %v5673 = vsel %vm573, %v5671, %v5669
      %v5674 = vsel %vm578, %v5673, 0.0
      %v5675 = vsel %vm579, %v5672, 0.0
      %5676 = vst [vmem:[#allocation2] sm:$0xff] %v5674
      %5677 = vst [vmem:[#allocation2 + $0x8] sm:$0xff] %v5675
      %5678 = vrot.lane.b32.xlu0 %v5666, 16
      %v5679 = vpop.permute.xlu0 %5678
      %5680 = vrot.lane.b32.xlu0 %v5667, 16
      %v5681 = vpop.permute.xlu0 %5680
      %v5682 = vsel %vm600, %v5679, %v5681
      %v5683 = vsel %vm600, %v5681, %v5679
      %v5684 = vsel %vm605, %v5683, 0.0
      %v5685 = vsel %vm606, %v5682, 0.0
      %5686 = vst [vmem:[#allocation2 + $0x10] sm:$0xff] %v5684
      %5687 = vst [vmem:[#allocation2 + $0x18] sm:$0xff] %v5685
      %5688 = vrot.lane.b32.xlu0 %v5666, 15
      %v5689 = vpop.permute.xlu0 %5688
      %5690 = vrot.lane.b32.xlu0 %v5667, 15
      %v5691 = vpop.permute.xlu0 %5690
      %v5692 = vsel %vm627, %v5689, %v5691
      %v5693 = vsel %vm627, %v5691, %v5689
      %v5694 = vsel %vm632, %v5693, 0.0
      %v5695 = vsel %vm633, %v5692, 0.0
      %5696 = vst [vmem:[#allocation2 + $0x20] sm:$0xff] %v5694
      %5697 = vst [vmem:[#allocation2 + $0x28] sm:$0xff] %v5695
      %5698 = vrot.lane.b32.xlu0 %v5666, 1
      %v5699 = vpop.permute.xlu0 %5698
      %5700 = vrot.lane.b32.xlu0 %v5667, 1
      %v5701 = vpop.permute.xlu0 %5700
      %v5702 = vsel %vm654, %v5699, %v5701
      %v5703 = vsel %vm654, %v5701, %v5699
      %v5704 = vsel %vm659, %v5703, 0.0
      %v5705 = vsel %vm660, %v5702, 0.0
      %5706 = vst [vmem:[#allocation2 + $0x30] sm:$0xff] %v5704
      %5707 = vst [vmem:[#allocation2 + $0x38] sm:$0xff] %v5705
      %v5708 = vsel %vm679, %v5666, 0.0
      %v5709 = vsel %vm680, %v5667, 0.0
      %5710 = vst [vmem:[#allocation2 + $0x40] sm:$0xff] %v5708
      %5711 = vst [vmem:[#allocation2 + $0x48] sm:$0xff] %v5709
      %5712 = vrot.lane.b32.xlu0 %v5666, 127
      %v5713 = vpop.permute.xlu0 %5712
      %5714 = vrot.lane.b32.xlu0 %v5667, 127
      %v5715 = vpop.permute.xlu0 %5714
      %v5716 = vsel %vm691, %v5713, %v5715
      %v5717 = vsel %vm691, %v5715, %v5713
      %v5718 = vsel %vm696, %v5716, 0.0
      %v5719 = vsel %vm697, %v5717, 0.0
      %5720 = vst [vmem:[#allocation2 + $0x50] sm:$0xff] %v5718
      %5721 = vst [vmem:[#allocation2 + $0x58] sm:$0xff] %v5719
      %5722 = vrot.lane.b32.xlu0 %v5666, 113
      %v5723 = vpop.permute.xlu0 %5722
      %5724 = vrot.lane.b32.xlu0 %v5667, 113
      %v5725 = vpop.permute.xlu0 %5724
      %v5726 = vsel %vm718, %v5723, %v5725
      %v5727 = vsel %vm718, %v5725, %v5723
      %v5728 = vsel %vm723, %v5726, 0.0
      %v5729 = vsel %vm724, %v5727, 0.0
      %5730 = vst [vmem:[#allocation2 + $0x60] sm:$0xff] %v5728
      %5731 = vst [vmem:[#allocation2 + $0x68] sm:$0xff] %v5729
      %5732 = vrot.lane.b32.xlu0 %v5666, 112
      %v5733 = vpop.permute.xlu0 %5732
      %5734 = vrot.lane.b32.xlu0 %v5667, 112
      %v5735 = vpop.permute.xlu0 %5734
      %v5736 = vsel %vm745, %v5733, %v5735
      %v5737 = vsel %vm745, %v5735, %v5733
      %v5738 = vsel %vm750, %v5736, 0.0
      %v5739 = vsel %vm751, %v5737, 0.0
      %5740 = vst [vmem:[#allocation2 + $0x70] sm:$0xff] %v5738
      %5741 = vst [vmem:[#allocation2 + $0x78] sm:$0xff] %v5739
      %5742 = vrot.lane.b32.xlu0 %v5666, 111
      %v5743 = vpop.permute.xlu0 %5742
      %5744 = vrot.lane.b32.xlu0 %v5667, 111
      %v5745 = vpop.permute.xlu0 %5744
      %v5746 = vsel %vm772, %v5743, %v5745
      %v5747 = vsel %vm772, %v5745, %v5743
      %v5748 = vsel %vm777, %v5746, 0.0
      %v5749 = vsel %vm778, %v5747, 0.0
      %5750 = vst [vmem:[#allocation2 + $0x80] sm:$0xff] %v5748
      %5751 = vst [vmem:[#allocation2 + $0x88] sm:$0xff] %v5749
      %s5752 = scalar_lea.vmem %s5, 144
      %v5753 = vld [vmem:[%s5752] sm:$0xf]
      %v5754 = vld [vmem:[#allocation2] sm:$0xff]
      %v5755 = vld [vmem:[#allocation2 + $0x8] sm:$0xff]
      %v5756 = vld [vmem:[#allocation2 + $0x10] sm:$0xff]
      %v5757 = vld [vmem:[#allocation2 + $0x18] sm:$0xff]
      %v5758 = vld [vmem:[#allocation2 + $0x20] sm:$0xff]
      %v5759 = vld [vmem:[#allocation2 + $0x28] sm:$0xff]
      %v5760 = vld [vmem:[#allocation2 + $0x30] sm:$0xff]
      %v5761 = vld [vmem:[#allocation2 + $0x38] sm:$0xff]
      %v5762 = vld [vmem:[#allocation2 + $0x40] sm:$0xff]
      %v5763 = vld [vmem:[#allocation2 + $0x48] sm:$0xff]
      %v5764 = vld [vmem:[#allocation2 + $0x50] sm:$0xff]
      %v5765 = vld [vmem:[#allocation2 + $0x58] sm:$0xff]
      %v5766 = vld [vmem:[#allocation2 + $0x60] sm:$0xff]
      %v5767 = vld [vmem:[#allocation2 + $0x68] sm:$0xff]
      %v5768 = vld [vmem:[#allocation2 + $0x70] sm:$0xff]
      %v5769 = vld [vmem:[#allocation2 + $0x78] sm:$0xff]
      %v5770 = vld [vmem:[#allocation2 + $0x80] sm:$0xff]
      %v5771 = vld [vmem:[#allocation2 + $0x88] sm:$0xff]
      %v5772 = vpack.c.bf16 %v5756, %v5754
      %v5773 = vpack.c.bf16 %v5757, %v5755
      %v5774 = vpack.c.bf16 %v5760, %v5758
      %v5775 = vpack.c.bf16 %v5761, %v5759
      %v5776 = vpack.c.bf16 %v5764, %v5762
      %v5777 = vpack.c.bf16 %v5765, %v5763
      %v5778 = vpack.c.bf16 %v5768, %v5766
      %v5779 = vpack.c.bf16 %v5769, %v5767
      %v5780 = vpack.c.bf16 %v5770, %v5770
      %v5781 = vpack.c.bf16 %v5771, %v5771
      %v5783 = vsel %vm824, %v5753, 0
      %v5786 = vsel %vm828, %v5780, 0
      %v5789 = vsel %vm828, %v5781, 0
      %5791 = vmatprep.subr.bf16.mxu0 %v5773
      %5792 = vmatpush1.bf16.msra.mxu0 %v5772
      %5793 = vmatprep.subr.bf16.mxu0 %v5775
      %5794 = vmatpush1.bf16.msra.mxu0 %v5774
      %5795 = vmatprep.subr.bf16.mxu0 %v5777
      %5796 = vmatpush1.bf16.msra.mxu0 %v5776
      %5797 = vmatprep.subr.bf16.mxu0 %v5779
      %5798 = vmatpush1.bf16.msra.mxu0 %v5778
      %5799 = vmatprep.subr.bf16.mxu0 %v5789
      %5800 = vmatpush1.bf16.msra.mxu0 %v5786
      %5801 = vmatprep.subr.bf16.mxu0 0
      %5802 = vmatpush1.bf16.msra.mxu0 0
      %5803 = vmatprep.subr.bf16.mxu0 0
      %5804 = vmatpush1.bf16.msra.mxu0 0
      %5805 = vmatprep.subr.bf16.mxu0 0
      %5806 = vmatpush1.bf16.msra.mxu0 0
      %5807 = vmatprep.subr.bf16.mxu0 0
      %5808 = vmatpush1.bf16.msra.mxu0 0
      %5809 = vmatprep.subr.bf16.mxu0 0
      %5810 = vmatpush1.bf16.msra.mxu0 0
      %5811 = vmatprep.subr.bf16.mxu0 0
      %5812 = vmatpush1.bf16.msra.mxu0 0
      %5813 = vmatprep.subr.bf16.mxu0 0
      %5814 = vmatpush1.bf16.msra.mxu0 0
      %5815 = vmatprep.subr.bf16.mxu0 0
      %5816 = vmatpush1.bf16.msra.mxu0 0
      %5817 = vmatprep.subr.bf16.mxu0 0
      %5818 = vmatpush1.bf16.msra.mxu0 0
      %5819 = vmatprep.subr.bf16.mxu0 0
      %5820 = vmatpush1.bf16.msra.mxu0 0
      %5821 = vmatprep.subr.bf16.mxu0 0
      %5822 = vmatpush1.bf16.msra.mxu0 0
      %5823 = vmatprep.mubr.bf16.mxu0 0
      %5824 = vmatmul.mubr.bf16.gmra.mrb[0].mxu0 %v5783
      %v5825 = vpop.f32.mrb[0].mxu0
      %v5826 = vadd.f32 0.0, %v5825
      %v5827 = vpop.f32.mrb[0].mxu0
      %v5828 = vadd.f32 0.0, %v5827
      %v5829 = vpop.f32.mrb[0].mxu0
      %v5830 = vpop.f32.mrb[0].mxu0
      %5831 = vdwg.mxu0
      %v5832 = vadd.f32 %v5826, %v5828
      %5833 = vadd.xlane.f32.xlu0 %v5832
      %v5834 = vpop.xlane.xlu0 %5833
      %v5835 = vmul.f32 %v5834, 0.00390625
      %v5836 = vsub.f32 %v5826, %v5835
      %v5837 = vsub.f32 %v5828, %v5835
      %v5838 = vmul.f32 %v5836, %v5836
      %v5839 = vmul.f32 %v5837, %v5837
      %v5840 = vadd.f32 %v5838, %v5839
      %5841 = vadd.xlane.f32.xlu0 %v5840
      %v5842 = vpop.xlane.xlu0 %5841
      %v5843 = vmul.f32 %v5842, 0.00390625
      %s5844 = scalar_lea.vmem %s6, 144
      %v5845 = vld [vmem:[%s5844] sm:$0xff]
      %v5846 = vadd.f32 %v5843, 1e-05
      %v5847 = vrsqrt.pop %v5846
      %v5848 = vmul.f32 %v5836, %v5847
      %v5849 = vmul.f32 %v5837, %v5847
      %5851 = vset.pattern.permute.xlu0 0
      %5852 = vperm.xlu0 %5851, %v5845
      %v5853 = vpop.permute.xlu0 %5852
      %v5855 = vmul.f32 %v5848, %v5853
      %v5856 = vmul.f32 %v5849, %v5853
      %5857 = vset.pattern.permute.xlu0 1
      %5858 = vperm.xlu0 %5857, %v5845
      %v5859 = vpop.permute.xlu0 %5858
      %v5861 = vadd.f32 %v5855, %v5859
      %v5862 = vadd.f32 %v5856, %v5859
      %vm5863 = vcmp.ge.f32.partialorder %v5861, 0.0
      %vm5864 = vcmp.ge.f32.partialorder %v5862, 0.0
      %v5865 = vmul.f32 %v5861, 0.01
      %v5866 = vmul.f32 %v5862, 0.01
      %v5867 = vsel %vm5863, %v5861, %v5865
      %v5868 = vsel %vm5864, %v5862, %v5866
      %v5869 = vld [vmem:[%s7] sm:$0x1]
      %v5870 = vpack.c.bf16 %v5867, %v5867
      %v5871 = vpack.c.bf16 %v5868, %v5868
      %v5872 = vld [vmem:[%s8] sm:$0x3]
      %5874 = vset.pattern.permute.xlu0 0
      %5875 = vperm.xlu0 %5874, %v5872
      %v5876 = vpop.permute.xlu0 %5875
      %v5879 = vsel %vm3171, %v5869, 0
      %v5882 = vsel %vm828, %v5870, 0
      %v5885 = vsel %vm828, %v5871, 0
      %5887 = vmatprep.subr.bf16.mxu0 %v5885
      %5888 = vmatpush1.bf16.msra.mxu0 %v5882
      %5889 = vmatprep.subr.bf16.mxu0 0
      %5890 = vmatpush1.bf16.msra.mxu0 0
      %5891 = vmatprep.subr.bf16.mxu0 0
      %5892 = vmatpush1.bf16.msra.mxu0 0
      %5893 = vmatprep.subr.bf16.mxu0 0
      %5894 = vmatpush1.bf16.msra.mxu0 0
      %5895 = vmatprep.subr.bf16.mxu0 0
      %5896 = vmatpush1.bf16.msra.mxu0 0
      %5897 = vmatprep.subr.bf16.mxu0 0
      %5898 = vmatpush1.bf16.msra.mxu0 0
      %5899 = vmatprep.subr.bf16.mxu0 0
      %5900 = vmatpush1.bf16.msra.mxu0 0
      %5901 = vmatprep.subr.bf16.mxu0 0
      %5902 = vmatpush1.bf16.msra.mxu0 0
      %5903 = vmatprep.subr.bf16.mxu0 0
      %5904 = vmatpush1.bf16.msra.mxu0 0
      %5905 = vmatprep.subr.bf16.mxu0 0
      %5906 = vmatpush1.bf16.msra.mxu0 0
      %5907 = vmatprep.subr.bf16.mxu0 0
      %5908 = vmatpush1.bf16.msra.mxu0 0
      %5909 = vmatprep.subr.bf16.mxu0 0
      %5910 = vmatpush1.bf16.msra.mxu0 0
      %5911 = vmatprep.subr.bf16.mxu0 0
      %5912 = vmatpush1.bf16.msra.mxu0 0
      %5913 = vmatprep.subr.bf16.mxu0 0
      %5914 = vmatpush1.bf16.msra.mxu0 0
      %5915 = vmatprep.subr.bf16.mxu0 0
      %5916 = vmatpush1.bf16.msra.mxu0 0
      %5917 = vmatprep.subr.bf16.mxu0 0
      %5918 = vmatpush1.bf16.msra.mxu0 0
      %5919 = vmatprep.mubr.bf16.mxu0 0
      %5920 = vmatmul.mubr.bf16.gmra.mrb[0].mxu0 %v5879
      %v5921 = vpop.f32.mrb[0].mxu0
      %v5922 = vadd.f32 %v5876, %v5921
      %v5923 = vpop.f32.mrb[0].mxu0
      %v5924 = vadd.f32 %v5876, %v5923
      %v5925 = vpop.f32.mrb[0].mxu0
      %v5926 = vpop.f32.mrb[0].mxu0
      %5927 = vdwg.mxu0
      %v5930 = vcombine.low %v5922, %v5924
      %v5932 = vunpack.c.l.s4 1983009808
      %v5933 = vunpack.c.0.s8 %v5932
      %v5934 = vlaneseq
      %v5935 = vshrl.u32 %v5934, 7
      %v5936 = vsub.s32 %v5933, %v5935
      %v5937 = vrot.slane %v5930, %v5936
      %5939 = vst [vmem:[%s386] sm:$0xf] %v5937
      %p5940 = scmp.lt.s32.totalorder %s22, 1
      %s5941 = scalar_select %p5940, %s22, 1
      %s5942 = smul.addr %s5941, 2
      %s5943 = smul.addr %s5942, 2
      %s5944 = scalar_lea.vmem %s11, %s5943
      // Predicated region
      $region65: #{_lambda_.1} parent=63 // pred_check
        %p5945 = pneg %p276
      $region66: #{_lambda_.1} parent=63 // pred_check_branch
        %5947 = sbr.rel (%p5945) target = $region68
      $region67: #{_lambda_.1} parent=63 // pred_region
        _
      $region68: #{_lambda_.1} parent=63 // pred_fallthru
        _
    $region64: #{_lambda_.1} parent=5 // pred_fallthru
      _
    %p5948 = scmp.le.s32.totalorder 2, %s17
    // Predicated region
    $region69: #{_lambda_.1} parent=5 // pred_check
      %p5949 = pneg %p5948
    $region70: #{_lambda_.1} parent=5 // pred_check_branch
      %5951 = sbr.rel (%p5949) target = $region72
    $region71: #{_lambda_.1} parent=5 // pred_region
      %s5952 = ssub.s32 %s17, 2
      // Predicated region
      $region73: #{_lambda_.1} parent=71 // pred_check
        %p5953 = pneg %p282
      $region74: #{_lambda_.1} parent=71 // pred_check_branch
        %5955 = sbr.rel (%p5953) target = $region76
      $region75: #{_lambda_.1} parent=71 // pred_region
        %p5956 = scmp.lt.s32.totalorder %s23, 1
        %s5957 = scalar_select %p5956, %s23, 1
        %s5958 = smul.addr %s5957, 2
        %s5959 = smul.addr %s5958, 2
        %s5960 = scalar_lea.vmem %s11, %s5959
      $region76: #{_lambda_.1} parent=71 // pred_fallthru
        _
    $region72: #{_lambda_.1} parent=5 // pred_fallthru
      _
  $region6: #{_lambda_.1} parent=0 // loop_footer
    %s21 = sadd.s32 1, %s17
  $region7: #{_lambda_.1} parent=0 // loop_footer_branch
    %16 = sbr.rel target = $region3
  $region8: #{_lambda_.1} parent=0 // loop_exit
    _

</llo_original>
